<compile_context>
chip_gen: v7x
topology: tpu7x:2x2x1
jax: 0.10.0
libtpu: 0.0.40
codegen_flags: <defaults>
</compile_context>

<pallas_src>
import functools

import jax
import jax.numpy as jnp
from jax.experimental import pallas as pl
from jax.experimental.pallas import tpu as pltpu

F32 = jnp.float32
MXU_DTYPE = jnp.bfloat16        # operand dtype fed to the MXU
EPS = 1e-5
APPROX_RECIP = True             # set False for exact softmax normalisation


# ----------------------------------------------------------------------------
# Pallas kernel: one grid step = one (batch, block) pair, fully VMEM-resident
# ----------------------------------------------------------------------------
def _ssa_stack_kernel(num_heads, head_dim,
                      x_ref, s_ref, t_ref,
                      wq_ref, wk_ref, wv_ref, bq_ref, bk_ref, bv_ref,
                      wc_ref, bc_ref, wr_ref, br_ref,
                      y_ref, x_state, o_acc):
    blk = pl.program_id(1)

    # Block 0 consumes the HBM input; later blocks consume the VMEM-resident
    # activation produced by the previous block (no inter-block HBM traffic).
    @pl.when(blk == 0)
    def _():
        x_state[...] = x_ref[0]

    x = x_state[...]                                            # [L, C] f32
    # BN + ReLU prologue for the q/k/v branch (BN folded to per-channel affine).
    a = jnp.maximum(x * s_ref[0] + t_ref[0], 0.0).astype(MXU_DTYPE)
    x_bf = x.astype(MXU_DTYPE)

    # Parallel conv branch relu(BN(Conv1x1(x))) acts on the raw input x.
    # It initializes the combined [L, E] accumulator; heads then add into it.
    cx = jnp.dot(x_bf, wc_ref[0], preferred_element_type=jnp.float32) + bc_ref[0]
    o_acc[...] = jnp.maximum(cx, 0.0)

    # Per-head attention.  1/temperature is folded into Wq/bq and gamma into
    # Wv/bv, so the head outputs are already scaled; weights are stacked per
    # head on a leading axis so no value-level lane slicing is needed.
    for h in range(num_heads):                      # static loop; values die
        lo = h * head_dim                           # into o_acc each iteration
        qh = jnp.dot(a, wq_ref[0, h], preferred_element_type=jnp.float32) + bq_ref[0, h]
        kh = jnp.dot(a, wk_ref[0, h], preferred_element_type=jnp.float32) + bk_ref[0, h]
        vh = jnp.dot(a, wv_ref[0, h], preferred_element_type=jnp.float32) + bv_ref[0, h]
        s = jax.lax.dot_general(qh.astype(MXU_DTYPE), kh.astype(MXU_DTYPE),
                                (((1,), (1,)), ((), ())),
                                preferred_element_type=jnp.float32)      # [L, L]
        s = s - jnp.max(s, axis=-1, keepdims=True)
        p = jnp.exp(s)
        denom = jnp.sum(p, axis=-1, keepdims=True)
        if APPROX_RECIP:
            p = p * pl.reciprocal(denom, approx=True)
        else:
            p = p / denom
        oh = jnp.dot(p.astype(MXU_DTYPE), vh.astype(MXU_DTYPE),
                     preferred_element_type=jnp.float32)                 # [L, hd]
        # Accumulate into this head's lane slot of the [L, E] scratch so the
        # output projection below is a single dense K=E matmul.
        o_acc[:, lo:lo + head_dim] = o_acc[:, lo:lo + head_dim] + oh

    # `reshape` epilogue: Conv1x1 (E->C) + BN + GELU, all fused.
    y = jnp.dot(o_acc[...].astype(MXU_DTYPE), wr_ref[0],
                preferred_element_type=jnp.float32) + br_ref[0]
    # TODO(synk): PyTorch nn.GELU() default is erf-exact; tanh approximation is
    # used for guaranteed Mosaic lowering (the reference matches it).
    y = jax.nn.gelu(y, approximate=True)

    x_state[...] = y                                            # feeds next block

    @pl.when(blk == pl.num_programs(1) - 1)
    def _():
        y_ref[0] = y.astype(y_ref.dtype)


# ----------------------------------------------------------------------------
# weight folding (BN / temperature / gamma) + pallas_call wrapper
# ----------------------------------------------------------------------------
def _bn_affine(bnp, eps=EPS):
    s = bnp['gamma'] * jax.lax.rsqrt(bnp['var'] + eps)
    t = bnp['beta'] - bnp['mean'] * s
    return s, t


def _fold_params(params, num_heads):
    """Fold BN / temperature / gamma into stacked per-block weights (tiny XLA ops)."""
    C, E = params[0]['wq'].shape
    hd = E // num_heads
    cols = {k: [] for k in ('s', 't', 'wq', 'wk', 'wv', 'bq', 'bk', 'bv',
                            'wc', 'bc', 'wr', 'br')}

    def split_w(w):   # [C, E] -> [heads, C, hd]  (head = column block, as in PyTorch view)
        return jnp.transpose(w.reshape(C, num_heads, hd), (1, 0, 2))

    def split_b(b):   # [E] -> [heads, 1, hd]
        return b.reshape(num_heads, 1, hd)

    for p in params:
        s1, t1 = _bn_affine(p['bn'])
        inv_t = 1.0 / p['temperature']
        g = p['gamma'][0]
        cols['s'].append(s1.reshape(1, C))
        cols['t'].append(t1.reshape(1, C))
        cols['wq'].append(split_w(p['wq'] * inv_t))
        cols['bq'].append(split_b(p['bq'] * inv_t))
        cols['wk'].append(split_w(p['wk']))
        cols['bk'].append(split_b(p['bk']))
        cols['wv'].append(split_w(p['wv'] * g))
        cols['bv'].append(split_b(p['bv'] * g))
        s2, t2 = _bn_affine(p['bn_conv'])
        cols['wc'].append(p['wc'] * s2[None, :])
        cols['bc'].append((p['bc'] * s2 + t2).reshape(1, E))
        s3, t3 = _bn_affine(p['bn_reshape'])
        cols['wr'].append(p['wr'] * s3[None, :])
        cols['br'].append((p['br'] * s3 + t3).reshape(1, C))

    dtypes = {'wq': MXU_DTYPE, 'wk': MXU_DTYPE, 'wv': MXU_DTYPE,
              'wc': MXU_DTYPE, 'wr': MXU_DTYPE}
    return {k: jnp.stack(v).astype(dtypes.get(k, F32)) for k, v in cols.items()}


def ssa_fwd(params, x_nchw, num_heads):
    N, C, H, W = x_nchw.shape
    L = H * W
    B = len(params)
    E = params[0]['wq'].shape[1]
    assert E % num_heads == 0
    hd = E // num_heads

    f = _fold_params(params, num_heads)
    x = jnp.transpose(x_nchw, (0, 2, 3, 1)).reshape(N, L, C).astype(F32)

    # Cost hints so XLA overlaps the tiny weight-fold ops with kernel dispatch.
    flops = N * B * (3 * 2 * L * C * E        # q/k/v projections
                     + 2 * 2 * L * L * E      # scores + attn@V (summed over heads)
                     + 2 * L * C * E          # conv branch
                     + 2 * L * E * C)         # reshape/out projection
    transcendentals = N * B * (num_heads * L * L + L * C)
    w_bytes = B * (3 * num_heads * C * hd * 2 + 3 * num_heads * hd * 4
                   + C * E * 2 + E * 4 + E * C * 2 + C * 4 + 2 * C * 4)
    bytes_accessed = 2 * N * L * C * 4 + N * w_bytes

    xmap = lambda n, b: (n, 0, 0)
    wmap = lambda n, b: (b, 0, 0)
    wmap4 = lambda n, b: (b, 0, 0, 0)

    y = pl.pallas_call(
        functools.partial(_ssa_stack_kernel, num_heads, hd),
        out_shape=jax.ShapeDtypeStruct((N, L, C), F32),
        grid=(N, B),
        in_specs=[
            pl.BlockSpec((1, L, C), xmap),                    # x
            pl.BlockSpec((1, 1, C), wmap),                    # BN scale
            pl.BlockSpec((1, 1, C), wmap),                    # BN shift
            pl.BlockSpec((1, num_heads, C, hd), wmap4),       # Wq (1/T folded)
            pl.BlockSpec((1, num_heads, C, hd), wmap4),       # Wk
            pl.BlockSpec((1, num_heads, C, hd), wmap4),       # Wv (gamma folded)
            pl.BlockSpec((1, num_heads, 1, hd), wmap4),       # bq
            pl.BlockSpec((1, num_heads, 1, hd), wmap4),       # bk
            pl.BlockSpec((1, num_heads, 1, hd), wmap4),       # bv
            pl.BlockSpec((1, C, E), wmap),                    # Wc (BN folded)
            pl.BlockSpec((1, 1, E), wmap),                    # bc
            pl.BlockSpec((1, E, C), wmap),                    # Wr (BN folded)
            pl.BlockSpec((1, 1, C), wmap),                    # br
        ],
        out_specs=pl.BlockSpec((1, L, C), xmap),
        scratch_shapes=[pltpu.VMEM((L, C), F32),              # x_state (inter-block)
                        pltpu.VMEM((L, E), F32)],             # conv + attn accumulator
        compiler_params=pltpu.CompilerParams(
            dimension_semantics=("parallel", "arbitrary")),
        cost_estimate=pl.CostEstimate(flops=flops,
                                      transcendentals=transcendentals,
                                      bytes_accessed=bytes_accessed),
    )(x, f['s'], f['t'], f['wq'], f['wk'], f['wv'],
      f['bq'], f['bk'], f['bv'], f['wc'], f['bc'], f['wr'], f['br'])

    return jnp.transpose(y.reshape(N, H, W, C), (0, 3, 1, 2))


# ----------------------------------------------------------------------------
# parameter init (deterministic, synthetic)
# ----------------------------------------------------------------------------
class KeyGen:
    def __init__(self, seed):
        self._key = jax.random.PRNGKey(seed)

    def __call__(self):
        self._key, sub = jax.random.split(self._key)
        return sub


def _conv1x1_w(kg, cin, cout):
    return jax.random.normal(kg(), (cin, cout), F32) * float((2.0 / cin) ** 0.5)


def _bias(kg, cout):
    return jax.random.normal(kg(), (cout,), F32) * 0.02


def _init_bn(c):
    return {'gamma': jnp.ones((c,), F32), 'beta': jnp.zeros((c,), F32),
            'mean': jnp.zeros((c,), F32), 'var': jnp.ones((c,), F32)}


def init_ssa(kg, in_channels, embed_dim, num_blocks):
    blocks = []
    for _ in range(num_blocks):
        blocks.append({
            'bn': _init_bn(in_channels),
            'wq': _conv1x1_w(kg, in_channels, embed_dim), 'bq': _bias(kg, embed_dim),
            'wk': _conv1x1_w(kg, in_channels, embed_dim), 'bk': _bias(kg, embed_dim),
            'wv': _conv1x1_w(kg, in_channels, embed_dim), 'bv': _bias(kg, embed_dim),
            # PyTorch inits gamma=0 / temperature=1; nonzero gamma used so the
            # attention path is actually exercised numerically.
            'gamma': jnp.array([0.1], F32),
            'temperature': jnp.array(1.0, F32),
            'wc': _conv1x1_w(kg, in_channels, embed_dim), 'bc': _bias(kg, embed_dim),
            'bn_conv': _init_bn(embed_dim),
            'wr': _conv1x1_w(kg, embed_dim, in_channels), 'br': _bias(kg, in_channels),
            'bn_reshape': _init_bn(in_channels),
        })
    return blocks


# ----------------------------------------------------------------------------
# pure-JAX reference (f32) for a numerical sanity check
# ----------------------------------------------------------------------------
def ssa_reference(params, x_nchw, num_heads):
    N, C, H, W = x_nchw.shape
    L = H * W
    x = jnp.transpose(x_nchw, (0, 2, 3, 1)).reshape(N, L, C).astype(F32)
    for p in params:
        s1, t1 = _bn_affine(p['bn'])
        a = jnp.maximum(x * s1 + t1, 0.0)
        q = (a @ p['wq'] + p['bq']) / p['temperature']
        k = a @ p['wk'] + p['bk']
        v = a @ p['wv'] + p['bv']
        E = q.shape[-1]
        hd = E // num_heads
        qh = q.reshape(N, L, num_heads, hd).transpose(0, 2, 1, 3)
        kh = k.reshape(N, L, num_heads, hd).transpose(0, 2, 1, 3)
        vh = v.reshape(N, L, num_heads, hd).transpose(0, 2, 1, 3)
        s = jnp.einsum('nhld,nhmd->nhlm', qh, kh)
        s = s - jnp.max(s, axis=-1, keepdims=True)
        pr = jnp.exp(s)
        pr = pr / jnp.sum(pr, axis=-1, keepdims=True)
        o = jnp.einsum('nhlm,nhmd->nhld', pr, vh)
        o = o.transpose(0, 2, 1, 3).reshape(N, L, E)
        s2, t2 = _bn_affine(p['bn_conv'])
        cx = jnp.maximum((x @ p['wc'] + p['bc']) * s2 + t2, 0.0)
        comb = p['gamma'] * o + cx
        s3, t3 = _bn_affine(p['bn_reshape'])
        x = jax.nn.gelu((comb @ p['wr'] + p['br']) * s3 + t3, approximate=True)
    return jnp.transpose(x.reshape(N, H, W, C), (0, 3, 1, 2))


# ----------------------------------------------------------------------------
if __name__ == "__main__":
    in_channels, embed_dim, num_heads, num_blocks = 64, 128, 4, 2
    N, H, W = 2, 16, 16

    kg = KeyGen(0)
    params = init_ssa(kg, in_channels, embed_dim, num_blocks)
    x = jax.random.normal(jax.random.PRNGKey(0), (N, in_channels, H, W), F32)

    fwd = jax.jit(functools.partial(ssa_fwd, num_heads=num_heads))
    out = jax.block_until_ready(fwd(params, x))

    assert out.shape == (N, in_channels, H, W), out.shape
    assert bool(jnp.all(jnp.isfinite(out)))

    ref = jax.block_until_ready(
        jax.jit(functools.partial(ssa_reference, num_heads=num_heads))(params, x))
    max_err = float(jnp.max(jnp.abs(out - ref)))
    # generous bound: bf16 MXU operands + approx-reciprocal softmax, 2 stacked blocks
    assert max_err < 0.2, f"max abs err {max_err}"

    print("KERNEL_OK")
</pallas_src>

<mosaic_0001>
module attributes {stable_mosaic.version = 11 : i64} {
  func.func @_ssa_stack_kernel(%arg0: i32, %arg1: i32, %arg2: memref<1x256x64xf32, #tpu.memory_space<vmem>>, %arg3: memref<1x1x64xf32, #tpu.memory_space<vmem>>, %arg4: memref<1x1x64xf32, #tpu.memory_space<vmem>>, %arg5: memref<1x4x64x32xbf16, #tpu.memory_space<vmem>>, %arg6: memref<1x4x64x32xbf16, #tpu.memory_space<vmem>>, %arg7: memref<1x4x64x32xbf16, #tpu.memory_space<vmem>>, %arg8: memref<1x4x1x32xf32, #tpu.memory_space<vmem>>, %arg9: memref<1x4x1x32xf32, #tpu.memory_space<vmem>>, %arg10: memref<1x4x1x32xf32, #tpu.memory_space<vmem>>, %arg11: memref<1x64x128xbf16, #tpu.memory_space<vmem>>, %arg12: memref<1x1x128xf32, #tpu.memory_space<vmem>>, %arg13: memref<1x128x64xbf16, #tpu.memory_space<vmem>>, %arg14: memref<1x1x64xf32, #tpu.memory_space<vmem>>, %arg15: memref<1x256x64xf32, #tpu.memory_space<vmem>>, %arg16: memref<256x64xf32, #tpu.memory_space<vmem>>, %arg17: memref<256x128xf32, #tpu.memory_space<vmem>>) attributes {dimension_semantics = [#tpu.dimension_semantics<parallel>, #tpu.dimension_semantics<arbitrary>], iteration_bounds = array<i64: 2, 2>, scalar_prefetch = 0 : i64, scratch_operands = 2 : i64, tpu.core_type = #tpu.core_type<tc>, window_params = [{transform_indices = @transform_0, window_bounds = array<i64: 1, 256, 64>}, {transform_indices = @transform_1, window_bounds = array<i64: 1, 1, 64>}, {transform_indices = @transform_2, window_bounds = array<i64: 1, 1, 64>}, {transform_indices = @transform_3, window_bounds = array<i64: 1, 4, 64, 32>}, {transform_indices = @transform_4, window_bounds = array<i64: 1, 4, 64, 32>}, {transform_indices = @transform_5, window_bounds = array<i64: 1, 4, 64, 32>}, {transform_indices = @transform_6, window_bounds = array<i64: 1, 4, 1, 32>}, {transform_indices = @transform_7, window_bounds = array<i64: 1, 4, 1, 32>}, {transform_indices = @transform_8, window_bounds = array<i64: 1, 4, 1, 32>}, {transform_indices = @transform_9, window_bounds = array<i64: 1, 64, 128>}, {transform_indices = @transform_10, window_bounds = array<i64: 1, 1, 128>}, {transform_indices = @transform_11, window_bounds = array<i64: 1, 128, 64>}, {transform_indices = @transform_12, window_bounds = array<i64: 1, 1, 64>}, {transform_indices = @transform_13, window_bounds = array<i64: 1, 256, 64>}]} {
    %c0_i32 = arith.constant 0 : i32
    %0 = arith.cmpi eq, %arg1, %c0_i32 : i32
    %1 = arith.extui %0 : i1 to i32
    %c0_i32_0 = arith.constant 0 : i32
    %2 = arith.cmpi ne, %1, %c0_i32_0 : i32
    scf.if %2 {
      %c0_168 = arith.constant 0 : index
      %c0_169 = arith.constant 0 : index
      %c0_170 = arith.constant 0 : index
      %212 = vector.load %arg2[%c0_168, %c0_169, %c0_170] : memref<1x256x64xf32, #tpu.memory_space<vmem>>, vector<1x256x64xf32>
      %213 = vector.shape_cast %212 : vector<1x256x64xf32> to vector<256x64xf32>
      %c0_171 = arith.constant 0 : index
      %c0_172 = arith.constant 0 : index
      %214 = vector.load %arg16[%c0_171, %c0_172] : memref<256x64xf32, #tpu.memory_space<vmem>>, vector<256x64xf32>
      tpu.vector_store %arg16[%c0_171, %c0_172], %213 {strides = array<i32>} : memref<256x64xf32, #tpu.memory_space<vmem>>, vector<256x64xf32>,
    } else {
    }
    %c0 = arith.constant 0 : index
    %c0_1 = arith.constant 0 : index
    %3 = vector.load %arg16[%c0, %c0_1] : memref<256x64xf32, #tpu.memory_space<vmem>>, vector<256x64xf32>
    %c0_2 = arith.constant 0 : index
    %c0_3 = arith.constant 0 : index
    %c0_4 = arith.constant 0 : index
    %4 = vector.load %arg3[%c0_2, %c0_3, %c0_4] : memref<1x1x64xf32, #tpu.memory_space<vmem>>, vector<1x1x64xf32>
    %5 = vector.shape_cast %4 : vector<1x1x64xf32> to vector<1x64xf32>
    %6 = vector.broadcast %5 : vector<1x64xf32> to vector<256x64xf32>
    %7 = arith.mulf %3, %6 : vector<256x64xf32>
    %c0_5 = arith.constant 0 : index
    %c0_6 = arith.constant 0 : index
    %c0_7 = arith.constant 0 : index
    %8 = vector.load %arg4[%c0_5, %c0_6, %c0_7] : memref<1x1x64xf32, #tpu.memory_space<vmem>>, vector<1x1x64xf32>
    %9 = vector.shape_cast %8 : vector<1x1x64xf32> to vector<1x64xf32>
    %10 = vector.broadcast %9 : vector<1x64xf32> to vector<256x64xf32>
    %11 = arith.addf %7, %10 : vector<256x64xf32>
    %cst = arith.constant 0.000000e+00 : f32
    %12 = vector.broadcast %cst : f32 to vector<256x64xf32>
    %13 = arith.maximumf %11, %12 : vector<256x64xf32>
    %14 = arith.truncf %13 : vector<256x64xf32> to vector<256x64xbf16>
    %15 = arith.truncf %3 : vector<256x64xf32> to vector<256x64xbf16>
    %c0_8 = arith.constant 0 : index
    %c0_9 = arith.constant 0 : index
    %c0_10 = arith.constant 0 : index
    %16 = vector.load %arg11[%c0_8, %c0_9, %c0_10] : memref<1x64x128xbf16, #tpu.memory_space<vmem>>, vector<1x64x128xbf16>
    %17 = vector.shape_cast %16 : vector<1x64x128xbf16> to vector<64x128xbf16>
    %cst_11 = arith.constant dense<0.000000e+00> : vector<256x128xf32>
    %18 = tpu.matmul %15, %17, %cst_11 {dimension_numbers = #tpu.dot_dimension_numbers<[1], [0], [0], [1], [0, 0, 1, 1], [], []>} : vector<256x64xbf16>, vector<64x128xbf16>, vector<256x128xf32> -> vector<256x128xf32>
    %c0_12 = arith.constant 0 : index
    %c0_13 = arith.constant 0 : index
    %c0_14 = arith.constant 0 : index
    %19 = vector.load %arg12[%c0_12, %c0_13, %c0_14] : memref<1x1x128xf32, #tpu.memory_space<vmem>>, vector<1x1x128xf32>
    %20 = vector.shape_cast %19 : vector<1x1x128xf32> to vector<1x128xf32>
    %21 = vector.broadcast %20 : vector<1x128xf32> to vector<256x128xf32>
    %22 = arith.addf %18, %21 : vector<256x128xf32>
    %cst_15 = arith.constant 0.000000e+00 : f32
    %23 = vector.broadcast %cst_15 : f32 to vector<256x128xf32>
    %24 = arith.maximumf %22, %23 : vector<256x128xf32>
    %c0_16 = arith.constant 0 : index
    %c0_17 = arith.constant 0 : index
    %25 = vector.load %arg17[%c0_16, %c0_17] : memref<256x128xf32, #tpu.memory_space<vmem>>, vector<256x128xf32>
    tpu.vector_store %arg17[%c0_16, %c0_17], %24 {strides = array<i32>} : memref<256x128xf32, #tpu.memory_space<vmem>>, vector<256x128xf32>,
    %c0_18 = arith.constant 0 : index
    %c0_19 = arith.constant 0 : index
    %c0_20 = arith.constant 0 : index
    %c0_21 = arith.constant 0 : index
    %26 = vector.load %arg5[%c0_18, %c0_19, %c0_20, %c0_21] : memref<1x4x64x32xbf16, #tpu.memory_space<vmem>>, vector<1x1x64x32xbf16>
    %27 = vector.shape_cast %26 : vector<1x1x64x32xbf16> to vector<64x32xbf16>
    %cst_22 = arith.constant dense<0.000000e+00> : vector<256x32xf32>
    %28 = tpu.matmul %14, %27, %cst_22 {dimension_numbers = #tpu.dot_dimension_numbers<[1], [0], [0], [1], [0, 0, 1, 1], [], []>} : vector<256x64xbf16>, vector<64x32xbf16>, vector<256x32xf32> -> vector<256x32xf32>
    %c0_23 = arith.constant 0 : index
    %c0_24 = arith.constant 0 : index
    %c0_25 = arith.constant 0 : index
    %c0_26 = arith.constant 0 : index
    %29 = vector.load %arg8[%c0_23, %c0_24, %c0_25, %c0_26] : memref<1x4x1x32xf32, #tpu.memory_space<vmem>>, vector<1x1x1x32xf32>
    %30 = vector.shape_cast %29 : vector<1x1x1x32xf32> to vector<1x32xf32>
    %31 = vector.broadcast %30 : vector<1x32xf32> to vector<256x32xf32>
    %32 = arith.addf %28, %31 : vector<256x32xf32>
    %c0_27 = arith.constant 0 : index
    %c0_28 = arith.constant 0 : index
    %c0_29 = arith.constant 0 : index
    %c0_30 = arith.constant 0 : index
    %33 = vector.load %arg6[%c0_27, %c0_28, %c0_29, %c0_30] : memref<1x4x64x32xbf16, #tpu.memory_space<vmem>>, vector<1x1x64x32xbf16>
    %34 = vector.shape_cast %33 : vector<1x1x64x32xbf16> to vector<64x32xbf16>
    %cst_31 = arith.constant dense<0.000000e+00> : vector<256x32xf32>
    %35 = tpu.matmul %14, %34, %cst_31 {dimension_numbers = #tpu.dot_dimension_numbers<[1], [0], [0], [1], [0, 0, 1, 1], [], []>} : vector<256x64xbf16>, vector<64x32xbf16>, vector<256x32xf32> -> vector<256x32xf32>
    %c0_32 = arith.constant 0 : index
    %c0_33 = arith.constant 0 : index
    %c0_34 = arith.constant 0 : index
    %c0_35 = arith.constant 0 : index
    %36 = vector.load %arg9[%c0_32, %c0_33, %c0_34, %c0_35] : memref<1x4x1x32xf32, #tpu.memory_space<vmem>>, vector<1x1x1x32xf32>
    %37 = vector.shape_cast %36 : vector<1x1x1x32xf32> to vector<1x32xf32>
    %38 = vector.broadcast %37 : vector<1x32xf32> to vector<256x32xf32>
    %39 = arith.addf %35, %38 : vector<256x32xf32>
    %c0_36 = arith.constant 0 : index
    %c0_37 = arith.constant 0 : index
    %c0_38 = arith.constant 0 : index
    %c0_39 = arith.constant 0 : index
    %40 = vector.load %arg7[%c0_36, %c0_37, %c0_38, %c0_39] : memref<1x4x64x32xbf16, #tpu.memory_space<vmem>>, vector<1x1x64x32xbf16>
    %41 = vector.shape_cast %40 : vector<1x1x64x32xbf16> to vector<64x32xbf16>
    %cst_40 = arith.constant dense<0.000000e+00> : vector<256x32xf32>
    %42 = tpu.matmul %14, %41, %cst_40 {dimension_numbers = #tpu.dot_dimension_numbers<[1], [0], [0], [1], [0, 0, 1, 1], [], []>} : vector<256x64xbf16>, vector<64x32xbf16>, vector<256x32xf32> -> vector<256x32xf32>
    %c0_41 = arith.constant 0 : index
    %c0_42 = arith.constant 0 : index
    %c0_43 = arith.constant 0 : index
    %c0_44 = arith.constant 0 : index
    %43 = vector.load %arg10[%c0_41, %c0_42, %c0_43, %c0_44] : memref<1x4x1x32xf32, #tpu.memory_space<vmem>>, vector<1x1x1x32xf32>
    %44 = vector.shape_cast %43 : vector<1x1x1x32xf32> to vector<1x32xf32>
    %45 = vector.broadcast %44 : vector<1x32xf32> to vector<256x32xf32>
    %46 = arith.addf %42, %45 : vector<256x32xf32>
    %47 = arith.truncf %32 : vector<256x32xf32> to vector<256x32xbf16>
    %48 = arith.truncf %39 : vector<256x32xf32> to vector<256x32xbf16>
    %cst_45 = arith.constant dense<0.000000e+00> : vector<256x256xf32>
    %49 = tpu.matmul %47, %48, %cst_45 {dimension_numbers = #tpu.dot_dimension_numbers<[1], [1], [0], [0], [0, 0, 1, 0], [], []>} : vector<256x32xbf16>, vector<256x32xbf16>, vector<256x256xf32> -> vector<256x256xf32>
    %cst_46 = arith.constant dense<0xFF800000> : vector<256xf32>
    %50 = vector.multi_reduction <maximumf>, %49, %cst_46 [1] : vector<256x256xf32> to vector<256xf32>
    %51 = vector.shape_cast %50 : vector<256xf32> to vector<256x1xf32>
    %52 = vector.broadcast %51 : vector<256x1xf32> to vector<256x256xf32>
    %53 = arith.subf %49, %52 : vector<256x256xf32>
    %54 = math.exp %53 : vector<256x256xf32>
    %cst_47 = arith.constant dense<0.000000e+00> : vector<256xf32>
    %55 = vector.multi_reduction <add>, %54, %cst_47 [1] : vector<256x256xf32> to vector<256xf32>
    %56 = vector.shape_cast %55 : vector<256xf32> to vector<256x1xf32>
    %57 = tpu.reciprocal %56 {approx = true} : vector<256x1xf32> -> vector<256x1xf32>
    %58 = vector.broadcast %57 : vector<256x1xf32> to vector<256x256xf32>
    %59 = arith.mulf %54, %58 : vector<256x256xf32>
    %60 = arith.truncf %59 : vector<256x256xf32> to vector<256x256xbf16>
    %61 = arith.truncf %46 : vector<256x32xf32> to vector<256x32xbf16>
    %cst_48 = arith.constant dense<0.000000e+00> : vector<256x32xf32>
    %62 = tpu.matmul %60, %61, %cst_48 {dimension_numbers = #tpu.dot_dimension_numbers<[1], [0], [0], [1], [0, 0, 1, 1], [], []>} : vector<256x256xbf16>, vector<256x32xbf16>, vector<256x32xf32> -> vector<256x32xf32>
    %c0_49 = arith.constant 0 : index
    %c0_50 = arith.constant 0 : index
    %63 = vector.load %arg17[%c0_49, %c0_50] : memref<256x128xf32, #tpu.memory_space<vmem>>, vector<256x32xf32>
    %64 = arith.addf %63, %62 : vector<256x32xf32>
    %c0_51 = arith.constant 0 : index
    %c0_52 = arith.constant 0 : index
    %65 = vector.load %arg17[%c0_51, %c0_52] : memref<256x128xf32, #tpu.memory_space<vmem>>, vector<256x32xf32>
    tpu.vector_store %arg17[%c0_51, %c0_52], %64 {strides = array<i32>} : memref<256x128xf32, #tpu.memory_space<vmem>>, vector<256x32xf32>,
    %c0_53 = arith.constant 0 : index
    %c1 = arith.constant 1 : index
    %c0_54 = arith.constant 0 : index
    %c0_55 = arith.constant 0 : index
    %66 = vector.load %arg5[%c0_53, %c1, %c0_54, %c0_55] : memref<1x4x64x32xbf16, #tpu.memory_space<vmem>>, vector<1x1x64x32xbf16>
    %67 = vector.shape_cast %66 : vector<1x1x64x32xbf16> to vector<64x32xbf16>
    %cst_56 = arith.constant dense<0.000000e+00> : vector<256x32xf32>
    %68 = tpu.matmul %14, %67, %cst_56 {dimension_numbers = #tpu.dot_dimension_numbers<[1], [0], [0], [1], [0, 0, 1, 1], [], []>} : vector<256x64xbf16>, vector<64x32xbf16>, vector<256x32xf32> -> vector<256x32xf32>
    %c0_57 = arith.constant 0 : index
    %c1_58 = arith.constant 1 : index
    %c0_59 = arith.constant 0 : index
    %c0_60 = arith.constant 0 : index
    %69 = vector.load %arg8[%c0_57, %c1_58, %c0_59, %c0_60] : memref<1x4x1x32xf32, #tpu.memory_space<vmem>>, vector<1x1x1x32xf32>
    %70 = vector.shape_cast %69 : vector<1x1x1x32xf32> to vector<1x32xf32>
    %71 = vector.broadcast %70 : vector<1x32xf32> to vector<256x32xf32>
    %72 = arith.addf %68, %71 : vector<256x32xf32>
    %c0_61 = arith.constant 0 : index
    %c1_62 = arith.constant 1 : index
    %c0_63 = arith.constant 0 : index
    %c0_64 = arith.constant 0 : index
    %73 = vector.load %arg6[%c0_61, %c1_62, %c0_63, %c0_64] : memref<1x4x64x32xbf16, #tpu.memory_space<vmem>>, vector<1x1x64x32xbf16>
    %74 = vector.shape_cast %73 : vector<1x1x64x32xbf16> to vector<64x32xbf16>
    %cst_65 = arith.constant dense<0.000000e+00> : vector<256x32xf32>
    %75 = tpu.matmul %14, %74, %cst_65 {dimension_numbers = #tpu.dot_dimension_numbers<[1], [0], [0], [1], [0, 0, 1, 1], [], []>} : vector<256x64xbf16>, vector<64x32xbf16>, vector<256x32xf32> -> vector<256x32xf32>
    %c0_66 = arith.constant 0 : index
    %c1_67 = arith.constant 1 : index
    %c0_68 = arith.constant 0 : index
    %c0_69 = arith.constant 0 : index
    %76 = vector.load %arg9[%c0_66, %c1_67, %c0_68, %c0_69] : memref<1x4x1x32xf32, #tpu.memory_space<vmem>>, vector<1x1x1x32xf32>
    %77 = vector.shape_cast %76 : vector<1x1x1x32xf32> to vector<1x32xf32>
    %78 = vector.broadcast %77 : vector<1x32xf32> to vector<256x32xf32>
    %79 = arith.addf %75, %78 : vector<256x32xf32>
    %c0_70 = arith.constant 0 : index
    %c1_71 = arith.constant 1 : index
    %c0_72 = arith.constant 0 : index
    %c0_73 = arith.constant 0 : index
    %80 = vector.load %arg7[%c0_70, %c1_71, %c0_72, %c0_73] : memref<1x4x64x32xbf16, #tpu.memory_space<vmem>>, vector<1x1x64x32xbf16>
    %81 = vector.shape_cast %80 : vector<1x1x64x32xbf16> to vector<64x32xbf16>
    %cst_74 = arith.constant dense<0.000000e+00> : vector<256x32xf32>
    %82 = tpu.matmul %14, %81, %cst_74 {dimension_numbers = #tpu.dot_dimension_numbers<[1], [0], [0], [1], [0, 0, 1, 1], [], []>} : vector<256x64xbf16>, vector<64x32xbf16>, vector<256x32xf32> -> vector<256x32xf32>
    %c0_75 = arith.constant 0 : index
    %c1_76 = arith.constant 1 : index
    %c0_77 = arith.constant 0 : index
    %c0_78 = arith.constant 0 : index
    %83 = vector.load %arg10[%c0_75, %c1_76, %c0_77, %c0_78] : memref<1x4x1x32xf32, #tpu.memory_space<vmem>>, vector<1x1x1x32xf32>
    %84 = vector.shape_cast %83 : vector<1x1x1x32xf32> to vector<1x32xf32>
    %85 = vector.broadcast %84 : vector<1x32xf32> to vector<256x32xf32>
    %86 = arith.addf %82, %85 : vector<256x32xf32>
    %87 = arith.truncf %72 : vector<256x32xf32> to vector<256x32xbf16>
    %88 = arith.truncf %79 : vector<256x32xf32> to vector<256x32xbf16>
    %cst_79 = arith.constant dense<0.000000e+00> : vector<256x256xf32>
    %89 = tpu.matmul %87, %88, %cst_79 {dimension_numbers = #tpu.dot_dimension_numbers<[1], [1], [0], [0], [0, 0, 1, 0], [], []>} : vector<256x32xbf16>, vector<256x32xbf16>, vector<256x256xf32> -> vector<256x256xf32>
    %cst_80 = arith.constant dense<0xFF800000> : vector<256xf32>
    %90 = vector.multi_reduction <maximumf>, %89, %cst_80 [1] : vector<256x256xf32> to vector<256xf32>
    %91 = vector.shape_cast %90 : vector<256xf32> to vector<256x1xf32>
    %92 = vector.broadcast %91 : vector<256x1xf32> to vector<256x256xf32>
    %93 = arith.subf %89, %92 : vector<256x256xf32>
    %94 = math.exp %93 : vector<256x256xf32>
    %cst_81 = arith.constant dense<0.000000e+00> : vector<256xf32>
    %95 = vector.multi_reduction <add>, %94, %cst_81 [1] : vector<256x256xf32> to vector<256xf32>
    %96 = vector.shape_cast %95 : vector<256xf32> to vector<256x1xf32>
    %97 = tpu.reciprocal %96 {approx = true} : vector<256x1xf32> -> vector<256x1xf32>
    %98 = vector.broadcast %97 : vector<256x1xf32> to vector<256x256xf32>
    %99 = arith.mulf %94, %98 : vector<256x256xf32>
    %100 = arith.truncf %99 : vector<256x256xf32> to vector<256x256xbf16>
    %101 = arith.truncf %86 : vector<256x32xf32> to vector<256x32xbf16>
    %cst_82 = arith.constant dense<0.000000e+00> : vector<256x32xf32>
    %102 = tpu.matmul %100, %101, %cst_82 {dimension_numbers = #tpu.dot_dimension_numbers<[1], [0], [0], [1], [0, 0, 1, 1], [], []>} : vector<256x256xbf16>, vector<256x32xbf16>, vector<256x32xf32> -> vector<256x32xf32>
    %c0_83 = arith.constant 0 : index
    %c32 = arith.constant 32 : index
    %103 = vector.load %arg17[%c0_83, %c32] : memref<256x128xf32, #tpu.memory_space<vmem>>, vector<256x32xf32>
    %104 = arith.addf %103, %102 : vector<256x32xf32>
    %c0_84 = arith.constant 0 : index
    %c32_85 = arith.constant 32 : index
    %105 = vector.load %arg17[%c0_84, %c32_85] : memref<256x128xf32, #tpu.memory_space<vmem>>, vector<256x32xf32>
    tpu.vector_store %arg17[%c0_84, %c32_85], %104 {strides = array<i32>} : memref<256x128xf32, #tpu.memory_space<vmem>>, vector<256x32xf32>,
    %c0_86 = arith.constant 0 : index
    %c2 = arith.constant 2 : index
    %c0_87 = arith.constant 0 : index
    %c0_88 = arith.constant 0 : index
    %106 = vector.load %arg5[%c0_86, %c2, %c0_87, %c0_88] : memref<1x4x64x32xbf16, #tpu.memory_space<vmem>>, vector<1x1x64x32xbf16>
    %107 = vector.shape_cast %106 : vector<1x1x64x32xbf16> to vector<64x32xbf16>
    %cst_89 = arith.constant dense<0.000000e+00> : vector<256x32xf32>
    %108 = tpu.matmul %14, %107, %cst_89 {dimension_numbers = #tpu.dot_dimension_numbers<[1], [0], [0], [1], [0, 0, 1, 1], [], []>} : vector<256x64xbf16>, vector<64x32xbf16>, vector<256x32xf32> -> vector<256x32xf32>
    %c0_90 = arith.constant 0 : index
    %c2_91 = arith.constant 2 : index
    %c0_92 = arith.constant 0 : index
    %c0_93 = arith.constant 0 : index
    %109 = vector.load %arg8[%c0_90, %c2_91, %c0_92, %c0_93] : memref<1x4x1x32xf32, #tpu.memory_space<vmem>>, vector<1x1x1x32xf32>
    %110 = vector.shape_cast %109 : vector<1x1x1x32xf32> to vector<1x32xf32>
    %111 = vector.broadcast %110 : vector<1x32xf32> to vector<256x32xf32>
    %112 = arith.addf %108, %111 : vector<256x32xf32>
    %c0_94 = arith.constant 0 : index
    %c2_95 = arith.constant 2 : index
    %c0_96 = arith.constant 0 : index
    %c0_97 = arith.constant 0 : index
    %113 = vector.load %arg6[%c0_94, %c2_95, %c0_96, %c0_97] : memref<1x4x64x32xbf16, #tpu.memory_space<vmem>>, vector<1x1x64x32xbf16>
    %114 = vector.shape_cast %113 : vector<1x1x64x32xbf16> to vector<64x32xbf16>
    %cst_98 = arith.constant dense<0.000000e+00> : vector<256x32xf32>
    %115 = tpu.matmul %14, %114, %cst_98 {dimension_numbers = #tpu.dot_dimension_numbers<[1], [0], [0], [1], [0, 0, 1, 1], [], []>} : vector<256x64xbf16>, vector<64x32xbf16>, vector<256x32xf32> -> vector<256x32xf32>
    %c0_99 = arith.constant 0 : index
    %c2_100 = arith.constant 2 : index
    %c0_101 = arith.constant 0 : index
    %c0_102 = arith.constant 0 : index
    %116 = vector.load %arg9[%c0_99, %c2_100, %c0_101, %c0_102] : memref<1x4x1x32xf32, #tpu.memory_space<vmem>>, vector<1x1x1x32xf32>
    %117 = vector.shape_cast %116 : vector<1x1x1x32xf32> to vector<1x32xf32>
    %118 = vector.broadcast %117 : vector<1x32xf32> to vector<256x32xf32>
    %119 = arith.addf %115, %118 : vector<256x32xf32>
    %c0_103 = arith.constant 0 : index
    %c2_104 = arith.constant 2 : index
    %c0_105 = arith.constant 0 : index
    %c0_106 = arith.constant 0 : index
    %120 = vector.load %arg7[%c0_103, %c2_104, %c0_105, %c0_106] : memref<1x4x64x32xbf16, #tpu.memory_space<vmem>>, vector<1x1x64x32xbf16>
    %121 = vector.shape_cast %120 : vector<1x1x64x32xbf16> to vector<64x32xbf16>
    %cst_107 = arith.constant dense<0.000000e+00> : vector<256x32xf32>
    %122 = tpu.matmul %14, %121, %cst_107 {dimension_numbers = #tpu.dot_dimension_numbers<[1], [0], [0], [1], [0, 0, 1, 1], [], []>} : vector<256x64xbf16>, vector<64x32xbf16>, vector<256x32xf32> -> vector<256x32xf32>
    %c0_108 = arith.constant 0 : index
    %c2_109 = arith.constant 2 : index
    %c0_110 = arith.constant 0 : index
    %c0_111 = arith.constant 0 : index
    %123 = vector.load %arg10[%c0_108, %c2_109, %c0_110, %c0_111] : memref<1x4x1x32xf32, #tpu.memory_space<vmem>>, vector<1x1x1x32xf32>
    %124 = vector.shape_cast %123 : vector<1x1x1x32xf32> to vector<1x32xf32>
    %125 = vector.broadcast %124 : vector<1x32xf32> to vector<256x32xf32>
    %126 = arith.addf %122, %125 : vector<256x32xf32>
    %127 = arith.truncf %112 : vector<256x32xf32> to vector<256x32xbf16>
    %128 = arith.truncf %119 : vector<256x32xf32> to vector<256x32xbf16>
    %cst_112 = arith.constant dense<0.000000e+00> : vector<256x256xf32>
    %129 = tpu.matmul %127, %128, %cst_112 {dimension_numbers = #tpu.dot_dimension_numbers<[1], [1], [0], [0], [0, 0, 1, 0], [], []>} : vector<256x32xbf16>, vector<256x32xbf16>, vector<256x256xf32> -> vector<256x256xf32>
    %cst_113 = arith.constant dense<0xFF800000> : vector<256xf32>
    %130 = vector.multi_reduction <maximumf>, %129, %cst_113 [1] : vector<256x256xf32> to vector<256xf32>
    %131 = vector.shape_cast %130 : vector<256xf32> to vector<256x1xf32>
    %132 = vector.broadcast %131 : vector<256x1xf32> to vector<256x256xf32>
    %133 = arith.subf %129, %132 : vector<256x256xf32>
    %134 = math.exp %133 : vector<256x256xf32>
    %cst_114 = arith.constant dense<0.000000e+00> : vector<256xf32>
    %135 = vector.multi_reduction <add>, %134, %cst_114 [1] : vector<256x256xf32> to vector<256xf32>
    %136 = vector.shape_cast %135 : vector<256xf32> to vector<256x1xf32>
    %137 = tpu.reciprocal %136 {approx = true} : vector<256x1xf32> -> vector<256x1xf32>
    %138 = vector.broadcast %137 : vector<256x1xf32> to vector<256x256xf32>
    %139 = arith.mulf %134, %138 : vector<256x256xf32>
    %140 = arith.truncf %139 : vector<256x256xf32> to vector<256x256xbf16>
    %141 = arith.truncf %126 : vector<256x32xf32> to vector<256x32xbf16>
    %cst_115 = arith.constant dense<0.000000e+00> : vector<256x32xf32>
    %142 = tpu.matmul %140, %141, %cst_115 {dimension_numbers = #tpu.dot_dimension_numbers<[1], [0], [0], [1], [0, 0, 1, 1], [], []>} : vector<256x256xbf16>, vector<256x32xbf16>, vector<256x32xf32> -> vector<256x32xf32>
    %c0_116 = arith.constant 0 : index
    %c64 = arith.constant 64 : index
    %143 = vector.load %arg17[%c0_116, %c64] : memref<256x128xf32, #tpu.memory_space<vmem>>, vector<256x32xf32>
    %144 = arith.addf %143, %142 : vector<256x32xf32>
    %c0_117 = arith.constant 0 : index
    %c64_118 = arith.constant 64 : index
    %145 = vector.load %arg17[%c0_117, %c64_118] : memref<256x128xf32, #tpu.memory_space<vmem>>, vector<256x32xf32>
    tpu.vector_store %arg17[%c0_117, %c64_118], %144 {strides = array<i32>} : memref<256x128xf32, #tpu.memory_space<vmem>>, vector<256x32xf32>,
    %c0_119 = arith.constant 0 : index
    %c3 = arith.constant 3 : index
    %c0_120 = arith.constant 0 : index
    %c0_121 = arith.constant 0 : index
    %146 = vector.load %arg5[%c0_119, %c3, %c0_120, %c0_121] : memref<1x4x64x32xbf16, #tpu.memory_space<vmem>>, vector<1x1x64x32xbf16>
    %147 = vector.shape_cast %146 : vector<1x1x64x32xbf16> to vector<64x32xbf16>
    %cst_122 = arith.constant dense<0.000000e+00> : vector<256x32xf32>
    %148 = tpu.matmul %14, %147, %cst_122 {dimension_numbers = #tpu.dot_dimension_numbers<[1], [0], [0], [1], [0, 0, 1, 1], [], []>} : vector<256x64xbf16>, vector<64x32xbf16>, vector<256x32xf32> -> vector<256x32xf32>
    %c0_123 = arith.constant 0 : index
    %c3_124 = arith.constant 3 : index
    %c0_125 = arith.constant 0 : index
    %c0_126 = arith.constant 0 : index
    %149 = vector.load %arg8[%c0_123, %c3_124, %c0_125, %c0_126] : memref<1x4x1x32xf32, #tpu.memory_space<vmem>>, vector<1x1x1x32xf32>
    %150 = vector.shape_cast %149 : vector<1x1x1x32xf32> to vector<1x32xf32>
    %151 = vector.broadcast %150 : vector<1x32xf32> to vector<256x32xf32>
    %152 = arith.addf %148, %151 : vector<256x32xf32>
    %c0_127 = arith.constant 0 : index
    %c3_128 = arith.constant 3 : index
    %c0_129 = arith.constant 0 : index
    %c0_130 = arith.constant 0 : index
    %153 = vector.load %arg6[%c0_127, %c3_128, %c0_129, %c0_130] : memref<1x4x64x32xbf16, #tpu.memory_space<vmem>>, vector<1x1x64x32xbf16>
    %154 = vector.shape_cast %153 : vector<1x1x64x32xbf16> to vector<64x32xbf16>
    %cst_131 = arith.constant dense<0.000000e+00> : vector<256x32xf32>
    %155 = tpu.matmul %14, %154, %cst_131 {dimension_numbers = #tpu.dot_dimension_numbers<[1], [0], [0], [1], [0, 0, 1, 1], [], []>} : vector<256x64xbf16>, vector<64x32xbf16>, vector<256x32xf32> -> vector<256x32xf32>
    %c0_132 = arith.constant 0 : index
    %c3_133 = arith.constant 3 : index
    %c0_134 = arith.constant 0 : index
    %c0_135 = arith.constant 0 : index
    %156 = vector.load %arg9[%c0_132, %c3_133, %c0_134, %c0_135] : memref<1x4x1x32xf32, #tpu.memory_space<vmem>>, vector<1x1x1x32xf32>
    %157 = vector.shape_cast %156 : vector<1x1x1x32xf32> to vector<1x32xf32>
    %158 = vector.broadcast %157 : vector<1x32xf32> to vector<256x32xf32>
    %159 = arith.addf %155, %158 : vector<256x32xf32>
    %c0_136 = arith.constant 0 : index
    %c3_137 = arith.constant 3 : index
    %c0_138 = arith.constant 0 : index
    %c0_139 = arith.constant 0 : index
    %160 = vector.load %arg7[%c0_136, %c3_137, %c0_138, %c0_139] : memref<1x4x64x32xbf16, #tpu.memory_space<vmem>>, vector<1x1x64x32xbf16>
    %161 = vector.shape_cast %160 : vector<1x1x64x32xbf16> to vector<64x32xbf16>
    %cst_140 = arith.constant dense<0.000000e+00> : vector<256x32xf32>
    %162 = tpu.matmul %14, %161, %cst_140 {dimension_numbers = #tpu.dot_dimension_numbers<[1], [0], [0], [1], [0, 0, 1, 1], [], []>} : vector<256x64xbf16>, vector<64x32xbf16>, vector<256x32xf32> -> vector<256x32xf32>
    %c0_141 = arith.constant 0 : index
    %c3_142 = arith.constant 3 : index
    %c0_143 = arith.constant 0 : index
    %c0_144 = arith.constant 0 : index
    %163 = vector.load %arg10[%c0_141, %c3_142, %c0_143, %c0_144] : memref<1x4x1x32xf32, #tpu.memory_space<vmem>>, vector<1x1x1x32xf32>
    %164 = vector.shape_cast %163 : vector<1x1x1x32xf32> to vector<1x32xf32>
    %165 = vector.broadcast %164 : vector<1x32xf32> to vector<256x32xf32>
    %166 = arith.addf %162, %165 : vector<256x32xf32>
    %167 = arith.truncf %152 : vector<256x32xf32> to vector<256x32xbf16>
    %168 = arith.truncf %159 : vector<256x32xf32> to vector<256x32xbf16>
    %cst_145 = arith.constant dense<0.000000e+00> : vector<256x256xf32>
    %169 = tpu.matmul %167, %168, %cst_145 {dimension_numbers = #tpu.dot_dimension_numbers<[1], [1], [0], [0], [0, 0, 1, 0], [], []>} : vector<256x32xbf16>, vector<256x32xbf16>, vector<256x256xf32> -> vector<256x256xf32>
    %cst_146 = arith.constant dense<0xFF800000> : vector<256xf32>
    %170 = vector.multi_reduction <maximumf>, %169, %cst_146 [1] : vector<256x256xf32> to vector<256xf32>
    %171 = vector.shape_cast %170 : vector<256xf32> to vector<256x1xf32>
    %172 = vector.broadcast %171 : vector<256x1xf32> to vector<256x256xf32>
    %173 = arith.subf %169, %172 : vector<256x256xf32>
    %174 = math.exp %173 : vector<256x256xf32>
    %cst_147 = arith.constant dense<0.000000e+00> : vector<256xf32>
    %175 = vector.multi_reduction <add>, %174, %cst_147 [1] : vector<256x256xf32> to vector<256xf32>
    %176 = vector.shape_cast %175 : vector<256xf32> to vector<256x1xf32>
    %177 = tpu.reciprocal %176 {approx = true} : vector<256x1xf32> -> vector<256x1xf32>
    %178 = vector.broadcast %177 : vector<256x1xf32> to vector<256x256xf32>
    %179 = arith.mulf %174, %178 : vector<256x256xf32>
    %180 = arith.truncf %179 : vector<256x256xf32> to vector<256x256xbf16>
    %181 = arith.truncf %166 : vector<256x32xf32> to vector<256x32xbf16>
    %cst_148 = arith.constant dense<0.000000e+00> : vector<256x32xf32>
    %182 = tpu.matmul %180, %181, %cst_148 {dimension_numbers = #tpu.dot_dimension_numbers<[1], [0], [0], [1], [0, 0, 1, 1], [], []>} : vector<256x256xbf16>, vector<256x32xbf16>, vector<256x32xf32> -> vector<256x32xf32>
    %c0_149 = arith.constant 0 : index
    %c96 = arith.constant 96 : index
    %183 = vector.load %arg17[%c0_149, %c96] : memref<256x128xf32, #tpu.memory_space<vmem>>, vector<256x32xf32>
    %184 = arith.addf %183, %182 : vector<256x32xf32>
    %c0_150 = arith.constant 0 : index
    %c96_151 = arith.constant 96 : index
    %185 = vector.load %arg17[%c0_150, %c96_151] : memref<256x128xf32, #tpu.memory_space<vmem>>, vector<256x32xf32>
    tpu.vector_store %arg17[%c0_150, %c96_151], %184 {strides = array<i32>} : memref<256x128xf32, #tpu.memory_space<vmem>>, vector<256x32xf32>,
    %c0_152 = arith.constant 0 : index
    %c0_153 = arith.constant 0 : index
    %186 = vector.load %arg17[%c0_152, %c0_153] : memref<256x128xf32, #tpu.memory_space<vmem>>, vector<256x128xf32>
    %187 = arith.truncf %186 : vector<256x128xf32> to vector<256x128xbf16>
    %c0_154 = arith.constant 0 : index
    %c0_155 = arith.constant 0 : index
    %c0_156 = arith.constant 0 : index
    %188 = vector.load %arg13[%c0_154, %c0_155, %c0_156] : memref<1x128x64xbf16, #tpu.memory_space<vmem>>, vector<1x128x64xbf16>
    %189 = vector.shape_cast %188 : vector<1x128x64xbf16> to vector<128x64xbf16>
    %cst_157 = arith.constant dense<0.000000e+00> : vector<256x64xf32>
    %190 = tpu.matmul %187, %189, %cst_157 {dimension_numbers = #tpu.dot_dimension_numbers<[1], [0], [0], [1], [0, 0, 1, 1], [], []>} : vector<256x128xbf16>, vector<128x64xbf16>, vector<256x64xf32> -> vector<256x64xf32>
    %c0_158 = arith.constant 0 : index
    %c0_159 = arith.constant 0 : index
    %c0_160 = arith.constant 0 : index
    %191 = vector.load %arg14[%c0_158, %c0_159, %c0_160] : memref<1x1x64xf32, #tpu.memory_space<vmem>>, vector<1x1x64xf32>
    %192 = vector.shape_cast %191 : vector<1x1x64xf32> to vector<1x64xf32>
    %193 = vector.broadcast %192 : vector<1x64xf32> to vector<256x64xf32>
    %194 = arith.addf %190, %193 : vector<256x64xf32>
    %195 = arith.mulf %194, %194 : vector<256x64xf32>
    %196 = arith.mulf %194, %195 : vector<256x64xf32>
    %cst_161 = arith.constant 4.471500e-02 : f32
    %197 = vector.broadcast %cst_161 : f32 to vector<256x64xf32>
    %198 = arith.mulf %197, %196 : vector<256x64xf32>
    %199 = arith.addf %194, %198 : vector<256x64xf32>
    %cst_162 = arith.constant 0.797884583 : f32
    %200 = vector.broadcast %cst_162 : f32 to vector<256x64xf32>
    %201 = arith.mulf %200, %199 : vector<256x64xf32>
    %202 = math.tanh %201 : vector<256x64xf32>
    %cst_163 = arith.constant 1.000000e+00 : f32
    %203 = vector.broadcast %cst_163 : f32 to vector<256x64xf32>
    %204 = arith.addf %203, %202 : vector<256x64xf32>
    %cst_164 = arith.constant 5.000000e-01 : f32
    %205 = vector.broadcast %cst_164 : f32 to vector<256x64xf32>
    %206 = arith.mulf %205, %204 : vector<256x64xf32>
    %207 = arith.mulf %194, %206 : vector<256x64xf32>
    %c0_165 = arith.constant 0 : index
    %c0_166 = arith.constant 0 : index
    %208 = vector.load %arg16[%c0_165, %c0_166] : memref<256x64xf32, #tpu.memory_space<vmem>>, vector<256x64xf32>
    tpu.vector_store %arg16[%c0_165, %c0_166], %207 {strides = array<i32>} : memref<256x64xf32, #tpu.memory_space<vmem>>, vector<256x64xf32>,
    %c1_i32 = arith.constant 1 : i32
    %209 = arith.cmpi eq, %arg1, %c1_i32 : i32
    %210 = arith.extui %209 : i1 to i32
    %c0_i32_167 = arith.constant 0 : i32
    %211 = arith.cmpi ne, %210, %c0_i32_167 : i32
    scf.if %211 {
      %c0_168 = arith.constant 0 : index
      %c0_169 = arith.constant 0 : index
      %c0_170 = arith.constant 0 : index
      %212 = vector.load %arg15[%c0_168, %c0_169, %c0_170] : memref<1x256x64xf32, #tpu.memory_space<vmem>>, vector<1x256x64xf32>
      %213 = vector.shape_cast %212 : vector<1x256x64xf32> to vector<256x64xf32>
      %214 = vector.shape_cast %207 : vector<256x64xf32> to vector<1x256x64xf32>
      tpu.vector_store %arg15[%c0_168, %c0_169, %c0_170], %214 {strides = array<i32>} : memref<1x256x64xf32, #tpu.memory_space<vmem>>, vector<1x256x64xf32>,
    } else {
    }
    return
  }
  func.func @transform_0(%arg0: i32, %arg1: i32) -> (i32, i32, i32) {
    %c0_i32 = arith.constant 0 : i32
    %c0_i32_0 = arith.constant 0 : i32
    %c0_i32_1 = arith.constant 0 : i32
    return %arg0, %c0_i32, %c0_i32_0 : i32, i32, i32
  }
  func.func @transform_1(%arg0: i32, %arg1: i32) -> (i32, i32, i32) {
    %c0_i32 = arith.constant 0 : i32
    %c0_i32_0 = arith.constant 0 : i32
    %c0_i32_1 = arith.constant 0 : i32
    return %arg1, %c0_i32, %c0_i32_0 : i32, i32, i32
  }
  func.func @transform_2(%arg0: i32, %arg1: i32) -> (i32, i32, i32) {
    %c0_i32 = arith.constant 0 : i32
    %c0_i32_0 = arith.constant 0 : i32
    %c0_i32_1 = arith.constant 0 : i32
    return %arg1, %c0_i32, %c0_i32_0 : i32, i32, i32
  }
  func.func @transform_3(%arg0: i32, %arg1: i32) -> (i32, i32, i32, i32) {
    %c0_i32 = arith.constant 0 : i32
    %c0_i32_0 = arith.constant 0 : i32
    %c0_i32_1 = arith.constant 0 : i32
    %c0_i32_2 = arith.constant 0 : i32
    return %arg1, %c0_i32, %c0_i32_0, %c0_i32_1 : i32, i32, i32, i32
  }
  func.func @transform_4(%arg0: i32, %arg1: i32) -> (i32, i32, i32, i32) {
    %c0_i32 = arith.constant 0 : i32
    %c0_i32_0 = arith.constant 0 : i32
    %c0_i32_1 = arith.constant 0 : i32
    %c0_i32_2 = arith.constant 0 : i32
    return %arg1, %c0_i32, %c0_i32_0, %c0_i32_1 : i32, i32, i32, i32
  }
  func.func @transform_5(%arg0: i32, %arg1: i32) -> (i32, i32, i32, i32) {
    %c0_i32 = arith.constant 0 : i32
    %c0_i32_0 = arith.constant 0 : i32
    %c0_i32_1 = arith.constant 0 : i32
    %c0_i32_2 = arith.constant 0 : i32
    return %arg1, %c0_i32, %c0_i32_0, %c0_i32_1 : i32, i32, i32, i32
  }
  func.func @transform_6(%arg0: i32, %arg1: i32) -> (i32, i32, i32, i32) {
    %c0_i32 = arith.constant 0 : i32
    %c0_i32_0 = arith.constant 0 : i32
    %c0_i32_1 = arith.constant 0 : i32
    %c0_i32_2 = arith.constant 0 : i32
    return %arg1, %c0_i32, %c0_i32_0, %c0_i32_1 : i32, i32, i32, i32
  }
  func.func @transform_7(%arg0: i32, %arg1: i32) -> (i32, i32, i32, i32) {
    %c0_i32 = arith.constant 0 : i32
    %c0_i32_0 = arith.constant 0 : i32
    %c0_i32_1 = arith.constant 0 : i32
    %c0_i32_2 = arith.constant 0 : i32
    return %arg1, %c0_i32, %c0_i32_0, %c0_i32_1 : i32, i32, i32, i32
  }
  func.func @transform_8(%arg0: i32, %arg1: i32) -> (i32, i32, i32, i32) {
    %c0_i32 = arith.constant 0 : i32
    %c0_i32_0 = arith.constant 0 : i32
    %c0_i32_1 = arith.constant 0 : i32
    %c0_i32_2 = arith.constant 0 : i32
    return %arg1, %c0_i32, %c0_i32_0, %c0_i32_1 : i32, i32, i32, i32
  }
  func.func @transform_9(%arg0: i32, %arg1: i32) -> (i32, i32, i32) {
    %c0_i32 = arith.constant 0 : i32
    %c0_i32_0 = arith.constant 0 : i32
    %c0_i32_1 = arith.constant 0 : i32
    return %arg1, %c0_i32, %c0_i32_0 : i32, i32, i32
  }
  func.func @transform_10(%arg0: i32, %arg1: i32) -> (i32, i32, i32) {
    %c0_i32 = arith.constant 0 : i32
    %c0_i32_0 = arith.constant 0 : i32
    %c0_i32_1 = arith.constant 0 : i32
    return %arg1, %c0_i32, %c0_i32_0 : i32, i32, i32
  }
  func.func @transform_11(%arg0: i32, %arg1: i32) -> (i32, i32, i32) {
    %c0_i32 = arith.constant 0 : i32
    %c0_i32_0 = arith.constant 0 : i32
    %c0_i32_1 = arith.constant 0 : i32
    return %arg1, %c0_i32, %c0_i32_0 : i32, i32, i32
  }
  func.func @transform_12(%arg0: i32, %arg1: i32) -> (i32, i32, i32) {
    %c0_i32 = arith.constant 0 : i32
    %c0_i32_0 = arith.constant 0 : i32
    %c0_i32_1 = arith.constant 0 : i32
    return %arg1, %c0_i32, %c0_i32_0 : i32, i32, i32
  }
  func.func @transform_13(%arg0: i32, %arg1: i32) -> (i32, i32, i32) {
    %c0_i32 = arith.constant 0 : i32
    %c0_i32_0 = arith.constant 0 : i32
    %c0_i32_1 = arith.constant 0 : i32
    return %arg0, %c0_i32, %c0_i32_0 : i32, i32, i32
  }
}

</mosaic_0001>

<llo_original>
// kernel: ssa_fwd.1
$region0: #{ssa_fwd.1}
  #allocation0 [shape = 'u32[]', space=smem, size = 0x4, offset = 0x4, fixed_abs, tag = 'smem constant byte address 0x4 - core index']
  #allocation1 [shape = 'u32[144,128]{1,0:T(1,128)}', space=vmem, size = 0x12000, scoped, tag = 'internal scratch']
  #allocation2 [shape = 'f32[256,64]{1,0:T(8,128)}', space=vmem, size = 0x20000, scoped, tag = 'scratch operand']
  #allocation3 [shape = 'f32[256,128]{1,0:T(8,128)}', space=vmem, size = 0x20000, scoped, tag = 'scratch operand']
  %s0 = inlined_call_operand.vmem [shape: f32[2,256,64], index: 0, kind: input, shape index: {}]
  %s1 = inlined_call_operand.vmem [shape: f32[2,1,64], index: 1, kind: input, shape index: {}]
  %s2 = inlined_call_operand.vmem [shape: f32[2,1,64], index: 2, kind: input, shape index: {}]
  %s3 = inlined_call_operand.vmem [shape: bf16[2,4,64,32], index: 3, kind: input, shape index: {}]
  %s4 = inlined_call_operand.vmem [shape: bf16[2,4,64,32], index: 4, kind: input, shape index: {}]
  %s5 = inlined_call_operand.vmem [shape: bf16[2,4,64,32], index: 5, kind: input, shape index: {}]
  %s6 = inlined_call_operand.vmem [shape: f32[2,4,1,32], index: 6, kind: input, shape index: {}]
  %s7 = inlined_call_operand.vmem [shape: f32[2,4,1,32], index: 7, kind: input, shape index: {}]
  %s8 = inlined_call_operand.vmem [shape: f32[2,4,1,32], index: 8, kind: input, shape index: {}]
  %s9 = inlined_call_operand.vmem [shape: bf16[2,64,128], index: 9, kind: input, shape index: {}]
  %s10 = inlined_call_operand.vmem [shape: f32[2,1,128], index: 10, kind: input, shape index: {}]
  %s11 = inlined_call_operand.vmem [shape: bf16[2,128,64], index: 11, kind: input, shape index: {}]
  %s12 = inlined_call_operand.vmem [shape: f32[2,1,64], index: 12, kind: input, shape index: {}]
  %s13 = inlined_call_operand.hbm [shape: f32[2,256,64], index: 13, kind: output, shape index: {}]
  %s14 = sld [smem:[#allocation0]]
  $region93: #{ssa_fwd.1} parent=0
    _
  %s16 = ssub.s32 1, %s14
  %s17 = scalar_select 0, %s16, %s14
  $region1: #{ssa_fwd.1} parent=0
    #allocation4 [shape = 'u8[262144]{0}', space=vmem, size = 0x40000, scoped, tag = 'output window, operand 0']
    #allocation5 [shape = 's32[2]{0}', space=sflag, size = 0x8, scoped, tag = 'scoped memory for ssa_fwd.1']
    %18 = vsyncpa [#allocation5], 0
    %s19 = scalar_lea.sflag [#allocation5], 1
    %20 = vsyncpa %s19, 0
    loop: start=0, step=1, limit=6
    $region2: #{ssa_fwd.1} parent=1 // loop_pre_header
      _
    $region3: #{ssa_fwd.1} parent=1 // loop_header
      %s22 = sphi 0, %s26
      %p23 = scmp.ge.s32.totalorder %s22, 6
      %s29 = sphi 0, %s41
      %s30 = sphi 0, %s37
      %s31 = sphi 0, %s29
      %s32 = sphi 0, %s30
      %s33 = sphi 0, %s31
      %s34 = sphi 0, %s32
      %s44 = sphi 0, %s46
      %s47 = sphi 0, %s44
      %s48 = sphi 0, %s47
      %s64 = sphi 0, %s48
      %s70 = sphi 0, %s72
      %s73 = sphi 0, %s70
      %s74 = sphi 0, %s73
      %s90 = sphi 0, %s74
      %s96 = sphi 0, %s98
      %s99 = sphi 0, %s96
      %s100 = sphi 0, %s99
      %s116 = sphi 0, %s100
      %s122 = sphi 0, %s124
      %s125 = sphi 0, %s122
      %s126 = sphi 0, %s125
      %s142 = sphi 0, %s126
      %s148 = sphi 0, %s150
      %s151 = sphi 0, %s148
      %s152 = sphi 0, %s151
      %s168 = sphi 0, %s152
      %s174 = sphi 0, %s176
      %s177 = sphi 0, %s174
      %s178 = sphi 0, %s177
      %s194 = sphi 0, %s178
      %s200 = sphi 0, %s202
      %s203 = sphi 0, %s200
      %s204 = sphi 0, %s203
      %s220 = sphi 0, %s204
      %s226 = sphi 0, %s228
      %s229 = sphi 0, %s226
      %s230 = sphi 0, %s229
      %s246 = sphi 0, %s230
      %s252 = sphi 0, %s254
      %s255 = sphi 0, %s252
      %s256 = sphi 0, %s255
      %s272 = sphi 0, %s256
      %s278 = sphi 0, %s280
      %s281 = sphi 0, %s278
      %s282 = sphi 0, %s281
      %s298 = sphi 0, %s282
      %s304 = sphi 0, %s306
      %s307 = sphi 0, %s304
      %s308 = sphi 0, %s307
      %s324 = sphi 0, %s308
      %s330 = sphi 0, %s332
      %s333 = sphi 0, %s330
      %s334 = sphi 0, %s333
      %s350 = sphi 0, %s334
      %s356 = sphi 0, %s358
      %s359 = sphi 0, %s356
      %s360 = sphi 0, %s359
      %s376 = sphi 0, %s360
      %s382 = sphi 0, %s384
      %s385 = sphi 0, %s382
      %s386 = sphi 0, %s385
      %s402 = sphi 0, %s386
    $region4: #{ssa_fwd.1} parent=1 // loop_header_branch
      %25 = sbr.rel (%p23) target = $region8
    $region5: #{ssa_fwd.1} parent=1 // loop_body
      %s27 = ssub.s32 %s22, 1
      %s28 = ssub.s32 %s22, 2
      %s35 = sadd.s32 1, %s30
      %p36 = scmp.ge.s32.totalorder %s35, 2
      %s37 = scalar_select %p36, 0, %s35
      %s38 = sadd.s32 1, %s29
      %s39 = scalar_select %p36, %s38, %s29
      %p40 = scmp.ge.s32.totalorder %s39, 2
      %s41 = scalar_select %p40, 0, %s39
      %s42 = ssub.s32 %s29, %s41
      %p43 = scmp.eq.s32.totalorder %s42, 0
      %s45 = sadd.s32 %s44, 1
      %s46 = scalar_select %p43, %s44, %s45
      %p49 = pneg %p43
      %p50 = scmp.eq.s32.totalorder %s22, 3
      %p51 = por %p49, %p50
      %p52 = scmp.ne.s32.totalorder %s44, %s47
      %p53 = scmp.eq.s32.totalorder %s22, 0
      %p54 = por %p52, %p53
      %p55 = scmp.ne.s32.totalorder %s44, %s47
      %p56 = scmp.eq.s32.totalorder %s27, 3
      %p57 = por %p55, %p56
      %p58 = scmp.ne.s32.totalorder %s47, %s48
      %p59 = scmp.eq.s32.totalorder %s27, 0
      %p60 = por %p58, %p59
      %p61 = scmp.ne.s32.totalorder %s47, %s48
      %p62 = scmp.eq.s32.totalorder %s28, 3
      %p63 = por %p61, %p62
      %p65 = scmp.ne.s32.totalorder %s48, %s64
      %p66 = scmp.eq.s32.totalorder %s28, 0
      %p67 = por %p65, %p66
      %s68 = ssub.s32 %s30, %s37
      %p69 = scmp.eq.s32.totalorder %s68, 0
      %s71 = sadd.s32 %s70, 1
      %s72 = scalar_select %p69, %s70, %s71
      %p75 = pneg %p69
      %p76 = scmp.eq.s32.totalorder %s22, 3
      %p77 = por %p75, %p76
      %p78 = scmp.ne.s32.totalorder %s70, %s73
      %p79 = scmp.eq.s32.totalorder %s22, 0
      %p80 = por %p78, %p79
      %p81 = scmp.ne.s32.totalorder %s70, %s73
      %p82 = scmp.eq.s32.totalorder %s27, 3
      %p83 = por %p81, %p82
      %p84 = scmp.ne.s32.totalorder %s73, %s74
      %p85 = scmp.eq.s32.totalorder %s27, 0
      %p86 = por %p84, %p85
      %p87 = scmp.ne.s32.totalorder %s73, %s74
      %p88 = scmp.eq.s32.totalorder %s28, 3
      %p89 = por %p87, %p88
      %p91 = scmp.ne.s32.totalorder %s74, %s90
      %p92 = scmp.eq.s32.totalorder %s28, 0
      %p93 = por %p91, %p92
      %s94 = ssub.s32 %s30, %s37
      %p95 = scmp.eq.s32.totalorder %s94, 0
      %s97 = sadd.s32 %s96, 1
      %s98 = scalar_select %p95, %s96, %s97
      %p101 = pneg %p95
      %p102 = scmp.eq.s32.totalorder %s22, 3
      %p103 = por %p101, %p102
      %p104 = scmp.ne.s32.totalorder %s96, %s99
      %p105 = scmp.eq.s32.totalorder %s22, 0
      %p106 = por %p104, %p105
      %p107 = scmp.ne.s32.totalorder %s96, %s99
      %p108 = scmp.eq.s32.totalorder %s27, 3
      %p109 = por %p107, %p108
      %p110 = scmp.ne.s32.totalorder %s99, %s100
      %p111 = scmp.eq.s32.totalorder %s27, 0
      %p112 = por %p110, %p111
      %p113 = scmp.ne.s32.totalorder %s99, %s100
      %p114 = scmp.eq.s32.totalorder %s28, 3
      %p115 = por %p113, %p114
      %p117 = scmp.ne.s32.totalorder %s100, %s116
      %p118 = scmp.eq.s32.totalorder %s28, 0
      %p119 = por %p117, %p118
      %s120 = ssub.s32 %s30, %s37
      %p121 = scmp.eq.s32.totalorder %s120, 0
      %s123 = sadd.s32 %s122, 1
      %s124 = scalar_select %p121, %s122, %s123
      %p127 = pneg %p121
      %p128 = scmp.eq.s32.totalorder %s22, 3
      %p129 = por %p127, %p128
      %p130 = scmp.ne.s32.totalorder %s122, %s125
      %p131 = scmp.eq.s32.totalorder %s22, 0
      %p132 = por %p130, %p131
      %p133 = scmp.ne.s32.totalorder %s122, %s125
      %p134 = scmp.eq.s32.totalorder %s27, 3
      %p135 = por %p133, %p134
      %p136 = scmp.ne.s32.totalorder %s125, %s126
      %p137 = scmp.eq.s32.totalorder %s27, 0
      %p138 = por %p136, %p137
      %p139 = scmp.ne.s32.totalorder %s125, %s126
      %p140 = scmp.eq.s32.totalorder %s28, 3
      %p141 = por %p139, %p140
      %p143 = scmp.ne.s32.totalorder %s126, %s142
      %p144 = scmp.eq.s32.totalorder %s28, 0
      %p145 = por %p143, %p144
      %s146 = ssub.s32 %s30, %s37
      %p147 = scmp.eq.s32.totalorder %s146, 0
      %s149 = sadd.s32 %s148, 1
      %s150 = scalar_select %p147, %s148, %s149
      %p153 = pneg %p147
      %p154 = scmp.eq.s32.totalorder %s22, 3
      %p155 = por %p153, %p154
      %p156 = scmp.ne.s32.totalorder %s148, %s151
      %p157 = scmp.eq.s32.totalorder %s22, 0
      %p158 = por %p156, %p157
      %p159 = scmp.ne.s32.totalorder %s148, %s151
      %p160 = scmp.eq.s32.totalorder %s27, 3
      %p161 = por %p159, %p160
      %p162 = scmp.ne.s32.totalorder %s151, %s152
      %p163 = scmp.eq.s32.totalorder %s27, 0
      %p164 = por %p162, %p163
      %p165 = scmp.ne.s32.totalorder %s151, %s152
      %p166 = scmp.eq.s32.totalorder %s28, 3
      %p167 = por %p165, %p166
      %p169 = scmp.ne.s32.totalorder %s152, %s168
      %p170 = scmp.eq.s32.totalorder %s28, 0
      %p171 = por %p169, %p170
      %s172 = ssub.s32 %s30, %s37
      %p173 = scmp.eq.s32.totalorder %s172, 0
      %s175 = sadd.s32 %s174, 1
      %s176 = scalar_select %p173, %s174, %s175
      %p179 = pneg %p173
      %p180 = scmp.eq.s32.totalorder %s22, 3
      %p181 = por %p179, %p180
      %p182 = scmp.ne.s32.totalorder %s174, %s177
      %p183 = scmp.eq.s32.totalorder %s22, 0
      %p184 = por %p182, %p183
      %p185 = scmp.ne.s32.totalorder %s174, %s177
      %p186 = scmp.eq.s32.totalorder %s27, 3
      %p187 = por %p185, %p186
      %p188 = scmp.ne.s32.totalorder %s177, %s178
      %p189 = scmp.eq.s32.totalorder %s27, 0
      %p190 = por %p188, %p189
      %p191 = scmp.ne.s32.totalorder %s177, %s178
      %p192 = scmp.eq.s32.totalorder %s28, 3
      %p193 = por %p191, %p192
      %p195 = scmp.ne.s32.totalorder %s178, %s194
      %p196 = scmp.eq.s32.totalorder %s28, 0
      %p197 = por %p195, %p196
      %s198 = ssub.s32 %s30, %s37
      %p199 = scmp.eq.s32.totalorder %s198, 0
      %s201 = sadd.s32 %s200, 1
      %s202 = scalar_select %p199, %s200, %s201
      %p205 = pneg %p199
      %p206 = scmp.eq.s32.totalorder %s22, 3
      %p207 = por %p205, %p206
      %p208 = scmp.ne.s32.totalorder %s200, %s203
      %p209 = scmp.eq.s32.totalorder %s22, 0
      %p210 = por %p208, %p209
      %p211 = scmp.ne.s32.totalorder %s200, %s203
      %p212 = scmp.eq.s32.totalorder %s27, 3
      %p213 = por %p211, %p212
      %p214 = scmp.ne.s32.totalorder %s203, %s204
      %p215 = scmp.eq.s32.totalorder %s27, 0
      %p216 = por %p214, %p215
      %p217 = scmp.ne.s32.totalorder %s203, %s204
      %p218 = scmp.eq.s32.totalorder %s28, 3
      %p219 = por %p217, %p218
      %p221 = scmp.ne.s32.totalorder %s204, %s220
      %p222 = scmp.eq.s32.totalorder %s28, 0
      %p223 = por %p221, %p222
      %s224 = ssub.s32 %s30, %s37
      %p225 = scmp.eq.s32.totalorder %s224, 0
      %s227 = sadd.s32 %s226, 1
      %s228 = scalar_select %p225, %s226, %s227
      %p231 = pneg %p225
      %p232 = scmp.eq.s32.totalorder %s22, 3
      %p233 = por %p231, %p232
      %p234 = scmp.ne.s32.totalorder %s226, %s229
      %p235 = scmp.eq.s32.totalorder %s22, 0
      %p236 = por %p234, %p235
      %p237 = scmp.ne.s32.totalorder %s226, %s229
      %p238 = scmp.eq.s32.totalorder %s27, 3
      %p239 = por %p237, %p238
      %p240 = scmp.ne.s32.totalorder %s229, %s230
      %p241 = scmp.eq.s32.totalorder %s27, 0
      %p242 = por %p240, %p241
      %p243 = scmp.ne.s32.totalorder %s229, %s230
      %p244 = scmp.eq.s32.totalorder %s28, 3
      %p245 = por %p243, %p244
      %p247 = scmp.ne.s32.totalorder %s230, %s246
      %p248 = scmp.eq.s32.totalorder %s28, 0
      %p249 = por %p247, %p248
      %s250 = ssub.s32 %s30, %s37
      %p251 = scmp.eq.s32.totalorder %s250, 0
      %s253 = sadd.s32 %s252, 1
      %s254 = scalar_select %p251, %s252, %s253
      %p257 = pneg %p251
      %p258 = scmp.eq.s32.totalorder %s22, 3
      %p259 = por %p257, %p258
      %p260 = scmp.ne.s32.totalorder %s252, %s255
      %p261 = scmp.eq.s32.totalorder %s22, 0
      %p262 = por %p260, %p261
      %p263 = scmp.ne.s32.totalorder %s252, %s255
      %p264 = scmp.eq.s32.totalorder %s27, 3
      %p265 = por %p263, %p264
      %p266 = scmp.ne.s32.totalorder %s255, %s256
      %p267 = scmp.eq.s32.totalorder %s27, 0
      %p268 = por %p266, %p267
      %p269 = scmp.ne.s32.totalorder %s255, %s256
      %p270 = scmp.eq.s32.totalorder %s28, 3
      %p271 = por %p269, %p270
      %p273 = scmp.ne.s32.totalorder %s256, %s272
      %p274 = scmp.eq.s32.totalorder %s28, 0
      %p275 = por %p273, %p274
      %s276 = ssub.s32 %s30, %s37
      %p277 = scmp.eq.s32.totalorder %s276, 0
      %s279 = sadd.s32 %s278, 1
      %s280 = scalar_select %p277, %s278, %s279
      %p283 = pneg %p277
      %p284 = scmp.eq.s32.totalorder %s22, 3
      %p285 = por %p283, %p284
      %p286 = scmp.ne.s32.totalorder %s278, %s281
      %p287 = scmp.eq.s32.totalorder %s22, 0
      %p288 = por %p286, %p287
      %p289 = scmp.ne.s32.totalorder %s278, %s281
      %p290 = scmp.eq.s32.totalorder %s27, 3
      %p291 = por %p289, %p290
      %p292 = scmp.ne.s32.totalorder %s281, %s282
      %p293 = scmp.eq.s32.totalorder %s27, 0
      %p294 = por %p292, %p293
      %p295 = scmp.ne.s32.totalorder %s281, %s282
      %p296 = scmp.eq.s32.totalorder %s28, 3
      %p297 = por %p295, %p296
      %p299 = scmp.ne.s32.totalorder %s282, %s298
      %p300 = scmp.eq.s32.totalorder %s28, 0
      %p301 = por %p299, %p300
      %s302 = ssub.s32 %s30, %s37
      %p303 = scmp.eq.s32.totalorder %s302, 0
      %s305 = sadd.s32 %s304, 1
      %s306 = scalar_select %p303, %s304, %s305
      %p309 = pneg %p303
      %p310 = scmp.eq.s32.totalorder %s22, 3
      %p311 = por %p309, %p310
      %p312 = scmp.ne.s32.totalorder %s304, %s307
      %p313 = scmp.eq.s32.totalorder %s22, 0
      %p314 = por %p312, %p313
      %p315 = scmp.ne.s32.totalorder %s304, %s307
      %p316 = scmp.eq.s32.totalorder %s27, 3
      %p317 = por %p315, %p316
      %p318 = scmp.ne.s32.totalorder %s307, %s308
      %p319 = scmp.eq.s32.totalorder %s27, 0
      %p320 = por %p318, %p319
      %p321 = scmp.ne.s32.totalorder %s307, %s308
      %p322 = scmp.eq.s32.totalorder %s28, 3
      %p323 = por %p321, %p322
      %p325 = scmp.ne.s32.totalorder %s308, %s324
      %p326 = scmp.eq.s32.totalorder %s28, 0
      %p327 = por %p325, %p326
      %s328 = ssub.s32 %s30, %s37
      %p329 = scmp.eq.s32.totalorder %s328, 0
      %s331 = sadd.s32 %s330, 1
      %s332 = scalar_select %p329, %s330, %s331
      %p335 = pneg %p329
      %p336 = scmp.eq.s32.totalorder %s22, 3
      %p337 = por %p335, %p336
      %p338 = scmp.ne.s32.totalorder %s330, %s333
      %p339 = scmp.eq.s32.totalorder %s22, 0
      %p340 = por %p338, %p339
      %p341 = scmp.ne.s32.totalorder %s330, %s333
      %p342 = scmp.eq.s32.totalorder %s27, 3
      %p343 = por %p341, %p342
      %p344 = scmp.ne.s32.totalorder %s333, %s334
      %p345 = scmp.eq.s32.totalorder %s27, 0
      %p346 = por %p344, %p345
      %p347 = scmp.ne.s32.totalorder %s333, %s334
      %p348 = scmp.eq.s32.totalorder %s28, 3
      %p349 = por %p347, %p348
      %p351 = scmp.ne.s32.totalorder %s334, %s350
      %p352 = scmp.eq.s32.totalorder %s28, 0
      %p353 = por %p351, %p352
      %s354 = ssub.s32 %s30, %s37
      %p355 = scmp.eq.s32.totalorder %s354, 0
      %s357 = sadd.s32 %s356, 1
      %s358 = scalar_select %p355, %s356, %s357
      %p361 = pneg %p355
      %p362 = scmp.eq.s32.totalorder %s22, 3
      %p363 = por %p361, %p362
      %p364 = scmp.ne.s32.totalorder %s356, %s359
      %p365 = scmp.eq.s32.totalorder %s22, 0
      %p366 = por %p364, %p365
      %p367 = scmp.ne.s32.totalorder %s356, %s359
      %p368 = scmp.eq.s32.totalorder %s27, 3
      %p369 = por %p367, %p368
      %p370 = scmp.ne.s32.totalorder %s359, %s360
      %p371 = scmp.eq.s32.totalorder %s27, 0
      %p372 = por %p370, %p371
      %p373 = scmp.ne.s32.totalorder %s359, %s360
      %p374 = scmp.eq.s32.totalorder %s28, 3
      %p375 = por %p373, %p374
      %p377 = scmp.ne.s32.totalorder %s360, %s376
      %p378 = scmp.eq.s32.totalorder %s28, 0
      %p379 = por %p377, %p378
      %s380 = ssub.s32 %s29, %s41
      %p381 = scmp.eq.s32.totalorder %s380, 0
      %s383 = sadd.s32 %s382, 1
      %s384 = scalar_select %p381, %s382, %s383
      %p387 = pneg %p381
      %p388 = scmp.eq.s32.totalorder %s22, 3
      %p389 = por %p387, %p388
      %p390 = scmp.ne.s32.totalorder %s382, %s385
      %p391 = scmp.eq.s32.totalorder %s22, 0
      %p392 = por %p390, %p391
      %p393 = scmp.ne.s32.totalorder %s382, %s385
      %p394 = scmp.eq.s32.totalorder %s27, 3
      %p395 = por %p393, %p394
      %p396 = scmp.ne.s32.totalorder %s385, %s386
      %p397 = scmp.eq.s32.totalorder %s27, 0
      %p398 = por %p396, %p397
      %p399 = scmp.ne.s32.totalorder %s385, %s386
      %p400 = scmp.eq.s32.totalorder %s28, 3
      %p401 = por %p399, %p400
      %p403 = scmp.ne.s32.totalorder %s386, %s402
      %p404 = scmp.eq.s32.totalorder %s28, 0
      %p405 = por %p403, %p404
      %p406 = scmp.le.s32.totalorder 1, %s22
      %p407 = scmp.lt.s32.totalorder %s22, 5
      %p408 = pnand %p406, %p407
      %p409 = pneg %p408
      // Predicated region
      $region9: #{ssa_fwd.1} parent=5 // pred_check
        _
      $region10: #{ssa_fwd.1} parent=5 // pred_check_branch
        %411 = sbr.rel (%p408) target = $region12
      $region11: #{ssa_fwd.1} parent=5 // pred_region
        %s412 = ssub.s32 %s22, 1
      $region12: #{ssa_fwd.1} parent=5 // pred_fallthru
        _
      %p413 = scmp.lt.s32.totalorder %s22, 4
      // Predicated region
      $region13: #{ssa_fwd.1} parent=5 // pred_check
        %p414 = pneg %p413
      $region14: #{ssa_fwd.1} parent=5 // pred_check_branch
        %416 = sbr.rel (%p414) target = $region16
      $region15: #{ssa_fwd.1} parent=5 // pred_region
        // Predicated region
        $region17: #{ssa_fwd.1} parent=15 // pred_check
          %p417 = pneg %p54
        $region18: #{ssa_fwd.1} parent=15 // pred_check_branch
          %419 = sbr.rel (%p417) target = $region20
        $region19: #{ssa_fwd.1} parent=15 // pred_region
          %p420 = scmp.lt.s32.totalorder %s29, 1
          %s421 = scalar_select %p420, %s29, 1
          %s422 = smul.addr %s421, 32
          %s423 = smul.addr %s422, 8
          %s424 = scalar_lea.vmem %s0, %s423
        $region20: #{ssa_fwd.1} parent=15 // pred_fallthru
          _
        // Predicated region
        $region21: #{ssa_fwd.1} parent=15 // pred_check
          %p425 = pneg %p80
        $region22: #{ssa_fwd.1} parent=15 // pred_check_branch
          %427 = sbr.rel (%p425) target = $region24
        $region23: #{ssa_fwd.1} parent=15 // pred_region
          %p428 = scmp.lt.s32.totalorder %s30, 1
          %s429 = scalar_select %p428, %s30, 1
          %s430 = scalar_lea.vmem %s1, %s429
        $region24: #{ssa_fwd.1} parent=15 // pred_fallthru
          _
        // Predicated region
        $region25: #{ssa_fwd.1} parent=15 // pred_check
          %p431 = pneg %p106
        $region26: #{ssa_fwd.1} parent=15 // pred_check_branch
          %433 = sbr.rel (%p431) target = $region28
        $region27: #{ssa_fwd.1} parent=15 // pred_region
          %p434 = scmp.lt.s32.totalorder %s30, 1
          %s435 = scalar_select %p434, %s30, 1
          %s436 = scalar_lea.vmem %s2, %s435
        $region28: #{ssa_fwd.1} parent=15 // pred_fallthru
          _
        // Predicated region
        $region29: #{ssa_fwd.1} parent=15 // pred_check
          %p437 = pneg %p132
        $region30: #{ssa_fwd.1} parent=15 // pred_check_branch
          %439 = sbr.rel (%p437) target = $region32
        $region31: #{ssa_fwd.1} parent=15 // pred_region
          %p440 = scmp.lt.s32.totalorder %s30, 1
          %s441 = scalar_select %p440, %s30, 1
          %s442 = smul.addr %s441, 32
          %s443 = smul.addr %s442, 4
          %s444 = scalar_lea.vmem %s3, %s443
        $region32: #{ssa_fwd.1} parent=15 // pred_fallthru
          _
        // Predicated region
        $region33: #{ssa_fwd.1} parent=15 // pred_check
          %p445 = pneg %p158
        $region34: #{ssa_fwd.1} parent=15 // pred_check_branch
          %447 = sbr.rel (%p445) target = $region36
        $region35: #{ssa_fwd.1} parent=15 // pred_region
          %p448 = scmp.lt.s32.totalorder %s30, 1
          %s449 = scalar_select %p448, %s30, 1
          %s450 = smul.addr %s449, 32
          %s451 = smul.addr %s450, 4
          %s452 = scalar_lea.vmem %s4, %s451
        $region36: #{ssa_fwd.1} parent=15 // pred_fallthru
          _
        // Predicated region
        $region37: #{ssa_fwd.1} parent=15 // pred_check
          %p453 = pneg %p184
        $region38: #{ssa_fwd.1} parent=15 // pred_check_branch
          %455 = sbr.rel (%p453) target = $region40
        $region39: #{ssa_fwd.1} parent=15 // pred_region
          %p456 = scmp.lt.s32.totalorder %s30, 1
          %s457 = scalar_select %p456, %s30, 1
          %s458 = smul.addr %s457, 32
          %s459 = smul.addr %s458, 4
          %s460 = scalar_lea.vmem %s5, %s459
        $region40: #{ssa_fwd.1} parent=15 // pred_fallthru
          _
        // Predicated region
        $region41: #{ssa_fwd.1} parent=15 // pred_check
          %p461 = pneg %p210
        $region42: #{ssa_fwd.1} parent=15 // pred_check_branch
          %463 = sbr.rel (%p461) target = $region44
        $region43: #{ssa_fwd.1} parent=15 // pred_region
          %p464 = scmp.lt.s32.totalorder %s30, 1
          %s465 = scalar_select %p464, %s30, 1
          %s466 = smul.addr %s465, 4
          %s467 = scalar_lea.vmem %s6, %s466
        $region44: #{ssa_fwd.1} parent=15 // pred_fallthru
          _
        // Predicated region
        $region45: #{ssa_fwd.1} parent=15 // pred_check
          %p468 = pneg %p236
        $region46: #{ssa_fwd.1} parent=15 // pred_check_branch
          %470 = sbr.rel (%p468) target = $region48
        $region47: #{ssa_fwd.1} parent=15 // pred_region
          %p471 = scmp.lt.s32.totalorder %s30, 1
          %s472 = scalar_select %p471, %s30, 1
          %s473 = smul.addr %s472, 4
          %s474 = scalar_lea.vmem %s7, %s473
        $region48: #{ssa_fwd.1} parent=15 // pred_fallthru
          _
        // Predicated region
        $region49: #{ssa_fwd.1} parent=15 // pred_check
          %p475 = pneg %p262
        $region50: #{ssa_fwd.1} parent=15 // pred_check_branch
          %477 = sbr.rel (%p475) target = $region52
        $region51: #{ssa_fwd.1} parent=15 // pred_region
          %p478 = scmp.lt.s32.totalorder %s30, 1
          %s479 = scalar_select %p478, %s30, 1
          %s480 = smul.addr %s479, 4
          %s481 = scalar_lea.vmem %s8, %s480
        $region52: #{ssa_fwd.1} parent=15 // pred_fallthru
          _
        // Predicated region
        $region53: #{ssa_fwd.1} parent=15 // pred_check
          %p482 = pneg %p288
        $region54: #{ssa_fwd.1} parent=15 // pred_check_branch
          %484 = sbr.rel (%p482) target = $region56
        $region55: #{ssa_fwd.1} parent=15 // pred_region
          %p485 = scmp.lt.s32.totalorder %s30, 1
          %s486 = scalar_select %p485, %s30, 1
          %s487 = smul.addr %s486, 8
          %s488 = smul.addr %s487, 4
          %s489 = scalar_lea.vmem %s9, %s488
        $region56: #{ssa_fwd.1} parent=15 // pred_fallthru
          _
        // Predicated region
        $region57: #{ssa_fwd.1} parent=15 // pred_check
          %p490 = pneg %p314
        $region58: #{ssa_fwd.1} parent=15 // pred_check_branch
          %492 = sbr.rel (%p490) target = $region60
        $region59: #{ssa_fwd.1} parent=15 // pred_region
          %p493 = scmp.lt.s32.totalorder %s30, 1
          %s494 = scalar_select %p493, %s30, 1
          %s495 = scalar_lea.vmem %s10, %s494
        $region60: #{ssa_fwd.1} parent=15 // pred_fallthru
          _
        // Predicated region
        $region61: #{ssa_fwd.1} parent=15 // pred_check
          %p496 = pneg %p340
        $region62: #{ssa_fwd.1} parent=15 // pred_check_branch
          %498 = sbr.rel (%p496) target = $region64
        $region63: #{ssa_fwd.1} parent=15 // pred_region
          %p499 = scmp.lt.s32.totalorder %s30, 1
          %s500 = scalar_select %p499, %s30, 1
          %s501 = smul.addr %s500, 16
          %s502 = smul.addr %s501, 4
          %s503 = scalar_lea.vmem %s11, %s502
        $region64: #{ssa_fwd.1} parent=15 // pred_fallthru
          _
        // Predicated region
        $region65: #{ssa_fwd.1} parent=15 // pred_check
          %p504 = pneg %p366
        $region66: #{ssa_fwd.1} parent=15 // pred_check_branch
          %506 = sbr.rel (%p504) target = $region68
        $region67: #{ssa_fwd.1} parent=15 // pred_region
          %p507 = scmp.lt.s32.totalorder %s30, 1
          %s508 = scalar_select %p507, %s30, 1
          %s509 = scalar_lea.vmem %s12, %s508
        $region68: #{ssa_fwd.1} parent=15 // pred_fallthru
          _
      $region16: #{ssa_fwd.1} parent=5 // pred_fallthru
        _
      %p510 = scmp.le.s32.totalorder 1, %s22
      %p511 = scmp.lt.s32.totalorder %s22, 5
      %p512 = pnand %p510, %p511
      %p513 = pneg %p512
      // Predicated region
      $region69: #{ssa_fwd.1} parent=5 // pred_check
        _
      $region70: #{ssa_fwd.1} parent=5 // pred_check_branch
        %515 = sbr.rel (%p512) target = $region72
      $region71: #{ssa_fwd.1} parent=5 // pred_region
        %s516 = ssub.s32 %s22, 1
        %p517 = scmp.lt.s32.totalorder %s31, 1
        %s518 = scalar_select %p517, %s31, 1
        %s519 = smul.addr %s518, 32
        %s520 = smul.addr %s519, 8
        %s521 = scalar_lea.vmem %s0, %s520
        %p522 = pneg %p60
        %p523 = pneg %p57
        %p524 = scmp.lt.s32.totalorder %s32, 1
        %s525 = scalar_select %p524, %s32, 1
        %s526 = scalar_lea.vmem %s1, %s525
        %p527 = pneg %p86
        %p528 = pneg %p83
        %p529 = scmp.lt.s32.totalorder %s32, 1
        %s530 = scalar_select %p529, %s32, 1
        %s531 = scalar_lea.vmem %s2, %s530
        %p532 = pneg %p112
        %p533 = pneg %p109
        %p534 = scmp.lt.s32.totalorder %s32, 1
        %s535 = scalar_select %p534, %s32, 1
        %s536 = smul.addr %s535, 32
        %s537 = smul.addr %s536, 4
        %s538 = scalar_lea.vmem %s3, %s537
        %p539 = pneg %p138
        %p540 = pneg %p135
        %p541 = scmp.lt.s32.totalorder %s32, 1
        %s542 = scalar_select %p541, %s32, 1
        %s543 = smul.addr %s542, 32
        %s544 = smul.addr %s543, 4
        %s545 = scalar_lea.vmem %s4, %s544
        %p546 = pneg %p164
        %p547 = pneg %p161
        %p548 = scmp.lt.s32.totalorder %s32, 1
        %s549 = scalar_select %p548, %s32, 1
        %s550 = smul.addr %s549, 32
        %s551 = smul.addr %s550, 4
        %s552 = scalar_lea.vmem %s5, %s551
        %p553 = pneg %p190
        %p554 = pneg %p187
        %p555 = scmp.lt.s32.totalorder %s32, 1
        %s556 = scalar_select %p555, %s32, 1
        %s557 = smul.addr %s556, 4
        %s558 = scalar_lea.vmem %s6, %s557
        %p559 = pneg %p216
        %p560 = pneg %p213
        %p561 = scmp.lt.s32.totalorder %s32, 1
        %s562 = scalar_select %p561, %s32, 1
        %s563 = smul.addr %s562, 4
        %s564 = scalar_lea.vmem %s7, %s563
        %p565 = pneg %p242
        %p566 = pneg %p239
        %p567 = scmp.lt.s32.totalorder %s32, 1
        %s568 = scalar_select %p567, %s32, 1
        %s569 = smul.addr %s568, 4
        %s570 = scalar_lea.vmem %s8, %s569
        %p571 = pneg %p268
        %p572 = pneg %p265
        %p573 = scmp.lt.s32.totalorder %s32, 1
        %s574 = scalar_select %p573, %s32, 1
        %s575 = smul.addr %s574, 8
        %s576 = smul.addr %s575, 4
        %s577 = scalar_lea.vmem %s9, %s576
        %p578 = pneg %p294
        %p579 = pneg %p291
        %p580 = scmp.lt.s32.totalorder %s32, 1
        %s581 = scalar_select %p580, %s32, 1
        %s582 = scalar_lea.vmem %s10, %s581
        %p583 = pneg %p320
        %p584 = pneg %p317
        %p585 = scmp.lt.s32.totalorder %s32, 1
        %s586 = scalar_select %p585, %s32, 1
        %s587 = smul.addr %s586, 16
        %s588 = smul.addr %s587, 4
        %s589 = scalar_lea.vmem %s11, %s588
        %p590 = pneg %p346
        %p591 = pneg %p343
        %p592 = scmp.lt.s32.totalorder %s32, 1
        %s593 = scalar_select %p592, %s32, 1
        %s594 = scalar_lea.vmem %s12, %s593
        %p595 = pneg %p372
        %p596 = pneg %p369
        %p597 = pneg %p398
        %p598 = pneg %p395
        %s599 = sand.u32 %s385, 1
        %s600 = scalar_lea.sflag [#allocation5], %s599
        %s601 = sand.u32 %s385, 1
        %s602 = smul.addr %s601, 256
        %s603 = scalar_lea.vmem [#allocation4], %s602
        %p604 = scmp.lt.s32.totalorder %s31, 1
        %s605 = scalar_select %p604, %s31, 1
        %s606 = smul.addr %s605, 32
        %s607 = smul.addr %s606, 8
        %s608 = scalar_lea.vmem %s0, %s607
        %p609 = scmp.lt.s32.totalorder %s32, 1
        %s610 = scalar_select %p609, %s32, 1
        %s611 = scalar_lea.vmem %s1, %s610
        %p612 = scmp.lt.s32.totalorder %s32, 1
        %s613 = scalar_select %p612, %s32, 1
        %s614 = scalar_lea.vmem %s2, %s613
        %p615 = scmp.lt.s32.totalorder %s32, 1
        %s616 = scalar_select %p615, %s32, 1
        %s617 = smul.addr %s616, 32
        %s618 = smul.addr %s617, 4
        %s619 = scalar_lea.vmem %s3, %s618
        %p620 = scmp.lt.s32.totalorder %s32, 1
        %s621 = scalar_select %p620, %s32, 1
        %s622 = smul.addr %s621, 32
        %s623 = smul.addr %s622, 4
        %s624 = scalar_lea.vmem %s4, %s623
        %p625 = scmp.lt.s32.totalorder %s32, 1
        %s626 = scalar_select %p625, %s32, 1
        %s627 = smul.addr %s626, 32
        %s628 = smul.addr %s627, 4
        %s629 = scalar_lea.vmem %s5, %s628
        %p630 = scmp.lt.s32.totalorder %s32, 1
        %s631 = scalar_select %p630, %s32, 1
        %s632 = smul.addr %s631, 4
        %s633 = scalar_lea.vmem %s6, %s632
        %p634 = scmp.lt.s32.totalorder %s32, 1
        %s635 = scalar_select %p634, %s32, 1
        %s636 = smul.addr %s635, 4
        %s637 = scalar_lea.vmem %s7, %s636
        %p638 = scmp.lt.s32.totalorder %s32, 1
        %s639 = scalar_select %p638, %s32, 1
        %s640 = smul.addr %s639, 4
        %s641 = scalar_lea.vmem %s8, %s640
        %p642 = scmp.lt.s32.totalorder %s32, 1
        %s643 = scalar_select %p642, %s32, 1
        %s644 = smul.addr %s643, 8
        %s645 = smul.addr %s644, 4
        %s646 = scalar_lea.vmem %s9, %s645
        %p647 = scmp.lt.s32.totalorder %s32, 1
        %s648 = scalar_select %p647, %s32, 1
        %s649 = scalar_lea.vmem %s10, %s648
        %p650 = scmp.lt.s32.totalorder %s32, 1
        %s651 = scalar_select %p650, %s32, 1
        %s652 = smul.addr %s651, 16
        %s653 = smul.addr %s652, 4
        %s654 = scalar_lea.vmem %s11, %s653
        %p655 = scmp.lt.s32.totalorder %s32, 1
        %s656 = scalar_select %p655, %s32, 1
        %s657 = scalar_lea.vmem %s12, %s656
        %p659 = scmp.eq.s32.totalorder %s32, 0
        // Predicated region
        $region73: #{ssa_fwd.1} parent=71 // pred_check
          %p660 = pneg %p659
        $region74: #{ssa_fwd.1} parent=71 // pred_check_branch
          %662 = sbr.rel (%p660) target = $region76
        $region75: #{ssa_fwd.1} parent=71 // pred_region
          %v663 = vld [vmem:[%s608] sm:$0xff]
          %v664 = vld [vmem:[%s608 + $0x8] sm:$0xff]
          %v665 = vld [vmem:[%s608 + $0x10] sm:$0xff]
          %v666 = vld [vmem:[%s608 + $0x18] sm:$0xff]
          %v667 = vld [vmem:[%s608 + $0x20] sm:$0xff]
          %v668 = vld [vmem:[%s608 + $0x28] sm:$0xff]
          %v669 = vld [vmem:[%s608 + $0x30] sm:$0xff]
          %v670 = vld [vmem:[%s608 + $0x38] sm:$0xff]
          %v671 = vld [vmem:[%s608 + $0x40] sm:$0xff]
          %v672 = vld [vmem:[%s608 + $0x48] sm:$0xff]
          %v673 = vld [vmem:[%s608 + $0x50] sm:$0xff]
          %v674 = vld [vmem:[%s608 + $0x58] sm:$0xff]
          %v675 = vld [vmem:[%s608 + $0x60] sm:$0xff]
          %v676 = vld [vmem:[%s608 + $0x68] sm:$0xff]
          %v677 = vld [vmem:[%s608 + $0x70] sm:$0xff]
          %v678 = vld [vmem:[%s608 + $0x78] sm:$0xff]
          %v679 = vld [vmem:[%s608 + $0x80] sm:$0xff]
          %v680 = vld [vmem:[%s608 + $0x88] sm:$0xff]
          %v681 = vld [vmem:[%s608 + $0x90] sm:$0xff]
          %v682 = vld [vmem:[%s608 + $0x98] sm:$0xff]
          %v683 = vld [vmem:[%s608 + $0xa0] sm:$0xff]
          %v684 = vld [vmem:[%s608 + $0xa8] sm:$0xff]
          %v685 = vld [vmem:[%s608 + $0xb0] sm:$0xff]
          %v686 = vld [vmem:[%s608 + $0xb8] sm:$0xff]
          %v687 = vld [vmem:[%s608 + $0xc0] sm:$0xff]
          %v688 = vld [vmem:[%s608 + $0xc8] sm:$0xff]
          %v689 = vld [vmem:[%s608 + $0xd0] sm:$0xff]
          %v690 = vld [vmem:[%s608 + $0xd8] sm:$0xff]
          %v691 = vld [vmem:[%s608 + $0xe0] sm:$0xff]
          %v692 = vld [vmem:[%s608 + $0xe8] sm:$0xff]
          %v693 = vld [vmem:[%s608 + $0xf0] sm:$0xff]
          %v694 = vld [vmem:[%s608 + $0xf8] sm:$0xff]
          %vm695 = vcmask 523264
          %696 = vst.msk [vmem:[#allocation2] sm:$0xff] %vm695, %v663
          %697 = vst.msk [vmem:[#allocation2 + $0x8] sm:$0xff] %vm695, %v664
          %698 = vst.msk [vmem:[#allocation2 + $0x10] sm:$0xff] %vm695, %v665
          %699 = vst.msk [vmem:[#allocation2 + $0x18] sm:$0xff] %vm695, %v666
          %700 = vst.msk [vmem:[#allocation2 + $0x20] sm:$0xff] %vm695, %v667
          %701 = vst.msk [vmem:[#allocation2 + $0x28] sm:$0xff] %vm695, %v668
          %702 = vst.msk [vmem:[#allocation2 + $0x30] sm:$0xff] %vm695, %v669
          %703 = vst.msk [vmem:[#allocation2 + $0x38] sm:$0xff] %vm695, %v670
          %704 = vst.msk [vmem:[#allocation2 + $0x40] sm:$0xff] %vm695, %v671
          %705 = vst.msk [vmem:[#allocation2 + $0x48] sm:$0xff] %vm695, %v672
          %706 = vst.msk [vmem:[#allocation2 + $0x50] sm:$0xff] %vm695, %v673
          %707 = vst.msk [vmem:[#allocation2 + $0x58] sm:$0xff] %vm695, %v674
          %708 = vst.msk [vmem:[#allocation2 + $0x60] sm:$0xff] %vm695, %v675
          %709 = vst.msk [vmem:[#allocation2 + $0x68] sm:$0xff] %vm695, %v676
          %710 = vst.msk [vmem:[#allocation2 + $0x70] sm:$0xff] %vm695, %v677
          %711 = vst.msk [vmem:[#allocation2 + $0x78] sm:$0xff] %vm695, %v678
          %712 = vst.msk [vmem:[#allocation2 + $0x80] sm:$0xff] %vm695, %v679
          %713 = vst.msk [vmem:[#allocation2 + $0x88] sm:$0xff] %vm695, %v680
          %714 = vst.msk [vmem:[#allocation2 + $0x90] sm:$0xff] %vm695, %v681
          %715 = vst.msk [vmem:[#allocation2 + $0x98] sm:$0xff] %vm695, %v682
          %716 = vst.msk [vmem:[#allocation2 + $0xa0] sm:$0xff] %vm695, %v683
          %717 = vst.msk [vmem:[#allocation2 + $0xa8] sm:$0xff] %vm695, %v684
          %718 = vst.msk [vmem:[#allocation2 + $0xb0] sm:$0xff] %vm695, %v685
          %719 = vst.msk [vmem:[#allocation2 + $0xb8] sm:$0xff] %vm695, %v686
          %720 = vst.msk [vmem:[#allocation2 + $0xc0] sm:$0xff] %vm695, %v687
          %721 = vst.msk [vmem:[#allocation2 + $0xc8] sm:$0xff] %vm695, %v688
          %722 = vst.msk [vmem:[#allocation2 + $0xd0] sm:$0xff] %vm695, %v689
          %723 = vst.msk [vmem:[#allocation2 + $0xd8] sm:$0xff] %vm695, %v690
          %724 = vst.msk [vmem:[#allocation2 + $0xe0] sm:$0xff] %vm695, %v691
          %725 = vst.msk [vmem:[#allocation2 + $0xe8] sm:$0xff] %vm695, %v692
          %726 = vst.msk [vmem:[#allocation2 + $0xf0] sm:$0xff] %vm695, %v693
          %727 = vst.msk [vmem:[#allocation2 + $0xf8] sm:$0xff] %vm695, %v694
        $region76: #{ssa_fwd.1} parent=71 // pred_fallthru
          _
        %v728 = vld [vmem:[#allocation2] sm:$0xff]
        %v729 = vld [vmem:[#allocation2 + $0x8] sm:$0xff]
        %v730 = vld [vmem:[#allocation2 + $0x10] sm:$0xff]
        %v731 = vld [vmem:[#allocation2 + $0x18] sm:$0xff]
        %v732 = vld [vmem:[#allocation2 + $0x20] sm:$0xff]
        %v733 = vld [vmem:[#allocation2 + $0x28] sm:$0xff]
        %v734 = vld [vmem:[#allocation2 + $0x30] sm:$0xff]
        %v735 = vld [vmem:[#allocation2 + $0x38] sm:$0xff]
        %v736 = vld [vmem:[#allocation2 + $0x40] sm:$0xff]
        %v737 = vld [vmem:[#allocation2 + $0x48] sm:$0xff]
        %v738 = vld [vmem:[#allocation2 + $0x50] sm:$0xff]
        %v739 = vld [vmem:[#allocation2 + $0x58] sm:$0xff]
        %v740 = vld [vmem:[#allocation2 + $0x60] sm:$0xff]
        %v741 = vld [vmem:[#allocation2 + $0x68] sm:$0xff]
        %v742 = vld [vmem:[#allocation2 + $0x70] sm:$0xff]
        %v743 = vld [vmem:[#allocation2 + $0x78] sm:$0xff]
        %v744 = vld [vmem:[#allocation2 + $0x80] sm:$0xff]
        %v745 = vld [vmem:[#allocation2 + $0x88] sm:$0xff]
        %v746 = vld [vmem:[#allocation2 + $0x90] sm:$0xff]
        %v747 = vld [vmem:[#allocation2 + $0x98] sm:$0xff]
        %v748 = vld [vmem:[#allocation2 + $0xa0] sm:$0xff]
        %v749 = vld [vmem:[#allocation2 + $0xa8] sm:$0xff]
        %v750 = vld [vmem:[#allocation2 + $0xb0] sm:$0xff]
        %v751 = vld [vmem:[#allocation2 + $0xb8] sm:$0xff]
        %v752 = vld [vmem:[#allocation2 + $0xc0] sm:$0xff]
        %v753 = vld [vmem:[#allocation2 + $0xc8] sm:$0xff]
        %v754 = vld [vmem:[#allocation2 + $0xd0] sm:$0xff]
        %v755 = vld [vmem:[#allocation2 + $0xd8] sm:$0xff]
        %v756 = vld [vmem:[#allocation2 + $0xe0] sm:$0xff]
        %v757 = vld [vmem:[#allocation2 + $0xe8] sm:$0xff]
        %v758 = vld [vmem:[#allocation2 + $0xf0] sm:$0xff]
        %v759 = vld [vmem:[#allocation2 + $0xf8] sm:$0xff]
        %v760 = vld [vmem:[%s611] sm:$0x1]
        %v762 = vlaneseq
        %v763 = vshrl.u32 %v762, 7
        %v764 = vsub.s32 0, %v763
        %v765 = vrot.slane %v760, %v764
        %v767 = vmul.f32 %v728, %v765
        %v768 = vmul.f32 %v729, %v765
        %v769 = vmul.f32 %v730, %v765
        %v770 = vmul.f32 %v731, %v765
        %v771 = vmul.f32 %v732, %v765
        %v772 = vmul.f32 %v733, %v765
        %v773 = vmul.f32 %v734, %v765
        %v774 = vmul.f32 %v735, %v765
        %v775 = vmul.f32 %v736, %v765
        %v776 = vmul.f32 %v737, %v765
        %v777 = vmul.f32 %v738, %v765
        %v778 = vmul.f32 %v739, %v765
        %v779 = vmul.f32 %v740, %v765
        %v780 = vmul.f32 %v741, %v765
        %v781 = vmul.f32 %v742, %v765
        %v782 = vmul.f32 %v743, %v765
        %v783 = vmul.f32 %v744, %v765
        %v784 = vmul.f32 %v745, %v765
        %v785 = vmul.f32 %v746, %v765
        %v786 = vmul.f32 %v747, %v765
        %v787 = vmul.f32 %v748, %v765
        %v788 = vmul.f32 %v749, %v765
        %v789 = vmul.f32 %v750, %v765
        %v790 = vmul.f32 %v751, %v765
        %v791 = vmul.f32 %v752, %v765
        %v792 = vmul.f32 %v753, %v765
        %v793 = vmul.f32 %v754, %v765
        %v794 = vmul.f32 %v755, %v765
        %v795 = vmul.f32 %v756, %v765
        %v796 = vmul.f32 %v757, %v765
        %v797 = vmul.f32 %v758, %v765
        %v798 = vmul.f32 %v759, %v765
        %v799 = vld [vmem:[%s614] sm:$0x1]
        %v801 = vlaneseq
        %v802 = vshrl.u32 %v801, 7
        %v803 = vsub.s32 0, %v802
        %v804 = vrot.slane %v799, %v803
        %v806 = vadd.f32 %v767, %v804
        %v807 = vadd.f32 %v768, %v804
        %v808 = vadd.f32 %v769, %v804
        %v809 = vadd.f32 %v770, %v804
        %v810 = vadd.f32 %v771, %v804
        %v811 = vadd.f32 %v772, %v804
        %v812 = vadd.f32 %v773, %v804
        %v813 = vadd.f32 %v774, %v804
        %v814 = vadd.f32 %v775, %v804
        %v815 = vadd.f32 %v776, %v804
        %v816 = vadd.f32 %v777, %v804
        %v817 = vadd.f32 %v778, %v804
        %v818 = vadd.f32 %v779, %v804
        %v819 = vadd.f32 %v780, %v804
        %v820 = vadd.f32 %v781, %v804
        %v821 = vadd.f32 %v782, %v804
        %v822 = vadd.f32 %v783, %v804
        %v823 = vadd.f32 %v784, %v804
        %v824 = vadd.f32 %v785, %v804
        %v825 = vadd.f32 %v786, %v804
        %v826 = vadd.f32 %v787, %v804
        %v827 = vadd.f32 %v788, %v804
        %v828 = vadd.f32 %v789, %v804
        %v829 = vadd.f32 %v790, %v804
        %v830 = vadd.f32 %v791, %v804
        %v831 = vadd.f32 %v792, %v804
        %v832 = vadd.f32 %v793, %v804
        %v833 = vadd.f32 %v794, %v804
        %v834 = vadd.f32 %v795, %v804
        %v835 = vadd.f32 %v796, %v804
        %v836 = vadd.f32 %v797, %v804
        %v837 = vadd.f32 %v798, %v804
        %v838 = vmax.f32 %v806, 0.0
        %v839 = vmax.f32 %v807, 0.0
        %v840 = vmax.f32 %v808, 0.0
        %v841 = vmax.f32 %v809, 0.0
        %v842 = vmax.f32 %v810, 0.0
        %v843 = vmax.f32 %v811, 0.0
        %v844 = vmax.f32 %v812, 0.0
        %v845 = vmax.f32 %v813, 0.0
        %v846 = vmax.f32 %v814, 0.0
        %v847 = vmax.f32 %v815, 0.0
        %v848 = vmax.f32 %v816, 0.0
        %v849 = vmax.f32 %v817, 0.0
        %v850 = vmax.f32 %v818, 0.0
        %v851 = vmax.f32 %v819, 0.0
        %v852 = vmax.f32 %v820, 0.0
        %v853 = vmax.f32 %v821, 0.0
        %v854 = vmax.f32 %v822, 0.0
        %v855 = vmax.f32 %v823, 0.0
        %v856 = vmax.f32 %v824, 0.0
        %v857 = vmax.f32 %v825, 0.0
        %v858 = vmax.f32 %v826, 0.0
        %v859 = vmax.f32 %v827, 0.0
        %v860 = vmax.f32 %v828, 0.0
        %v861 = vmax.f32 %v829, 0.0
        %v862 = vmax.f32 %v830, 0.0
        %v863 = vmax.f32 %v831, 0.0
        %v864 = vmax.f32 %v832, 0.0
        %v865 = vmax.f32 %v833, 0.0
        %v866 = vmax.f32 %v834, 0.0
        %v867 = vmax.f32 %v835, 0.0
        %v868 = vmax.f32 %v836, 0.0
        %v869 = vmax.f32 %v837, 0.0
        %v870 = vpack.c.bf16 %v839, %v838
        %v871 = vpack.c.bf16 %v841, %v840
        %v872 = vpack.c.bf16 %v843, %v842
        %v873 = vpack.c.bf16 %v845, %v844
        %v874 = vpack.c.bf16 %v847, %v846
        %v875 = vpack.c.bf16 %v849, %v848
        %v876 = vpack.c.bf16 %v851, %v850
        %v877 = vpack.c.bf16 %v853, %v852
        %v878 = vpack.c.bf16 %v855, %v854
        %v879 = vpack.c.bf16 %v857, %v856
        %v880 = vpack.c.bf16 %v859, %v858
        %v881 = vpack.c.bf16 %v861, %v860
        %v882 = vpack.c.bf16 %v863, %v862
        %v883 = vpack.c.bf16 %v865, %v864
        %v884 = vpack.c.bf16 %v867, %v866
        %v885 = vpack.c.bf16 %v869, %v868
        %v886 = vpack.c.bf16 %v729, %v728
        %v887 = vpack.c.bf16 %v731, %v730
        %v888 = vpack.c.bf16 %v733, %v732
        %v889 = vpack.c.bf16 %v735, %v734
        %v890 = vpack.c.bf16 %v737, %v736
        %v891 = vpack.c.bf16 %v739, %v738
        %v892 = vpack.c.bf16 %v741, %v740
        %v893 = vpack.c.bf16 %v743, %v742
        %v894 = vpack.c.bf16 %v745, %v744
        %v895 = vpack.c.bf16 %v747, %v746
        %v896 = vpack.c.bf16 %v749, %v748
        %v897 = vpack.c.bf16 %v751, %v750
        %v898 = vpack.c.bf16 %v753, %v752
        %v899 = vpack.c.bf16 %v755, %v754
        %v900 = vpack.c.bf16 %v757, %v756
        %v901 = vpack.c.bf16 %v759, %v758
        %v902 = vld [vmem:[%s646] sm:$0xf]
        %v903 = vld [vmem:[%s646 + $0x4] sm:$0xf]
        %v904 = vld [vmem:[%s646 + $0x8] sm:$0xf]
        %v905 = vld [vmem:[%s646 + $0xc] sm:$0xf]
        %v906 = vld [vmem:[%s646 + $0x10] sm:$0xf]
        %v907 = vld [vmem:[%s646 + $0x14] sm:$0xf]
        %v908 = vld [vmem:[%s646 + $0x18] sm:$0xf]
        %v909 = vld [vmem:[%s646 + $0x1c] sm:$0xf]
        %v910 = vld [vmem:[%s649] sm:$0x1]
        %v912 = vlaneseq
        %v913 = vshrl.u32 %v912, 7
        %v914 = vsub.s32 0, %v913
        %v915 = vrot.slane %v910, %v914
        %v925 = vunpack.c.l.b16 %v902
        %v926 = vunpack.c.l.b16 %v903
        %v927 = vunpack.c.l.b16 %v904
        %v928 = vunpack.c.l.b16 %v905
        %v929 = vunpack.c.l.b16 %v906
        %v930 = vunpack.c.l.b16 %v907
        %v931 = vunpack.c.l.b16 %v908
        %v932 = vunpack.c.l.b16 %v909
        %v933 = vpack.c.b16 %v926, %v925
        %v934 = vpack.c.b16 %v928, %v927
        %v935 = vpack.c.b16 %v930, %v929
        %v936 = vpack.c.b16 %v932, %v931
        %vm941 = vcmask 523264
        %v943 = vsel %vm941, %v886, 0
        %v946 = vsel %vm941, %v887, 0
        %v949 = vsel %vm941, %v888, 0
        %v952 = vsel %vm941, %v889, 0
        %v955 = vsel %vm941, %v890, 0
        %v958 = vsel %vm941, %v891, 0
        %v961 = vsel %vm941, %v892, 0
        %v964 = vsel %vm941, %v893, 0
        %v967 = vsel %vm941, %v894, 0
        %v970 = vsel %vm941, %v895, 0
        %v973 = vsel %vm941, %v896, 0
        %v976 = vsel %vm941, %v897, 0
        %v979 = vsel %vm941, %v898, 0
        %v982 = vsel %vm941, %v899, 0
        %v985 = vsel %vm941, %v900, 0
        %v988 = vsel %vm941, %v901, 0
        %990 = vmatprep.subr.bf16.mxu0 0
        %991 = vmatpush1.bf16.msra.mxu0 %v933
        %992 = vmatprep.subr.bf16.mxu0 0
        %993 = vmatpush1.bf16.msra.mxu0 %v934
        %994 = vmatprep.subr.bf16.mxu0 0
        %995 = vmatpush1.bf16.msra.mxu0 %v935
        %996 = vmatprep.subr.bf16.mxu0 0
        %997 = vmatpush1.bf16.msra.mxu0 %v936
        %998 = vmatprep.subr.bf16.mxu0 0
        %999 = vmatpush1.bf16.msra.mxu0 0
        %1000 = vmatprep.subr.bf16.mxu0 0
        %1001 = vmatpush1.bf16.msra.mxu0 0
        %1002 = vmatprep.subr.bf16.mxu0 0
        %1003 = vmatpush1.bf16.msra.mxu0 0
        %1004 = vmatprep.subr.bf16.mxu0 0
        %1005 = vmatpush1.bf16.msra.mxu0 0
        %1006 = vmatprep.subr.bf16.mxu0 0
        %1007 = vmatpush1.bf16.msra.mxu0 0
        %1008 = vmatprep.subr.bf16.mxu0 0
        %1009 = vmatpush1.bf16.msra.mxu0 0
        %1010 = vmatprep.subr.bf16.mxu0 0
        %1011 = vmatpush1.bf16.msra.mxu0 0
        %1012 = vmatprep.subr.bf16.mxu0 0
        %1013 = vmatpush1.bf16.msra.mxu0 0
        %1014 = vmatprep.subr.bf16.mxu0 0
        %1015 = vmatpush1.bf16.msra.mxu0 0
        %1016 = vmatprep.subr.bf16.mxu0 0
        %1017 = vmatpush1.bf16.msra.mxu0 0
        %1018 = vmatprep.subr.bf16.mxu0 0
        %1019 = vmatpush1.bf16.msra.mxu0 0
        %1020 = vmatprep.subr.bf16.mxu0 0
        %1021 = vmatpush1.bf16.msra.mxu0 0
        %1022 = vmatprep.mubr.bf16.mxu0 0
        %1023 = vmatmul.mubr.bf16.gmra.mrb[0].mxu0 %v943
        %v1024 = vpop.f32.mrb[0].mxu0
        %v1025 = vadd.f32 %v915, %v1024
        %v1026 = vpop.f32.mrb[0].mxu0
        %v1027 = vpop.f32.mrb[0].mxu0
        %v1028 = vadd.f32 %v915, %v1027
        %v1029 = vpop.f32.mrb[0].mxu0
        %1030 = vmatprep.mubr.bf16.mxu0 0
        %1031 = vmatmul.mubr.bf16.gmra.mrb[0].mxu0 %v946
        %v1032 = vpop.f32.mrb[0].mxu0
        %v1033 = vadd.f32 %v915, %v1032
        %v1034 = vpop.f32.mrb[0].mxu0
        %v1035 = vpop.f32.mrb[0].mxu0
        %v1036 = vadd.f32 %v915, %v1035
        %v1037 = vpop.f32.mrb[0].mxu0
        %1038 = vmatprep.mubr.bf16.mxu0 0
        %1039 = vmatmul.mubr.bf16.gmra.mrb[0].mxu0 %v949
        %v1040 = vpop.f32.mrb[0].mxu0
        %v1041 = vadd.f32 %v915, %v1040
        %v1042 = vpop.f32.mrb[0].mxu0
        %v1043 = vpop.f32.mrb[0].mxu0
        %v1044 = vadd.f32 %v915, %v1043
        %v1045 = vpop.f32.mrb[0].mxu0
        %1046 = vmatprep.mubr.bf16.mxu0 0
        %1047 = vmatmul.mubr.bf16.gmra.mrb[0].mxu0 %v952
        %v1048 = vpop.f32.mrb[0].mxu0
        %v1049 = vadd.f32 %v915, %v1048
        %v1050 = vpop.f32.mrb[0].mxu0
        %v1051 = vpop.f32.mrb[0].mxu0
        %v1052 = vadd.f32 %v915, %v1051
        %v1053 = vpop.f32.mrb[0].mxu0
        %1054 = vmatprep.mubr.bf16.mxu0 0
        %1055 = vmatmul.mubr.bf16.gmra.mrb[0].mxu0 %v955
        %v1056 = vpop.f32.mrb[0].mxu0
        %v1057 = vadd.f32 %v915, %v1056
        %v1058 = vpop.f32.mrb[0].mxu0
        %v1059 = vpop.f32.mrb[0].mxu0
        %v1060 = vadd.f32 %v915, %v1059
        %v1061 = vpop.f32.mrb[0].mxu0
        %1062 = vmatprep.mubr.bf16.mxu0 0
        %1063 = vmatmul.mubr.bf16.gmra.mrb[0].mxu0 %v958
        %v1064 = vpop.f32.mrb[0].mxu0
        %v1065 = vadd.f32 %v915, %v1064
        %v1066 = vpop.f32.mrb[0].mxu0
        %v1067 = vpop.f32.mrb[0].mxu0
        %v1068 = vadd.f32 %v915, %v1067
        %v1069 = vpop.f32.mrb[0].mxu0
        %1070 = vmatprep.mubr.bf16.mxu0 0
        %1071 = vmatmul.mubr.bf16.gmra.mrb[0].mxu0 %v961
        %v1072 = vpop.f32.mrb[0].mxu0
        %v1073 = vadd.f32 %v915, %v1072
        %v1074 = vpop.f32.mrb[0].mxu0
        %v1075 = vpop.f32.mrb[0].mxu0
        %v1076 = vadd.f32 %v915, %v1075
        %v1077 = vpop.f32.mrb[0].mxu0
        %1078 = vmatprep.mubr.bf16.mxu0 0
        %1079 = vmatmul.mubr.bf16.gmra.mrb[0].mxu0 %v964
        %v1080 = vpop.f32.mrb[0].mxu0
        %v1081 = vadd.f32 %v915, %v1080
        %v1082 = vpop.f32.mrb[0].mxu0
        %v1083 = vpop.f32.mrb[0].mxu0
        %v1084 = vadd.f32 %v915, %v1083
        %v1085 = vpop.f32.mrb[0].mxu0
        %1086 = vmatprep.mubr.bf16.mxu0 0
        %1087 = vmatmul.mubr.bf16.gmra.mrb[0].mxu0 %v967
        %v1088 = vpop.f32.mrb[0].mxu0
        %v1089 = vadd.f32 %v915, %v1088
        %v1090 = vpop.f32.mrb[0].mxu0
        %v1091 = vpop.f32.mrb[0].mxu0
        %v1092 = vadd.f32 %v915, %v1091
        %v1093 = vpop.f32.mrb[0].mxu0
        %1094 = vmatprep.mubr.bf16.mxu0 0
        %1095 = vmatmul.mubr.bf16.gmra.mrb[0].mxu0 %v970
        %v1096 = vpop.f32.mrb[0].mxu0
        %v1097 = vadd.f32 %v915, %v1096
        %v1098 = vpop.f32.mrb[0].mxu0
        %v1099 = vpop.f32.mrb[0].mxu0
        %v1100 = vadd.f32 %v915, %v1099
        %v1101 = vpop.f32.mrb[0].mxu0
        %1102 = vmatprep.mubr.bf16.mxu0 0
        %1103 = vmatmul.mubr.bf16.gmra.mrb[0].mxu0 %v973
        %v1104 = vpop.f32.mrb[0].mxu0
        %v1105 = vadd.f32 %v915, %v1104
        %v1106 = vpop.f32.mrb[0].mxu0
        %v1107 = vpop.f32.mrb[0].mxu0
        %v1108 = vadd.f32 %v915, %v1107
        %v1109 = vpop.f32.mrb[0].mxu0
        %1110 = vmatprep.mubr.bf16.mxu0 0
        %1111 = vmatmul.mubr.bf16.gmra.mrb[0].mxu0 %v976
        %v1112 = vpop.f32.mrb[0].mxu0
        %v1113 = vadd.f32 %v915, %v1112
        %v1114 = vpop.f32.mrb[0].mxu0
        %v1115 = vpop.f32.mrb[0].mxu0
        %v1116 = vadd.f32 %v915, %v1115
        %v1117 = vpop.f32.mrb[0].mxu0
        %1118 = vmatprep.mubr.bf16.mxu0 0
        %1119 = vmatmul.mubr.bf16.gmra.mrb[0].mxu0 %v979
        %v1120 = vpop.f32.mrb[0].mxu0
        %v1121 = vadd.f32 %v915, %v1120
        %v1122 = vpop.f32.mrb[0].mxu0
        %v1123 = vpop.f32.mrb[0].mxu0
        %v1124 = vadd.f32 %v915, %v1123
        %v1125 = vpop.f32.mrb[0].mxu0
        %1126 = vmatprep.mubr.bf16.mxu0 0
        %1127 = vmatmul.mubr.bf16.gmra.mrb[0].mxu0 %v982
        %v1128 = vpop.f32.mrb[0].mxu0
        %v1129 = vadd.f32 %v915, %v1128
        %v1130 = vpop.f32.mrb[0].mxu0
        %v1131 = vpop.f32.mrb[0].mxu0
        %v1132 = vadd.f32 %v915, %v1131
        %v1133 = vpop.f32.mrb[0].mxu0
        %1134 = vmatprep.mubr.bf16.mxu0 0
        %1135 = vmatmul.mubr.bf16.gmra.mrb[0].mxu0 %v985
        %v1136 = vpop.f32.mrb[0].mxu0
        %v1137 = vadd.f32 %v915, %v1136
        %v1138 = vpop.f32.mrb[0].mxu0
        %v1139 = vpop.f32.mrb[0].mxu0
        %v1140 = vadd.f32 %v915, %v1139
        %v1141 = vpop.f32.mrb[0].mxu0
        %1142 = vmatprep.mubr.bf16.mxu0 0
        %1143 = vmatmul.mubr.bf16.gmra.mrb[0].mxu0 %v988
        %v1144 = vpop.f32.mrb[0].mxu0
        %v1145 = vadd.f32 %v915, %v1144
        %v1146 = vpop.f32.mrb[0].mxu0
        %v1147 = vpop.f32.mrb[0].mxu0
        %v1148 = vadd.f32 %v915, %v1147
        %v1149 = vpop.f32.mrb[0].mxu0
        %1150 = vdwg.mxu0
        %v1151 = vmax.f32 %v1025, 0.0
        %v1152 = vmax.f32 %v1028, 0.0
        %v1153 = vmax.f32 %v1033, 0.0
        %v1154 = vmax.f32 %v1036, 0.0
        %v1155 = vmax.f32 %v1041, 0.0
        %v1156 = vmax.f32 %v1044, 0.0
        %v1157 = vmax.f32 %v1049, 0.0
        %v1158 = vmax.f32 %v1052, 0.0
        %v1159 = vmax.f32 %v1057, 0.0
        %v1160 = vmax.f32 %v1060, 0.0
        %v1161 = vmax.f32 %v1065, 0.0
        %v1162 = vmax.f32 %v1068, 0.0
        %v1163 = vmax.f32 %v1073, 0.0
        %v1164 = vmax.f32 %v1076, 0.0
        %v1165 = vmax.f32 %v1081, 0.0
        %v1166 = vmax.f32 %v1084, 0.0
        %v1167 = vmax.f32 %v1089, 0.0
        %v1168 = vmax.f32 %v1092, 0.0
        %v1169 = vmax.f32 %v1097, 0.0
        %v1170 = vmax.f32 %v1100, 0.0
        %v1171 = vmax.f32 %v1105, 0.0
        %v1172 = vmax.f32 %v1108, 0.0
        %v1173 = vmax.f32 %v1113, 0.0
        %v1174 = vmax.f32 %v1116, 0.0
        %v1175 = vmax.f32 %v1121, 0.0
        %v1176 = vmax.f32 %v1124, 0.0
        %v1177 = vmax.f32 %v1129, 0.0
        %v1178 = vmax.f32 %v1132, 0.0
        %v1179 = vmax.f32 %v1137, 0.0
        %v1180 = vmax.f32 %v1140, 0.0
        %v1181 = vmax.f32 %v1145, 0.0
        %v1182 = vmax.f32 %v1148, 0.0
        %1183 = vst [vmem:[#allocation3] sm:$0xff] %v1151
        %1184 = vst [vmem:[#allocation3 + $0x8] sm:$0xff] %v1152
        %1185 = vst [vmem:[#allocation3 + $0x10] sm:$0xff] %v1153
        %1186 = vst [vmem:[#allocation3 + $0x18] sm:$0xff] %v1154
        %1187 = vst [vmem:[#allocation3 + $0x20] sm:$0xff] %v1155
        %1188 = vst [vmem:[#allocation3 + $0x28] sm:$0xff] %v1156
        %1189 = vst [vmem:[#allocation3 + $0x30] sm:$0xff] %v1157
        %1190 = vst [vmem:[#allocation3 + $0x38] sm:$0xff] %v1158
        %1191 = vst [vmem:[#allocation3 + $0x40] sm:$0xff] %v1159
        %1192 = vst [vmem:[#allocation3 + $0x48] sm:$0xff] %v1160
        %1193 = vst [vmem:[#allocation3 + $0x50] sm:$0xff] %v1161
        %1194 = vst [vmem:[#allocation3 + $0x58] sm:$0xff] %v1162
        %1195 = vst [vmem:[#allocation3 + $0x60] sm:$0xff] %v1163
        %1196 = vst [vmem:[#allocation3 + $0x68] sm:$0xff] %v1164
        %1197 = vst [vmem:[#allocation3 + $0x70] sm:$0xff] %v1165
        %1198 = vst [vmem:[#allocation3 + $0x78] sm:$0xff] %v1166
        %1199 = vst [vmem:[#allocation3 + $0x80] sm:$0xff] %v1167
        %1200 = vst [vmem:[#allocation3 + $0x88] sm:$0xff] %v1168
        %1201 = vst [vmem:[#allocation3 + $0x90] sm:$0xff] %v1169
        %1202 = vst [vmem:[#allocation3 + $0x98] sm:$0xff] %v1170
        %1203 = vst [vmem:[#allocation3 + $0xa0] sm:$0xff] %v1171
        %1204 = vst [vmem:[#allocation3 + $0xa8] sm:$0xff] %v1172
        %1205 = vst [vmem:[#allocation3 + $0xb0] sm:$0xff] %v1173
        %1206 = vst [vmem:[#allocation3 + $0xb8] sm:$0xff] %v1174
        %1207 = vst [vmem:[#allocation3 + $0xc0] sm:$0xff] %v1175
        %1208 = vst [vmem:[#allocation3 + $0xc8] sm:$0xff] %v1176
        %1209 = vst [vmem:[#allocation3 + $0xd0] sm:$0xff] %v1177
        %1210 = vst [vmem:[#allocation3 + $0xd8] sm:$0xff] %v1178
        %1211 = vst [vmem:[#allocation3 + $0xe0] sm:$0xff] %v1179
        %1212 = vst [vmem:[#allocation3 + $0xe8] sm:$0xff] %v1180
        %1213 = vst [vmem:[#allocation3 + $0xf0] sm:$0xff] %v1181
        %1214 = vst [vmem:[#allocation3 + $0xf8] sm:$0xff] %v1182
        %v1215 = vld [vmem:[%s619] sm:$0xf]
        %v1216 = vld [vmem:[%s619 + $0x4] sm:$0xf]
        %v1217 = vld [vmem:[%s619 + $0x8] sm:$0xf]
        %v1218 = vld [vmem:[%s619 + $0xc] sm:$0xf]
        %v1219 = vld [vmem:[%s619 + $0x10] sm:$0xf]
        %v1220 = vld [vmem:[%s619 + $0x14] sm:$0xf]
        %v1221 = vld [vmem:[%s619 + $0x18] sm:$0xf]
        %v1222 = vld [vmem:[%s619 + $0x1c] sm:$0xf]
        %v1223 = vld [vmem:[%s633] sm:$0x1]
        %v1225 = vlaneseq
        %v1226 = vshrl.u32 %v1225, 7
        %v1227 = vsub.s32 0, %v1226
        %v1228 = vrot.slane %v1223, %v1227
        %v1238 = vunpack.c.l.b16 %v1215
        %v1239 = vunpack.c.l.b16 %v1216
        %v1240 = vunpack.c.l.b16 %v1217
        %v1241 = vunpack.c.l.b16 %v1218
        %v1242 = vunpack.c.l.b16 %v1219
        %v1243 = vunpack.c.l.b16 %v1220
        %v1244 = vunpack.c.l.b16 %v1221
        %v1245 = vunpack.c.l.b16 %v1222
        %v1246 = vpack.c.b16 %v1239, %v1238
        %v1247 = vpack.c.b16 %v1241, %v1240
        %v1248 = vpack.c.b16 %v1243, %v1242
        %v1249 = vpack.c.b16 %v1245, %v1244
        %v1255 = vsel %vm941, %v870, 0
        %v1258 = vsel %vm941, %v871, 0
        %v1261 = vsel %vm941, %v872, 0
        %v1264 = vsel %vm941, %v873, 0
        %v1267 = vsel %vm941, %v874, 0
        %v1270 = vsel %vm941, %v875, 0
        %v1273 = vsel %vm941, %v876, 0
        %v1276 = vsel %vm941, %v877, 0
        %v1279 = vsel %vm941, %v878, 0
        %v1282 = vsel %vm941, %v879, 0
        %v1285 = vsel %vm941, %v880, 0
        %v1288 = vsel %vm941, %v881, 0
        %v1291 = vsel %vm941, %v882, 0
        %v1294 = vsel %vm941, %v883, 0
        %v1297 = vsel %vm941, %v884, 0
        %v1300 = vsel %vm941, %v885, 0
        %1302 = vmatprep.subr.bf16.mxu0 0
        %1303 = vmatpush1.bf16.msra.mxu0 %v1246
        %1304 = vmatprep.subr.bf16.mxu0 0
        %1305 = vmatpush1.bf16.msra.mxu0 %v1247
        %1306 = vmatprep.subr.bf16.mxu0 0
        %1307 = vmatpush1.bf16.msra.mxu0 %v1248
        %1308 = vmatprep.subr.bf16.mxu0 0
        %1309 = vmatpush1.bf16.msra.mxu0 %v1249
        %1310 = vmatprep.subr.bf16.mxu0 0
        %1311 = vmatpush1.bf16.msra.mxu0 0
        %1312 = vmatprep.subr.bf16.mxu0 0
        %1313 = vmatpush1.bf16.msra.mxu0 0
        %1314 = vmatprep.subr.bf16.mxu0 0
        %1315 = vmatpush1.bf16.msra.mxu0 0
        %1316 = vmatprep.subr.bf16.mxu0 0
        %1317 = vmatpush1.bf16.msra.mxu0 0
        %1318 = vmatprep.subr.bf16.mxu0 0
        %1319 = vmatpush1.bf16.msra.mxu0 0
        %1320 = vmatprep.subr.bf16.mxu0 0
        %1321 = vmatpush1.bf16.msra.mxu0 0
        %1322 = vmatprep.subr.bf16.mxu0 0
        %1323 = vmatpush1.bf16.msra.mxu0 0
        %1324 = vmatprep.subr.bf16.mxu0 0
        %1325 = vmatpush1.bf16.msra.mxu0 0
        %1326 = vmatprep.subr.bf16.mxu0 0
        %1327 = vmatpush1.bf16.msra.mxu0 0
        %1328 = vmatprep.subr.bf16.mxu0 0
        %1329 = vmatpush1.bf16.msra.mxu0 0
        %1330 = vmatprep.subr.bf16.mxu0 0
        %1331 = vmatpush1.bf16.msra.mxu0 0
        %1332 = vmatprep.subr.bf16.mxu0 0
        %1333 = vmatpush1.bf16.msra.mxu0 0
        %1334 = vmatprep.mubr.bf16.mxu0 0
        %1335 = vmatmul.mubr.bf16.gmra.mrb[0].mxu0 %v1255
        %v1336 = vpop.f32.mrb[0].mxu0
        %v1337 = vadd.f32 %v1228, %v1336
        %v1338 = vpop.f32.mrb[0].mxu0
        %v1339 = vpop.f32.mrb[0].mxu0
        %v1340 = vadd.f32 %v1228, %v1339
        %v1341 = vpop.f32.mrb[0].mxu0
        %1342 = vmatprep.mubr.bf16.mxu0 0
        %1343 = vmatmul.mubr.bf16.gmra.mrb[0].mxu0 %v1258
        %v1344 = vpop.f32.mrb[0].mxu0
        %v1345 = vadd.f32 %v1228, %v1344
        %v1346 = vpop.f32.mrb[0].mxu0
        %v1347 = vpop.f32.mrb[0].mxu0
        %v1348 = vadd.f32 %v1228, %v1347
        %v1349 = vpop.f32.mrb[0].mxu0
        %1350 = vmatprep.mubr.bf16.mxu0 0
        %1351 = vmatmul.mubr.bf16.gmra.mrb[0].mxu0 %v1261
        %v1352 = vpop.f32.mrb[0].mxu0
        %v1353 = vadd.f32 %v1228, %v1352
        %v1354 = vpop.f32.mrb[0].mxu0
        %v1355 = vpop.f32.mrb[0].mxu0
        %v1356 = vadd.f32 %v1228, %v1355
        %v1357 = vpop.f32.mrb[0].mxu0
        %1358 = vmatprep.mubr.bf16.mxu0 0
        %1359 = vmatmul.mubr.bf16.gmra.mrb[0].mxu0 %v1264
        %v1360 = vpop.f32.mrb[0].mxu0
        %v1361 = vadd.f32 %v1228, %v1360
        %v1362 = vpop.f32.mrb[0].mxu0
        %v1363 = vpop.f32.mrb[0].mxu0
        %v1364 = vadd.f32 %v1228, %v1363
        %v1365 = vpop.f32.mrb[0].mxu0
        %1366 = vmatprep.mubr.bf16.mxu0 0
        %1367 = vmatmul.mubr.bf16.gmra.mrb[0].mxu0 %v1267
        %v1368 = vpop.f32.mrb[0].mxu0
        %v1369 = vadd.f32 %v1228, %v1368
        %v1370 = vpop.f32.mrb[0].mxu0
        %v1371 = vpop.f32.mrb[0].mxu0
        %v1372 = vadd.f32 %v1228, %v1371
        %v1373 = vpop.f32.mrb[0].mxu0
        %1374 = vmatprep.mubr.bf16.mxu0 0
        %1375 = vmatmul.mubr.bf16.gmra.mrb[0].mxu0 %v1270
        %v1376 = vpop.f32.mrb[0].mxu0
        %v1377 = vadd.f32 %v1228, %v1376
        %v1378 = vpop.f32.mrb[0].mxu0
        %v1379 = vpop.f32.mrb[0].mxu0
        %v1380 = vadd.f32 %v1228, %v1379
        %v1381 = vpop.f32.mrb[0].mxu0
        %1382 = vmatprep.mubr.bf16.mxu0 0
        %1383 = vmatmul.mubr.bf16.gmra.mrb[0].mxu0 %v1273
        %v1384 = vpop.f32.mrb[0].mxu0
        %v1385 = vadd.f32 %v1228, %v1384
        %v1386 = vpop.f32.mrb[0].mxu0
        %v1387 = vpop.f32.mrb[0].mxu0
        %v1388 = vadd.f32 %v1228, %v1387
        %v1389 = vpop.f32.mrb[0].mxu0
        %1390 = vmatprep.mubr.bf16.mxu0 0
        %1391 = vmatmul.mubr.bf16.gmra.mrb[0].mxu0 %v1276
        %v1392 = vpop.f32.mrb[0].mxu0
        %v1393 = vadd.f32 %v1228, %v1392
        %v1394 = vpop.f32.mrb[0].mxu0
        %v1395 = vpop.f32.mrb[0].mxu0
        %v1396 = vadd.f32 %v1228, %v1395
        %v1397 = vpop.f32.mrb[0].mxu0
        %1398 = vmatprep.mubr.bf16.mxu0 0
        %1399 = vmatmul.mubr.bf16.gmra.mrb[0].mxu0 %v1279
        %v1400 = vpop.f32.mrb[0].mxu0
        %v1401 = vadd.f32 %v1228, %v1400
        %v1402 = vpop.f32.mrb[0].mxu0
        %v1403 = vpop.f32.mrb[0].mxu0
        %v1404 = vadd.f32 %v1228, %v1403
        %v1405 = vpop.f32.mrb[0].mxu0
        %1406 = vmatprep.mubr.bf16.mxu0 0
        %1407 = vmatmul.mubr.bf16.gmra.mrb[0].mxu0 %v1282
        %v1408 = vpop.f32.mrb[0].mxu0
        %v1409 = vadd.f32 %v1228, %v1408
        %v1410 = vpop.f32.mrb[0].mxu0
        %v1411 = vpop.f32.mrb[0].mxu0
        %v1412 = vadd.f32 %v1228, %v1411
        %v1413 = vpop.f32.mrb[0].mxu0
        %1414 = vmatprep.mubr.bf16.mxu0 0
        %1415 = vmatmul.mubr.bf16.gmra.mrb[0].mxu0 %v1285
        %v1416 = vpop.f32.mrb[0].mxu0
        %v1417 = vadd.f32 %v1228, %v1416
        %v1418 = vpop.f32.mrb[0].mxu0
        %v1419 = vpop.f32.mrb[0].mxu0
        %v1420 = vadd.f32 %v1228, %v1419
        %v1421 = vpop.f32.mrb[0].mxu0
        %1422 = vmatprep.mubr.bf16.mxu0 0
        %1423 = vmatmul.mubr.bf16.gmra.mrb[0].mxu0 %v1288
        %v1424 = vpop.f32.mrb[0].mxu0
        %v1425 = vadd.f32 %v1228, %v1424
        %v1426 = vpop.f32.mrb[0].mxu0
        %v1427 = vpop.f32.mrb[0].mxu0
        %v1428 = vadd.f32 %v1228, %v1427
        %v1429 = vpop.f32.mrb[0].mxu0
        %1430 = vmatprep.mubr.bf16.mxu0 0
        %1431 = vmatmul.mubr.bf16.gmra.mrb[0].mxu0 %v1291
        %v1432 = vpop.f32.mrb[0].mxu0
        %v1433 = vadd.f32 %v1228, %v1432
        %v1434 = vpop.f32.mrb[0].mxu0
        %v1435 = vpop.f32.mrb[0].mxu0
        %v1436 = vadd.f32 %v1228, %v1435
        %v1437 = vpop.f32.mrb[0].mxu0
        %1438 = vmatprep.mubr.bf16.mxu0 0
        %1439 = vmatmul.mubr.bf16.gmra.mrb[0].mxu0 %v1294
        %v1440 = vpop.f32.mrb[0].mxu0
        %v1441 = vadd.f32 %v1228, %v1440
        %v1442 = vpop.f32.mrb[0].mxu0
        %v1443 = vpop.f32.mrb[0].mxu0
        %v1444 = vadd.f32 %v1228, %v1443
        %v1445 = vpop.f32.mrb[0].mxu0
        %1446 = vmatprep.mubr.bf16.mxu0 0
        %1447 = vmatmul.mubr.bf16.gmra.mrb[0].mxu0 %v1297
        %v1448 = vpop.f32.mrb[0].mxu0
        %v1449 = vadd.f32 %v1228, %v1448
        %v1450 = vpop.f32.mrb[0].mxu0
        %v1451 = vpop.f32.mrb[0].mxu0
        %v1452 = vadd.f32 %v1228, %v1451
        %v1453 = vpop.f32.mrb[0].mxu0
        %1454 = vmatprep.mubr.bf16.mxu0 0
        %1455 = vmatmul.mubr.bf16.gmra.mrb[0].mxu0 %v1300
        %v1456 = vpop.f32.mrb[0].mxu0
        %v1457 = vadd.f32 %v1228, %v1456
        %v1458 = vpop.f32.mrb[0].mxu0
        %v1459 = vpop.f32.mrb[0].mxu0
        %v1460 = vadd.f32 %v1228, %v1459
        %v1461 = vpop.f32.mrb[0].mxu0
        %1462 = vdwg.mxu0
        %v1463 = vld [vmem:[%s624] sm:$0xf]
        %v1464 = vld [vmem:[%s624 + $0x4] sm:$0xf]
        %v1465 = vld [vmem:[%s624 + $0x8] sm:$0xf]
        %v1466 = vld [vmem:[%s624 + $0xc] sm:$0xf]
        %v1467 = vld [vmem:[%s624 + $0x10] sm:$0xf]
        %v1468 = vld [vmem:[%s624 + $0x14] sm:$0xf]
        %v1469 = vld [vmem:[%s624 + $0x18] sm:$0xf]
        %v1470 = vld [vmem:[%s624 + $0x1c] sm:$0xf]
        %v1471 = vld [vmem:[%s637] sm:$0x1]
        %v1473 = vlaneseq
        %v1474 = vshrl.u32 %v1473, 7
        %v1475 = vsub.s32 0, %v1474
        %v1476 = vrot.slane %v1471, %v1475
        %v1486 = vunpack.c.l.b16 %v1463
        %v1487 = vunpack.c.l.b16 %v1464
        %v1488 = vunpack.c.l.b16 %v1465
        %v1489 = vunpack.c.l.b16 %v1466
        %v1490 = vunpack.c.l.b16 %v1467
        %v1491 = vunpack.c.l.b16 %v1468
        %v1492 = vunpack.c.l.b16 %v1469
        %v1493 = vunpack.c.l.b16 %v1470
        %v1494 = vpack.c.b16 %v1487, %v1486
        %v1495 = vpack.c.b16 %v1489, %v1488
        %v1496 = vpack.c.b16 %v1491, %v1490
        %v1497 = vpack.c.b16 %v1493, %v1492
        %1502 = vmatprep.subr.bf16.mxu0 0
        %1503 = vmatpush1.bf16.msra.mxu0 %v1494
        %1504 = vmatprep.subr.bf16.mxu0 0
        %1505 = vmatpush1.bf16.msra.mxu0 %v1495
        %1506 = vmatprep.subr.bf16.mxu0 0
        %1507 = vmatpush1.bf16.msra.mxu0 %v1496
        %1508 = vmatprep.subr.bf16.mxu0 0
        %1509 = vmatpush1.bf16.msra.mxu0 %v1497
        %1510 = vmatprep.subr.bf16.mxu0 0
        %1511 = vmatpush1.bf16.msra.mxu0 0
        %1512 = vmatprep.subr.bf16.mxu0 0
        %1513 = vmatpush1.bf16.msra.mxu0 0
        %1514 = vmatprep.subr.bf16.mxu0 0
        %1515 = vmatpush1.bf16.msra.mxu0 0
        %1516 = vmatprep.subr.bf16.mxu0 0
        %1517 = vmatpush1.bf16.msra.mxu0 0
        %1518 = vmatprep.subr.bf16.mxu0 0
        %1519 = vmatpush1.bf16.msra.mxu0 0
        %1520 = vmatprep.subr.bf16.mxu0 0
        %1521 = vmatpush1.bf16.msra.mxu0 0
        %1522 = vmatprep.subr.bf16.mxu0 0
        %1523 = vmatpush1.bf16.msra.mxu0 0
        %1524 = vmatprep.subr.bf16.mxu0 0
        %1525 = vmatpush1.bf16.msra.mxu0 0
        %1526 = vmatprep.subr.bf16.mxu0 0
        %1527 = vmatpush1.bf16.msra.mxu0 0
        %1528 = vmatprep.subr.bf16.mxu0 0
        %1529 = vmatpush1.bf16.msra.mxu0 0
        %1530 = vmatprep.subr.bf16.mxu0 0
        %1531 = vmatpush1.bf16.msra.mxu0 0
        %1532 = vmatprep.subr.bf16.mxu0 0
        %1533 = vmatpush1.bf16.msra.mxu0 0
        %1534 = vmatprep.mubr.bf16.mxu0 0
        %1535 = vmatmul.mubr.bf16.gmra.mrb[0].mxu0 %v1255
        %v1536 = vpop.f32.mrb[0].mxu0
        %v1537 = vadd.f32 %v1476, %v1536
        %v1538 = vpop.f32.mrb[0].mxu0
        %v1539 = vpop.f32.mrb[0].mxu0
        %v1540 = vadd.f32 %v1476, %v1539
        %v1541 = vpop.f32.mrb[0].mxu0
        %1542 = vmatprep.mubr.bf16.mxu0 0
        %1543 = vmatmul.mubr.bf16.gmra.mrb[0].mxu0 %v1258
        %v1544 = vpop.f32.mrb[0].mxu0
        %v1545 = vadd.f32 %v1476, %v1544
        %v1546 = vpop.f32.mrb[0].mxu0
        %v1547 = vpop.f32.mrb[0].mxu0
        %v1548 = vadd.f32 %v1476, %v1547
        %v1549 = vpop.f32.mrb[0].mxu0
        %1550 = vmatprep.mubr.bf16.mxu0 0
        %1551 = vmatmul.mubr.bf16.gmra.mrb[0].mxu0 %v1261
        %v1552 = vpop.f32.mrb[0].mxu0
        %v1553 = vadd.f32 %v1476, %v1552
        %v1554 = vpop.f32.mrb[0].mxu0
        %v1555 = vpop.f32.mrb[0].mxu0
        %v1556 = vadd.f32 %v1476, %v1555
        %v1557 = vpop.f32.mrb[0].mxu0
        %1558 = vmatprep.mubr.bf16.mxu0 0
        %1559 = vmatmul.mubr.bf16.gmra.mrb[0].mxu0 %v1264
        %v1560 = vpop.f32.mrb[0].mxu0
        %v1561 = vadd.f32 %v1476, %v1560
        %v1562 = vpop.f32.mrb[0].mxu0
        %v1563 = vpop.f32.mrb[0].mxu0
        %v1564 = vadd.f32 %v1476, %v1563
        %v1565 = vpop.f32.mrb[0].mxu0
        %1566 = vmatprep.mubr.bf16.mxu0 0
        %1567 = vmatmul.mubr.bf16.gmra.mrb[0].mxu0 %v1267
        %v1568 = vpop.f32.mrb[0].mxu0
        %v1569 = vadd.f32 %v1476, %v1568
        %v1570 = vpop.f32.mrb[0].mxu0
        %v1571 = vpop.f32.mrb[0].mxu0
        %v1572 = vadd.f32 %v1476, %v1571
        %v1573 = vpop.f32.mrb[0].mxu0
        %1574 = vmatprep.mubr.bf16.mxu0 0
        %1575 = vmatmul.mubr.bf16.gmra.mrb[0].mxu0 %v1270
        %v1576 = vpop.f32.mrb[0].mxu0
        %v1577 = vadd.f32 %v1476, %v1576
        %v1578 = vpop.f32.mrb[0].mxu0
        %v1579 = vpop.f32.mrb[0].mxu0
        %v1580 = vadd.f32 %v1476, %v1579
        %v1581 = vpop.f32.mrb[0].mxu0
        %1582 = vmatprep.mubr.bf16.mxu0 0
        %1583 = vmatmul.mubr.bf16.gmra.mrb[0].mxu0 %v1273
        %v1584 = vpop.f32.mrb[0].mxu0
        %v1585 = vadd.f32 %v1476, %v1584
        %v1586 = vpop.f32.mrb[0].mxu0
        %v1587 = vpop.f32.mrb[0].mxu0
        %v1588 = vadd.f32 %v1476, %v1587
        %v1589 = vpop.f32.mrb[0].mxu0
        %1590 = vmatprep.mubr.bf16.mxu0 0
        %1591 = vmatmul.mubr.bf16.gmra.mrb[0].mxu0 %v1276
        %v1592 = vpop.f32.mrb[0].mxu0
        %v1593 = vadd.f32 %v1476, %v1592
        %v1594 = vpop.f32.mrb[0].mxu0
        %v1595 = vpop.f32.mrb[0].mxu0
        %v1596 = vadd.f32 %v1476, %v1595
        %v1597 = vpop.f32.mrb[0].mxu0
        %1598 = vmatprep.mubr.bf16.mxu0 0
        %1599 = vmatmul.mubr.bf16.gmra.mrb[0].mxu0 %v1279
        %v1600 = vpop.f32.mrb[0].mxu0
        %v1601 = vadd.f32 %v1476, %v1600
        %v1602 = vpop.f32.mrb[0].mxu0
        %v1603 = vpop.f32.mrb[0].mxu0
        %v1604 = vadd.f32 %v1476, %v1603
        %v1605 = vpop.f32.mrb[0].mxu0
        %1606 = vmatprep.mubr.bf16.mxu0 0
        %1607 = vmatmul.mubr.bf16.gmra.mrb[0].mxu0 %v1282
        %v1608 = vpop.f32.mrb[0].mxu0
        %v1609 = vadd.f32 %v1476, %v1608
        %v1610 = vpop.f32.mrb[0].mxu0
        %v1611 = vpop.f32.mrb[0].mxu0
        %v1612 = vadd.f32 %v1476, %v1611
        %v1613 = vpop.f32.mrb[0].mxu0
        %1614 = vmatprep.mubr.bf16.mxu0 0
        %1615 = vmatmul.mubr.bf16.gmra.mrb[0].mxu0 %v1285
        %v1616 = vpop.f32.mrb[0].mxu0
        %v1617 = vadd.f32 %v1476, %v1616
        %v1618 = vpop.f32.mrb[0].mxu0
        %v1619 = vpop.f32.mrb[0].mxu0
        %v1620 = vadd.f32 %v1476, %v1619
        %v1621 = vpop.f32.mrb[0].mxu0
        %1622 = vmatprep.mubr.bf16.mxu0 0
        %1623 = vmatmul.mubr.bf16.gmra.mrb[0].mxu0 %v1288
        %v1624 = vpop.f32.mrb[0].mxu0
        %v1625 = vadd.f32 %v1476, %v1624
        %v1626 = vpop.f32.mrb[0].mxu0
        %v1627 = vpop.f32.mrb[0].mxu0
        %v1628 = vadd.f32 %v1476, %v1627
        %v1629 = vpop.f32.mrb[0].mxu0
        %1630 = vmatprep.mubr.bf16.mxu0 0
        %1631 = vmatmul.mubr.bf16.gmra.mrb[0].mxu0 %v1291
        %v1632 = vpop.f32.mrb[0].mxu0
        %v1633 = vadd.f32 %v1476, %v1632
        %v1634 = vpop.f32.mrb[0].mxu0
        %v1635 = vpop.f32.mrb[0].mxu0
        %v1636 = vadd.f32 %v1476, %v1635
        %v1637 = vpop.f32.mrb[0].mxu0
        %1638 = vmatprep.mubr.bf16.mxu0 0
        %1639 = vmatmul.mubr.bf16.gmra.mrb[0].mxu0 %v1294
        %v1640 = vpop.f32.mrb[0].mxu0
        %v1641 = vadd.f32 %v1476, %v1640
        %v1642 = vpop.f32.mrb[0].mxu0
        %v1643 = vpop.f32.mrb[0].mxu0
        %v1644 = vadd.f32 %v1476, %v1643
        %v1645 = vpop.f32.mrb[0].mxu0
        %1646 = vmatprep.mubr.bf16.mxu0 0
        %1647 = vmatmul.mubr.bf16.gmra.mrb[0].mxu0 %v1297
        %v1648 = vpop.f32.mrb[0].mxu0
        %v1649 = vadd.f32 %v1476, %v1648
        %v1650 = vpop.f32.mrb[0].mxu0
        %v1651 = vpop.f32.mrb[0].mxu0
        %v1652 = vadd.f32 %v1476, %v1651
        %v1653 = vpop.f32.mrb[0].mxu0
        %1654 = vmatprep.mubr.bf16.mxu0 0
        %1655 = vmatmul.mubr.bf16.gmra.mrb[0].mxu0 %v1300
        %v1656 = vpop.f32.mrb[0].mxu0
        %v1657 = vadd.f32 %v1476, %v1656
        %v1658 = vpop.f32.mrb[0].mxu0
        %v1659 = vpop.f32.mrb[0].mxu0
        %v1660 = vadd.f32 %v1476, %v1659
        %v1661 = vpop.f32.mrb[0].mxu0
        %1662 = vdwg.mxu0
        %v1663 = vld [vmem:[%s629] sm:$0xf]
        %v1664 = vld [vmem:[%s629 + $0x4] sm:$0xf]
        %v1665 = vld [vmem:[%s629 + $0x8] sm:$0xf]
        %v1666 = vld [vmem:[%s629 + $0xc] sm:$0xf]
        %v1667 = vld [vmem:[%s629 + $0x10] sm:$0xf]
        %v1668 = vld [vmem:[%s629 + $0x14] sm:$0xf]
        %v1669 = vld [vmem:[%s629 + $0x18] sm:$0xf]
        %v1670 = vld [vmem:[%s629 + $0x1c] sm:$0xf]
        %v1671 = vld [vmem:[%s641] sm:$0x1]
        %v1673 = vlaneseq
        %v1674 = vshrl.u32 %v1673, 7
        %v1675 = vsub.s32 0, %v1674
        %v1676 = vrot.slane %v1671, %v1675
        %v1686 = vunpack.c.l.b16 %v1663
        %v1687 = vunpack.c.l.b16 %v1664
        %v1688 = vunpack.c.l.b16 %v1665
        %v1689 = vunpack.c.l.b16 %v1666
        %v1690 = vunpack.c.l.b16 %v1667
        %v1691 = vunpack.c.l.b16 %v1668
        %v1692 = vunpack.c.l.b16 %v1669
        %v1693 = vunpack.c.l.b16 %v1670
        %v1694 = vpack.c.b16 %v1687, %v1686
        %v1695 = vpack.c.b16 %v1689, %v1688
        %v1696 = vpack.c.b16 %v1691, %v1690
        %v1697 = vpack.c.b16 %v1693, %v1692
        %1702 = vmatprep.subr.bf16.mxu0 0
        %1703 = vmatpush1.bf16.msra.mxu0 %v1694
        %1704 = vmatprep.subr.bf16.mxu0 0
        %1705 = vmatpush1.bf16.msra.mxu0 %v1695
        %1706 = vmatprep.subr.bf16.mxu0 0
        %1707 = vmatpush1.bf16.msra.mxu0 %v1696
        %1708 = vmatprep.subr.bf16.mxu0 0
        %1709 = vmatpush1.bf16.msra.mxu0 %v1697
        %1710 = vmatprep.subr.bf16.mxu0 0
        %1711 = vmatpush1.bf16.msra.mxu0 0
        %1712 = vmatprep.subr.bf16.mxu0 0
        %1713 = vmatpush1.bf16.msra.mxu0 0
        %1714 = vmatprep.subr.bf16.mxu0 0
        %1715 = vmatpush1.bf16.msra.mxu0 0
        %1716 = vmatprep.subr.bf16.mxu0 0
        %1717 = vmatpush1.bf16.msra.mxu0 0
        %1718 = vmatprep.subr.bf16.mxu0 0
        %1719 = vmatpush1.bf16.msra.mxu0 0
        %1720 = vmatprep.subr.bf16.mxu0 0
        %1721 = vmatpush1.bf16.msra.mxu0 0
        %1722 = vmatprep.subr.bf16.mxu0 0
        %1723 = vmatpush1.bf16.msra.mxu0 0
        %1724 = vmatprep.subr.bf16.mxu0 0
        %1725 = vmatpush1.bf16.msra.mxu0 0
        %1726 = vmatprep.subr.bf16.mxu0 0
        %1727 = vmatpush1.bf16.msra.mxu0 0
        %1728 = vmatprep.subr.bf16.mxu0 0
        %1729 = vmatpush1.bf16.msra.mxu0 0
        %1730 = vmatprep.subr.bf16.mxu0 0
        %1731 = vmatpush1.bf16.msra.mxu0 0
        %1732 = vmatprep.subr.bf16.mxu0 0
        %1733 = vmatpush1.bf16.msra.mxu0 0
        %1734 = vmatprep.mubr.bf16.mxu0 0
        %1735 = vmatmul.mubr.bf16.gmra.mrb[0].mxu0 %v1255
        %v1736 = vpop.f32.mrb[0].mxu0
        %v1737 = vadd.f32 %v1676, %v1736
        %v1738 = vpop.f32.mrb[0].mxu0
        %v1739 = vpop.f32.mrb[0].mxu0
        %v1740 = vadd.f32 %v1676, %v1739
        %v1741 = vpop.f32.mrb[0].mxu0
        %1742 = vmatprep.mubr.bf16.mxu0 0
        %1743 = vmatmul.mubr.bf16.gmra.mrb[0].mxu0 %v1258
        %v1744 = vpop.f32.mrb[0].mxu0
        %v1745 = vadd.f32 %v1676, %v1744
        %v1746 = vpop.f32.mrb[0].mxu0
        %v1747 = vpop.f32.mrb[0].mxu0
        %v1748 = vadd.f32 %v1676, %v1747
        %v1749 = vpop.f32.mrb[0].mxu0
        %1750 = vmatprep.mubr.bf16.mxu0 0
        %1751 = vmatmul.mubr.bf16.gmra.mrb[0].mxu0 %v1261
        %v1752 = vpop.f32.mrb[0].mxu0
        %v1753 = vadd.f32 %v1676, %v1752
        %v1754 = vpop.f32.mrb[0].mxu0
        %v1755 = vpop.f32.mrb[0].mxu0
        %v1756 = vadd.f32 %v1676, %v1755
        %v1757 = vpop.f32.mrb[0].mxu0
        %1758 = vmatprep.mubr.bf16.mxu0 0
        %1759 = vmatmul.mubr.bf16.gmra.mrb[0].mxu0 %v1264
        %v1760 = vpop.f32.mrb[0].mxu0
        %v1761 = vadd.f32 %v1676, %v1760
        %v1762 = vpop.f32.mrb[0].mxu0
        %v1763 = vpop.f32.mrb[0].mxu0
        %v1764 = vadd.f32 %v1676, %v1763
        %v1765 = vpop.f32.mrb[0].mxu0
        %1766 = vmatprep.mubr.bf16.mxu0 0
        %1767 = vmatmul.mubr.bf16.gmra.mrb[0].mxu0 %v1267
        %v1768 = vpop.f32.mrb[0].mxu0
        %v1769 = vadd.f32 %v1676, %v1768
        %v1770 = vpop.f32.mrb[0].mxu0
        %v1771 = vpop.f32.mrb[0].mxu0
        %v1772 = vadd.f32 %v1676, %v1771
        %v1773 = vpop.f32.mrb[0].mxu0
        %1774 = vmatprep.mubr.bf16.mxu0 0
        %1775 = vmatmul.mubr.bf16.gmra.mrb[0].mxu0 %v1270
        %v1776 = vpop.f32.mrb[0].mxu0
        %v1777 = vadd.f32 %v1676, %v1776
        %v1778 = vpop.f32.mrb[0].mxu0
        %v1779 = vpop.f32.mrb[0].mxu0
        %v1780 = vadd.f32 %v1676, %v1779
        %v1781 = vpop.f32.mrb[0].mxu0
        %1782 = vmatprep.mubr.bf16.mxu0 0
        %1783 = vmatmul.mubr.bf16.gmra.mrb[0].mxu0 %v1273
        %v1784 = vpop.f32.mrb[0].mxu0
        %v1785 = vadd.f32 %v1676, %v1784
        %v1786 = vpop.f32.mrb[0].mxu0
        %v1787 = vpop.f32.mrb[0].mxu0
        %v1788 = vadd.f32 %v1676, %v1787
        %v1789 = vpop.f32.mrb[0].mxu0
        %1790 = vmatprep.mubr.bf16.mxu0 0
        %1791 = vmatmul.mubr.bf16.gmra.mrb[0].mxu0 %v1276
        %v1792 = vpop.f32.mrb[0].mxu0
        %v1793 = vadd.f32 %v1676, %v1792
        %v1794 = vpop.f32.mrb[0].mxu0
        %v1795 = vpop.f32.mrb[0].mxu0
        %v1796 = vadd.f32 %v1676, %v1795
        %v1797 = vpop.f32.mrb[0].mxu0
        %1798 = vmatprep.mubr.bf16.mxu0 0
        %1799 = vmatmul.mubr.bf16.gmra.mrb[0].mxu0 %v1279
        %v1800 = vpop.f32.mrb[0].mxu0
        %v1801 = vadd.f32 %v1676, %v1800
        %v1802 = vpop.f32.mrb[0].mxu0
        %v1803 = vpop.f32.mrb[0].mxu0
        %v1804 = vadd.f32 %v1676, %v1803
        %v1805 = vpop.f32.mrb[0].mxu0
        %1806 = vmatprep.mubr.bf16.mxu0 0
        %1807 = vmatmul.mubr.bf16.gmra.mrb[0].mxu0 %v1282
        %v1808 = vpop.f32.mrb[0].mxu0
        %v1809 = vadd.f32 %v1676, %v1808
        %v1810 = vpop.f32.mrb[0].mxu0
        %v1811 = vpop.f32.mrb[0].mxu0
        %v1812 = vadd.f32 %v1676, %v1811
        %v1813 = vpop.f32.mrb[0].mxu0
        %1814 = vmatprep.mubr.bf16.mxu0 0
        %1815 = vmatmul.mubr.bf16.gmra.mrb[0].mxu0 %v1285
        %v1816 = vpop.f32.mrb[0].mxu0
        %v1817 = vadd.f32 %v1676, %v1816
        %v1818 = vpop.f32.mrb[0].mxu0
        %v1819 = vpop.f32.mrb[0].mxu0
        %v1820 = vadd.f32 %v1676, %v1819
        %v1821 = vpop.f32.mrb[0].mxu0
        %1822 = vmatprep.mubr.bf16.mxu0 0
        %1823 = vmatmul.mubr.bf16.gmra.mrb[0].mxu0 %v1288
        %v1824 = vpop.f32.mrb[0].mxu0
        %v1825 = vadd.f32 %v1676, %v1824
        %v1826 = vpop.f32.mrb[0].mxu0
        %v1827 = vpop.f32.mrb[0].mxu0
        %v1828 = vadd.f32 %v1676, %v1827
        %v1829 = vpop.f32.mrb[0].mxu0
        %1830 = vmatprep.mubr.bf16.mxu0 0
        %1831 = vmatmul.mubr.bf16.gmra.mrb[0].mxu0 %v1291
        %v1832 = vpop.f32.mrb[0].mxu0
        %v1833 = vadd.f32 %v1676, %v1832
        %v1834 = vpop.f32.mrb[0].mxu0
        %v1835 = vpop.f32.mrb[0].mxu0
        %v1836 = vadd.f32 %v1676, %v1835
        %v1837 = vpop.f32.mrb[0].mxu0
        %1838 = vmatprep.mubr.bf16.mxu0 0
        %1839 = vmatmul.mubr.bf16.gmra.mrb[0].mxu0 %v1294
        %v1840 = vpop.f32.mrb[0].mxu0
        %v1841 = vadd.f32 %v1676, %v1840
        %v1842 = vpop.f32.mrb[0].mxu0
        %v1843 = vpop.f32.mrb[0].mxu0
        %v1844 = vadd.f32 %v1676, %v1843
        %v1845 = vpop.f32.mrb[0].mxu0
        %1846 = vmatprep.mubr.bf16.mxu0 0
        %1847 = vmatmul.mubr.bf16.gmra.mrb[0].mxu0 %v1297
        %v1848 = vpop.f32.mrb[0].mxu0
        %v1849 = vadd.f32 %v1676, %v1848
        %v1850 = vpop.f32.mrb[0].mxu0
        %v1851 = vpop.f32.mrb[0].mxu0
        %v1852 = vadd.f32 %v1676, %v1851
        %v1853 = vpop.f32.mrb[0].mxu0
        %1854 = vmatprep.mubr.bf16.mxu0 0
        %1855 = vmatmul.mubr.bf16.gmra.mrb[0].mxu0 %v1300
        %v1856 = vpop.f32.mrb[0].mxu0
        %v1857 = vadd.f32 %v1676, %v1856
        %v1858 = vpop.f32.mrb[0].mxu0
        %v1859 = vpop.f32.mrb[0].mxu0
        %v1860 = vadd.f32 %v1676, %v1859
        %v1861 = vpop.f32.mrb[0].mxu0
        %1862 = vdwg.mxu0
        %v1863 = vpack.c.bf16 %v1340, %v1337
        %v1864 = vpack.c.bf16 %v1348, %v1345
        %v1865 = vpack.c.bf16 %v1356, %v1353
        %v1866 = vpack.c.bf16 %v1364, %v1361
        %v1867 = vpack.c.bf16 %v1372, %v1369
        %v1868 = vpack.c.bf16 %v1380, %v1377
        %v1869 = vpack.c.bf16 %v1388, %v1385
        %v1870 = vpack.c.bf16 %v1396, %v1393
        %v1871 = vpack.c.bf16 %v1404, %v1401
        %v1872 = vpack.c.bf16 %v1412, %v1409
        %v1873 = vpack.c.bf16 %v1420, %v1417
        %v1874 = vpack.c.bf16 %v1428, %v1425
        %v1875 = vpack.c.bf16 %v1436, %v1433
        %v1876 = vpack.c.bf16 %v1444, %v1441
        %v1877 = vpack.c.bf16 %v1452, %v1449
        %v1878 = vpack.c.bf16 %v1460, %v1457
        %v1879 = vpack.c.bf16 %v1540, %v1537
        %v1880 = vpack.c.bf16 %v1548, %v1545
        %v1881 = vpack.c.bf16 %v1556, %v1553
        %v1882 = vpack.c.bf16 %v1564, %v1561
        %v1883 = vpack.c.bf16 %v1572, %v1569
        %v1884 = vpack.c.bf16 %v1580, %v1577
        %v1885 = vpack.c.bf16 %v1588, %v1585
        %v1886 = vpack.c.bf16 %v1596, %v1593
        %v1887 = vpack.c.bf16 %v1604, %v1601
        %v1888 = vpack.c.bf16 %v1612, %v1609
        %v1889 = vpack.c.bf16 %v1620, %v1617
        %v1890 = vpack.c.bf16 %v1628, %v1625
        %v1891 = vpack.c.bf16 %v1636, %v1633
        %v1892 = vpack.c.bf16 %v1644, %v1641
        %v1893 = vpack.c.bf16 %v1652, %v1649
        %v1894 = vpack.c.bf16 %v1660, %v1657
        %vm1895 = vcmask 261120
        %v1897 = vsel %vm1895, %v1863, 0
        %v1900 = vsel %vm1895, %v1864, 0
        %v1903 = vsel %vm1895, %v1865, 0
        %v1906 = vsel %vm1895, %v1866, 0
        %v1909 = vsel %vm1895, %v1867, 0
        %v1912 = vsel %vm1895, %v1868, 0
        %v1915 = vsel %vm1895, %v1869, 0
        %v1918 = vsel %vm1895, %v1870, 0
        %v1921 = vsel %vm1895, %v1871, 0
        %v1924 = vsel %vm1895, %v1872, 0
        %v1927 = vsel %vm1895, %v1873, 0
        %v1930 = vsel %vm1895, %v1874, 0
        %v1933 = vsel %vm1895, %v1875, 0
        %v1936 = vsel %vm1895, %v1876, 0
        %v1939 = vsel %vm1895, %v1877, 0
        %v1942 = vsel %vm1895, %v1878, 0
        %v1945 = vsel %vm1895, %v1879, 0
        %v1948 = vsel %vm1895, %v1880, 0
        %v1951 = vsel %vm1895, %v1881, 0
        %v1954 = vsel %vm1895, %v1882, 0
        %v1957 = vsel %vm1895, %v1883, 0
        %v1960 = vsel %vm1895, %v1884, 0
        %v1963 = vsel %vm1895, %v1885, 0
        %v1966 = vsel %vm1895, %v1886, 0
        %v1969 = vsel %vm1895, %v1887, 0
        %v1972 = vsel %vm1895, %v1888, 0
        %v1975 = vsel %vm1895, %v1889, 0
        %v1978 = vsel %vm1895, %v1890, 0
        %v1981 = vsel %vm1895, %v1891, 0
        %v1984 = vsel %vm1895, %v1892, 0
        %v1987 = vsel %vm1895, %v1893, 0
        %v1990 = vsel %vm1895, %v1894, 0
        %1992 = vmatprep.subr.bf16.mxu0 0
        %1993 = vmatpush1.bf16.xpose.msra.mxu0 %v1945
        %1994 = vmatprep.subr.bf16.mxu0 0
        %1995 = vmatpush1.bf16.xpose.msra.mxu0 %v1948
        %1996 = vmatprep.subr.bf16.mxu0 0
        %1997 = vmatpush1.bf16.xpose.msra.mxu0 %v1951
        %1998 = vmatprep.subr.bf16.mxu0 0
        %1999 = vmatpush1.bf16.xpose.msra.mxu0 %v1954
        %2000 = vmatprep.subr.bf16.mxu0 0
        %2001 = vmatpush1.bf16.xpose.msra.mxu0 %v1957
        %2002 = vmatprep.subr.bf16.mxu0 0
        %2003 = vmatpush1.bf16.xpose.msra.mxu0 %v1960
        %2004 = vmatprep.subr.bf16.mxu0 0
        %2005 = vmatpush1.bf16.xpose.msra.mxu0 %v1963
        %2006 = vmatprep.subr.bf16.mxu0 0
        %2007 = vmatpush1.bf16.xpose.msra.mxu0 %v1966
        %2008 = vmatprep.subr.bf16.mxu0 0
        %2009 = vmatpush1.bf16.xpose.msra.mxu0 %v1969
        %2010 = vmatprep.subr.bf16.mxu0 0
        %2011 = vmatpush1.bf16.xpose.msra.mxu0 %v1972
        %2012 = vmatprep.subr.bf16.mxu0 0
        %2013 = vmatpush1.bf16.xpose.msra.mxu0 %v1975
        %2014 = vmatprep.subr.bf16.mxu0 0
        %2015 = vmatpush1.bf16.xpose.msra.mxu0 %v1978
        %2016 = vmatprep.subr.bf16.mxu0 0
        %2017 = vmatpush1.bf16.xpose.msra.mxu0 %v1981
        %2018 = vmatprep.subr.bf16.mxu0 0
        %2019 = vmatpush1.bf16.xpose.msra.mxu0 %v1984
        %2020 = vmatprep.subr.bf16.mxu0 0
        %2021 = vmatpush1.bf16.xpose.msra.mxu0 %v1987
        %2022 = vmatprep.subr.bf16.mxu0 0
        %2023 = vmatpush1.bf16.xpose.msra.mxu0 %v1990
        %2024 = vmatprep.mubr.bf16.mxu0 0
        %2025 = vmatmul.mubr.bf16.gmra.mrb[0].mxu0 %v1897
        %v2026 = vpop.f32.mrb[0].mxu0
        %v2027 = vadd.f32 0.0, %v2026
        %v2028 = vpop.f32.mrb[0].mxu0
        %v2029 = vadd.f32 0.0, %v2028
        %v2030 = vpop.f32.mrb[0].mxu0
        %v2031 = vadd.f32 0.0, %v2030
        %v2032 = vpop.f32.mrb[0].mxu0
        %v2033 = vadd.f32 0.0, %v2032
        %2034 = vmatprep.mubr.bf16.mxu0 0
        %2035 = vmatmul.mubr.bf16.gmra.mrb[0].mxu0 %v1900
        %v2036 = vpop.f32.mrb[0].mxu0
        %v2037 = vadd.f32 0.0, %v2036
        %v2038 = vpop.f32.mrb[0].mxu0
        %v2039 = vadd.f32 0.0, %v2038
        %v2040 = vpop.f32.mrb[0].mxu0
        %v2041 = vadd.f32 0.0, %v2040
        %v2042 = vpop.f32.mrb[0].mxu0
        %v2043 = vadd.f32 0.0, %v2042
        %2044 = vmatprep.mubr.bf16.mxu0 0
        %2045 = vmatmul.mubr.bf16.gmra.mrb[0].mxu0 %v1903
        %v2046 = vpop.f32.mrb[0].mxu0
        %v2047 = vadd.f32 0.0, %v2046
        %v2048 = vpop.f32.mrb[0].mxu0
        %v2049 = vadd.f32 0.0, %v2048
        %v2050 = vpop.f32.mrb[0].mxu0
        %v2051 = vadd.f32 0.0, %v2050
        %v2052 = vpop.f32.mrb[0].mxu0
        %v2053 = vadd.f32 0.0, %v2052
        %2054 = vmatprep.mubr.bf16.mxu0 0
        %2055 = vmatmul.mubr.bf16.gmra.mrb[0].mxu0 %v1906
        %v2056 = vpop.f32.mrb[0].mxu0
        %v2057 = vadd.f32 0.0, %v2056
        %v2058 = vpop.f32.mrb[0].mxu0
        %v2059 = vadd.f32 0.0, %v2058
        %v2060 = vpop.f32.mrb[0].mxu0
        %v2061 = vadd.f32 0.0, %v2060
        %v2062 = vpop.f32.mrb[0].mxu0
        %v2063 = vadd.f32 0.0, %v2062
        %2064 = vmatprep.mubr.bf16.mxu0 0
        %2065 = vmatmul.mubr.bf16.gmra.mrb[0].mxu0 %v1909
        %v2066 = vpop.f32.mrb[0].mxu0
        %v2067 = vadd.f32 0.0, %v2066
        %v2068 = vpop.f32.mrb[0].mxu0
        %v2069 = vadd.f32 0.0, %v2068
        %v2070 = vpop.f32.mrb[0].mxu0
        %v2071 = vadd.f32 0.0, %v2070
        %v2072 = vpop.f32.mrb[0].mxu0
        %v2073 = vadd.f32 0.0, %v2072
        %2074 = vmatprep.mubr.bf16.mxu0 0
        %2075 = vmatmul.mubr.bf16.gmra.mrb[0].mxu0 %v1912
        %v2076 = vpop.f32.mrb[0].mxu0
        %v2077 = vadd.f32 0.0, %v2076
        %v2078 = vpop.f32.mrb[0].mxu0
        %v2079 = vadd.f32 0.0, %v2078
        %v2080 = vpop.f32.mrb[0].mxu0
        %v2081 = vadd.f32 0.0, %v2080
        %v2082 = vpop.f32.mrb[0].mxu0
        %v2083 = vadd.f32 0.0, %v2082
        %2084 = vmatprep.mubr.bf16.mxu0 0
        %2085 = vmatmul.mubr.bf16.gmra.mrb[0].mxu0 %v1915
        %v2086 = vpop.f32.mrb[0].mxu0
        %v2087 = vadd.f32 0.0, %v2086
        %v2088 = vpop.f32.mrb[0].mxu0
        %v2089 = vadd.f32 0.0, %v2088
        %v2090 = vpop.f32.mrb[0].mxu0
        %v2091 = vadd.f32 0.0, %v2090
        %v2092 = vpop.f32.mrb[0].mxu0
        %v2093 = vadd.f32 0.0, %v2092
        %2094 = vmatprep.mubr.bf16.mxu0 0
        %2095 = vmatmul.mubr.bf16.gmra.mrb[0].mxu0 %v1918
        %v2096 = vpop.f32.mrb[0].mxu0
        %v2097 = vadd.f32 0.0, %v2096
        %v2098 = vpop.f32.mrb[0].mxu0
        %v2099 = vadd.f32 0.0, %v2098
        %v2100 = vpop.f32.mrb[0].mxu0
        %v2101 = vadd.f32 0.0, %v2100
        %v2102 = vpop.f32.mrb[0].mxu0
        %v2103 = vadd.f32 0.0, %v2102
        %2104 = vmatprep.mubr.bf16.mxu0 0
        %2105 = vmatmul.mubr.bf16.gmra.mrb[0].mxu0 %v1921
        %v2106 = vpop.f32.mrb[0].mxu0
        %v2107 = vadd.f32 0.0, %v2106
        %v2108 = vpop.f32.mrb[0].mxu0
        %v2109 = vadd.f32 0.0, %v2108
        %v2110 = vpop.f32.mrb[0].mxu0
        %v2111 = vadd.f32 0.0, %v2110
        %v2112 = vpop.f32.mrb[0].mxu0
        %v2113 = vadd.f32 0.0, %v2112
        %2114 = vmatprep.mubr.bf16.mxu0 0
        %2115 = vmatmul.mubr.bf16.gmra.mrb[0].mxu0 %v1924
        %v2116 = vpop.f32.mrb[0].mxu0
        %v2117 = vadd.f32 0.0, %v2116
        %v2118 = vpop.f32.mrb[0].mxu0
        %v2119 = vadd.f32 0.0, %v2118
        %v2120 = vpop.f32.mrb[0].mxu0
        %v2121 = vadd.f32 0.0, %v2120
        %v2122 = vpop.f32.mrb[0].mxu0
        %v2123 = vadd.f32 0.0, %v2122
        %2124 = vmatprep.mubr.bf16.mxu0 0
        %2125 = vmatmul.mubr.bf16.gmra.mrb[0].mxu0 %v1927
        %v2126 = vpop.f32.mrb[0].mxu0
        %v2127 = vadd.f32 0.0, %v2126
        %v2128 = vpop.f32.mrb[0].mxu0
        %v2129 = vadd.f32 0.0, %v2128
        %v2130 = vpop.f32.mrb[0].mxu0
        %v2131 = vadd.f32 0.0, %v2130
        %v2132 = vpop.f32.mrb[0].mxu0
        %v2133 = vadd.f32 0.0, %v2132
        %2134 = vmatprep.mubr.bf16.mxu0 0
        %2135 = vmatmul.mubr.bf16.gmra.mrb[0].mxu0 %v1930
        %v2136 = vpop.f32.mrb[0].mxu0
        %v2137 = vadd.f32 0.0, %v2136
        %v2138 = vpop.f32.mrb[0].mxu0
        %v2139 = vadd.f32 0.0, %v2138
        %v2140 = vpop.f32.mrb[0].mxu0
        %v2141 = vadd.f32 0.0, %v2140
        %v2142 = vpop.f32.mrb[0].mxu0
        %v2143 = vadd.f32 0.0, %v2142
        %2144 = vmatprep.mubr.bf16.mxu0 0
        %2145 = vmatmul.mubr.bf16.gmra.mrb[0].mxu0 %v1933
        %v2146 = vpop.f32.mrb[0].mxu0
        %v2147 = vadd.f32 0.0, %v2146
        %v2148 = vpop.f32.mrb[0].mxu0
        %v2149 = vadd.f32 0.0, %v2148
        %v2150 = vpop.f32.mrb[0].mxu0
        %v2151 = vadd.f32 0.0, %v2150
        %v2152 = vpop.f32.mrb[0].mxu0
        %v2153 = vadd.f32 0.0, %v2152
        %2154 = vmatprep.mubr.bf16.mxu0 0
        %2155 = vmatmul.mubr.bf16.gmra.mrb[0].mxu0 %v1936
        %v2156 = vpop.f32.mrb[0].mxu0
        %v2157 = vadd.f32 0.0, %v2156
        %v2158 = vpop.f32.mrb[0].mxu0
        %v2159 = vadd.f32 0.0, %v2158
        %v2160 = vpop.f32.mrb[0].mxu0
        %v2161 = vadd.f32 0.0, %v2160
        %v2162 = vpop.f32.mrb[0].mxu0
        %v2163 = vadd.f32 0.0, %v2162
        %2164 = vmatprep.mubr.bf16.mxu0 0
        %2165 = vmatmul.mubr.bf16.gmra.mrb[0].mxu0 %v1939
        %v2166 = vpop.f32.mrb[0].mxu0
        %v2167 = vadd.f32 0.0, %v2166
        %v2168 = vpop.f32.mrb[0].mxu0
        %v2169 = vadd.f32 0.0, %v2168
        %v2170 = vpop.f32.mrb[0].mxu0
        %v2171 = vadd.f32 0.0, %v2170
        %v2172 = vpop.f32.mrb[0].mxu0
        %v2173 = vadd.f32 0.0, %v2172
        %2174 = vmatprep.mubr.bf16.mxu0 0
        %2175 = vmatmul.mubr.bf16.gmra.mrb[0].mxu0 %v1942
        %v2176 = vpop.f32.mrb[0].mxu0
        %v2177 = vadd.f32 0.0, %v2176
        %v2178 = vpop.f32.mrb[0].mxu0
        %v2179 = vadd.f32 0.0, %v2178
        %v2180 = vpop.f32.mrb[0].mxu0
        %v2181 = vadd.f32 0.0, %v2180
        %v2182 = vpop.f32.mrb[0].mxu0
        %v2183 = vadd.f32 0.0, %v2182
        %2184 = vdwg.mxu0
        %v2185 = vmax.f32 %v2027, %v2029
        %2186 = vmax.xlane.f32.xlu0 %v2185
        %v2187 = vpop.xlane.xlu0 %2186
        %v2188 = vmax.f32 %v2031, %v2033
        %2189 = vmax.xlane.f32.xlu0 %v2188
        %v2190 = vpop.xlane.xlu0 %2189
        %v2191 = vmax.f32 %v2037, %v2039
        %2192 = vmax.xlane.f32.xlu0 %v2191
        %v2193 = vpop.xlane.xlu0 %2192
        %v2194 = vmax.f32 %v2041, %v2043
        %2195 = vmax.xlane.f32.xlu0 %v2194
        %v2196 = vpop.xlane.xlu0 %2195
        %v2197 = vmax.f32 %v2047, %v2049
        %2198 = vmax.xlane.f32.xlu0 %v2197
        %v2199 = vpop.xlane.xlu0 %2198
        %v2200 = vmax.f32 %v2051, %v2053
        %2201 = vmax.xlane.f32.xlu0 %v2200
        %v2202 = vpop.xlane.xlu0 %2201
        %v2203 = vmax.f32 %v2057, %v2059
        %2204 = vmax.xlane.f32.xlu0 %v2203
        %v2205 = vpop.xlane.xlu0 %2204
        %v2206 = vmax.f32 %v2061, %v2063
        %2207 = vmax.xlane.f32.xlu0 %v2206
        %v2208 = vpop.xlane.xlu0 %2207
        %v2209 = vmax.f32 %v2067, %v2069
        %2210 = vmax.xlane.f32.xlu0 %v2209
        %v2211 = vpop.xlane.xlu0 %2210
        %v2212 = vmax.f32 %v2071, %v2073
        %2213 = vmax.xlane.f32.xlu0 %v2212
        %v2214 = vpop.xlane.xlu0 %2213
        %v2215 = vmax.f32 %v2077, %v2079
        %2216 = vmax.xlane.f32.xlu0 %v2215
        %v2217 = vpop.xlane.xlu0 %2216
        %v2218 = vmax.f32 %v2081, %v2083
        %2219 = vmax.xlane.f32.xlu0 %v2218
        %v2220 = vpop.xlane.xlu0 %2219
        %v2221 = vmax.f32 %v2087, %v2089
        %2222 = vmax.xlane.f32.xlu0 %v2221
        %v2223 = vpop.xlane.xlu0 %2222
        %v2224 = vmax.f32 %v2091, %v2093
        %2225 = vmax.xlane.f32.xlu0 %v2224
        %v2226 = vpop.xlane.xlu0 %2225
        %v2227 = vmax.f32 %v2097, %v2099
        %2228 = vmax.xlane.f32.xlu0 %v2227
        %v2229 = vpop.xlane.xlu0 %2228
        %v2230 = vmax.f32 %v2101, %v2103
        %2231 = vmax.xlane.f32.xlu0 %v2230
        %v2232 = vpop.xlane.xlu0 %2231
        %v2233 = vmax.f32 %v2107, %v2109
        %2234 = vmax.xlane.f32.xlu0 %v2233
        %v2235 = vpop.xlane.xlu0 %2234
        %v2236 = vmax.f32 %v2111, %v2113
        %2237 = vmax.xlane.f32.xlu0 %v2236
        %v2238 = vpop.xlane.xlu0 %2237
        %v2239 = vmax.f32 %v2117, %v2119
        %2240 = vmax.xlane.f32.xlu0 %v2239
        %v2241 = vpop.xlane.xlu0 %2240
        %v2242 = vmax.f32 %v2121, %v2123
        %2243 = vmax.xlane.f32.xlu0 %v2242
        %v2244 = vpop.xlane.xlu0 %2243
        %v2245 = vmax.f32 %v2127, %v2129
        %2246 = vmax.xlane.f32.xlu0 %v2245
        %v2247 = vpop.xlane.xlu0 %2246
        %v2248 = vmax.f32 %v2131, %v2133
        %2249 = vmax.xlane.f32.xlu0 %v2248
        %v2250 = vpop.xlane.xlu0 %2249
        %v2251 = vmax.f32 %v2137, %v2139
        %2252 = vmax.xlane.f32.xlu0 %v2251
        %v2253 = vpop.xlane.xlu0 %2252
        %v2254 = vmax.f32 %v2141, %v2143
        %2255 = vmax.xlane.f32.xlu0 %v2254
        %v2256 = vpop.xlane.xlu0 %2255
        %v2257 = vmax.f32 %v2147, %v2149
        %2258 = vmax.xlane.f32.xlu0 %v2257
        %v2259 = vpop.xlane.xlu0 %2258
        %v2260 = vmax.f32 %v2151, %v2153
        %2261 = vmax.xlane.f32.xlu0 %v2260
        %v2262 = vpop.xlane.xlu0 %2261
        %v2263 = vmax.f32 %v2157, %v2159
        %2264 = vmax.xlane.f32.xlu0 %v2263
        %v2265 = vpop.xlane.xlu0 %2264
        %v2266 = vmax.f32 %v2161, %v2163
        %2267 = vmax.xlane.f32.xlu0 %v2266
        %v2268 = vpop.xlane.xlu0 %2267
        %v2269 = vmax.f32 %v2167, %v2169
        %2270 = vmax.xlane.f32.xlu0 %v2269
        %v2271 = vpop.xlane.xlu0 %2270
        %v2272 = vmax.f32 %v2171, %v2173
        %2273 = vmax.xlane.f32.xlu0 %v2272
        %v2274 = vpop.xlane.xlu0 %2273
        %v2275 = vmax.f32 %v2177, %v2179
        %2276 = vmax.xlane.f32.xlu0 %v2275
        %v2277 = vpop.xlane.xlu0 %2276
        %v2278 = vmax.f32 %v2181, %v2183
        %2279 = vmax.xlane.f32.xlu0 %v2278
        %v2280 = vpop.xlane.xlu0 %2279
        %v2281 = vsub.f32 %v2027, %v2187
        %v2282 = vsub.f32 %v2029, %v2187
        %v2283 = vsub.f32 %v2031, %v2190
        %v2284 = vsub.f32 %v2033, %v2190
        %v2285 = vsub.f32 %v2037, %v2193
        %v2286 = vsub.f32 %v2039, %v2193
        %v2287 = vsub.f32 %v2041, %v2196
        %v2288 = vsub.f32 %v2043, %v2196
        %v2289 = vsub.f32 %v2047, %v2199
        %v2290 = vsub.f32 %v2049, %v2199
        %v2291 = vsub.f32 %v2051, %v2202
        %v2292 = vsub.f32 %v2053, %v2202
        %v2293 = vsub.f32 %v2057, %v2205
        %v2294 = vsub.f32 %v2059, %v2205
        %v2295 = vsub.f32 %v2061, %v2208
        %v2296 = vsub.f32 %v2063, %v2208
        %v2297 = vsub.f32 %v2067, %v2211
        %v2298 = vsub.f32 %v2069, %v2211
        %v2299 = vsub.f32 %v2071, %v2214
        %v2300 = vsub.f32 %v2073, %v2214
        %v2301 = vsub.f32 %v2077, %v2217
        %v2302 = vsub.f32 %v2079, %v2217
        %v2303 = vsub.f32 %v2081, %v2220
        %v2304 = vsub.f32 %v2083, %v2220
        %v2305 = vsub.f32 %v2087, %v2223
        %v2306 = vsub.f32 %v2089, %v2223
        %v2307 = vsub.f32 %v2091, %v2226
        %v2308 = vsub.f32 %v2093, %v2226
        %v2309 = vsub.f32 %v2097, %v2229
        %v2310 = vsub.f32 %v2099, %v2229
        %v2311 = vsub.f32 %v2101, %v2232
        %v2312 = vsub.f32 %v2103, %v2232
        %v2313 = vsub.f32 %v2107, %v2235
        %v2314 = vsub.f32 %v2109, %v2235
        %v2315 = vsub.f32 %v2111, %v2238
        %v2316 = vsub.f32 %v2113, %v2238
        %v2317 = vsub.f32 %v2117, %v2241
        %v2318 = vsub.f32 %v2119, %v2241
        %v2319 = vsub.f32 %v2121, %v2244
        %v2320 = vsub.f32 %v2123, %v2244
        %v2321 = vsub.f32 %v2127, %v2247
        %v2322 = vsub.f32 %v2129, %v2247
        %v2323 = vsub.f32 %v2131, %v2250
        %v2324 = vsub.f32 %v2133, %v2250
        %v2325 = vsub.f32 %v2137, %v2253
        %v2326 = vsub.f32 %v2139, %v2253
        %v2327 = vsub.f32 %v2141, %v2256
        %v2328 = vsub.f32 %v2143, %v2256
        %v2329 = vsub.f32 %v2147, %v2259
        %v2330 = vsub.f32 %v2149, %v2259
        %v2331 = vsub.f32 %v2151, %v2262
        %v2332 = vsub.f32 %v2153, %v2262
        %v2333 = vsub.f32 %v2157, %v2265
        %v2334 = vsub.f32 %v2159, %v2265
        %v2335 = vsub.f32 %v2161, %v2268
        %v2336 = vsub.f32 %v2163, %v2268
        %v2337 = vsub.f32 %v2167, %v2271
        %v2338 = vsub.f32 %v2169, %v2271
        %v2339 = vsub.f32 %v2171, %v2274
        %v2340 = vsub.f32 %v2173, %v2274
        %v2341 = vsub.f32 %v2177, %v2277
        %v2342 = vsub.f32 %v2179, %v2277
        %v2343 = vsub.f32 %v2181, %v2280
        %v2344 = vsub.f32 %v2183, %v2280
        %v2345 = vmul.f32 %v2281, 1.442695
        %v2346 = vpow.pop %v2345
        %v2347 = vmul.f32 %v2282, 1.442695
        %v2348 = vpow.pop %v2347
        %v2349 = vmul.f32 %v2283, 1.442695
        %v2350 = vpow.pop %v2349
        %v2351 = vmul.f32 %v2284, 1.442695
        %v2352 = vpow.pop %v2351
        %v2353 = vmul.f32 %v2285, 1.442695
        %v2354 = vpow.pop %v2353
        %v2355 = vmul.f32 %v2286, 1.442695
        %v2356 = vpow.pop %v2355
        %v2357 = vmul.f32 %v2287, 1.442695
        %v2358 = vpow.pop %v2357
        %v2359 = vmul.f32 %v2288, 1.442695
        %v2360 = vpow.pop %v2359
        %v2361 = vmul.f32 %v2289, 1.442695
        %v2362 = vpow.pop %v2361
        %v2363 = vmul.f32 %v2290, 1.442695
        %v2364 = vpow.pop %v2363
        %v2365 = vmul.f32 %v2291, 1.442695
        %v2366 = vpow.pop %v2365
        %v2367 = vmul.f32 %v2292, 1.442695
        %v2368 = vpow.pop %v2367
        %v2369 = vmul.f32 %v2293, 1.442695
        %v2370 = vpow.pop %v2369
        %v2371 = vmul.f32 %v2294, 1.442695
        %v2372 = vpow.pop %v2371
        %v2373 = vmul.f32 %v2295, 1.442695
        %v2374 = vpow.pop %v2373
        %v2375 = vmul.f32 %v2296, 1.442695
        %v2376 = vpow.pop %v2375
        %v2377 = vmul.f32 %v2297, 1.442695
        %v2378 = vpow.pop %v2377
        %v2379 = vmul.f32 %v2298, 1.442695
        %v2380 = vpow.pop %v2379
        %v2381 = vmul.f32 %v2299, 1.442695
        %v2382 = vpow.pop %v2381
        %v2383 = vmul.f32 %v2300, 1.442695
        %v2384 = vpow.pop %v2383
        %v2385 = vmul.f32 %v2301, 1.442695
        %v2386 = vpow.pop %v2385
        %v2387 = vmul.f32 %v2302, 1.442695
        %v2388 = vpow.pop %v2387
        %v2389 = vmul.f32 %v2303, 1.442695
        %v2390 = vpow.pop %v2389
        %v2391 = vmul.f32 %v2304, 1.442695
        %v2392 = vpow.pop %v2391
        %v2393 = vmul.f32 %v2305, 1.442695
        %v2394 = vpow.pop %v2393
        %v2395 = vmul.f32 %v2306, 1.442695
        %v2396 = vpow.pop %v2395
        %v2397 = vmul.f32 %v2307, 1.442695
        %v2398 = vpow.pop %v2397
        %v2399 = vmul.f32 %v2308, 1.442695
        %v2400 = vpow.pop %v2399
        %v2401 = vmul.f32 %v2309, 1.442695
        %v2402 = vpow.pop %v2401
        %v2403 = vmul.f32 %v2310, 1.442695
        %v2404 = vpow.pop %v2403
        %v2405 = vmul.f32 %v2311, 1.442695
        %v2406 = vpow.pop %v2405
        %v2407 = vmul.f32 %v2312, 1.442695
        %v2408 = vpow.pop %v2407
        %v2409 = vmul.f32 %v2313, 1.442695
        %v2410 = vpow.pop %v2409
        %v2411 = vmul.f32 %v2314, 1.442695
        %v2412 = vpow.pop %v2411
        %v2413 = vmul.f32 %v2315, 1.442695
        %v2414 = vpow.pop %v2413
        %v2415 = vmul.f32 %v2316, 1.442695
        %v2416 = vpow.pop %v2415
        %v2417 = vmul.f32 %v2317, 1.442695
        %v2418 = vpow.pop %v2417
        %v2419 = vmul.f32 %v2318, 1.442695
        %v2420 = vpow.pop %v2419
        %v2421 = vmul.f32 %v2319, 1.442695
        %v2422 = vpow.pop %v2421
        %v2423 = vmul.f32 %v2320, 1.442695
        %v2424 = vpow.pop %v2423
        %v2425 = vmul.f32 %v2321, 1.442695
        %v2426 = vpow.pop %v2425
        %v2427 = vmul.f32 %v2322, 1.442695
        %v2428 = vpow.pop %v2427
        %v2429 = vmul.f32 %v2323, 1.442695
        %v2430 = vpow.pop %v2429
        %v2431 = vmul.f32 %v2324, 1.442695
        %v2432 = vpow.pop %v2431
        %v2433 = vmul.f32 %v2325, 1.442695
        %v2434 = vpow.pop %v2433
        %v2435 = vmul.f32 %v2326, 1.442695
        %v2436 = vpow.pop %v2435
        %v2437 = vmul.f32 %v2327, 1.442695
        %v2438 = vpow.pop %v2437
        %v2439 = vmul.f32 %v2328, 1.442695
        %v2440 = vpow.pop %v2439
        %v2441 = vmul.f32 %v2329, 1.442695
        %v2442 = vpow.pop %v2441
        %v2443 = vmul.f32 %v2330, 1.442695
        %v2444 = vpow.pop %v2443
        %v2445 = vmul.f32 %v2331, 1.442695
        %v2446 = vpow.pop %v2445
        %v2447 = vmul.f32 %v2332, 1.442695
        %v2448 = vpow.pop %v2447
        %v2449 = vmul.f32 %v2333, 1.442695
        %v2450 = vpow.pop %v2449
        %v2451 = vmul.f32 %v2334, 1.442695
        %v2452 = vpow.pop %v2451
        %v2453 = vmul.f32 %v2335, 1.442695
        %v2454 = vpow.pop %v2453
        %v2455 = vmul.f32 %v2336, 1.442695
        %v2456 = vpow.pop %v2455
        %v2457 = vmul.f32 %v2337, 1.442695
        %v2458 = vpow.pop %v2457
        %v2459 = vmul.f32 %v2338, 1.442695
        %v2460 = vpow.pop %v2459
        %v2461 = vmul.f32 %v2339, 1.442695
        %v2462 = vpow.pop %v2461
        %v2463 = vmul.f32 %v2340, 1.442695
        %v2464 = vpow.pop %v2463
        %v2465 = vmul.f32 %v2341, 1.442695
        %v2466 = vpow.pop %v2465
        %v2467 = vmul.f32 %v2342, 1.442695
        %v2468 = vpow.pop %v2467
        %v2469 = vmul.f32 %v2343, 1.442695
        %v2470 = vpow.pop %v2469
        %v2471 = vmul.f32 %v2344, 1.442695
        %v2472 = vpow.pop %v2471
        %v2473 = vadd.f32 %v2346, %v2348
        %2474 = vadd.xlane.f32.xlu0 %v2473
        %v2475 = vpop.xlane.xlu0 %2474
        %v2476 = vadd.f32 %v2350, %v2352
        %2477 = vadd.xlane.f32.xlu0 %v2476
        %v2478 = vpop.xlane.xlu0 %2477
        %v2479 = vadd.f32 %v2354, %v2356
        %2480 = vadd.xlane.f32.xlu0 %v2479
        %v2481 = vpop.xlane.xlu0 %2480
        %v2482 = vadd.f32 %v2358, %v2360
        %2483 = vadd.xlane.f32.xlu0 %v2482
        %v2484 = vpop.xlane.xlu0 %2483
        %v2485 = vadd.f32 %v2362, %v2364
        %2486 = vadd.xlane.f32.xlu0 %v2485
        %v2487 = vpop.xlane.xlu0 %2486
        %v2488 = vadd.f32 %v2366, %v2368
        %2489 = vadd.xlane.f32.xlu0 %v2488
        %v2490 = vpop.xlane.xlu0 %2489
        %v2491 = vadd.f32 %v2370, %v2372
        %2492 = vadd.xlane.f32.xlu0 %v2491
        %v2493 = vpop.xlane.xlu0 %2492
        %v2494 = vadd.f32 %v2374, %v2376
        %2495 = vadd.xlane.f32.xlu0 %v2494
        %v2496 = vpop.xlane.xlu0 %2495
        %v2497 = vadd.f32 %v2378, %v2380
        %2498 = vadd.xlane.f32.xlu0 %v2497
        %v2499 = vpop.xlane.xlu0 %2498
        %v2500 = vadd.f32 %v2382, %v2384
        %2501 = vadd.xlane.f32.xlu0 %v2500
        %v2502 = vpop.xlane.xlu0 %2501
        %v2503 = vadd.f32 %v2386, %v2388
        %2504 = vadd.xlane.f32.xlu0 %v2503
        %v2505 = vpop.xlane.xlu0 %2504
        %v2506 = vadd.f32 %v2390, %v2392
        %2507 = vadd.xlane.f32.xlu0 %v2506
        %v2508 = vpop.xlane.xlu0 %2507
        %v2509 = vadd.f32 %v2394, %v2396
        %2510 = vadd.xlane.f32.xlu0 %v2509
        %v2511 = vpop.xlane.xlu0 %2510
        %v2512 = vadd.f32 %v2398, %v2400
        %2513 = vadd.xlane.f32.xlu0 %v2512
        %v2514 = vpop.xlane.xlu0 %2513
        %v2515 = vadd.f32 %v2402, %v2404
        %2516 = vadd.xlane.f32.xlu0 %v2515
        %v2517 = vpop.xlane.xlu0 %2516
        %v2518 = vadd.f32 %v2406, %v2408
        %2519 = vadd.xlane.f32.xlu0 %v2518
        %v2520 = vpop.xlane.xlu0 %2519
        %v2521 = vadd.f32 %v2410, %v2412
        %2522 = vadd.xlane.f32.xlu0 %v2521
        %v2523 = vpop.xlane.xlu0 %2522
        %v2524 = vadd.f32 %v2414, %v2416
        %2525 = vadd.xlane.f32.xlu0 %v2524
        %v2526 = vpop.xlane.xlu0 %2525
        %v2527 = vadd.f32 %v2418, %v2420
        %2528 = vadd.xlane.f32.xlu0 %v2527
        %v2529 = vpop.xlane.xlu0 %2528
        %v2530 = vadd.f32 %v2422, %v2424
        %2531 = vadd.xlane.f32.xlu0 %v2530
        %v2532 = vpop.xlane.xlu0 %2531
        %v2533 = vadd.f32 %v2426, %v2428
        %2534 = vadd.xlane.f32.xlu0 %v2533
        %v2535 = vpop.xlane.xlu0 %2534
        %v2536 = vadd.f32 %v2430, %v2432
        %2537 = vadd.xlane.f32.xlu0 %v2536
        %v2538 = vpop.xlane.xlu0 %2537
        %v2539 = vadd.f32 %v2434, %v2436
        %2540 = vadd.xlane.f32.xlu0 %v2539
        %v2541 = vpop.xlane.xlu0 %2540
        %v2542 = vadd.f32 %v2438, %v2440
        %2543 = vadd.xlane.f32.xlu0 %v2542
        %v2544 = vpop.xlane.xlu0 %2543
        %v2545 = vadd.f32 %v2442, %v2444
        %2546 = vadd.xlane.f32.xlu0 %v2545
        %v2547 = vpop.xlane.xlu0 %2546
        %v2548 = vadd.f32 %v2446, %v2448
        %2549 = vadd.xlane.f32.xlu0 %v2548
        %v2550 = vpop.xlane.xlu0 %2549
        %v2551 = vadd.f32 %v2450, %v2452
        %2552 = vadd.xlane.f32.xlu0 %v2551
        %v2553 = vpop.xlane.xlu0 %2552
        %v2554 = vadd.f32 %v2454, %v2456
        %2555 = vadd.xlane.f32.xlu0 %v2554
        %v2556 = vpop.xlane.xlu0 %2555
        %v2557 = vadd.f32 %v2458, %v2460
        %2558 = vadd.xlane.f32.xlu0 %v2557
        %v2559 = vpop.xlane.xlu0 %2558
        %v2560 = vadd.f32 %v2462, %v2464
        %2561 = vadd.xlane.f32.xlu0 %v2560
        %v2562 = vpop.xlane.xlu0 %2561
        %v2563 = vadd.f32 %v2466, %v2468
        %2564 = vadd.xlane.f32.xlu0 %v2563
        %v2565 = vpop.xlane.xlu0 %2564
        %v2566 = vadd.f32 %v2470, %v2472
        %2567 = vadd.xlane.f32.xlu0 %v2566
        %v2568 = vpop.xlane.xlu0 %2567
        %v2569 = vrcp.pop %v2475
        %v2570 = vrcp.pop %v2478
        %v2571 = vrcp.pop %v2481
        %v2572 = vrcp.pop %v2484
        %v2573 = vrcp.pop %v2487
        %v2574 = vrcp.pop %v2490
        %v2575 = vrcp.pop %v2493
        %v2576 = vrcp.pop %v2496
        %v2577 = vrcp.pop %v2499
        %v2578 = vrcp.pop %v2502
        %v2579 = vrcp.pop %v2505
        %v2580 = vrcp.pop %v2508
        %v2581 = vrcp.pop %v2511
        %v2582 = vrcp.pop %v2514
        %v2583 = vrcp.pop %v2517
        %v2584 = vrcp.pop %v2520
        %v2585 = vrcp.pop %v2523
        %v2586 = vrcp.pop %v2526
        %v2587 = vrcp.pop %v2529
        %v2588 = vrcp.pop %v2532
        %v2589 = vrcp.pop %v2535
        %v2590 = vrcp.pop %v2538
        %v2591 = vrcp.pop %v2541
        %v2592 = vrcp.pop %v2544
        %v2593 = vrcp.pop %v2547
        %v2594 = vrcp.pop %v2550
        %v2595 = vrcp.pop %v2553
        %v2596 = vrcp.pop %v2556
        %v2597 = vrcp.pop %v2559
        %v2598 = vrcp.pop %v2562
        %v2599 = vrcp.pop %v2565
        %v2600 = vrcp.pop %v2568
        %v2601 = vmul.f32 %v2346, %v2569
        %v2602 = vmul.f32 %v2348, %v2569
        %v2603 = vmul.f32 %v2350, %v2570
        %v2604 = vmul.f32 %v2352, %v2570
        %v2605 = vmul.f32 %v2354, %v2571
        %v2606 = vmul.f32 %v2356, %v2571
        %v2607 = vmul.f32 %v2358, %v2572
        %v2608 = vmul.f32 %v2360, %v2572
        %v2609 = vmul.f32 %v2362, %v2573
        %v2610 = vmul.f32 %v2364, %v2573
        %v2611 = vmul.f32 %v2366, %v2574
        %v2612 = vmul.f32 %v2368, %v2574
        %v2613 = vmul.f32 %v2370, %v2575
        %v2614 = vmul.f32 %v2372, %v2575
        %v2615 = vmul.f32 %v2374, %v2576
        %v2616 = vmul.f32 %v2376, %v2576
        %v2617 = vmul.f32 %v2378, %v2577
        %v2618 = vmul.f32 %v2380, %v2577
        %v2619 = vmul.f32 %v2382, %v2578
        %v2620 = vmul.f32 %v2384, %v2578
        %v2621 = vmul.f32 %v2386, %v2579
        %v2622 = vmul.f32 %v2388, %v2579
        %v2623 = vmul.f32 %v2390, %v2580
        %v2624 = vmul.f32 %v2392, %v2580
        %v2625 = vmul.f32 %v2394, %v2581
        %v2626 = vmul.f32 %v2396, %v2581
        %v2627 = vmul.f32 %v2398, %v2582
        %v2628 = vmul.f32 %v2400, %v2582
        %v2629 = vmul.f32 %v2402, %v2583
        %v2630 = vmul.f32 %v2404, %v2583
        %v2631 = vmul.f32 %v2406, %v2584
        %v2632 = vmul.f32 %v2408, %v2584
        %v2633 = vmul.f32 %v2410, %v2585
        %v2634 = vmul.f32 %v2412, %v2585
        %v2635 = vmul.f32 %v2414, %v2586
        %v2636 = vmul.f32 %v2416, %v2586
        %v2637 = vmul.f32 %v2418, %v2587
        %v2638 = vmul.f32 %v2420, %v2587
        %v2639 = vmul.f32 %v2422, %v2588
        %v2640 = vmul.f32 %v2424, %v2588
        %v2641 = vmul.f32 %v2426, %v2589
        %v2642 = vmul.f32 %v2428, %v2589
        %v2643 = vmul.f32 %v2430, %v2590
        %v2644 = vmul.f32 %v2432, %v2590
        %v2645 = vmul.f32 %v2434, %v2591
        %v2646 = vmul.f32 %v2436, %v2591
        %v2647 = vmul.f32 %v2438, %v2592
        %v2648 = vmul.f32 %v2440, %v2592
        %v2649 = vmul.f32 %v2442, %v2593
        %v2650 = vmul.f32 %v2444, %v2593
        %v2651 = vmul.f32 %v2446, %v2594
        %v2652 = vmul.f32 %v2448, %v2594
        %v2653 = vmul.f32 %v2450, %v2595
        %v2654 = vmul.f32 %v2452, %v2595
        %v2655 = vmul.f32 %v2454, %v2596
        %v2656 = vmul.f32 %v2456, %v2596
        %v2657 = vmul.f32 %v2458, %v2597
        %v2658 = vmul.f32 %v2460, %v2597
        %v2659 = vmul.f32 %v2462, %v2598
        %v2660 = vmul.f32 %v2464, %v2598
        %v2661 = vmul.f32 %v2466, %v2599
        %v2662 = vmul.f32 %v2468, %v2599
        %v2663 = vmul.f32 %v2470, %v2600
        %v2664 = vmul.f32 %v2472, %v2600
        %v2665 = vpack.c.bf16 %v2603, %v2601
        %v2666 = vpack.c.bf16 %v2604, %v2602
        %v2667 = vpack.c.bf16 %v2607, %v2605
        %v2668 = vpack.c.bf16 %v2608, %v2606
        %v2669 = vpack.c.bf16 %v2611, %v2609
        %v2670 = vpack.c.bf16 %v2612, %v2610
        %v2671 = vpack.c.bf16 %v2615, %v2613
        %v2672 = vpack.c.bf16 %v2616, %v2614
        %v2673 = vpack.c.bf16 %v2619, %v2617
        %v2674 = vpack.c.bf16 %v2620, %v2618
        %v2675 = vpack.c.bf16 %v2623, %v2621
        %v2676 = vpack.c.bf16 %v2624, %v2622
        %v2677 = vpack.c.bf16 %v2627, %v2625
        %v2678 = vpack.c.bf16 %v2628, %v2626
        %v2679 = vpack.c.bf16 %v2631, %v2629
        %v2680 = vpack.c.bf16 %v2632, %v2630
        %v2681 = vpack.c.bf16 %v2635, %v2633
        %v2682 = vpack.c.bf16 %v2636, %v2634
        %v2683 = vpack.c.bf16 %v2639, %v2637
        %v2684 = vpack.c.bf16 %v2640, %v2638
        %v2685 = vpack.c.bf16 %v2643, %v2641
        %v2686 = vpack.c.bf16 %v2644, %v2642
        %v2687 = vpack.c.bf16 %v2647, %v2645
        %v2688 = vpack.c.bf16 %v2648, %v2646
        %v2689 = vpack.c.bf16 %v2651, %v2649
        %v2690 = vpack.c.bf16 %v2652, %v2650
        %v2691 = vpack.c.bf16 %v2655, %v2653
        %v2692 = vpack.c.bf16 %v2656, %v2654
        %v2693 = vpack.c.bf16 %v2659, %v2657
        %v2694 = vpack.c.bf16 %v2660, %v2658
        %v2695 = vpack.c.bf16 %v2663, %v2661
        %v2696 = vpack.c.bf16 %v2664, %v2662
        %v2697 = vpack.c.bf16 %v1740, %v1737
        %v2698 = vpack.c.bf16 %v1748, %v1745
        %v2699 = vpack.c.bf16 %v1756, %v1753
        %v2700 = vpack.c.bf16 %v1764, %v1761
        %v2701 = vpack.c.bf16 %v1772, %v1769
        %v2702 = vpack.c.bf16 %v1780, %v1777
        %v2703 = vpack.c.bf16 %v1788, %v1785
        %v2704 = vpack.c.bf16 %v1796, %v1793
        %v2705 = vpack.c.bf16 %v1804, %v1801
        %v2706 = vpack.c.bf16 %v1812, %v1809
        %v2707 = vpack.c.bf16 %v1820, %v1817
        %v2708 = vpack.c.bf16 %v1828, %v1825
        %v2709 = vpack.c.bf16 %v1836, %v1833
        %v2710 = vpack.c.bf16 %v1844, %v1841
        %v2711 = vpack.c.bf16 %v1852, %v1849
        %v2712 = vpack.c.bf16 %v1860, %v1857
        %2713 = vmatprep.subr.bf16.mxu0 0
        %2714 = vmatpush1.bf16.msra.mxu0 %v2697
        %2715 = vmatprep.subr.bf16.mxu0 0
        %2716 = vmatpush1.bf16.msra.mxu0 %v2698
        %2717 = vmatprep.subr.bf16.mxu0 0
        %2718 = vmatpush1.bf16.msra.mxu0 %v2699
        %2719 = vmatprep.subr.bf16.mxu0 0
        %2720 = vmatpush1.bf16.msra.mxu0 %v2700
        %2721 = vmatprep.subr.bf16.mxu0 0
        %2722 = vmatpush1.bf16.msra.mxu0 %v2701
        %2723 = vmatprep.subr.bf16.mxu0 0
        %2724 = vmatpush1.bf16.msra.mxu0 %v2702
        %2725 = vmatprep.subr.bf16.mxu0 0
        %2726 = vmatpush1.bf16.msra.mxu0 %v2703
        %2727 = vmatprep.subr.bf16.mxu0 0
        %2728 = vmatpush1.bf16.msra.mxu0 %v2704
        %2729 = vmatprep.subr.bf16.mxu0 0
        %2730 = vmatpush1.bf16.msra.mxu0 %v2705
        %2731 = vmatprep.subr.bf16.mxu0 0
        %2732 = vmatpush1.bf16.msra.mxu0 %v2706
        %2733 = vmatprep.subr.bf16.mxu0 0
        %2734 = vmatpush1.bf16.msra.mxu0 %v2707
        %2735 = vmatprep.subr.bf16.mxu0 0
        %2736 = vmatpush1.bf16.msra.mxu0 %v2708
        %2737 = vmatprep.subr.bf16.mxu0 0
        %2738 = vmatpush1.bf16.msra.mxu0 %v2709
        %2739 = vmatprep.subr.bf16.mxu0 0
        %2740 = vmatpush1.bf16.msra.mxu0 %v2710
        %2741 = vmatprep.subr.bf16.mxu0 0
        %2742 = vmatpush1.bf16.msra.mxu0 %v2711
        %2743 = vmatprep.subr.bf16.mxu0 0
        %2744 = vmatpush1.bf16.msra.mxu0 %v2712
        %2745 = vmatprep.mubr.bf16.mxu0 %v2666
        %2746 = vmatmul.mubr.bf16.gmra.mrb[0].mxu0 %v2665
        %v2747 = vpop.f32.mrb[0].mxu0
        %v2748 = vadd.f32 0.0, %v2747
        %v2749 = vpop.f32.mrb[0].mxu0
        %v2750 = vpop.f32.mrb[0].mxu0
        %v2751 = vadd.f32 0.0, %v2750
        %v2752 = vpop.f32.mrb[0].mxu0
        %2753 = vmatprep.mubr.bf16.mxu0 %v2668
        %2754 = vmatmul.mubr.bf16.gmra.mrb[0].mxu0 %v2667
        %v2755 = vpop.f32.mrb[0].mxu0
        %v2756 = vadd.f32 0.0, %v2755
        %v2757 = vpop.f32.mrb[0].mxu0
        %v2758 = vpop.f32.mrb[0].mxu0
        %v2759 = vadd.f32 0.0, %v2758
        %v2760 = vpop.f32.mrb[0].mxu0
        %2761 = vmatprep.mubr.bf16.mxu0 %v2670
        %2762 = vmatmul.mubr.bf16.gmra.mrb[0].mxu0 %v2669
        %v2763 = vpop.f32.mrb[0].mxu0
        %v2764 = vadd.f32 0.0, %v2763
        %v2765 = vpop.f32.mrb[0].mxu0
        %v2766 = vpop.f32.mrb[0].mxu0
        %v2767 = vadd.f32 0.0, %v2766
        %v2768 = vpop.f32.mrb[0].mxu0
        %2769 = vmatprep.mubr.bf16.mxu0 %v2672
        %2770 = vmatmul.mubr.bf16.gmra.mrb[0].mxu0 %v2671
        %v2771 = vpop.f32.mrb[0].mxu0
        %v2772 = vadd.f32 0.0, %v2771
        %v2773 = vpop.f32.mrb[0].mxu0
        %v2774 = vpop.f32.mrb[0].mxu0
        %v2775 = vadd.f32 0.0, %v2774
        %v2776 = vpop.f32.mrb[0].mxu0
        %2777 = vmatprep.mubr.bf16.mxu0 %v2674
        %2778 = vmatmul.mubr.bf16.gmra.mrb[0].mxu0 %v2673
        %v2779 = vpop.f32.mrb[0].mxu0
        %v2780 = vadd.f32 0.0, %v2779
        %v2781 = vpop.f32.mrb[0].mxu0
        %v2782 = vpop.f32.mrb[0].mxu0
        %v2783 = vadd.f32 0.0, %v2782
        %v2784 = vpop.f32.mrb[0].mxu0
        %2785 = vmatprep.mubr.bf16.mxu0 %v2676
        %2786 = vmatmul.mubr.bf16.gmra.mrb[0].mxu0 %v2675
        %v2787 = vpop.f32.mrb[0].mxu0
        %v2788 = vadd.f32 0.0, %v2787
        %v2789 = vpop.f32.mrb[0].mxu0
        %v2790 = vpop.f32.mrb[0].mxu0
        %v2791 = vadd.f32 0.0, %v2790
        %v2792 = vpop.f32.mrb[0].mxu0
        %2793 = vmatprep.mubr.bf16.mxu0 %v2678
        %2794 = vmatmul.mubr.bf16.gmra.mrb[0].mxu0 %v2677
        %v2795 = vpop.f32.mrb[0].mxu0
        %v2796 = vadd.f32 0.0, %v2795
        %v2797 = vpop.f32.mrb[0].mxu0
        %v2798 = vpop.f32.mrb[0].mxu0
        %v2799 = vadd.f32 0.0, %v2798
        %v2800 = vpop.f32.mrb[0].mxu0
        %2801 = vmatprep.mubr.bf16.mxu0 %v2680
        %2802 = vmatmul.mubr.bf16.gmra.mrb[0].mxu0 %v2679
        %v2803 = vpop.f32.mrb[0].mxu0
        %v2804 = vadd.f32 0.0, %v2803
        %v2805 = vpop.f32.mrb[0].mxu0
        %v2806 = vpop.f32.mrb[0].mxu0
        %v2807 = vadd.f32 0.0, %v2806
        %v2808 = vpop.f32.mrb[0].mxu0
        %2809 = vmatprep.mubr.bf16.mxu0 %v2682
        %2810 = vmatmul.mubr.bf16.gmra.mrb[0].mxu0 %v2681
        %v2811 = vpop.f32.mrb[0].mxu0
        %v2812 = vadd.f32 0.0, %v2811
        %v2813 = vpop.f32.mrb[0].mxu0
        %v2814 = vpop.f32.mrb[0].mxu0
        %v2815 = vadd.f32 0.0, %v2814
        %v2816 = vpop.f32.mrb[0].mxu0
        %2817 = vmatprep.mubr.bf16.mxu0 %v2684
        %2818 = vmatmul.mubr.bf16.gmra.mrb[0].mxu0 %v2683
        %v2819 = vpop.f32.mrb[0].mxu0
        %v2820 = vadd.f32 0.0, %v2819
        %v2821 = vpop.f32.mrb[0].mxu0
        %v2822 = vpop.f32.mrb[0].mxu0
        %v2823 = vadd.f32 0.0, %v2822
        %v2824 = vpop.f32.mrb[0].mxu0
        %2825 = vmatprep.mubr.bf16.mxu0 %v2686
        %2826 = vmatmul.mubr.bf16.gmra.mrb[0].mxu0 %v2685
        %v2827 = vpop.f32.mrb[0].mxu0
        %v2828 = vadd.f32 0.0, %v2827
        %v2829 = vpop.f32.mrb[0].mxu0
        %v2830 = vpop.f32.mrb[0].mxu0
        %v2831 = vadd.f32 0.0, %v2830
        %v2832 = vpop.f32.mrb[0].mxu0
        %2833 = vmatprep.mubr.bf16.mxu0 %v2688
        %2834 = vmatmul.mubr.bf16.gmra.mrb[0].mxu0 %v2687
        %v2835 = vpop.f32.mrb[0].mxu0
        %v2836 = vadd.f32 0.0, %v2835
        %v2837 = vpop.f32.mrb[0].mxu0
        %v2838 = vpop.f32.mrb[0].mxu0
        %v2839 = vadd.f32 0.0, %v2838
        %v2840 = vpop.f32.mrb[0].mxu0
        %2841 = vmatprep.mubr.bf16.mxu0 %v2690
        %2842 = vmatmul.mubr.bf16.gmra.mrb[0].mxu0 %v2689
        %v2843 = vpop.f32.mrb[0].mxu0
        %v2844 = vadd.f32 0.0, %v2843
        %v2845 = vpop.f32.mrb[0].mxu0
        %v2846 = vpop.f32.mrb[0].mxu0
        %v2847 = vadd.f32 0.0, %v2846
        %v2848 = vpop.f32.mrb[0].mxu0
        %2849 = vmatprep.mubr.bf16.mxu0 %v2692
        %2850 = vmatmul.mubr.bf16.gmra.mrb[0].mxu0 %v2691
        %v2851 = vpop.f32.mrb[0].mxu0
        %v2852 = vadd.f32 0.0, %v2851
        %v2853 = vpop.f32.mrb[0].mxu0
        %v2854 = vpop.f32.mrb[0].mxu0
        %v2855 = vadd.f32 0.0, %v2854
        %v2856 = vpop.f32.mrb[0].mxu0
        %2857 = vmatprep.mubr.bf16.mxu0 %v2694
        %2858 = vmatmul.mubr.bf16.gmra.mrb[0].mxu0 %v2693
        %v2859 = vpop.f32.mrb[0].mxu0
        %v2860 = vadd.f32 0.0, %v2859
        %v2861 = vpop.f32.mrb[0].mxu0
        %v2862 = vpop.f32.mrb[0].mxu0
        %v2863 = vadd.f32 0.0, %v2862
        %v2864 = vpop.f32.mrb[0].mxu0
        %2865 = vmatprep.mubr.bf16.mxu0 %v2696
        %2866 = vmatmul.mubr.bf16.gmra.mrb[0].mxu0 %v2695
        %v2867 = vpop.f32.mrb[0].mxu0
        %v2868 = vadd.f32 0.0, %v2867
        %v2869 = vpop.f32.mrb[0].mxu0
        %v2870 = vpop.f32.mrb[0].mxu0
        %v2871 = vadd.f32 0.0, %v2870
        %v2872 = vpop.f32.mrb[0].mxu0
        %2873 = vdwg.mxu0
        %v2874 = vld [vmem:[#allocation3] sm:$0xff]
        %v2875 = vld [vmem:[#allocation3 + $0x8] sm:$0xff]
        %v2876 = vld [vmem:[#allocation3 + $0x10] sm:$0xff]
        %v2877 = vld [vmem:[#allocation3 + $0x18] sm:$0xff]
        %v2878 = vld [vmem:[#allocation3 + $0x20] sm:$0xff]
        %v2879 = vld [vmem:[#allocation3 + $0x28] sm:$0xff]
        %v2880 = vld [vmem:[#allocation3 + $0x30] sm:$0xff]
        %v2881 = vld [vmem:[#allocation3 + $0x38] sm:$0xff]
        %v2882 = vld [vmem:[#allocation3 + $0x40] sm:$0xff]
        %v2883 = vld [vmem:[#allocation3 + $0x48] sm:$0xff]
        %v2884 = vld [vmem:[#allocation3 + $0x50] sm:$0xff]
        %v2885 = vld [vmem:[#allocation3 + $0x58] sm:$0xff]
        %v2886 = vld [vmem:[#allocation3 + $0x60] sm:$0xff]
        %v2887 = vld [vmem:[#allocation3 + $0x68] sm:$0xff]
        %v2888 = vld [vmem:[#allocation3 + $0x70] sm:$0xff]
        %v2889 = vld [vmem:[#allocation3 + $0x78] sm:$0xff]
        %v2890 = vld [vmem:[#allocation3 + $0x80] sm:$0xff]
        %v2891 = vld [vmem:[#allocation3 + $0x88] sm:$0xff]
        %v2892 = vld [vmem:[#allocation3 + $0x90] sm:$0xff]
        %v2893 = vld [vmem:[#allocation3 + $0x98] sm:$0xff]
        %v2894 = vld [vmem:[#allocation3 + $0xa0] sm:$0xff]
        %v2895 = vld [vmem:[#allocation3 + $0xa8] sm:$0xff]
        %v2896 = vld [vmem:[#allocation3 + $0xb0] sm:$0xff]
        %v2897 = vld [vmem:[#allocation3 + $0xb8] sm:$0xff]
        %v2898 = vld [vmem:[#allocation3 + $0xc0] sm:$0xff]
        %v2899 = vld [vmem:[#allocation3 + $0xc8] sm:$0xff]
        %v2900 = vld [vmem:[#allocation3 + $0xd0] sm:$0xff]
        %v2901 = vld [vmem:[#allocation3 + $0xd8] sm:$0xff]
        %v2902 = vld [vmem:[#allocation3 + $0xe0] sm:$0xff]
        %v2903 = vld [vmem:[#allocation3 + $0xe8] sm:$0xff]
        %v2904 = vld [vmem:[#allocation3 + $0xf0] sm:$0xff]
        %v2905 = vld [vmem:[#allocation3 + $0xf8] sm:$0xff]
        %v2906 = vadd.f32 %v2874, %v2748
        %v2907 = vadd.f32 %v2875, %v2751
        %v2908 = vadd.f32 %v2876, %v2756
        %v2909 = vadd.f32 %v2877, %v2759
        %v2910 = vadd.f32 %v2878, %v2764
        %v2911 = vadd.f32 %v2879, %v2767
        %v2912 = vadd.f32 %v2880, %v2772
        %v2913 = vadd.f32 %v2881, %v2775
        %v2914 = vadd.f32 %v2882, %v2780
        %v2915 = vadd.f32 %v2883, %v2783
        %v2916 = vadd.f32 %v2884, %v2788
        %v2917 = vadd.f32 %v2885, %v2791
        %v2918 = vadd.f32 %v2886, %v2796
        %v2919 = vadd.f32 %v2887, %v2799
        %v2920 = vadd.f32 %v2888, %v2804
        %v2921 = vadd.f32 %v2889, %v2807
        %v2922 = vadd.f32 %v2890, %v2812
        %v2923 = vadd.f32 %v2891, %v2815
        %v2924 = vadd.f32 %v2892, %v2820
        %v2925 = vadd.f32 %v2893, %v2823
        %v2926 = vadd.f32 %v2894, %v2828
        %v2927 = vadd.f32 %v2895, %v2831
        %v2928 = vadd.f32 %v2896, %v2836
        %v2929 = vadd.f32 %v2897, %v2839
        %v2930 = vadd.f32 %v2898, %v2844
        %v2931 = vadd.f32 %v2899, %v2847
        %v2932 = vadd.f32 %v2900, %v2852
        %v2933 = vadd.f32 %v2901, %v2855
        %v2934 = vadd.f32 %v2902, %v2860
        %v2935 = vadd.f32 %v2903, %v2863
        %v2936 = vadd.f32 %v2904, %v2868
        %v2937 = vadd.f32 %v2905, %v2871
        %2938 = vst.msk [vmem:[#allocation3] sm:$0xff] %vm1895, %v2906
        %2939 = vst.msk [vmem:[#allocation3 + $0x8] sm:$0xff] %vm1895, %v2907
        %2940 = vst.msk [vmem:[#allocation3 + $0x10] sm:$0xff] %vm1895, %v2908
        %2941 = vst.msk [vmem:[#allocation3 + $0x18] sm:$0xff] %vm1895, %v2909
        %2942 = vst.msk [vmem:[#allocation3 + $0x20] sm:$0xff] %vm1895, %v2910
        %2943 = vst.msk [vmem:[#allocation3 + $0x28] sm:$0xff] %vm1895, %v2911
        %2944 = vst.msk [vmem:[#allocation3 + $0x30] sm:$0xff] %vm1895, %v2912
        %2945 = vst.msk [vmem:[#allocation3 + $0x38] sm:$0xff] %vm1895, %v2913
        %2946 = vst.msk [vmem:[#allocation3 + $0x40] sm:$0xff] %vm1895, %v2914
        %2947 = vst.msk [vmem:[#allocation3 + $0x48] sm:$0xff] %vm1895, %v2915
        %2948 = vst.msk [vmem:[#allocation3 + $0x50] sm:$0xff] %vm1895, %v2916
        %2949 = vst.msk [vmem:[#allocation3 + $0x58] sm:$0xff] %vm1895, %v2917
        %2950 = vst.msk [vmem:[#allocation3 + $0x60] sm:$0xff] %vm1895, %v2918
        %2951 = vst.msk [vmem:[#allocation3 + $0x68] sm:$0xff] %vm1895, %v2919
        %2952 = vst.msk [vmem:[#allocation3 + $0x70] sm:$0xff] %vm1895, %v2920
        %2953 = vst.msk [vmem:[#allocation3 + $0x78] sm:$0xff] %vm1895, %v2921
        %2954 = vst.msk [vmem:[#allocation3 + $0x80] sm:$0xff] %vm1895, %v2922
        %2955 = vst.msk [vmem:[#allocation3 + $0x88] sm:$0xff] %vm1895, %v2923
        %2956 = vst.msk [vmem:[#allocation3 + $0x90] sm:$0xff] %vm1895, %v2924
        %2957 = vst.msk [vmem:[#allocation3 + $0x98] sm:$0xff] %vm1895, %v2925
        %2958 = vst.msk [vmem:[#allocation3 + $0xa0] sm:$0xff] %vm1895, %v2926
        %2959 = vst.msk [vmem:[#allocation3 + $0xa8] sm:$0xff] %vm1895, %v2927
        %2960 = vst.msk [vmem:[#allocation3 + $0xb0] sm:$0xff] %vm1895, %v2928
        %2961 = vst.msk [vmem:[#allocation3 + $0xb8] sm:$0xff] %vm1895, %v2929
        %2962 = vst.msk [vmem:[#allocation3 + $0xc0] sm:$0xff] %vm1895, %v2930
        %2963 = vst.msk [vmem:[#allocation3 + $0xc8] sm:$0xff] %vm1895, %v2931
        %2964 = vst.msk [vmem:[#allocation3 + $0xd0] sm:$0xff] %vm1895, %v2932
        %2965 = vst.msk [vmem:[#allocation3 + $0xd8] sm:$0xff] %vm1895, %v2933
        %2966 = vst.msk [vmem:[#allocation3 + $0xe0] sm:$0xff] %vm1895, %v2934
        %2967 = vst.msk [vmem:[#allocation3 + $0xe8] sm:$0xff] %vm1895, %v2935
        %2968 = vst.msk [vmem:[#allocation3 + $0xf0] sm:$0xff] %vm1895, %v2936
        %2969 = vst.msk [vmem:[#allocation3 + $0xf8] sm:$0xff] %vm1895, %v2937
        %s2970 = scalar_lea.vmem %s619, 32
        %v2971 = vld [vmem:[%s2970] sm:$0xf]
        %v2972 = vld [vmem:[%s2970 + $0x4] sm:$0xf]
        %v2973 = vld [vmem:[%s2970 + $0x8] sm:$0xf]
        %v2974 = vld [vmem:[%s2970 + $0xc] sm:$0xf]
        %v2975 = vld [vmem:[%s2970 + $0x10] sm:$0xf]
        %v2976 = vld [vmem:[%s2970 + $0x14] sm:$0xf]
        %v2977 = vld [vmem:[%s2970 + $0x18] sm:$0xf]
        %v2978 = vld [vmem:[%s2970 + $0x1c] sm:$0xf]
        %s2979 = scalar_lea.vmem %s633, 1
        %v2980 = vld [vmem:[%s2979] sm:$0x1]
        %v2982 = vlaneseq
        %v2983 = vshrl.u32 %v2982, 7
        %v2984 = vsub.s32 0, %v2983
        %v2985 = vrot.slane %v2980, %v2984
        %v2995 = vunpack.c.l.b16 %v2971
        %v2996 = vunpack.c.l.b16 %v2972
        %v2997 = vunpack.c.l.b16 %v2973
        %v2998 = vunpack.c.l.b16 %v2974
        %v2999 = vunpack.c.l.b16 %v2975
        %v3000 = vunpack.c.l.b16 %v2976
        %v3001 = vunpack.c.l.b16 %v2977
        %v3002 = vunpack.c.l.b16 %v2978
        %v3003 = vpack.c.b16 %v2996, %v2995
        %v3004 = vpack.c.b16 %v2998, %v2997
        %v3005 = vpack.c.b16 %v3000, %v2999
        %v3006 = vpack.c.b16 %v3002, %v3001
        %3011 = vmatprep.subr.bf16.mxu0 0
        %3012 = vmatpush1.bf16.msra.mxu0 %v3003
        %3013 = vmatprep.subr.bf16.mxu0 0
        %3014 = vmatpush1.bf16.msra.mxu0 %v3004
        %3015 = vmatprep.subr.bf16.mxu0 0
        %3016 = vmatpush1.bf16.msra.mxu0 %v3005
        %3017 = vmatprep.subr.bf16.mxu0 0
        %3018 = vmatpush1.bf16.msra.mxu0 %v3006
        %3019 = vmatprep.subr.bf16.mxu0 0
        %3020 = vmatpush1.bf16.msra.mxu0 0
        %3021 = vmatprep.subr.bf16.mxu0 0
        %3022 = vmatpush1.bf16.msra.mxu0 0
        %3023 = vmatprep.subr.bf16.mxu0 0
        %3024 = vmatpush1.bf16.msra.mxu0 0
        %3025 = vmatprep.subr.bf16.mxu0 0
        %3026 = vmatpush1.bf16.msra.mxu0 0
        %3027 = vmatprep.subr.bf16.mxu0 0
        %3028 = vmatpush1.bf16.msra.mxu0 0
        %3029 = vmatprep.subr.bf16.mxu0 0
        %3030 = vmatpush1.bf16.msra.mxu0 0
        %3031 = vmatprep.subr.bf16.mxu0 0
        %3032 = vmatpush1.bf16.msra.mxu0 0
        %3033 = vmatprep.subr.bf16.mxu0 0
        %3034 = vmatpush1.bf16.msra.mxu0 0
        %3035 = vmatprep.subr.bf16.mxu0 0
        %3036 = vmatpush1.bf16.msra.mxu0 0
        %3037 = vmatprep.subr.bf16.mxu0 0
        %3038 = vmatpush1.bf16.msra.mxu0 0
        %3039 = vmatprep.subr.bf16.mxu0 0
        %3040 = vmatpush1.bf16.msra.mxu0 0
        %3041 = vmatprep.subr.bf16.mxu0 0
        %3042 = vmatpush1.bf16.msra.mxu0 0
        %3043 = vmatprep.mubr.bf16.mxu0 0
        %3044 = vmatmul.mubr.bf16.gmra.mrb[0].mxu0 %v1255
        %v3045 = vpop.f32.mrb[0].mxu0
        %v3046 = vadd.f32 %v2985, %v3045
        %v3047 = vpop.f32.mrb[0].mxu0
        %v3048 = vpop.f32.mrb[0].mxu0
        %v3049 = vadd.f32 %v2985, %v3048
        %v3050 = vpop.f32.mrb[0].mxu0
        %3051 = vmatprep.mubr.bf16.mxu0 0
        %3052 = vmatmul.mubr.bf16.gmra.mrb[0].mxu0 %v1258
        %v3053 = vpop.f32.mrb[0].mxu0
        %v3054 = vadd.f32 %v2985, %v3053
        %v3055 = vpop.f32.mrb[0].mxu0
        %v3056 = vpop.f32.mrb[0].mxu0
        %v3057 = vadd.f32 %v2985, %v3056
        %v3058 = vpop.f32.mrb[0].mxu0
        %3059 = vmatprep.mubr.bf16.mxu0 0
        %3060 = vmatmul.mubr.bf16.gmra.mrb[0].mxu0 %v1261
        %v3061 = vpop.f32.mrb[0].mxu0
        %v3062 = vadd.f32 %v2985, %v3061
        %v3063 = vpop.f32.mrb[0].mxu0
        %v3064 = vpop.f32.mrb[0].mxu0
        %v3065 = vadd.f32 %v2985, %v3064
        %v3066 = vpop.f32.mrb[0].mxu0
        %3067 = vmatprep.mubr.bf16.mxu0 0
        %3068 = vmatmul.mubr.bf16.gmra.mrb[0].mxu0 %v1264
        %v3069 = vpop.f32.mrb[0].mxu0
        %v3070 = vadd.f32 %v2985, %v3069
        %v3071 = vpop.f32.mrb[0].mxu0
        %v3072 = vpop.f32.mrb[0].mxu0
        %v3073 = vadd.f32 %v2985, %v3072
        %v3074 = vpop.f32.mrb[0].mxu0
        %3075 = vmatprep.mubr.bf16.mxu0 0
        %3076 = vmatmul.mubr.bf16.gmra.mrb[0].mxu0 %v1267
        %v3077 = vpop.f32.mrb[0].mxu0
        %v3078 = vadd.f32 %v2985, %v3077
        %v3079 = vpop.f32.mrb[0].mxu0
        %v3080 = vpop.f32.mrb[0].mxu0
        %v3081 = vadd.f32 %v2985, %v3080
        %v3082 = vpop.f32.mrb[0].mxu0
        %3083 = vmatprep.mubr.bf16.mxu0 0
        %3084 = vmatmul.mubr.bf16.gmra.mrb[0].mxu0 %v1270
        %v3085 = vpop.f32.mrb[0].mxu0
        %v3086 = vadd.f32 %v2985, %v3085
        %v3087 = vpop.f32.mrb[0].mxu0
        %v3088 = vpop.f32.mrb[0].mxu0
        %v3089 = vadd.f32 %v2985, %v3088
        %v3090 = vpop.f32.mrb[0].mxu0
        %3091 = vmatprep.mubr.bf16.mxu0 0
        %3092 = vmatmul.mubr.bf16.gmra.mrb[0].mxu0 %v1273
        %v3093 = vpop.f32.mrb[0].mxu0
        %v3094 = vadd.f32 %v2985, %v3093
        %v3095 = vpop.f32.mrb[0].mxu0
        %v3096 = vpop.f32.mrb[0].mxu0
        %v3097 = vadd.f32 %v2985, %v3096
        %v3098 = vpop.f32.mrb[0].mxu0
        %3099 = vmatprep.mubr.bf16.mxu0 0
        %3100 = vmatmul.mubr.bf16.gmra.mrb[0].mxu0 %v1276
        %v3101 = vpop.f32.mrb[0].mxu0
        %v3102 = vadd.f32 %v2985, %v3101
        %v3103 = vpop.f32.mrb[0].mxu0
        %v3104 = vpop.f32.mrb[0].mxu0
        %v3105 = vadd.f32 %v2985, %v3104
        %v3106 = vpop.f32.mrb[0].mxu0
        %3107 = vmatprep.mubr.bf16.mxu0 0
        %3108 = vmatmul.mubr.bf16.gmra.mrb[0].mxu0 %v1279
        %v3109 = vpop.f32.mrb[0].mxu0
        %v3110 = vadd.f32 %v2985, %v3109
        %v3111 = vpop.f32.mrb[0].mxu0
        %v3112 = vpop.f32.mrb[0].mxu0
        %v3113 = vadd.f32 %v2985, %v3112
        %v3114 = vpop.f32.mrb[0].mxu0
        %3115 = vmatprep.mubr.bf16.mxu0 0
        %3116 = vmatmul.mubr.bf16.gmra.mrb[0].mxu0 %v1282
        %v3117 = vpop.f32.mrb[0].mxu0
        %v3118 = vadd.f32 %v2985, %v3117
        %v3119 = vpop.f32.mrb[0].mxu0
        %v3120 = vpop.f32.mrb[0].mxu0
        %v3121 = vadd.f32 %v2985, %v3120
        %v3122 = vpop.f32.mrb[0].mxu0
        %3123 = vmatprep.mubr.bf16.mxu0 0
        %3124 = vmatmul.mubr.bf16.gmra.mrb[0].mxu0 %v1285
        %v3125 = vpop.f32.mrb[0].mxu0
        %v3126 = vadd.f32 %v2985, %v3125
        %v3127 = vpop.f32.mrb[0].mxu0
        %v3128 = vpop.f32.mrb[0].mxu0
        %v3129 = vadd.f32 %v2985, %v3128
        %v3130 = vpop.f32.mrb[0].mxu0
        %3131 = vmatprep.mubr.bf16.mxu0 0
        %3132 = vmatmul.mubr.bf16.gmra.mrb[0].mxu0 %v1288
        %v3133 = vpop.f32.mrb[0].mxu0
        %v3134 = vadd.f32 %v2985, %v3133
        %v3135 = vpop.f32.mrb[0].mxu0
        %v3136 = vpop.f32.mrb[0].mxu0
        %v3137 = vadd.f32 %v2985, %v3136
        %v3138 = vpop.f32.mrb[0].mxu0
        %3139 = vmatprep.mubr.bf16.mxu0 0
        %3140 = vmatmul.mubr.bf16.gmra.mrb[0].mxu0 %v1291
        %v3141 = vpop.f32.mrb[0].mxu0
        %v3142 = vadd.f32 %v2985, %v3141
        %v3143 = vpop.f32.mrb[0].mxu0
        %v3144 = vpop.f32.mrb[0].mxu0
        %v3145 = vadd.f32 %v2985, %v3144
        %v3146 = vpop.f32.mrb[0].mxu0
        %3147 = vmatprep.mubr.bf16.mxu0 0
        %3148 = vmatmul.mubr.bf16.gmra.mrb[0].mxu0 %v1294
        %v3149 = vpop.f32.mrb[0].mxu0
        %v3150 = vadd.f32 %v2985, %v3149
        %v3151 = vpop.f32.mrb[0].mxu0
        %v3152 = vpop.f32.mrb[0].mxu0
        %v3153 = vadd.f32 %v2985, %v3152
        %v3154 = vpop.f32.mrb[0].mxu0
        %3155 = vmatprep.mubr.bf16.mxu0 0
        %3156 = vmatmul.mubr.bf16.gmra.mrb[0].mxu0 %v1297
        %v3157 = vpop.f32.mrb[0].mxu0
        %v3158 = vadd.f32 %v2985, %v3157
        %v3159 = vpop.f32.mrb[0].mxu0
        %v3160 = vpop.f32.mrb[0].mxu0
        %v3161 = vadd.f32 %v2985, %v3160
        %v3162 = vpop.f32.mrb[0].mxu0
        %3163 = vmatprep.mubr.bf16.mxu0 0
        %3164 = vmatmul.mubr.bf16.gmra.mrb[0].mxu0 %v1300
        %v3165 = vpop.f32.mrb[0].mxu0
        %v3166 = vadd.f32 %v2985, %v3165
        %v3167 = vpop.f32.mrb[0].mxu0
        %v3168 = vpop.f32.mrb[0].mxu0
        %v3169 = vadd.f32 %v2985, %v3168
        %v3170 = vpop.f32.mrb[0].mxu0
        %3171 = vdwg.mxu0
        %s3172 = scalar_lea.vmem %s624, 32
        %v3173 = vld [vmem:[%s3172] sm:$0xf]
        %v3174 = vld [vmem:[%s3172 + $0x4] sm:$0xf]
        %v3175 = vld [vmem:[%s3172 + $0x8] sm:$0xf]
        %v3176 = vld [vmem:[%s3172 + $0xc] sm:$0xf]
        %v3177 = vld [vmem:[%s3172 + $0x10] sm:$0xf]
        %v3178 = vld [vmem:[%s3172 + $0x14] sm:$0xf]
        %v3179 = vld [vmem:[%s3172 + $0x18] sm:$0xf]
        %v3180 = vld [vmem:[%s3172 + $0x1c] sm:$0xf]
        %s3181 = scalar_lea.vmem %s637, 1
        %v3182 = vld [vmem:[%s3181] sm:$0x1]
        %v3184 = vlaneseq
        %v3185 = vshrl.u32 %v3184, 7
        %v3186 = vsub.s32 0, %v3185
        %v3187 = vrot.slane %v3182, %v3186
        %v3197 = vunpack.c.l.b16 %v3173
        %v3198 = vunpack.c.l.b16 %v3174
        %v3199 = vunpack.c.l.b16 %v3175
        %v3200 = vunpack.c.l.b16 %v3176
        %v3201 = vunpack.c.l.b16 %v3177
        %v3202 = vunpack.c.l.b16 %v3178
        %v3203 = vunpack.c.l.b16 %v3179
        %v3204 = vunpack.c.l.b16 %v3180
        %v3205 = vpack.c.b16 %v3198, %v3197
        %v3206 = vpack.c.b16 %v3200, %v3199
        %v3207 = vpack.c.b16 %v3202, %v3201
        %v3208 = vpack.c.b16 %v3204, %v3203
        %3213 = vmatprep.subr.bf16.mxu0 0
        %3214 = vmatpush1.bf16.msra.mxu0 %v3205
        %3215 = vmatprep.subr.bf16.mxu0 0
        %3216 = vmatpush1.bf16.msra.mxu0 %v3206
        %3217 = vmatprep.subr.bf16.mxu0 0
        %3218 = vmatpush1.bf16.msra.mxu0 %v3207
        %3219 = vmatprep.subr.bf16.mxu0 0
        %3220 = vmatpush1.bf16.msra.mxu0 %v3208
        %3221 = vmatprep.subr.bf16.mxu0 0
        %3222 = vmatpush1.bf16.msra.mxu0 0
        %3223 = vmatprep.subr.bf16.mxu0 0
        %3224 = vmatpush1.bf16.msra.mxu0 0
        %3225 = vmatprep.subr.bf16.mxu0 0
        %3226 = vmatpush1.bf16.msra.mxu0 0
        %3227 = vmatprep.subr.bf16.mxu0 0
        %3228 = vmatpush1.bf16.msra.mxu0 0
        %3229 = vmatprep.subr.bf16.mxu0 0
        %3230 = vmatpush1.bf16.msra.mxu0 0
        %3231 = vmatprep.subr.bf16.mxu0 0
        %3232 = vmatpush1.bf16.msra.mxu0 0
        %3233 = vmatprep.subr.bf16.mxu0 0
        %3234 = vmatpush1.bf16.msra.mxu0 0
        %3235 = vmatprep.subr.bf16.mxu0 0
        %3236 = vmatpush1.bf16.msra.mxu0 0
        %3237 = vmatprep.subr.bf16.mxu0 0
        %3238 = vmatpush1.bf16.msra.mxu0 0
        %3239 = vmatprep.subr.bf16.mxu0 0
        %3240 = vmatpush1.bf16.msra.mxu0 0
        %3241 = vmatprep.subr.bf16.mxu0 0
        %3242 = vmatpush1.bf16.msra.mxu0 0
        %3243 = vmatprep.subr.bf16.mxu0 0
        %3244 = vmatpush1.bf16.msra.mxu0 0
        %3245 = vmatprep.mubr.bf16.mxu0 0
        %3246 = vmatmul.mubr.bf16.gmra.mrb[0].mxu0 %v1255
        %v3247 = vpop.f32.mrb[0].mxu0
        %v3248 = vadd.f32 %v3187, %v3247
        %v3249 = vpop.f32.mrb[0].mxu0
        %v3250 = vpop.f32.mrb[0].mxu0
        %v3251 = vadd.f32 %v3187, %v3250
        %v3252 = vpop.f32.mrb[0].mxu0
        %3253 = vmatprep.mubr.bf16.mxu0 0
        %3254 = vmatmul.mubr.bf16.gmra.mrb[0].mxu0 %v1258
        %v3255 = vpop.f32.mrb[0].mxu0
        %v3256 = vadd.f32 %v3187, %v3255
        %v3257 = vpop.f32.mrb[0].mxu0
        %v3258 = vpop.f32.mrb[0].mxu0
        %v3259 = vadd.f32 %v3187, %v3258
        %v3260 = vpop.f32.mrb[0].mxu0
        %3261 = vmatprep.mubr.bf16.mxu0 0
        %3262 = vmatmul.mubr.bf16.gmra.mrb[0].mxu0 %v1261
        %v3263 = vpop.f32.mrb[0].mxu0
        %v3264 = vadd.f32 %v3187, %v3263
        %v3265 = vpop.f32.mrb[0].mxu0
        %v3266 = vpop.f32.mrb[0].mxu0
        %v3267 = vadd.f32 %v3187, %v3266
        %v3268 = vpop.f32.mrb[0].mxu0
        %3269 = vmatprep.mubr.bf16.mxu0 0
        %3270 = vmatmul.mubr.bf16.gmra.mrb[0].mxu0 %v1264
        %v3271 = vpop.f32.mrb[0].mxu0
        %v3272 = vadd.f32 %v3187, %v3271
        %v3273 = vpop.f32.mrb[0].mxu0
        %v3274 = vpop.f32.mrb[0].mxu0
        %v3275 = vadd.f32 %v3187, %v3274
        %v3276 = vpop.f32.mrb[0].mxu0
        %3277 = vmatprep.mubr.bf16.mxu0 0
        %3278 = vmatmul.mubr.bf16.gmra.mrb[0].mxu0 %v1267
        %v3279 = vpop.f32.mrb[0].mxu0
        %v3280 = vadd.f32 %v3187, %v3279
        %v3281 = vpop.f32.mrb[0].mxu0
        %v3282 = vpop.f32.mrb[0].mxu0
        %v3283 = vadd.f32 %v3187, %v3282
        %v3284 = vpop.f32.mrb[0].mxu0
        %3285 = vmatprep.mubr.bf16.mxu0 0
        %3286 = vmatmul.mubr.bf16.gmra.mrb[0].mxu0 %v1270
        %v3287 = vpop.f32.mrb[0].mxu0
        %v3288 = vadd.f32 %v3187, %v3287
        %v3289 = vpop.f32.mrb[0].mxu0
        %v3290 = vpop.f32.mrb[0].mxu0
        %v3291 = vadd.f32 %v3187, %v3290
        %v3292 = vpop.f32.mrb[0].mxu0
        %3293 = vmatprep.mubr.bf16.mxu0 0
        %3294 = vmatmul.mubr.bf16.gmra.mrb[0].mxu0 %v1273
        %v3295 = vpop.f32.mrb[0].mxu0
        %v3296 = vadd.f32 %v3187, %v3295
        %v3297 = vpop.f32.mrb[0].mxu0
        %v3298 = vpop.f32.mrb[0].mxu0
        %v3299 = vadd.f32 %v3187, %v3298
        %v3300 = vpop.f32.mrb[0].mxu0
        %3301 = vmatprep.mubr.bf16.mxu0 0
        %3302 = vmatmul.mubr.bf16.gmra.mrb[0].mxu0 %v1276
        %v3303 = vpop.f32.mrb[0].mxu0
        %v3304 = vadd.f32 %v3187, %v3303
        %v3305 = vpop.f32.mrb[0].mxu0
        %v3306 = vpop.f32.mrb[0].mxu0
        %v3307 = vadd.f32 %v3187, %v3306
        %v3308 = vpop.f32.mrb[0].mxu0
        %3309 = vmatprep.mubr.bf16.mxu0 0
        %3310 = vmatmul.mubr.bf16.gmra.mrb[0].mxu0 %v1279
        %v3311 = vpop.f32.mrb[0].mxu0
        %v3312 = vadd.f32 %v3187, %v3311
        %v3313 = vpop.f32.mrb[0].mxu0
        %v3314 = vpop.f32.mrb[0].mxu0
        %v3315 = vadd.f32 %v3187, %v3314
        %v3316 = vpop.f32.mrb[0].mxu0
        %3317 = vmatprep.mubr.bf16.mxu0 0
        %3318 = vmatmul.mubr.bf16.gmra.mrb[0].mxu0 %v1282
        %v3319 = vpop.f32.mrb[0].mxu0
        %v3320 = vadd.f32 %v3187, %v3319
        %v3321 = vpop.f32.mrb[0].mxu0
        %v3322 = vpop.f32.mrb[0].mxu0
        %v3323 = vadd.f32 %v3187, %v3322
        %v3324 = vpop.f32.mrb[0].mxu0
        %3325 = vmatprep.mubr.bf16.mxu0 0
        %3326 = vmatmul.mubr.bf16.gmra.mrb[0].mxu0 %v1285
        %v3327 = vpop.f32.mrb[0].mxu0
        %v3328 = vadd.f32 %v3187, %v3327
        %v3329 = vpop.f32.mrb[0].mxu0
        %v3330 = vpop.f32.mrb[0].mxu0
        %v3331 = vadd.f32 %v3187, %v3330
        %v3332 = vpop.f32.mrb[0].mxu0
        %3333 = vmatprep.mubr.bf16.mxu0 0
        %3334 = vmatmul.mubr.bf16.gmra.mrb[0].mxu0 %v1288
        %v3335 = vpop.f32.mrb[0].mxu0
        %v3336 = vadd.f32 %v3187, %v3335
        %v3337 = vpop.f32.mrb[0].mxu0
        %v3338 = vpop.f32.mrb[0].mxu0
        %v3339 = vadd.f32 %v3187, %v3338
        %v3340 = vpop.f32.mrb[0].mxu0
        %3341 = vmatprep.mubr.bf16.mxu0 0
        %3342 = vmatmul.mubr.bf16.gmra.mrb[0].mxu0 %v1291
        %v3343 = vpop.f32.mrb[0].mxu0
        %v3344 = vadd.f32 %v3187, %v3343
        %v3345 = vpop.f32.mrb[0].mxu0
        %v3346 = vpop.f32.mrb[0].mxu0
        %v3347 = vadd.f32 %v3187, %v3346
        %v3348 = vpop.f32.mrb[0].mxu0
        %3349 = vmatprep.mubr.bf16.mxu0 0
        %3350 = vmatmul.mubr.bf16.gmra.mrb[0].mxu0 %v1294
        %v3351 = vpop.f32.mrb[0].mxu0
        %v3352 = vadd.f32 %v3187, %v3351
        %v3353 = vpop.f32.mrb[0].mxu0
        %v3354 = vpop.f32.mrb[0].mxu0
        %v3355 = vadd.f32 %v3187, %v3354
        %v3356 = vpop.f32.mrb[0].mxu0
        %3357 = vmatprep.mubr.bf16.mxu0 0
        %3358 = vmatmul.mubr.bf16.gmra.mrb[0].mxu0 %v1297
        %v3359 = vpop.f32.mrb[0].mxu0
        %v3360 = vadd.f32 %v3187, %v3359
        %v3361 = vpop.f32.mrb[0].mxu0
        %v3362 = vpop.f32.mrb[0].mxu0
        %v3363 = vadd.f32 %v3187, %v3362
        %v3364 = vpop.f32.mrb[0].mxu0
        %3365 = vmatprep.mubr.bf16.mxu0 0
        %3366 = vmatmul.mubr.bf16.gmra.mrb[0].mxu0 %v1300
        %v3367 = vpop.f32.mrb[0].mxu0
        %v3368 = vadd.f32 %v3187, %v3367
        %v3369 = vpop.f32.mrb[0].mxu0
        %v3370 = vpop.f32.mrb[0].mxu0
        %v3371 = vadd.f32 %v3187, %v3370
        %v3372 = vpop.f32.mrb[0].mxu0
        %3373 = vdwg.mxu0
        %s3374 = scalar_lea.vmem %s629, 32
        %v3375 = vld [vmem:[%s3374] sm:$0xf]
        %v3376 = vld [vmem:[%s3374 + $0x4] sm:$0xf]
        %v3377 = vld [vmem:[%s3374 + $0x8] sm:$0xf]
        %v3378 = vld [vmem:[%s3374 + $0xc] sm:$0xf]
        %v3379 = vld [vmem:[%s3374 + $0x10] sm:$0xf]
        %v3380 = vld [vmem:[%s3374 + $0x14] sm:$0xf]
        %v3381 = vld [vmem:[%s3374 + $0x18] sm:$0xf]
        %v3382 = vld [vmem:[%s3374 + $0x1c] sm:$0xf]
        %s3383 = scalar_lea.vmem %s641, 1
        %v3384 = vld [vmem:[%s3383] sm:$0x1]
        %v3386 = vlaneseq
        %v3387 = vshrl.u32 %v3386, 7
        %v3388 = vsub.s32 0, %v3387
        %v3389 = vrot.slane %v3384, %v3388
        %v3399 = vunpack.c.l.b16 %v3375
        %v3400 = vunpack.c.l.b16 %v3376
        %v3401 = vunpack.c.l.b16 %v3377
        %v3402 = vunpack.c.l.b16 %v3378
        %v3403 = vunpack.c.l.b16 %v3379
        %v3404 = vunpack.c.l.b16 %v3380
        %v3405 = vunpack.c.l.b16 %v3381
        %v3406 = vunpack.c.l.b16 %v3382
        %v3407 = vpack.c.b16 %v3400, %v3399
        %v3408 = vpack.c.b16 %v3402, %v3401
        %v3409 = vpack.c.b16 %v3404, %v3403
        %v3410 = vpack.c.b16 %v3406, %v3405
        %3415 = vmatprep.subr.bf16.mxu0 0
        %3416 = vmatpush1.bf16.msra.mxu0 %v3407
        %3417 = vmatprep.subr.bf16.mxu0 0
        %3418 = vmatpush1.bf16.msra.mxu0 %v3408
        %3419 = vmatprep.subr.bf16.mxu0 0
        %3420 = vmatpush1.bf16.msra.mxu0 %v3409
        %3421 = vmatprep.subr.bf16.mxu0 0
        %3422 = vmatpush1.bf16.msra.mxu0 %v3410
        %3423 = vmatprep.subr.bf16.mxu0 0
        %3424 = vmatpush1.bf16.msra.mxu0 0
        %3425 = vmatprep.subr.bf16.mxu0 0
        %3426 = vmatpush1.bf16.msra.mxu0 0
        %3427 = vmatprep.subr.bf16.mxu0 0
        %3428 = vmatpush1.bf16.msra.mxu0 0
        %3429 = vmatprep.subr.bf16.mxu0 0
        %3430 = vmatpush1.bf16.msra.mxu0 0
        %3431 = vmatprep.subr.bf16.mxu0 0
        %3432 = vmatpush1.bf16.msra.mxu0 0
        %3433 = vmatprep.subr.bf16.mxu0 0
        %3434 = vmatpush1.bf16.msra.mxu0 0
        %3435 = vmatprep.subr.bf16.mxu0 0
        %3436 = vmatpush1.bf16.msra.mxu0 0
        %3437 = vmatprep.subr.bf16.mxu0 0
        %3438 = vmatpush1.bf16.msra.mxu0 0
        %3439 = vmatprep.subr.bf16.mxu0 0
        %3440 = vmatpush1.bf16.msra.mxu0 0
        %3441 = vmatprep.subr.bf16.mxu0 0
        %3442 = vmatpush1.bf16.msra.mxu0 0
        %3443 = vmatprep.subr.bf16.mxu0 0
        %3444 = vmatpush1.bf16.msra.mxu0 0
        %3445 = vmatprep.subr.bf16.mxu0 0
        %3446 = vmatpush1.bf16.msra.mxu0 0
        %3447 = vmatprep.mubr.bf16.mxu0 0
        %3448 = vmatmul.mubr.bf16.gmra.mrb[0].mxu0 %v1255
        %v3449 = vpop.f32.mrb[0].mxu0
        %v3450 = vadd.f32 %v3389, %v3449
        %v3451 = vpop.f32.mrb[0].mxu0
        %v3452 = vpop.f32.mrb[0].mxu0
        %v3453 = vadd.f32 %v3389, %v3452
        %v3454 = vpop.f32.mrb[0].mxu0
        %3455 = vmatprep.mubr.bf16.mxu0 0
        %3456 = vmatmul.mubr.bf16.gmra.mrb[0].mxu0 %v1258
        %v3457 = vpop.f32.mrb[0].mxu0
        %v3458 = vadd.f32 %v3389, %v3457
        %v3459 = vpop.f32.mrb[0].mxu0
        %v3460 = vpop.f32.mrb[0].mxu0
        %v3461 = vadd.f32 %v3389, %v3460
        %v3462 = vpop.f32.mrb[0].mxu0
        %3463 = vmatprep.mubr.bf16.mxu0 0
        %3464 = vmatmul.mubr.bf16.gmra.mrb[0].mxu0 %v1261
        %v3465 = vpop.f32.mrb[0].mxu0
        %v3466 = vadd.f32 %v3389, %v3465
        %v3467 = vpop.f32.mrb[0].mxu0
        %v3468 = vpop.f32.mrb[0].mxu0
        %v3469 = vadd.f32 %v3389, %v3468
        %v3470 = vpop.f32.mrb[0].mxu0
        %3471 = vmatprep.mubr.bf16.mxu0 0
        %3472 = vmatmul.mubr.bf16.gmra.mrb[0].mxu0 %v1264
        %v3473 = vpop.f32.mrb[0].mxu0
        %v3474 = vadd.f32 %v3389, %v3473
        %v3475 = vpop.f32.mrb[0].mxu0
        %v3476 = vpop.f32.mrb[0].mxu0
        %v3477 = vadd.f32 %v3389, %v3476
        %v3478 = vpop.f32.mrb[0].mxu0
        %3479 = vmatprep.mubr.bf16.mxu0 0
        %3480 = vmatmul.mubr.bf16.gmra.mrb[0].mxu0 %v1267
        %v3481 = vpop.f32.mrb[0].mxu0
        %v3482 = vadd.f32 %v3389, %v3481
        %v3483 = vpop.f32.mrb[0].mxu0
        %v3484 = vpop.f32.mrb[0].mxu0
        %v3485 = vadd.f32 %v3389, %v3484
        %v3486 = vpop.f32.mrb[0].mxu0
        %3487 = vmatprep.mubr.bf16.mxu0 0
        %3488 = vmatmul.mubr.bf16.gmra.mrb[0].mxu0 %v1270
        %v3489 = vpop.f32.mrb[0].mxu0
        %v3490 = vadd.f32 %v3389, %v3489
        %v3491 = vpop.f32.mrb[0].mxu0
        %v3492 = vpop.f32.mrb[0].mxu0
        %v3493 = vadd.f32 %v3389, %v3492
        %v3494 = vpop.f32.mrb[0].mxu0
        %3495 = vmatprep.mubr.bf16.mxu0 0
        %3496 = vmatmul.mubr.bf16.gmra.mrb[0].mxu0 %v1273
        %v3497 = vpop.f32.mrb[0].mxu0
        %v3498 = vadd.f32 %v3389, %v3497
        %v3499 = vpop.f32.mrb[0].mxu0
        %v3500 = vpop.f32.mrb[0].mxu0
        %v3501 = vadd.f32 %v3389, %v3500
        %v3502 = vpop.f32.mrb[0].mxu0
        %3503 = vmatprep.mubr.bf16.mxu0 0
        %3504 = vmatmul.mubr.bf16.gmra.mrb[0].mxu0 %v1276
        %v3505 = vpop.f32.mrb[0].mxu0
        %v3506 = vadd.f32 %v3389, %v3505
        %v3507 = vpop.f32.mrb[0].mxu0
        %v3508 = vpop.f32.mrb[0].mxu0
        %v3509 = vadd.f32 %v3389, %v3508
        %v3510 = vpop.f32.mrb[0].mxu0
        %3511 = vmatprep.mubr.bf16.mxu0 0
        %3512 = vmatmul.mubr.bf16.gmra.mrb[0].mxu0 %v1279
        %v3513 = vpop.f32.mrb[0].mxu0
        %v3514 = vadd.f32 %v3389, %v3513
        %v3515 = vpop.f32.mrb[0].mxu0
        %v3516 = vpop.f32.mrb[0].mxu0
        %v3517 = vadd.f32 %v3389, %v3516
        %v3518 = vpop.f32.mrb[0].mxu0
        %3519 = vmatprep.mubr.bf16.mxu0 0
        %3520 = vmatmul.mubr.bf16.gmra.mrb[0].mxu0 %v1282
        %v3521 = vpop.f32.mrb[0].mxu0
        %v3522 = vadd.f32 %v3389, %v3521
        %v3523 = vpop.f32.mrb[0].mxu0
        %v3524 = vpop.f32.mrb[0].mxu0
        %v3525 = vadd.f32 %v3389, %v3524
        %v3526 = vpop.f32.mrb[0].mxu0
        %3527 = vmatprep.mubr.bf16.mxu0 0
        %3528 = vmatmul.mubr.bf16.gmra.mrb[0].mxu0 %v1285
        %v3529 = vpop.f32.mrb[0].mxu0
        %v3530 = vadd.f32 %v3389, %v3529
        %v3531 = vpop.f32.mrb[0].mxu0
        %v3532 = vpop.f32.mrb[0].mxu0
        %v3533 = vadd.f32 %v3389, %v3532
        %v3534 = vpop.f32.mrb[0].mxu0
        %3535 = vmatprep.mubr.bf16.mxu0 0
        %3536 = vmatmul.mubr.bf16.gmra.mrb[0].mxu0 %v1288
        %v3537 = vpop.f32.mrb[0].mxu0
        %v3538 = vadd.f32 %v3389, %v3537
        %v3539 = vpop.f32.mrb[0].mxu0
        %v3540 = vpop.f32.mrb[0].mxu0
        %v3541 = vadd.f32 %v3389, %v3540
        %v3542 = vpop.f32.mrb[0].mxu0
        %3543 = vmatprep.mubr.bf16.mxu0 0
        %3544 = vmatmul.mubr.bf16.gmra.mrb[0].mxu0 %v1291
        %v3545 = vpop.f32.mrb[0].mxu0
        %v3546 = vadd.f32 %v3389, %v3545
        %v3547 = vpop.f32.mrb[0].mxu0
        %v3548 = vpop.f32.mrb[0].mxu0
        %v3549 = vadd.f32 %v3389, %v3548
        %v3550 = vpop.f32.mrb[0].mxu0
        %3551 = vmatprep.mubr.bf16.mxu0 0
        %3552 = vmatmul.mubr.bf16.gmra.mrb[0].mxu0 %v1294
        %v3553 = vpop.f32.mrb[0].mxu0
        %v3554 = vadd.f32 %v3389, %v3553
        %v3555 = vpop.f32.mrb[0].mxu0
        %v3556 = vpop.f32.mrb[0].mxu0
        %v3557 = vadd.f32 %v3389, %v3556
        %v3558 = vpop.f32.mrb[0].mxu0
        %3559 = vmatprep.mubr.bf16.mxu0 0
        %3560 = vmatmul.mubr.bf16.gmra.mrb[0].mxu0 %v1297
        %v3561 = vpop.f32.mrb[0].mxu0
        %v3562 = vadd.f32 %v3389, %v3561
        %v3563 = vpop.f32.mrb[0].mxu0
        %v3564 = vpop.f32.mrb[0].mxu0
        %v3565 = vadd.f32 %v3389, %v3564
        %v3566 = vpop.f32.mrb[0].mxu0
        %3567 = vmatprep.mubr.bf16.mxu0 0
        %3568 = vmatmul.mubr.bf16.gmra.mrb[0].mxu0 %v1300
        %v3569 = vpop.f32.mrb[0].mxu0
        %v3570 = vadd.f32 %v3389, %v3569
        %v3571 = vpop.f32.mrb[0].mxu0
        %v3572 = vpop.f32.mrb[0].mxu0
        %v3573 = vadd.f32 %v3389, %v3572
        %v3574 = vpop.f32.mrb[0].mxu0
        %3575 = vdwg.mxu0
        %v3576 = vpack.c.bf16 %v3049, %v3046
        %v3577 = vpack.c.bf16 %v3057, %v3054
        %v3578 = vpack.c.bf16 %v3065, %v3062
        %v3579 = vpack.c.bf16 %v3073, %v3070
        %v3580 = vpack.c.bf16 %v3081, %v3078
        %v3581 = vpack.c.bf16 %v3089, %v3086
        %v3582 = vpack.c.bf16 %v3097, %v3094
        %v3583 = vpack.c.bf16 %v3105, %v3102
        %v3584 = vpack.c.bf16 %v3113, %v3110
        %v3585 = vpack.c.bf16 %v3121, %v3118
        %v3586 = vpack.c.bf16 %v3129, %v3126
        %v3587 = vpack.c.bf16 %v3137, %v3134
        %v3588 = vpack.c.bf16 %v3145, %v3142
        %v3589 = vpack.c.bf16 %v3153, %v3150
        %v3590 = vpack.c.bf16 %v3161, %v3158
        %v3591 = vpack.c.bf16 %v3169, %v3166
        %v3592 = vpack.c.bf16 %v3251, %v3248
        %v3593 = vpack.c.bf16 %v3259, %v3256
        %v3594 = vpack.c.bf16 %v3267, %v3264
        %v3595 = vpack.c.bf16 %v3275, %v3272
        %v3596 = vpack.c.bf16 %v3283, %v3280
        %v3597 = vpack.c.bf16 %v3291, %v3288
        %v3598 = vpack.c.bf16 %v3299, %v3296
        %v3599 = vpack.c.bf16 %v3307, %v3304
        %v3600 = vpack.c.bf16 %v3315, %v3312
        %v3601 = vpack.c.bf16 %v3323, %v3320
        %v3602 = vpack.c.bf16 %v3331, %v3328
        %v3603 = vpack.c.bf16 %v3339, %v3336
        %v3604 = vpack.c.bf16 %v3347, %v3344
        %v3605 = vpack.c.bf16 %v3355, %v3352
        %v3606 = vpack.c.bf16 %v3363, %v3360
        %v3607 = vpack.c.bf16 %v3371, %v3368
        %v3609 = vsel %vm1895, %v3576, 0
        %v3612 = vsel %vm1895, %v3577, 0
        %v3615 = vsel %vm1895, %v3578, 0
        %v3618 = vsel %vm1895, %v3579, 0
        %v3621 = vsel %vm1895, %v3580, 0
        %v3624 = vsel %vm1895, %v3581, 0
        %v3627 = vsel %vm1895, %v3582, 0
        %v3630 = vsel %vm1895, %v3583, 0
        %v3633 = vsel %vm1895, %v3584, 0
        %v3636 = vsel %vm1895, %v3585, 0
        %v3639 = vsel %vm1895, %v3586, 0
        %v3642 = vsel %vm1895, %v3587, 0
        %v3645 = vsel %vm1895, %v3588, 0
        %v3648 = vsel %vm1895, %v3589, 0
        %v3651 = vsel %vm1895, %v3590, 0
        %v3654 = vsel %vm1895, %v3591, 0
        %v3657 = vsel %vm1895, %v3592, 0
        %v3660 = vsel %vm1895, %v3593, 0
        %v3663 = vsel %vm1895, %v3594, 0
        %v3666 = vsel %vm1895, %v3595, 0
        %v3669 = vsel %vm1895, %v3596, 0
        %v3672 = vsel %vm1895, %v3597, 0
        %v3675 = vsel %vm1895, %v3598, 0
        %v3678 = vsel %vm1895, %v3599, 0
        %v3681 = vsel %vm1895, %v3600, 0
        %v3684 = vsel %vm1895, %v3601, 0
        %v3687 = vsel %vm1895, %v3602, 0
        %v3690 = vsel %vm1895, %v3603, 0
        %v3693 = vsel %vm1895, %v3604, 0
        %v3696 = vsel %vm1895, %v3605, 0
        %v3699 = vsel %vm1895, %v3606, 0
        %v3702 = vsel %vm1895, %v3607, 0
        %3704 = vmatprep.subr.bf16.mxu0 0
        %3705 = vmatpush1.bf16.xpose.msra.mxu0 %v3657
        %3706 = vmatprep.subr.bf16.mxu0 0
        %3707 = vmatpush1.bf16.xpose.msra.mxu0 %v3660
        %3708 = vmatprep.subr.bf16.mxu0 0
        %3709 = vmatpush1.bf16.xpose.msra.mxu0 %v3663
        %3710 = vmatprep.subr.bf16.mxu0 0
        %3711 = vmatpush1.bf16.xpose.msra.mxu0 %v3666
        %3712 = vmatprep.subr.bf16.mxu0 0
        %3713 = vmatpush1.bf16.xpose.msra.mxu0 %v3669
        %3714 = vmatprep.subr.bf16.mxu0 0
        %3715 = vmatpush1.bf16.xpose.msra.mxu0 %v3672
        %3716 = vmatprep.subr.bf16.mxu0 0
        %3717 = vmatpush1.bf16.xpose.msra.mxu0 %v3675
        %3718 = vmatprep.subr.bf16.mxu0 0
        %3719 = vmatpush1.bf16.xpose.msra.mxu0 %v3678
        %3720 = vmatprep.subr.bf16.mxu0 0
        %3721 = vmatpush1.bf16.xpose.msra.mxu0 %v3681
        %3722 = vmatprep.subr.bf16.mxu0 0
        %3723 = vmatpush1.bf16.xpose.msra.mxu0 %v3684
        %3724 = vmatprep.subr.bf16.mxu0 0
        %3725 = vmatpush1.bf16.xpose.msra.mxu0 %v3687
        %3726 = vmatprep.subr.bf16.mxu0 0
        %3727 = vmatpush1.bf16.xpose.msra.mxu0 %v3690
        %3728 = vmatprep.subr.bf16.mxu0 0
        %3729 = vmatpush1.bf16.xpose.msra.mxu0 %v3693
        %3730 = vmatprep.subr.bf16.mxu0 0
        %3731 = vmatpush1.bf16.xpose.msra.mxu0 %v3696
        %3732 = vmatprep.subr.bf16.mxu0 0
        %3733 = vmatpush1.bf16.xpose.msra.mxu0 %v3699
        %3734 = vmatprep.subr.bf16.mxu0 0
        %3735 = vmatpush1.bf16.xpose.msra.mxu0 %v3702
        %3736 = vmatprep.mubr.bf16.mxu0 0
        %3737 = vmatmul.mubr.bf16.gmra.mrb[0].mxu0 %v3609
        %v3738 = vpop.f32.mrb[0].mxu0
        %v3739 = vadd.f32 0.0, %v3738
        %v3740 = vpop.f32.mrb[0].mxu0
        %v3741 = vadd.f32 0.0, %v3740
        %v3742 = vpop.f32.mrb[0].mxu0
        %v3743 = vadd.f32 0.0, %v3742
        %v3744 = vpop.f32.mrb[0].mxu0
        %v3745 = vadd.f32 0.0, %v3744
        %3746 = vmatprep.mubr.bf16.mxu0 0
        %3747 = vmatmul.mubr.bf16.gmra.mrb[0].mxu0 %v3612
        %v3748 = vpop.f32.mrb[0].mxu0
        %v3749 = vadd.f32 0.0, %v3748
        %v3750 = vpop.f32.mrb[0].mxu0
        %v3751 = vadd.f32 0.0, %v3750
        %v3752 = vpop.f32.mrb[0].mxu0
        %v3753 = vadd.f32 0.0, %v3752
        %v3754 = vpop.f32.mrb[0].mxu0
        %v3755 = vadd.f32 0.0, %v3754
        %3756 = vmatprep.mubr.bf16.mxu0 0
        %3757 = vmatmul.mubr.bf16.gmra.mrb[0].mxu0 %v3615
        %v3758 = vpop.f32.mrb[0].mxu0
        %v3759 = vadd.f32 0.0, %v3758
        %v3760 = vpop.f32.mrb[0].mxu0
        %v3761 = vadd.f32 0.0, %v3760
        %v3762 = vpop.f32.mrb[0].mxu0
        %v3763 = vadd.f32 0.0, %v3762
        %v3764 = vpop.f32.mrb[0].mxu0
        %v3765 = vadd.f32 0.0, %v3764
        %3766 = vmatprep.mubr.bf16.mxu0 0
        %3767 = vmatmul.mubr.bf16.gmra.mrb[0].mxu0 %v3618
        %v3768 = vpop.f32.mrb[0].mxu0
        %v3769 = vadd.f32 0.0, %v3768
        %v3770 = vpop.f32.mrb[0].mxu0
        %v3771 = vadd.f32 0.0, %v3770
        %v3772 = vpop.f32.mrb[0].mxu0
        %v3773 = vadd.f32 0.0, %v3772
        %v3774 = vpop.f32.mrb[0].mxu0
        %v3775 = vadd.f32 0.0, %v3774
        %3776 = vmatprep.mubr.bf16.mxu0 0
        %3777 = vmatmul.mubr.bf16.gmra.mrb[0].mxu0 %v3621
        %v3778 = vpop.f32.mrb[0].mxu0
        %v3779 = vadd.f32 0.0, %v3778
        %v3780 = vpop.f32.mrb[0].mxu0
        %v3781 = vadd.f32 0.0, %v3780
        %v3782 = vpop.f32.mrb[0].mxu0
        %v3783 = vadd.f32 0.0, %v3782
        %v3784 = vpop.f32.mrb[0].mxu0
        %v3785 = vadd.f32 0.0, %v3784
        %3786 = vmatprep.mubr.bf16.mxu0 0
        %3787 = vmatmul.mubr.bf16.gmra.mrb[0].mxu0 %v3624
        %v3788 = vpop.f32.mrb[0].mxu0
        %v3789 = vadd.f32 0.0, %v3788
        %v3790 = vpop.f32.mrb[0].mxu0
        %v3791 = vadd.f32 0.0, %v3790
        %v3792 = vpop.f32.mrb[0].mxu0
        %v3793 = vadd.f32 0.0, %v3792
        %v3794 = vpop.f32.mrb[0].mxu0
        %v3795 = vadd.f32 0.0, %v3794
        %3796 = vmatprep.mubr.bf16.mxu0 0
        %3797 = vmatmul.mubr.bf16.gmra.mrb[0].mxu0 %v3627
        %v3798 = vpop.f32.mrb[0].mxu0
        %v3799 = vadd.f32 0.0, %v3798
        %v3800 = vpop.f32.mrb[0].mxu0
        %v3801 = vadd.f32 0.0, %v3800
        %v3802 = vpop.f32.mrb[0].mxu0
        %v3803 = vadd.f32 0.0, %v3802
        %v3804 = vpop.f32.mrb[0].mxu0
        %v3805 = vadd.f32 0.0, %v3804
        %3806 = vmatprep.mubr.bf16.mxu0 0
        %3807 = vmatmul.mubr.bf16.gmra.mrb[0].mxu0 %v3630
        %v3808 = vpop.f32.mrb[0].mxu0
        %v3809 = vadd.f32 0.0, %v3808
        %v3810 = vpop.f32.mrb[0].mxu0
        %v3811 = vadd.f32 0.0, %v3810
        %v3812 = vpop.f32.mrb[0].mxu0
        %v3813 = vadd.f32 0.0, %v3812
        %v3814 = vpop.f32.mrb[0].mxu0
        %v3815 = vadd.f32 0.0, %v3814
        %3816 = vmatprep.mubr.bf16.mxu0 0
        %3817 = vmatmul.mubr.bf16.gmra.mrb[0].mxu0 %v3633
        %v3818 = vpop.f32.mrb[0].mxu0
        %v3819 = vadd.f32 0.0, %v3818
        %v3820 = vpop.f32.mrb[0].mxu0
        %v3821 = vadd.f32 0.0, %v3820
        %v3822 = vpop.f32.mrb[0].mxu0
        %v3823 = vadd.f32 0.0, %v3822
        %v3824 = vpop.f32.mrb[0].mxu0
        %v3825 = vadd.f32 0.0, %v3824
        %3826 = vmatprep.mubr.bf16.mxu0 0
        %3827 = vmatmul.mubr.bf16.gmra.mrb[0].mxu0 %v3636
        %v3828 = vpop.f32.mrb[0].mxu0
        %v3829 = vadd.f32 0.0, %v3828
        %v3830 = vpop.f32.mrb[0].mxu0
        %v3831 = vadd.f32 0.0, %v3830
        %v3832 = vpop.f32.mrb[0].mxu0
        %v3833 = vadd.f32 0.0, %v3832
        %v3834 = vpop.f32.mrb[0].mxu0
        %v3835 = vadd.f32 0.0, %v3834
        %3836 = vmatprep.mubr.bf16.mxu0 0
        %3837 = vmatmul.mubr.bf16.gmra.mrb[0].mxu0 %v3639
        %v3838 = vpop.f32.mrb[0].mxu0
        %v3839 = vadd.f32 0.0, %v3838
        %v3840 = vpop.f32.mrb[0].mxu0
        %v3841 = vadd.f32 0.0, %v3840
        %v3842 = vpop.f32.mrb[0].mxu0
        %v3843 = vadd.f32 0.0, %v3842
        %v3844 = vpop.f32.mrb[0].mxu0
        %v3845 = vadd.f32 0.0, %v3844
        %3846 = vmatprep.mubr.bf16.mxu0 0
        %3847 = vmatmul.mubr.bf16.gmra.mrb[0].mxu0 %v3642
        %v3848 = vpop.f32.mrb[0].mxu0
        %v3849 = vadd.f32 0.0, %v3848
        %v3850 = vpop.f32.mrb[0].mxu0
        %v3851 = vadd.f32 0.0, %v3850
        %v3852 = vpop.f32.mrb[0].mxu0
        %v3853 = vadd.f32 0.0, %v3852
        %v3854 = vpop.f32.mrb[0].mxu0
        %v3855 = vadd.f32 0.0, %v3854
        %3856 = vmatprep.mubr.bf16.mxu0 0
        %3857 = vmatmul.mubr.bf16.gmra.mrb[0].mxu0 %v3645
        %v3858 = vpop.f32.mrb[0].mxu0
        %v3859 = vadd.f32 0.0, %v3858
        %v3860 = vpop.f32.mrb[0].mxu0
        %v3861 = vadd.f32 0.0, %v3860
        %v3862 = vpop.f32.mrb[0].mxu0
        %v3863 = vadd.f32 0.0, %v3862
        %v3864 = vpop.f32.mrb[0].mxu0
        %v3865 = vadd.f32 0.0, %v3864
        %3866 = vmatprep.mubr.bf16.mxu0 0
        %3867 = vmatmul.mubr.bf16.gmra.mrb[0].mxu0 %v3648
        %v3868 = vpop.f32.mrb[0].mxu0
        %v3869 = vadd.f32 0.0, %v3868
        %v3870 = vpop.f32.mrb[0].mxu0
        %v3871 = vadd.f32 0.0, %v3870
        %v3872 = vpop.f32.mrb[0].mxu0
        %v3873 = vadd.f32 0.0, %v3872
        %v3874 = vpop.f32.mrb[0].mxu0
        %v3875 = vadd.f32 0.0, %v3874
        %3876 = vmatprep.mubr.bf16.mxu0 0
        %3877 = vmatmul.mubr.bf16.gmra.mrb[0].mxu0 %v3651
        %v3878 = vpop.f32.mrb[0].mxu0
        %v3879 = vadd.f32 0.0, %v3878
        %v3880 = vpop.f32.mrb[0].mxu0
        %v3881 = vadd.f32 0.0, %v3880
        %v3882 = vpop.f32.mrb[0].mxu0
        %v3883 = vadd.f32 0.0, %v3882
        %v3884 = vpop.f32.mrb[0].mxu0
        %v3885 = vadd.f32 0.0, %v3884
        %3886 = vmatprep.mubr.bf16.mxu0 0
        %3887 = vmatmul.mubr.bf16.gmra.mrb[0].mxu0 %v3654
        %v3888 = vpop.f32.mrb[0].mxu0
        %v3889 = vadd.f32 0.0, %v3888
        %v3890 = vpop.f32.mrb[0].mxu0
        %v3891 = vadd.f32 0.0, %v3890
        %v3892 = vpop.f32.mrb[0].mxu0
        %v3893 = vadd.f32 0.0, %v3892
        %v3894 = vpop.f32.mrb[0].mxu0
        %v3895 = vadd.f32 0.0, %v3894
        %3896 = vdwg.mxu0
        %v3897 = vmax.f32 %v3739, %v3741
        %3898 = vmax.xlane.f32.xlu0 %v3897
        %v3899 = vpop.xlane.xlu0 %3898
        %v3900 = vmax.f32 %v3743, %v3745
        %3901 = vmax.xlane.f32.xlu0 %v3900
        %v3902 = vpop.xlane.xlu0 %3901
        %v3903 = vmax.f32 %v3749, %v3751
        %3904 = vmax.xlane.f32.xlu0 %v3903
        %v3905 = vpop.xlane.xlu0 %3904
        %v3906 = vmax.f32 %v3753, %v3755
        %3907 = vmax.xlane.f32.xlu0 %v3906
        %v3908 = vpop.xlane.xlu0 %3907
        %v3909 = vmax.f32 %v3759, %v3761
        %3910 = vmax.xlane.f32.xlu0 %v3909
        %v3911 = vpop.xlane.xlu0 %3910
        %v3912 = vmax.f32 %v3763, %v3765
        %3913 = vmax.xlane.f32.xlu0 %v3912
        %v3914 = vpop.xlane.xlu0 %3913
        %v3915 = vmax.f32 %v3769, %v3771
        %3916 = vmax.xlane.f32.xlu0 %v3915
        %v3917 = vpop.xlane.xlu0 %3916
        %v3918 = vmax.f32 %v3773, %v3775
        %3919 = vmax.xlane.f32.xlu0 %v3918
        %v3920 = vpop.xlane.xlu0 %3919
        %v3921 = vmax.f32 %v3779, %v3781
        %3922 = vmax.xlane.f32.xlu0 %v3921
        %v3923 = vpop.xlane.xlu0 %3922
        %v3924 = vmax.f32 %v3783, %v3785
        %3925 = vmax.xlane.f32.xlu0 %v3924
        %v3926 = vpop.xlane.xlu0 %3925
        %v3927 = vmax.f32 %v3789, %v3791
        %3928 = vmax.xlane.f32.xlu0 %v3927
        %v3929 = vpop.xlane.xlu0 %3928
        %v3930 = vmax.f32 %v3793, %v3795
        %3931 = vmax.xlane.f32.xlu0 %v3930
        %v3932 = vpop.xlane.xlu0 %3931
        %v3933 = vmax.f32 %v3799, %v3801
        %3934 = vmax.xlane.f32.xlu0 %v3933
        %v3935 = vpop.xlane.xlu0 %3934
        %v3936 = vmax.f32 %v3803, %v3805
        %3937 = vmax.xlane.f32.xlu0 %v3936
        %v3938 = vpop.xlane.xlu0 %3937
        %v3939 = vmax.f32 %v3809, %v3811
        %3940 = vmax.xlane.f32.xlu0 %v3939
        %v3941 = vpop.xlane.xlu0 %3940
        %v3942 = vmax.f32 %v3813, %v3815
        %3943 = vmax.xlane.f32.xlu0 %v3942
        %v3944 = vpop.xlane.xlu0 %3943
        %v3945 = vmax.f32 %v3819, %v3821
        %3946 = vmax.xlane.f32.xlu0 %v3945
        %v3947 = vpop.xlane.xlu0 %3946
        %v3948 = vmax.f32 %v3823, %v3825
        %3949 = vmax.xlane.f32.xlu0 %v3948
        %v3950 = vpop.xlane.xlu0 %3949
        %v3951 = vmax.f32 %v3829, %v3831
        %3952 = vmax.xlane.f32.xlu0 %v3951
        %v3953 = vpop.xlane.xlu0 %3952
        %v3954 = vmax.f32 %v3833, %v3835
        %3955 = vmax.xlane.f32.xlu0 %v3954
        %v3956 = vpop.xlane.xlu0 %3955
        %v3957 = vmax.f32 %v3839, %v3841
        %3958 = vmax.xlane.f32.xlu0 %v3957
        %v3959 = vpop.xlane.xlu0 %3958
        %v3960 = vmax.f32 %v3843, %v3845
        %3961 = vmax.xlane.f32.xlu0 %v3960
        %v3962 = vpop.xlane.xlu0 %3961
        %v3963 = vmax.f32 %v3849, %v3851
        %3964 = vmax.xlane.f32.xlu0 %v3963
        %v3965 = vpop.xlane.xlu0 %3964
        %v3966 = vmax.f32 %v3853, %v3855
        %3967 = vmax.xlane.f32.xlu0 %v3966
        %v3968 = vpop.xlane.xlu0 %3967
        %v3969 = vmax.f32 %v3859, %v3861
        %3970 = vmax.xlane.f32.xlu0 %v3969
        %v3971 = vpop.xlane.xlu0 %3970
        %v3972 = vmax.f32 %v3863, %v3865
        %3973 = vmax.xlane.f32.xlu0 %v3972
        %v3974 = vpop.xlane.xlu0 %3973
        %v3975 = vmax.f32 %v3869, %v3871
        %3976 = vmax.xlane.f32.xlu0 %v3975
        %v3977 = vpop.xlane.xlu0 %3976
        %v3978 = vmax.f32 %v3873, %v3875
        %3979 = vmax.xlane.f32.xlu0 %v3978
        %v3980 = vpop.xlane.xlu0 %3979
        %v3981 = vmax.f32 %v3879, %v3881
        %3982 = vmax.xlane.f32.xlu0 %v3981
        %v3983 = vpop.xlane.xlu0 %3982
        %v3984 = vmax.f32 %v3883, %v3885
        %3985 = vmax.xlane.f32.xlu0 %v3984
        %v3986 = vpop.xlane.xlu0 %3985
        %v3987 = vmax.f32 %v3889, %v3891
        %3988 = vmax.xlane.f32.xlu0 %v3987
        %v3989 = vpop.xlane.xlu0 %3988
        %v3990 = vmax.f32 %v3893, %v3895
        %3991 = vmax.xlane.f32.xlu0 %v3990
        %v3992 = vpop.xlane.xlu0 %3991
        %v3993 = vsub.f32 %v3739, %v3899
        %v3994 = vsub.f32 %v3741, %v3899
        %v3995 = vsub.f32 %v3743, %v3902
        %v3996 = vsub.f32 %v3745, %v3902
        %v3997 = vsub.f32 %v3749, %v3905
        %v3998 = vsub.f32 %v3751, %v3905
        %v3999 = vsub.f32 %v3753, %v3908
        %v4000 = vsub.f32 %v3755, %v3908
        %v4001 = vsub.f32 %v3759, %v3911
        %v4002 = vsub.f32 %v3761, %v3911
        %v4003 = vsub.f32 %v3763, %v3914
        %v4004 = vsub.f32 %v3765, %v3914
        %v4005 = vsub.f32 %v3769, %v3917
        %v4006 = vsub.f32 %v3771, %v3917
        %v4007 = vsub.f32 %v3773, %v3920
        %v4008 = vsub.f32 %v3775, %v3920
        %v4009 = vsub.f32 %v3779, %v3923
        %v4010 = vsub.f32 %v3781, %v3923
        %v4011 = vsub.f32 %v3783, %v3926
        %v4012 = vsub.f32 %v3785, %v3926
        %v4013 = vsub.f32 %v3789, %v3929
        %v4014 = vsub.f32 %v3791, %v3929
        %v4015 = vsub.f32 %v3793, %v3932
        %v4016 = vsub.f32 %v3795, %v3932
        %v4017 = vsub.f32 %v3799, %v3935
        %v4018 = vsub.f32 %v3801, %v3935
        %v4019 = vsub.f32 %v3803, %v3938
        %v4020 = vsub.f32 %v3805, %v3938
        %v4021 = vsub.f32 %v3809, %v3941
        %v4022 = vsub.f32 %v3811, %v3941
        %v4023 = vsub.f32 %v3813, %v3944
        %v4024 = vsub.f32 %v3815, %v3944
        %v4025 = vsub.f32 %v3819, %v3947
        %v4026 = vsub.f32 %v3821, %v3947
        %v4027 = vsub.f32 %v3823, %v3950
        %v4028 = vsub.f32 %v3825, %v3950
        %v4029 = vsub.f32 %v3829, %v3953
        %v4030 = vsub.f32 %v3831, %v3953
        %v4031 = vsub.f32 %v3833, %v3956
        %v4032 = vsub.f32 %v3835, %v3956
        %v4033 = vsub.f32 %v3839, %v3959
        %v4034 = vsub.f32 %v3841, %v3959
        %v4035 = vsub.f32 %v3843, %v3962
        %v4036 = vsub.f32 %v3845, %v3962
        %v4037 = vsub.f32 %v3849, %v3965
        %v4038 = vsub.f32 %v3851, %v3965
        %v4039 = vsub.f32 %v3853, %v3968
        %v4040 = vsub.f32 %v3855, %v3968
        %v4041 = vsub.f32 %v3859, %v3971
        %v4042 = vsub.f32 %v3861, %v3971
        %v4043 = vsub.f32 %v3863, %v3974
        %v4044 = vsub.f32 %v3865, %v3974
        %v4045 = vsub.f32 %v3869, %v3977
        %v4046 = vsub.f32 %v3871, %v3977
        %v4047 = vsub.f32 %v3873, %v3980
        %v4048 = vsub.f32 %v3875, %v3980
        %v4049 = vsub.f32 %v3879, %v3983
        %v4050 = vsub.f32 %v3881, %v3983
        %v4051 = vsub.f32 %v3883, %v3986
        %v4052 = vsub.f32 %v3885, %v3986
        %v4053 = vsub.f32 %v3889, %v3989
        %v4054 = vsub.f32 %v3891, %v3989
        %v4055 = vsub.f32 %v3893, %v3992
        %v4056 = vsub.f32 %v3895, %v3992
        %v4057 = vmul.f32 %v3993, 1.442695
        %v4058 = vpow.pop %v4057
        %v4059 = vmul.f32 %v3994, 1.442695
        %v4060 = vpow.pop %v4059
        %v4061 = vmul.f32 %v3995, 1.442695
        %v4062 = vpow.pop %v4061
        %v4063 = vmul.f32 %v3996, 1.442695
        %v4064 = vpow.pop %v4063
        %v4065 = vmul.f32 %v3997, 1.442695
        %v4066 = vpow.pop %v4065
        %v4067 = vmul.f32 %v3998, 1.442695
        %v4068 = vpow.pop %v4067
        %v4069 = vmul.f32 %v3999, 1.442695
        %v4070 = vpow.pop %v4069
        %v4071 = vmul.f32 %v4000, 1.442695
        %v4072 = vpow.pop %v4071
        %v4073 = vmul.f32 %v4001, 1.442695
        %v4074 = vpow.pop %v4073
        %v4075 = vmul.f32 %v4002, 1.442695
        %v4076 = vpow.pop %v4075
        %v4077 = vmul.f32 %v4003, 1.442695
        %v4078 = vpow.pop %v4077
        %v4079 = vmul.f32 %v4004, 1.442695
        %v4080 = vpow.pop %v4079
        %v4081 = vmul.f32 %v4005, 1.442695
        %v4082 = vpow.pop %v4081
        %v4083 = vmul.f32 %v4006, 1.442695
        %v4084 = vpow.pop %v4083
        %v4085 = vmul.f32 %v4007, 1.442695
        %v4086 = vpow.pop %v4085
        %v4087 = vmul.f32 %v4008, 1.442695
        %v4088 = vpow.pop %v4087
        %v4089 = vmul.f32 %v4009, 1.442695
        %v4090 = vpow.pop %v4089
        %v4091 = vmul.f32 %v4010, 1.442695
        %v4092 = vpow.pop %v4091
        %v4093 = vmul.f32 %v4011, 1.442695
        %v4094 = vpow.pop %v4093
        %v4095 = vmul.f32 %v4012, 1.442695
        %v4096 = vpow.pop %v4095
        %v4097 = vmul.f32 %v4013, 1.442695
        %v4098 = vpow.pop %v4097
        %v4099 = vmul.f32 %v4014, 1.442695
        %v4100 = vpow.pop %v4099
        %v4101 = vmul.f32 %v4015, 1.442695
        %v4102 = vpow.pop %v4101
        %v4103 = vmul.f32 %v4016, 1.442695
        %v4104 = vpow.pop %v4103
        %v4105 = vmul.f32 %v4017, 1.442695
        %v4106 = vpow.pop %v4105
        %v4107 = vmul.f32 %v4018, 1.442695
        %v4108 = vpow.pop %v4107
        %v4109 = vmul.f32 %v4019, 1.442695
        %v4110 = vpow.pop %v4109
        %v4111 = vmul.f32 %v4020, 1.442695
        %v4112 = vpow.pop %v4111
        %v4113 = vmul.f32 %v4021, 1.442695
        %v4114 = vpow.pop %v4113
        %v4115 = vmul.f32 %v4022, 1.442695
        %v4116 = vpow.pop %v4115
        %v4117 = vmul.f32 %v4023, 1.442695
        %v4118 = vpow.pop %v4117
        %v4119 = vmul.f32 %v4024, 1.442695
        %v4120 = vpow.pop %v4119
        %v4121 = vmul.f32 %v4025, 1.442695
        %v4122 = vpow.pop %v4121
        %v4123 = vmul.f32 %v4026, 1.442695
        %v4124 = vpow.pop %v4123
        %v4125 = vmul.f32 %v4027, 1.442695
        %v4126 = vpow.pop %v4125
        %v4127 = vmul.f32 %v4028, 1.442695
        %v4128 = vpow.pop %v4127
        %v4129 = vmul.f32 %v4029, 1.442695
        %v4130 = vpow.pop %v4129
        %v4131 = vmul.f32 %v4030, 1.442695
        %v4132 = vpow.pop %v4131
        %v4133 = vmul.f32 %v4031, 1.442695
        %v4134 = vpow.pop %v4133
        %v4135 = vmul.f32 %v4032, 1.442695
        %v4136 = vpow.pop %v4135
        %v4137 = vmul.f32 %v4033, 1.442695
        %v4138 = vpow.pop %v4137
        %v4139 = vmul.f32 %v4034, 1.442695
        %v4140 = vpow.pop %v4139
        %v4141 = vmul.f32 %v4035, 1.442695
        %v4142 = vpow.pop %v4141
        %v4143 = vmul.f32 %v4036, 1.442695
        %v4144 = vpow.pop %v4143
        %v4145 = vmul.f32 %v4037, 1.442695
        %v4146 = vpow.pop %v4145
        %v4147 = vmul.f32 %v4038, 1.442695
        %v4148 = vpow.pop %v4147
        %v4149 = vmul.f32 %v4039, 1.442695
        %v4150 = vpow.pop %v4149
        %v4151 = vmul.f32 %v4040, 1.442695
        %v4152 = vpow.pop %v4151
        %v4153 = vmul.f32 %v4041, 1.442695
        %v4154 = vpow.pop %v4153
        %v4155 = vmul.f32 %v4042, 1.442695
        %v4156 = vpow.pop %v4155
        %v4157 = vmul.f32 %v4043, 1.442695
        %v4158 = vpow.pop %v4157
        %v4159 = vmul.f32 %v4044, 1.442695
        %v4160 = vpow.pop %v4159
        %v4161 = vmul.f32 %v4045, 1.442695
        %v4162 = vpow.pop %v4161
        %v4163 = vmul.f32 %v4046, 1.442695
        %v4164 = vpow.pop %v4163
        %v4165 = vmul.f32 %v4047, 1.442695
        %v4166 = vpow.pop %v4165
        %v4167 = vmul.f32 %v4048, 1.442695
        %v4168 = vpow.pop %v4167
        %v4169 = vmul.f32 %v4049, 1.442695
        %v4170 = vpow.pop %v4169
        %v4171 = vmul.f32 %v4050, 1.442695
        %v4172 = vpow.pop %v4171
        %v4173 = vmul.f32 %v4051, 1.442695
        %v4174 = vpow.pop %v4173
        %v4175 = vmul.f32 %v4052, 1.442695
        %v4176 = vpow.pop %v4175
        %v4177 = vmul.f32 %v4053, 1.442695
        %v4178 = vpow.pop %v4177
        %v4179 = vmul.f32 %v4054, 1.442695
        %v4180 = vpow.pop %v4179
        %v4181 = vmul.f32 %v4055, 1.442695
        %v4182 = vpow.pop %v4181
        %v4183 = vmul.f32 %v4056, 1.442695
        %v4184 = vpow.pop %v4183
        %v4185 = vadd.f32 %v4058, %v4060
        %4186 = vadd.xlane.f32.xlu0 %v4185
        %v4187 = vpop.xlane.xlu0 %4186
        %v4188 = vadd.f32 %v4062, %v4064
        %4189 = vadd.xlane.f32.xlu0 %v4188
        %v4190 = vpop.xlane.xlu0 %4189
        %v4191 = vadd.f32 %v4066, %v4068
        %4192 = vadd.xlane.f32.xlu0 %v4191
        %v4193 = vpop.xlane.xlu0 %4192
        %v4194 = vadd.f32 %v4070, %v4072
        %4195 = vadd.xlane.f32.xlu0 %v4194
        %v4196 = vpop.xlane.xlu0 %4195
        %v4197 = vadd.f32 %v4074, %v4076
        %4198 = vadd.xlane.f32.xlu0 %v4197
        %v4199 = vpop.xlane.xlu0 %4198
        %v4200 = vadd.f32 %v4078, %v4080
        %4201 = vadd.xlane.f32.xlu0 %v4200
        %v4202 = vpop.xlane.xlu0 %4201
        %v4203 = vadd.f32 %v4082, %v4084
        %4204 = vadd.xlane.f32.xlu0 %v4203
        %v4205 = vpop.xlane.xlu0 %4204
        %v4206 = vadd.f32 %v4086, %v4088
        %4207 = vadd.xlane.f32.xlu0 %v4206
        %v4208 = vpop.xlane.xlu0 %4207
        %v4209 = vadd.f32 %v4090, %v4092
        %4210 = vadd.xlane.f32.xlu0 %v4209
        %v4211 = vpop.xlane.xlu0 %4210
        %v4212 = vadd.f32 %v4094, %v4096
        %4213 = vadd.xlane.f32.xlu0 %v4212
        %v4214 = vpop.xlane.xlu0 %4213
        %v4215 = vadd.f32 %v4098, %v4100
        %4216 = vadd.xlane.f32.xlu0 %v4215
        %v4217 = vpop.xlane.xlu0 %4216
        %v4218 = vadd.f32 %v4102, %v4104
        %4219 = vadd.xlane.f32.xlu0 %v4218
        %v4220 = vpop.xlane.xlu0 %4219
        %v4221 = vadd.f32 %v4106, %v4108
        %4222 = vadd.xlane.f32.xlu0 %v4221
        %v4223 = vpop.xlane.xlu0 %4222
        %v4224 = vadd.f32 %v4110, %v4112
        %4225 = vadd.xlane.f32.xlu0 %v4224
        %v4226 = vpop.xlane.xlu0 %4225
        %v4227 = vadd.f32 %v4114, %v4116
        %4228 = vadd.xlane.f32.xlu0 %v4227
        %v4229 = vpop.xlane.xlu0 %4228
        %v4230 = vadd.f32 %v4118, %v4120
        %4231 = vadd.xlane.f32.xlu0 %v4230
        %v4232 = vpop.xlane.xlu0 %4231
        %v4233 = vadd.f32 %v4122, %v4124
        %4234 = vadd.xlane.f32.xlu0 %v4233
        %v4235 = vpop.xlane.xlu0 %4234
        %v4236 = vadd.f32 %v4126, %v4128
        %4237 = vadd.xlane.f32.xlu0 %v4236
        %v4238 = vpop.xlane.xlu0 %4237
        %v4239 = vadd.f32 %v4130, %v4132
        %4240 = vadd.xlane.f32.xlu0 %v4239
        %v4241 = vpop.xlane.xlu0 %4240
        %v4242 = vadd.f32 %v4134, %v4136
        %4243 = vadd.xlane.f32.xlu0 %v4242
        %v4244 = vpop.xlane.xlu0 %4243
        %v4245 = vadd.f32 %v4138, %v4140
        %4246 = vadd.xlane.f32.xlu0 %v4245
        %v4247 = vpop.xlane.xlu0 %4246
        %v4248 = vadd.f32 %v4142, %v4144
        %4249 = vadd.xlane.f32.xlu0 %v4248
        %v4250 = vpop.xlane.xlu0 %4249
        %v4251 = vadd.f32 %v4146, %v4148
        %4252 = vadd.xlane.f32.xlu0 %v4251
        %v4253 = vpop.xlane.xlu0 %4252
        %v4254 = vadd.f32 %v4150, %v4152
        %4255 = vadd.xlane.f32.xlu0 %v4254
        %v4256 = vpop.xlane.xlu0 %4255
        %v4257 = vadd.f32 %v4154, %v4156
        %4258 = vadd.xlane.f32.xlu0 %v4257
        %v4259 = vpop.xlane.xlu0 %4258
        %v4260 = vadd.f32 %v4158, %v4160
        %4261 = vadd.xlane.f32.xlu0 %v4260
        %v4262 = vpop.xlane.xlu0 %4261
        %v4263 = vadd.f32 %v4162, %v4164
        %4264 = vadd.xlane.f32.xlu0 %v4263
        %v4265 = vpop.xlane.xlu0 %4264
        %v4266 = vadd.f32 %v4166, %v4168
        %4267 = vadd.xlane.f32.xlu0 %v4266
        %v4268 = vpop.xlane.xlu0 %4267
        %v4269 = vadd.f32 %v4170, %v4172
        %4270 = vadd.xlane.f32.xlu0 %v4269
        %v4271 = vpop.xlane.xlu0 %4270
        %v4272 = vadd.f32 %v4174, %v4176
        %4273 = vadd.xlane.f32.xlu0 %v4272
        %v4274 = vpop.xlane.xlu0 %4273
        %v4275 = vadd.f32 %v4178, %v4180
        %4276 = vadd.xlane.f32.xlu0 %v4275
        %v4277 = vpop.xlane.xlu0 %4276
        %v4278 = vadd.f32 %v4182, %v4184
        %4279 = vadd.xlane.f32.xlu0 %v4278
        %v4280 = vpop.xlane.xlu0 %4279
        %v4281 = vrcp.pop %v4187
        %v4282 = vrcp.pop %v4190
        %v4283 = vrcp.pop %v4193
        %v4284 = vrcp.pop %v4196
        %v4285 = vrcp.pop %v4199
        %v4286 = vrcp.pop %v4202
        %v4287 = vrcp.pop %v4205
        %v4288 = vrcp.pop %v4208
        %v4289 = vrcp.pop %v4211
        %v4290 = vrcp.pop %v4214
        %v4291 = vrcp.pop %v4217
        %v4292 = vrcp.pop %v4220
        %v4293 = vrcp.pop %v4223
        %v4294 = vrcp.pop %v4226
        %v4295 = vrcp.pop %v4229
        %v4296 = vrcp.pop %v4232
        %v4297 = vrcp.pop %v4235
        %v4298 = vrcp.pop %v4238
        %v4299 = vrcp.pop %v4241
        %v4300 = vrcp.pop %v4244
        %v4301 = vrcp.pop %v4247
        %v4302 = vrcp.pop %v4250
        %v4303 = vrcp.pop %v4253
        %v4304 = vrcp.pop %v4256
        %v4305 = vrcp.pop %v4259
        %v4306 = vrcp.pop %v4262
        %v4307 = vrcp.pop %v4265
        %v4308 = vrcp.pop %v4268
        %v4309 = vrcp.pop %v4271
        %v4310 = vrcp.pop %v4274
        %v4311 = vrcp.pop %v4277
        %v4312 = vrcp.pop %v4280
        %v4313 = vmul.f32 %v4058, %v4281
        %v4314 = vmul.f32 %v4060, %v4281
        %v4315 = vmul.f32 %v4062, %v4282
        %v4316 = vmul.f32 %v4064, %v4282
        %v4317 = vmul.f32 %v4066, %v4283
        %v4318 = vmul.f32 %v4068, %v4283
        %v4319 = vmul.f32 %v4070, %v4284
        %v4320 = vmul.f32 %v4072, %v4284
        %v4321 = vmul.f32 %v4074, %v4285
        %v4322 = vmul.f32 %v4076, %v4285
        %v4323 = vmul.f32 %v4078, %v4286
        %v4324 = vmul.f32 %v4080, %v4286
        %v4325 = vmul.f32 %v4082, %v4287
        %v4326 = vmul.f32 %v4084, %v4287
        %v4327 = vmul.f32 %v4086, %v4288
        %v4328 = vmul.f32 %v4088, %v4288
        %v4329 = vmul.f32 %v4090, %v4289
        %v4330 = vmul.f32 %v4092, %v4289
        %v4331 = vmul.f32 %v4094, %v4290
        %v4332 = vmul.f32 %v4096, %v4290
        %v4333 = vmul.f32 %v4098, %v4291
        %v4334 = vmul.f32 %v4100, %v4291
        %v4335 = vmul.f32 %v4102, %v4292
        %v4336 = vmul.f32 %v4104, %v4292
        %v4337 = vmul.f32 %v4106, %v4293
        %v4338 = vmul.f32 %v4108, %v4293
        %v4339 = vmul.f32 %v4110, %v4294
        %v4340 = vmul.f32 %v4112, %v4294
        %v4341 = vmul.f32 %v4114, %v4295
        %v4342 = vmul.f32 %v4116, %v4295
        %v4343 = vmul.f32 %v4118, %v4296
        %v4344 = vmul.f32 %v4120, %v4296
        %v4345 = vmul.f32 %v4122, %v4297
        %v4346 = vmul.f32 %v4124, %v4297
        %v4347 = vmul.f32 %v4126, %v4298
        %v4348 = vmul.f32 %v4128, %v4298
        %v4349 = vmul.f32 %v4130, %v4299
        %v4350 = vmul.f32 %v4132, %v4299
        %v4351 = vmul.f32 %v4134, %v4300
        %v4352 = vmul.f32 %v4136, %v4300
        %v4353 = vmul.f32 %v4138, %v4301
        %v4354 = vmul.f32 %v4140, %v4301
        %v4355 = vmul.f32 %v4142, %v4302
        %v4356 = vmul.f32 %v4144, %v4302
        %v4357 = vmul.f32 %v4146, %v4303
        %v4358 = vmul.f32 %v4148, %v4303
        %v4359 = vmul.f32 %v4150, %v4304
        %v4360 = vmul.f32 %v4152, %v4304
        %v4361 = vmul.f32 %v4154, %v4305
        %v4362 = vmul.f32 %v4156, %v4305
        %v4363 = vmul.f32 %v4158, %v4306
        %v4364 = vmul.f32 %v4160, %v4306
        %v4365 = vmul.f32 %v4162, %v4307
        %v4366 = vmul.f32 %v4164, %v4307
        %v4367 = vmul.f32 %v4166, %v4308
        %v4368 = vmul.f32 %v4168, %v4308
        %v4369 = vmul.f32 %v4170, %v4309
        %v4370 = vmul.f32 %v4172, %v4309
        %v4371 = vmul.f32 %v4174, %v4310
        %v4372 = vmul.f32 %v4176, %v4310
        %v4373 = vmul.f32 %v4178, %v4311
        %v4374 = vmul.f32 %v4180, %v4311
        %v4375 = vmul.f32 %v4182, %v4312
        %v4376 = vmul.f32 %v4184, %v4312
        %v4377 = vpack.c.bf16 %v4315, %v4313
        %v4378 = vpack.c.bf16 %v4316, %v4314
        %v4379 = vpack.c.bf16 %v4319, %v4317
        %v4380 = vpack.c.bf16 %v4320, %v4318
        %v4381 = vpack.c.bf16 %v4323, %v4321
        %v4382 = vpack.c.bf16 %v4324, %v4322
        %v4383 = vpack.c.bf16 %v4327, %v4325
        %v4384 = vpack.c.bf16 %v4328, %v4326
        %v4385 = vpack.c.bf16 %v4331, %v4329
        %v4386 = vpack.c.bf16 %v4332, %v4330
        %v4387 = vpack.c.bf16 %v4335, %v4333
        %v4388 = vpack.c.bf16 %v4336, %v4334
        %v4389 = vpack.c.bf16 %v4339, %v4337
        %v4390 = vpack.c.bf16 %v4340, %v4338
        %v4391 = vpack.c.bf16 %v4343, %v4341
        %v4392 = vpack.c.bf16 %v4344, %v4342
        %v4393 = vpack.c.bf16 %v4347, %v4345
        %v4394 = vpack.c.bf16 %v4348, %v4346
        %v4395 = vpack.c.bf16 %v4351, %v4349
        %v4396 = vpack.c.bf16 %v4352, %v4350
        %v4397 = vpack.c.bf16 %v4355, %v4353
        %v4398 = vpack.c.bf16 %v4356, %v4354
        %v4399 = vpack.c.bf16 %v4359, %v4357
        %v4400 = vpack.c.bf16 %v4360, %v4358
        %v4401 = vpack.c.bf16 %v4363, %v4361
        %v4402 = vpack.c.bf16 %v4364, %v4362
        %v4403 = vpack.c.bf16 %v4367, %v4365
        %v4404 = vpack.c.bf16 %v4368, %v4366
        %v4405 = vpack.c.bf16 %v4371, %v4369
        %v4406 = vpack.c.bf16 %v4372, %v4370
        %v4407 = vpack.c.bf16 %v4375, %v4373
        %v4408 = vpack.c.bf16 %v4376, %v4374
        %v4409 = vpack.c.bf16 %v3453, %v3450
        %v4410 = vpack.c.bf16 %v3461, %v3458
        %v4411 = vpack.c.bf16 %v3469, %v3466
        %v4412 = vpack.c.bf16 %v3477, %v3474
        %v4413 = vpack.c.bf16 %v3485, %v3482
        %v4414 = vpack.c.bf16 %v3493, %v3490
        %v4415 = vpack.c.bf16 %v3501, %v3498
        %v4416 = vpack.c.bf16 %v3509, %v3506
        %v4417 = vpack.c.bf16 %v3517, %v3514
        %v4418 = vpack.c.bf16 %v3525, %v3522
        %v4419 = vpack.c.bf16 %v3533, %v3530
        %v4420 = vpack.c.bf16 %v3541, %v3538
        %v4421 = vpack.c.bf16 %v3549, %v3546
        %v4422 = vpack.c.bf16 %v3557, %v3554
        %v4423 = vpack.c.bf16 %v3565, %v3562
        %v4424 = vpack.c.bf16 %v3573, %v3570
        %4425 = vmatprep.subr.bf16.mxu0 0
        %4426 = vmatpush1.bf16.msra.mxu0 %v4409
        %4427 = vmatprep.subr.bf16.mxu0 0
        %4428 = vmatpush1.bf16.msra.mxu0 %v4410
        %4429 = vmatprep.subr.bf16.mxu0 0
        %4430 = vmatpush1.bf16.msra.mxu0 %v4411
        %4431 = vmatprep.subr.bf16.mxu0 0
        %4432 = vmatpush1.bf16.msra.mxu0 %v4412
        %4433 = vmatprep.subr.bf16.mxu0 0
        %4434 = vmatpush1.bf16.msra.mxu0 %v4413
        %4435 = vmatprep.subr.bf16.mxu0 0
        %4436 = vmatpush1.bf16.msra.mxu0 %v4414
        %4437 = vmatprep.subr.bf16.mxu0 0
        %4438 = vmatpush1.bf16.msra.mxu0 %v4415
        %4439 = vmatprep.subr.bf16.mxu0 0
        %4440 = vmatpush1.bf16.msra.mxu0 %v4416
        %4441 = vmatprep.subr.bf16.mxu0 0
        %4442 = vmatpush1.bf16.msra.mxu0 %v4417
        %4443 = vmatprep.subr.bf16.mxu0 0
        %4444 = vmatpush1.bf16.msra.mxu0 %v4418
        %4445 = vmatprep.subr.bf16.mxu0 0
        %4446 = vmatpush1.bf16.msra.mxu0 %v4419
        %4447 = vmatprep.subr.bf16.mxu0 0
        %4448 = vmatpush1.bf16.msra.mxu0 %v4420
        %4449 = vmatprep.subr.bf16.mxu0 0
        %4450 = vmatpush1.bf16.msra.mxu0 %v4421
        %4451 = vmatprep.subr.bf16.mxu0 0
        %4452 = vmatpush1.bf16.msra.mxu0 %v4422
        %4453 = vmatprep.subr.bf16.mxu0 0
        %4454 = vmatpush1.bf16.msra.mxu0 %v4423
        %4455 = vmatprep.subr.bf16.mxu0 0
        %4456 = vmatpush1.bf16.msra.mxu0 %v4424
        %4457 = vmatprep.mubr.bf16.mxu0 %v4378
        %4458 = vmatmul.mubr.bf16.gmra.mrb[0].mxu0 %v4377
        %v4459 = vpop.f32.mrb[0].mxu0
        %v4460 = vadd.f32 0.0, %v4459
        %v4461 = vpop.f32.mrb[0].mxu0
        %v4462 = vpop.f32.mrb[0].mxu0
        %v4463 = vadd.f32 0.0, %v4462
        %v4464 = vpop.f32.mrb[0].mxu0
        %4465 = vmatprep.mubr.bf16.mxu0 %v4380
        %4466 = vmatmul.mubr.bf16.gmra.mrb[0].mxu0 %v4379
        %v4467 = vpop.f32.mrb[0].mxu0
        %v4468 = vadd.f32 0.0, %v4467
        %v4469 = vpop.f32.mrb[0].mxu0
        %v4470 = vpop.f32.mrb[0].mxu0
        %v4471 = vadd.f32 0.0, %v4470
        %v4472 = vpop.f32.mrb[0].mxu0
        %4473 = vmatprep.mubr.bf16.mxu0 %v4382
        %4474 = vmatmul.mubr.bf16.gmra.mrb[0].mxu0 %v4381
        %v4475 = vpop.f32.mrb[0].mxu0
        %v4476 = vadd.f32 0.0, %v4475
        %v4477 = vpop.f32.mrb[0].mxu0
        %v4478 = vpop.f32.mrb[0].mxu0
        %v4479 = vadd.f32 0.0, %v4478
        %v4480 = vpop.f32.mrb[0].mxu0
        %4481 = vmatprep.mubr.bf16.mxu0 %v4384
        %4482 = vmatmul.mubr.bf16.gmra.mrb[0].mxu0 %v4383
        %v4483 = vpop.f32.mrb[0].mxu0
        %v4484 = vadd.f32 0.0, %v4483
        %v4485 = vpop.f32.mrb[0].mxu0
        %v4486 = vpop.f32.mrb[0].mxu0
        %v4487 = vadd.f32 0.0, %v4486
        %v4488 = vpop.f32.mrb[0].mxu0
        %4489 = vmatprep.mubr.bf16.mxu0 %v4386
        %4490 = vmatmul.mubr.bf16.gmra.mrb[0].mxu0 %v4385
        %v4491 = vpop.f32.mrb[0].mxu0
        %v4492 = vadd.f32 0.0, %v4491
        %v4493 = vpop.f32.mrb[0].mxu0
        %v4494 = vpop.f32.mrb[0].mxu0
        %v4495 = vadd.f32 0.0, %v4494
        %v4496 = vpop.f32.mrb[0].mxu0
        %4497 = vmatprep.mubr.bf16.mxu0 %v4388
        %4498 = vmatmul.mubr.bf16.gmra.mrb[0].mxu0 %v4387
        %v4499 = vpop.f32.mrb[0].mxu0
        %v4500 = vadd.f32 0.0, %v4499
        %v4501 = vpop.f32.mrb[0].mxu0
        %v4502 = vpop.f32.mrb[0].mxu0
        %v4503 = vadd.f32 0.0, %v4502
        %v4504 = vpop.f32.mrb[0].mxu0
        %4505 = vmatprep.mubr.bf16.mxu0 %v4390
        %4506 = vmatmul.mubr.bf16.gmra.mrb[0].mxu0 %v4389
        %v4507 = vpop.f32.mrb[0].mxu0
        %v4508 = vadd.f32 0.0, %v4507
        %v4509 = vpop.f32.mrb[0].mxu0
        %v4510 = vpop.f32.mrb[0].mxu0
        %v4511 = vadd.f32 0.0, %v4510
        %v4512 = vpop.f32.mrb[0].mxu0
        %4513 = vmatprep.mubr.bf16.mxu0 %v4392
        %4514 = vmatmul.mubr.bf16.gmra.mrb[0].mxu0 %v4391
        %v4515 = vpop.f32.mrb[0].mxu0
        %v4516 = vadd.f32 0.0, %v4515
        %v4517 = vpop.f32.mrb[0].mxu0
        %v4518 = vpop.f32.mrb[0].mxu0
        %v4519 = vadd.f32 0.0, %v4518
        %v4520 = vpop.f32.mrb[0].mxu0
        %4521 = vmatprep.mubr.bf16.mxu0 %v4394
        %4522 = vmatmul.mubr.bf16.gmra.mrb[0].mxu0 %v4393
        %v4523 = vpop.f32.mrb[0].mxu0
        %v4524 = vadd.f32 0.0, %v4523
        %v4525 = vpop.f32.mrb[0].mxu0
        %v4526 = vpop.f32.mrb[0].mxu0
        %v4527 = vadd.f32 0.0, %v4526
        %v4528 = vpop.f32.mrb[0].mxu0
        %4529 = vmatprep.mubr.bf16.mxu0 %v4396
        %4530 = vmatmul.mubr.bf16.gmra.mrb[0].mxu0 %v4395
        %v4531 = vpop.f32.mrb[0].mxu0
        %v4532 = vadd.f32 0.0, %v4531
        %v4533 = vpop.f32.mrb[0].mxu0
        %v4534 = vpop.f32.mrb[0].mxu0
        %v4535 = vadd.f32 0.0, %v4534
        %v4536 = vpop.f32.mrb[0].mxu0
        %4537 = vmatprep.mubr.bf16.mxu0 %v4398
        %4538 = vmatmul.mubr.bf16.gmra.mrb[0].mxu0 %v4397
        %v4539 = vpop.f32.mrb[0].mxu0
        %v4540 = vadd.f32 0.0, %v4539
        %v4541 = vpop.f32.mrb[0].mxu0
        %v4542 = vpop.f32.mrb[0].mxu0
        %v4543 = vadd.f32 0.0, %v4542
        %v4544 = vpop.f32.mrb[0].mxu0
        %4545 = vmatprep.mubr.bf16.mxu0 %v4400
        %4546 = vmatmul.mubr.bf16.gmra.mrb[0].mxu0 %v4399
        %v4547 = vpop.f32.mrb[0].mxu0
        %v4548 = vadd.f32 0.0, %v4547
        %v4549 = vpop.f32.mrb[0].mxu0
        %v4550 = vpop.f32.mrb[0].mxu0
        %v4551 = vadd.f32 0.0, %v4550
        %v4552 = vpop.f32.mrb[0].mxu0
        %4553 = vmatprep.mubr.bf16.mxu0 %v4402
        %4554 = vmatmul.mubr.bf16.gmra.mrb[0].mxu0 %v4401
        %v4555 = vpop.f32.mrb[0].mxu0
        %v4556 = vadd.f32 0.0, %v4555
        %v4557 = vpop.f32.mrb[0].mxu0
        %v4558 = vpop.f32.mrb[0].mxu0
        %v4559 = vadd.f32 0.0, %v4558
        %v4560 = vpop.f32.mrb[0].mxu0
        %4561 = vmatprep.mubr.bf16.mxu0 %v4404
        %4562 = vmatmul.mubr.bf16.gmra.mrb[0].mxu0 %v4403
        %v4563 = vpop.f32.mrb[0].mxu0
        %v4564 = vadd.f32 0.0, %v4563
        %v4565 = vpop.f32.mrb[0].mxu0
        %v4566 = vpop.f32.mrb[0].mxu0
        %v4567 = vadd.f32 0.0, %v4566
        %v4568 = vpop.f32.mrb[0].mxu0
        %4569 = vmatprep.mubr.bf16.mxu0 %v4406
        %4570 = vmatmul.mubr.bf16.gmra.mrb[0].mxu0 %v4405
        %v4571 = vpop.f32.mrb[0].mxu0
        %v4572 = vadd.f32 0.0, %v4571
        %v4573 = vpop.f32.mrb[0].mxu0
        %v4574 = vpop.f32.mrb[0].mxu0
        %v4575 = vadd.f32 0.0, %v4574
        %v4576 = vpop.f32.mrb[0].mxu0
        %4577 = vmatprep.mubr.bf16.mxu0 %v4408
        %4578 = vmatmul.mubr.bf16.gmra.mrb[0].mxu0 %v4407
        %v4579 = vpop.f32.mrb[0].mxu0
        %v4580 = vadd.f32 0.0, %v4579
        %v4581 = vpop.f32.mrb[0].mxu0
        %v4582 = vpop.f32.mrb[0].mxu0
        %v4583 = vadd.f32 0.0, %v4582
        %v4584 = vpop.f32.mrb[0].mxu0
        %4585 = vdwg.mxu0
        %v4586 = vld [vmem:[#allocation3] sm:$0xff]
        %v4587 = vld [vmem:[#allocation3 + $0x8] sm:$0xff]
        %v4588 = vld [vmem:[#allocation3 + $0x10] sm:$0xff]
        %v4589 = vld [vmem:[#allocation3 + $0x18] sm:$0xff]
        %v4590 = vld [vmem:[#allocation3 + $0x20] sm:$0xff]
        %v4591 = vld [vmem:[#allocation3 + $0x28] sm:$0xff]
        %v4592 = vld [vmem:[#allocation3 + $0x30] sm:$0xff]
        %v4593 = vld [vmem:[#allocation3 + $0x38] sm:$0xff]
        %v4594 = vld [vmem:[#allocation3 + $0x40] sm:$0xff]
        %v4595 = vld [vmem:[#allocation3 + $0x48] sm:$0xff]
        %v4596 = vld [vmem:[#allocation3 + $0x50] sm:$0xff]
        %v4597 = vld [vmem:[#allocation3 + $0x58] sm:$0xff]
        %v4598 = vld [vmem:[#allocation3 + $0x60] sm:$0xff]
        %v4599 = vld [vmem:[#allocation3 + $0x68] sm:$0xff]
        %v4600 = vld [vmem:[#allocation3 + $0x70] sm:$0xff]
        %v4601 = vld [vmem:[#allocation3 + $0x78] sm:$0xff]
        %v4602 = vld [vmem:[#allocation3 + $0x80] sm:$0xff]
        %v4603 = vld [vmem:[#allocation3 + $0x88] sm:$0xff]
        %v4604 = vld [vmem:[#allocation3 + $0x90] sm:$0xff]
        %v4605 = vld [vmem:[#allocation3 + $0x98] sm:$0xff]
        %v4606 = vld [vmem:[#allocation3 + $0xa0] sm:$0xff]
        %v4607 = vld [vmem:[#allocation3 + $0xa8] sm:$0xff]
        %v4608 = vld [vmem:[#allocation3 + $0xb0] sm:$0xff]
        %v4609 = vld [vmem:[#allocation3 + $0xb8] sm:$0xff]
        %v4610 = vld [vmem:[#allocation3 + $0xc0] sm:$0xff]
        %v4611 = vld [vmem:[#allocation3 + $0xc8] sm:$0xff]
        %v4612 = vld [vmem:[#allocation3 + $0xd0] sm:$0xff]
        %v4613 = vld [vmem:[#allocation3 + $0xd8] sm:$0xff]
        %v4614 = vld [vmem:[#allocation3 + $0xe0] sm:$0xff]
        %v4615 = vld [vmem:[#allocation3 + $0xe8] sm:$0xff]
        %v4616 = vld [vmem:[#allocation3 + $0xf0] sm:$0xff]
        %v4617 = vld [vmem:[#allocation3 + $0xf8] sm:$0xff]
        %4650 = vrot.lane.b32.xlu0 %v4460, 32
        %v4651 = vpop.permute.xlu0 %4650
        %4652 = vrot.lane.b32.xlu0 %v4463, 32
        %v4653 = vpop.permute.xlu0 %4652
        %4654 = vrot.lane.b32.xlu0 %v4468, 32
        %v4655 = vpop.permute.xlu0 %4654
        %4656 = vrot.lane.b32.xlu0 %v4471, 32
        %v4657 = vpop.permute.xlu0 %4656
        %4658 = vrot.lane.b32.xlu0 %v4476, 32
        %v4659 = vpop.permute.xlu0 %4658
        %4660 = vrot.lane.b32.xlu0 %v4479, 32
        %v4661 = vpop.permute.xlu0 %4660
        %4662 = vrot.lane.b32.xlu0 %v4484, 32
        %v4663 = vpop.permute.xlu0 %4662
        %4664 = vrot.lane.b32.xlu0 %v4487, 32
        %v4665 = vpop.permute.xlu0 %4664
        %4666 = vrot.lane.b32.xlu0 %v4492, 32
        %v4667 = vpop.permute.xlu0 %4666
        %4668 = vrot.lane.b32.xlu0 %v4495, 32
        %v4669 = vpop.permute.xlu0 %4668
        %4670 = vrot.lane.b32.xlu0 %v4500, 32
        %v4671 = vpop.permute.xlu0 %4670
        %4672 = vrot.lane.b32.xlu0 %v4503, 32
        %v4673 = vpop.permute.xlu0 %4672
        %4674 = vrot.lane.b32.xlu0 %v4508, 32
        %v4675 = vpop.permute.xlu0 %4674
        %4676 = vrot.lane.b32.xlu0 %v4511, 32
        %v4677 = vpop.permute.xlu0 %4676
        %4678 = vrot.lane.b32.xlu0 %v4516, 32
        %v4679 = vpop.permute.xlu0 %4678
        %4680 = vrot.lane.b32.xlu0 %v4519, 32
        %v4681 = vpop.permute.xlu0 %4680
        %4682 = vrot.lane.b32.xlu0 %v4524, 32
        %v4683 = vpop.permute.xlu0 %4682
        %4684 = vrot.lane.b32.xlu0 %v4527, 32
        %v4685 = vpop.permute.xlu0 %4684
        %4686 = vrot.lane.b32.xlu0 %v4532, 32
        %v4687 = vpop.permute.xlu0 %4686
        %4688 = vrot.lane.b32.xlu0 %v4535, 32
        %v4689 = vpop.permute.xlu0 %4688
        %4690 = vrot.lane.b32.xlu0 %v4540, 32
        %v4691 = vpop.permute.xlu0 %4690
        %4692 = vrot.lane.b32.xlu0 %v4543, 32
        %v4693 = vpop.permute.xlu0 %4692
        %4694 = vrot.lane.b32.xlu0 %v4548, 32
        %v4695 = vpop.permute.xlu0 %4694
        %4696 = vrot.lane.b32.xlu0 %v4551, 32
        %v4697 = vpop.permute.xlu0 %4696
        %4698 = vrot.lane.b32.xlu0 %v4556, 32
        %v4699 = vpop.permute.xlu0 %4698
        %4700 = vrot.lane.b32.xlu0 %v4559, 32
        %v4701 = vpop.permute.xlu0 %4700
        %4702 = vrot.lane.b32.xlu0 %v4564, 32
        %v4703 = vpop.permute.xlu0 %4702
        %4704 = vrot.lane.b32.xlu0 %v4567, 32
        %v4705 = vpop.permute.xlu0 %4704
        %4706 = vrot.lane.b32.xlu0 %v4572, 32
        %v4707 = vpop.permute.xlu0 %4706
        %4708 = vrot.lane.b32.xlu0 %v4575, 32
        %v4709 = vpop.permute.xlu0 %4708
        %4710 = vrot.lane.b32.xlu0 %v4580, 32
        %v4711 = vpop.permute.xlu0 %4710
        %4712 = vrot.lane.b32.xlu0 %v4583, 32
        %v4713 = vpop.permute.xlu0 %4712
        %v4746 = vadd.f32 %v4586, %v4651
        %v4747 = vadd.f32 %v4587, %v4653
        %v4748 = vadd.f32 %v4588, %v4655
        %v4749 = vadd.f32 %v4589, %v4657
        %v4750 = vadd.f32 %v4590, %v4659
        %v4751 = vadd.f32 %v4591, %v4661
        %v4752 = vadd.f32 %v4592, %v4663
        %v4753 = vadd.f32 %v4593, %v4665
        %v4754 = vadd.f32 %v4594, %v4667
        %v4755 = vadd.f32 %v4595, %v4669
        %v4756 = vadd.f32 %v4596, %v4671
        %v4757 = vadd.f32 %v4597, %v4673
        %v4758 = vadd.f32 %v4598, %v4675
        %v4759 = vadd.f32 %v4599, %v4677
        %v4760 = vadd.f32 %v4600, %v4679
        %v4761 = vadd.f32 %v4601, %v4681
        %v4762 = vadd.f32 %v4602, %v4683
        %v4763 = vadd.f32 %v4603, %v4685
        %v4764 = vadd.f32 %v4604, %v4687
        %v4765 = vadd.f32 %v4605, %v4689
        %v4766 = vadd.f32 %v4606, %v4691
        %v4767 = vadd.f32 %v4607, %v4693
        %v4768 = vadd.f32 %v4608, %v4695
        %v4769 = vadd.f32 %v4609, %v4697
        %v4770 = vadd.f32 %v4610, %v4699
        %v4771 = vadd.f32 %v4611, %v4701
        %v4772 = vadd.f32 %v4612, %v4703
        %v4773 = vadd.f32 %v4613, %v4705
        %v4774 = vadd.f32 %v4614, %v4707
        %v4775 = vadd.f32 %v4615, %v4709
        %v4776 = vadd.f32 %v4616, %v4711
        %v4777 = vadd.f32 %v4617, %v4713
        %vm4778 = vcmask 523520
        %4779 = vst.msk [vmem:[#allocation3] sm:$0xff] %vm4778, %v4746
        %4780 = vst.msk [vmem:[#allocation3 + $0x8] sm:$0xff] %vm4778, %v4747
        %4781 = vst.msk [vmem:[#allocation3 + $0x10] sm:$0xff] %vm4778, %v4748
        %4782 = vst.msk [vmem:[#allocation3 + $0x18] sm:$0xff] %vm4778, %v4749
        %4783 = vst.msk [vmem:[#allocation3 + $0x20] sm:$0xff] %vm4778, %v4750
        %4784 = vst.msk [vmem:[#allocation3 + $0x28] sm:$0xff] %vm4778, %v4751
        %4785 = vst.msk [vmem:[#allocation3 + $0x30] sm:$0xff] %vm4778, %v4752
        %4786 = vst.msk [vmem:[#allocation3 + $0x38] sm:$0xff] %vm4778, %v4753
        %4787 = vst.msk [vmem:[#allocation3 + $0x40] sm:$0xff] %vm4778, %v4754
        %4788 = vst.msk [vmem:[#allocation3 + $0x48] sm:$0xff] %vm4778, %v4755
        %4789 = vst.msk [vmem:[#allocation3 + $0x50] sm:$0xff] %vm4778, %v4756
        %4790 = vst.msk [vmem:[#allocation3 + $0x58] sm:$0xff] %vm4778, %v4757
        %4791 = vst.msk [vmem:[#allocation3 + $0x60] sm:$0xff] %vm4778, %v4758
        %4792 = vst.msk [vmem:[#allocation3 + $0x68] sm:$0xff] %vm4778, %v4759
        %4793 = vst.msk [vmem:[#allocation3 + $0x70] sm:$0xff] %vm4778, %v4760
        %4794 = vst.msk [vmem:[#allocation3 + $0x78] sm:$0xff] %vm4778, %v4761
        %4795 = vst.msk [vmem:[#allocation3 + $0x80] sm:$0xff] %vm4778, %v4762
        %4796 = vst.msk [vmem:[#allocation3 + $0x88] sm:$0xff] %vm4778, %v4763
        %4797 = vst.msk [vmem:[#allocation3 + $0x90] sm:$0xff] %vm4778, %v4764
        %4798 = vst.msk [vmem:[#allocation3 + $0x98] sm:$0xff] %vm4778, %v4765
        %4799 = vst.msk [vmem:[#allocation3 + $0xa0] sm:$0xff] %vm4778, %v4766
        %4800 = vst.msk [vmem:[#allocation3 + $0xa8] sm:$0xff] %vm4778, %v4767
        %4801 = vst.msk [vmem:[#allocation3 + $0xb0] sm:$0xff] %vm4778, %v4768
        %4802 = vst.msk [vmem:[#allocation3 + $0xb8] sm:$0xff] %vm4778, %v4769
        %4803 = vst.msk [vmem:[#allocation3 + $0xc0] sm:$0xff] %vm4778, %v4770
        %4804 = vst.msk [vmem:[#allocation3 + $0xc8] sm:$0xff] %vm4778, %v4771
        %4805 = vst.msk [vmem:[#allocation3 + $0xd0] sm:$0xff] %vm4778, %v4772
        %4806 = vst.msk [vmem:[#allocation3 + $0xd8] sm:$0xff] %vm4778, %v4773
        %4807 = vst.msk [vmem:[#allocation3 + $0xe0] sm:$0xff] %vm4778, %v4774
        %4808 = vst.msk [vmem:[#allocation3 + $0xe8] sm:$0xff] %vm4778, %v4775
        %4809 = vst.msk [vmem:[#allocation3 + $0xf0] sm:$0xff] %vm4778, %v4776
        %4810 = vst.msk [vmem:[#allocation3 + $0xf8] sm:$0xff] %vm4778, %v4777
        %s4811 = scalar_lea.vmem %s619, 64
        %v4812 = vld [vmem:[%s4811] sm:$0xf]
        %v4813 = vld [vmem:[%s4811 + $0x4] sm:$0xf]
        %v4814 = vld [vmem:[%s4811 + $0x8] sm:$0xf]
        %v4815 = vld [vmem:[%s4811 + $0xc] sm:$0xf]
        %v4816 = vld [vmem:[%s4811 + $0x10] sm:$0xf]
        %v4817 = vld [vmem:[%s4811 + $0x14] sm:$0xf]
        %v4818 = vld [vmem:[%s4811 + $0x18] sm:$0xf]
        %v4819 = vld [vmem:[%s4811 + $0x1c] sm:$0xf]
        %s4820 = scalar_lea.vmem %s633, 2
        %v4821 = vld [vmem:[%s4820] sm:$0x1]
        %v4823 = vlaneseq
        %v4824 = vshrl.u32 %v4823, 7
        %v4825 = vsub.s32 0, %v4824
        %v4826 = vrot.slane %v4821, %v4825
        %v4836 = vunpack.c.l.b16 %v4812
        %v4837 = vunpack.c.l.b16 %v4813
        %v4838 = vunpack.c.l.b16 %v4814
        %v4839 = vunpack.c.l.b16 %v4815
        %v4840 = vunpack.c.l.b16 %v4816
        %v4841 = vunpack.c.l.b16 %v4817
        %v4842 = vunpack.c.l.b16 %v4818
        %v4843 = vunpack.c.l.b16 %v4819
        %v4844 = vpack.c.b16 %v4837, %v4836
        %v4845 = vpack.c.b16 %v4839, %v4838
        %v4846 = vpack.c.b16 %v4841, %v4840
        %v4847 = vpack.c.b16 %v4843, %v4842
        %4852 = vmatprep.subr.bf16.mxu0 0
        %4853 = vmatpush1.bf16.msra.mxu0 %v4844
        %4854 = vmatprep.subr.bf16.mxu0 0
        %4855 = vmatpush1.bf16.msra.mxu0 %v4845
        %4856 = vmatprep.subr.bf16.mxu0 0
        %4857 = vmatpush1.bf16.msra.mxu0 %v4846
        %4858 = vmatprep.subr.bf16.mxu0 0
        %4859 = vmatpush1.bf16.msra.mxu0 %v4847
        %4860 = vmatprep.subr.bf16.mxu0 0
        %4861 = vmatpush1.bf16.msra.mxu0 0
        %4862 = vmatprep.subr.bf16.mxu0 0
        %4863 = vmatpush1.bf16.msra.mxu0 0
        %4864 = vmatprep.subr.bf16.mxu0 0
        %4865 = vmatpush1.bf16.msra.mxu0 0
        %4866 = vmatprep.subr.bf16.mxu0 0
        %4867 = vmatpush1.bf16.msra.mxu0 0
        %4868 = vmatprep.subr.bf16.mxu0 0
        %4869 = vmatpush1.bf16.msra.mxu0 0
        %4870 = vmatprep.subr.bf16.mxu0 0
        %4871 = vmatpush1.bf16.msra.mxu0 0
        %4872 = vmatprep.subr.bf16.mxu0 0
        %4873 = vmatpush1.bf16.msra.mxu0 0
        %4874 = vmatprep.subr.bf16.mxu0 0
        %4875 = vmatpush1.bf16.msra.mxu0 0
        %4876 = vmatprep.subr.bf16.mxu0 0
        %4877 = vmatpush1.bf16.msra.mxu0 0
        %4878 = vmatprep.subr.bf16.mxu0 0
        %4879 = vmatpush1.bf16.msra.mxu0 0
        %4880 = vmatprep.subr.bf16.mxu0 0
        %4881 = vmatpush1.bf16.msra.mxu0 0
        %4882 = vmatprep.subr.bf16.mxu0 0
        %4883 = vmatpush1.bf16.msra.mxu0 0
        %4884 = vmatprep.mubr.bf16.mxu0 0
        %4885 = vmatmul.mubr.bf16.gmra.mrb[0].mxu0 %v1255
        %v4886 = vpop.f32.mrb[0].mxu0
        %v4887 = vadd.f32 %v4826, %v4886
        %v4888 = vpop.f32.mrb[0].mxu0
        %v4889 = vpop.f32.mrb[0].mxu0
        %v4890 = vadd.f32 %v4826, %v4889
        %v4891 = vpop.f32.mrb[0].mxu0
        %4892 = vmatprep.mubr.bf16.mxu0 0
        %4893 = vmatmul.mubr.bf16.gmra.mrb[0].mxu0 %v1258
        %v4894 = vpop.f32.mrb[0].mxu0
        %v4895 = vadd.f32 %v4826, %v4894
        %v4896 = vpop.f32.mrb[0].mxu0
        %v4897 = vpop.f32.mrb[0].mxu0
        %v4898 = vadd.f32 %v4826, %v4897
        %v4899 = vpop.f32.mrb[0].mxu0
        %4900 = vmatprep.mubr.bf16.mxu0 0
        %4901 = vmatmul.mubr.bf16.gmra.mrb[0].mxu0 %v1261
        %v4902 = vpop.f32.mrb[0].mxu0
        %v4903 = vadd.f32 %v4826, %v4902
        %v4904 = vpop.f32.mrb[0].mxu0
        %v4905 = vpop.f32.mrb[0].mxu0
        %v4906 = vadd.f32 %v4826, %v4905
        %v4907 = vpop.f32.mrb[0].mxu0
        %4908 = vmatprep.mubr.bf16.mxu0 0
        %4909 = vmatmul.mubr.bf16.gmra.mrb[0].mxu0 %v1264
        %v4910 = vpop.f32.mrb[0].mxu0
        %v4911 = vadd.f32 %v4826, %v4910
        %v4912 = vpop.f32.mrb[0].mxu0
        %v4913 = vpop.f32.mrb[0].mxu0
        %v4914 = vadd.f32 %v4826, %v4913
        %v4915 = vpop.f32.mrb[0].mxu0
        %4916 = vmatprep.mubr.bf16.mxu0 0
        %4917 = vmatmul.mubr.bf16.gmra.mrb[0].mxu0 %v1267
        %v4918 = vpop.f32.mrb[0].mxu0
        %v4919 = vadd.f32 %v4826, %v4918
        %v4920 = vpop.f32.mrb[0].mxu0
        %v4921 = vpop.f32.mrb[0].mxu0
        %v4922 = vadd.f32 %v4826, %v4921
        %v4923 = vpop.f32.mrb[0].mxu0
        %4924 = vmatprep.mubr.bf16.mxu0 0
        %4925 = vmatmul.mubr.bf16.gmra.mrb[0].mxu0 %v1270
        %v4926 = vpop.f32.mrb[0].mxu0
        %v4927 = vadd.f32 %v4826, %v4926
        %v4928 = vpop.f32.mrb[0].mxu0
        %v4929 = vpop.f32.mrb[0].mxu0
        %v4930 = vadd.f32 %v4826, %v4929
        %v4931 = vpop.f32.mrb[0].mxu0
        %4932 = vmatprep.mubr.bf16.mxu0 0
        %4933 = vmatmul.mubr.bf16.gmra.mrb[0].mxu0 %v1273
        %v4934 = vpop.f32.mrb[0].mxu0
        %v4935 = vadd.f32 %v4826, %v4934
        %v4936 = vpop.f32.mrb[0].mxu0
        %v4937 = vpop.f32.mrb[0].mxu0
        %v4938 = vadd.f32 %v4826, %v4937
        %v4939 = vpop.f32.mrb[0].mxu0
        %4940 = vmatprep.mubr.bf16.mxu0 0
        %4941 = vmatmul.mubr.bf16.gmra.mrb[0].mxu0 %v1276
        %v4942 = vpop.f32.mrb[0].mxu0
        %v4943 = vadd.f32 %v4826, %v4942
        %v4944 = vpop.f32.mrb[0].mxu0
        %v4945 = vpop.f32.mrb[0].mxu0
        %v4946 = vadd.f32 %v4826, %v4945
        %v4947 = vpop.f32.mrb[0].mxu0
        %4948 = vmatprep.mubr.bf16.mxu0 0
        %4949 = vmatmul.mubr.bf16.gmra.mrb[0].mxu0 %v1279
        %v4950 = vpop.f32.mrb[0].mxu0
        %v4951 = vadd.f32 %v4826, %v4950
        %v4952 = vpop.f32.mrb[0].mxu0
        %v4953 = vpop.f32.mrb[0].mxu0
        %v4954 = vadd.f32 %v4826, %v4953
        %v4955 = vpop.f32.mrb[0].mxu0
        %4956 = vmatprep.mubr.bf16.mxu0 0
        %4957 = vmatmul.mubr.bf16.gmra.mrb[0].mxu0 %v1282
        %v4958 = vpop.f32.mrb[0].mxu0
        %v4959 = vadd.f32 %v4826, %v4958
        %v4960 = vpop.f32.mrb[0].mxu0
        %v4961 = vpop.f32.mrb[0].mxu0
        %v4962 = vadd.f32 %v4826, %v4961
        %v4963 = vpop.f32.mrb[0].mxu0
        %4964 = vmatprep.mubr.bf16.mxu0 0
        %4965 = vmatmul.mubr.bf16.gmra.mrb[0].mxu0 %v1285
        %v4966 = vpop.f32.mrb[0].mxu0
        %v4967 = vadd.f32 %v4826, %v4966
        %v4968 = vpop.f32.mrb[0].mxu0
        %v4969 = vpop.f32.mrb[0].mxu0
        %v4970 = vadd.f32 %v4826, %v4969
        %v4971 = vpop.f32.mrb[0].mxu0
        %4972 = vmatprep.mubr.bf16.mxu0 0
        %4973 = vmatmul.mubr.bf16.gmra.mrb[0].mxu0 %v1288
        %v4974 = vpop.f32.mrb[0].mxu0
        %v4975 = vadd.f32 %v4826, %v4974
        %v4976 = vpop.f32.mrb[0].mxu0
        %v4977 = vpop.f32.mrb[0].mxu0
        %v4978 = vadd.f32 %v4826, %v4977
        %v4979 = vpop.f32.mrb[0].mxu0
        %4980 = vmatprep.mubr.bf16.mxu0 0
        %4981 = vmatmul.mubr.bf16.gmra.mrb[0].mxu0 %v1291
        %v4982 = vpop.f32.mrb[0].mxu0
        %v4983 = vadd.f32 %v4826, %v4982
        %v4984 = vpop.f32.mrb[0].mxu0
        %v4985 = vpop.f32.mrb[0].mxu0
        %v4986 = vadd.f32 %v4826, %v4985
        %v4987 = vpop.f32.mrb[0].mxu0
        %4988 = vmatprep.mubr.bf16.mxu0 0
        %4989 = vmatmul.mubr.bf16.gmra.mrb[0].mxu0 %v1294
        %v4990 = vpop.f32.mrb[0].mxu0
        %v4991 = vadd.f32 %v4826, %v4990
        %v4992 = vpop.f32.mrb[0].mxu0
        %v4993 = vpop.f32.mrb[0].mxu0
        %v4994 = vadd.f32 %v4826, %v4993
        %v4995 = vpop.f32.mrb[0].mxu0
        %4996 = vmatprep.mubr.bf16.mxu0 0
        %4997 = vmatmul.mubr.bf16.gmra.mrb[0].mxu0 %v1297
        %v4998 = vpop.f32.mrb[0].mxu0
        %v4999 = vadd.f32 %v4826, %v4998
        %v5000 = vpop.f32.mrb[0].mxu0
        %v5001 = vpop.f32.mrb[0].mxu0
        %v5002 = vadd.f32 %v4826, %v5001
        %v5003 = vpop.f32.mrb[0].mxu0
        %5004 = vmatprep.mubr.bf16.mxu0 0
        %5005 = vmatmul.mubr.bf16.gmra.mrb[0].mxu0 %v1300
        %v5006 = vpop.f32.mrb[0].mxu0
        %v5007 = vadd.f32 %v4826, %v5006
        %v5008 = vpop.f32.mrb[0].mxu0
        %v5009 = vpop.f32.mrb[0].mxu0
        %v5010 = vadd.f32 %v4826, %v5009
        %v5011 = vpop.f32.mrb[0].mxu0
        %5012 = vdwg.mxu0
        %s5013 = scalar_lea.vmem %s624, 64
        %v5014 = vld [vmem:[%s5013] sm:$0xf]
        %v5015 = vld [vmem:[%s5013 + $0x4] sm:$0xf]
        %v5016 = vld [vmem:[%s5013 + $0x8] sm:$0xf]
        %v5017 = vld [vmem:[%s5013 + $0xc] sm:$0xf]
        %v5018 = vld [vmem:[%s5013 + $0x10] sm:$0xf]
        %v5019 = vld [vmem:[%s5013 + $0x14] sm:$0xf]
        %v5020 = vld [vmem:[%s5013 + $0x18] sm:$0xf]
        %v5021 = vld [vmem:[%s5013 + $0x1c] sm:$0xf]
        %s5022 = scalar_lea.vmem %s637, 2
        %v5023 = vld [vmem:[%s5022] sm:$0x1]
        %v5025 = vlaneseq
        %v5026 = vshrl.u32 %v5025, 7
        %v5027 = vsub.s32 0, %v5026
        %v5028 = vrot.slane %v5023, %v5027
        %v5038 = vunpack.c.l.b16 %v5014
        %v5039 = vunpack.c.l.b16 %v5015
        %v5040 = vunpack.c.l.b16 %v5016
        %v5041 = vunpack.c.l.b16 %v5017
        %v5042 = vunpack.c.l.b16 %v5018
        %v5043 = vunpack.c.l.b16 %v5019
        %v5044 = vunpack.c.l.b16 %v5020
        %v5045 = vunpack.c.l.b16 %v5021
        %v5046 = vpack.c.b16 %v5039, %v5038
        %v5047 = vpack.c.b16 %v5041, %v5040
        %v5048 = vpack.c.b16 %v5043, %v5042
        %v5049 = vpack.c.b16 %v5045, %v5044
        %5054 = vmatprep.subr.bf16.mxu0 0
        %5055 = vmatpush1.bf16.msra.mxu0 %v5046
        %5056 = vmatprep.subr.bf16.mxu0 0
        %5057 = vmatpush1.bf16.msra.mxu0 %v5047
        %5058 = vmatprep.subr.bf16.mxu0 0
        %5059 = vmatpush1.bf16.msra.mxu0 %v5048
        %5060 = vmatprep.subr.bf16.mxu0 0
        %5061 = vmatpush1.bf16.msra.mxu0 %v5049
        %5062 = vmatprep.subr.bf16.mxu0 0
        %5063 = vmatpush1.bf16.msra.mxu0 0
        %5064 = vmatprep.subr.bf16.mxu0 0
        %5065 = vmatpush1.bf16.msra.mxu0 0
        %5066 = vmatprep.subr.bf16.mxu0 0
        %5067 = vmatpush1.bf16.msra.mxu0 0
        %5068 = vmatprep.subr.bf16.mxu0 0
        %5069 = vmatpush1.bf16.msra.mxu0 0
        %5070 = vmatprep.subr.bf16.mxu0 0
        %5071 = vmatpush1.bf16.msra.mxu0 0
        %5072 = vmatprep.subr.bf16.mxu0 0
        %5073 = vmatpush1.bf16.msra.mxu0 0
        %5074 = vmatprep.subr.bf16.mxu0 0
        %5075 = vmatpush1.bf16.msra.mxu0 0
        %5076 = vmatprep.subr.bf16.mxu0 0
        %5077 = vmatpush1.bf16.msra.mxu0 0
        %5078 = vmatprep.subr.bf16.mxu0 0
        %5079 = vmatpush1.bf16.msra.mxu0 0
        %5080 = vmatprep.subr.bf16.mxu0 0
        %5081 = vmatpush1.bf16.msra.mxu0 0
        %5082 = vmatprep.subr.bf16.mxu0 0
        %5083 = vmatpush1.bf16.msra.mxu0 0
        %5084 = vmatprep.subr.bf16.mxu0 0
        %5085 = vmatpush1.bf16.msra.mxu0 0
        %5086 = vmatprep.mubr.bf16.mxu0 0
        %5087 = vmatmul.mubr.bf16.gmra.mrb[0].mxu0 %v1255
        %v5088 = vpop.f32.mrb[0].mxu0
        %v5089 = vadd.f32 %v5028, %v5088
        %v5090 = vpop.f32.mrb[0].mxu0
        %v5091 = vpop.f32.mrb[0].mxu0
        %v5092 = vadd.f32 %v5028, %v5091
        %v5093 = vpop.f32.mrb[0].mxu0
        %5094 = vmatprep.mubr.bf16.mxu0 0
        %5095 = vmatmul.mubr.bf16.gmra.mrb[0].mxu0 %v1258
        %v5096 = vpop.f32.mrb[0].mxu0
        %v5097 = vadd.f32 %v5028, %v5096
        %v5098 = vpop.f32.mrb[0].mxu0
        %v5099 = vpop.f32.mrb[0].mxu0
        %v5100 = vadd.f32 %v5028, %v5099
        %v5101 = vpop.f32.mrb[0].mxu0
        %5102 = vmatprep.mubr.bf16.mxu0 0
        %5103 = vmatmul.mubr.bf16.gmra.mrb[0].mxu0 %v1261
        %v5104 = vpop.f32.mrb[0].mxu0
        %v5105 = vadd.f32 %v5028, %v5104
        %v5106 = vpop.f32.mrb[0].mxu0
        %v5107 = vpop.f32.mrb[0].mxu0
        %v5108 = vadd.f32 %v5028, %v5107
        %v5109 = vpop.f32.mrb[0].mxu0
        %5110 = vmatprep.mubr.bf16.mxu0 0
        %5111 = vmatmul.mubr.bf16.gmra.mrb[0].mxu0 %v1264
        %v5112 = vpop.f32.mrb[0].mxu0
        %v5113 = vadd.f32 %v5028, %v5112
        %v5114 = vpop.f32.mrb[0].mxu0
        %v5115 = vpop.f32.mrb[0].mxu0
        %v5116 = vadd.f32 %v5028, %v5115
        %v5117 = vpop.f32.mrb[0].mxu0
        %5118 = vmatprep.mubr.bf16.mxu0 0
        %5119 = vmatmul.mubr.bf16.gmra.mrb[0].mxu0 %v1267
        %v5120 = vpop.f32.mrb[0].mxu0
        %v5121 = vadd.f32 %v5028, %v5120
        %v5122 = vpop.f32.mrb[0].mxu0
        %v5123 = vpop.f32.mrb[0].mxu0
        %v5124 = vadd.f32 %v5028, %v5123
        %v5125 = vpop.f32.mrb[0].mxu0
        %5126 = vmatprep.mubr.bf16.mxu0 0
        %5127 = vmatmul.mubr.bf16.gmra.mrb[0].mxu0 %v1270
        %v5128 = vpop.f32.mrb[0].mxu0
        %v5129 = vadd.f32 %v5028, %v5128
        %v5130 = vpop.f32.mrb[0].mxu0
        %v5131 = vpop.f32.mrb[0].mxu0
        %v5132 = vadd.f32 %v5028, %v5131
        %v5133 = vpop.f32.mrb[0].mxu0
        %5134 = vmatprep.mubr.bf16.mxu0 0
        %5135 = vmatmul.mubr.bf16.gmra.mrb[0].mxu0 %v1273
        %v5136 = vpop.f32.mrb[0].mxu0
        %v5137 = vadd.f32 %v5028, %v5136
        %v5138 = vpop.f32.mrb[0].mxu0
        %v5139 = vpop.f32.mrb[0].mxu0
        %v5140 = vadd.f32 %v5028, %v5139
        %v5141 = vpop.f32.mrb[0].mxu0
        %5142 = vmatprep.mubr.bf16.mxu0 0
        %5143 = vmatmul.mubr.bf16.gmra.mrb[0].mxu0 %v1276
        %v5144 = vpop.f32.mrb[0].mxu0
        %v5145 = vadd.f32 %v5028, %v5144
        %v5146 = vpop.f32.mrb[0].mxu0
        %v5147 = vpop.f32.mrb[0].mxu0
        %v5148 = vadd.f32 %v5028, %v5147
        %v5149 = vpop.f32.mrb[0].mxu0
        %5150 = vmatprep.mubr.bf16.mxu0 0
        %5151 = vmatmul.mubr.bf16.gmra.mrb[0].mxu0 %v1279
        %v5152 = vpop.f32.mrb[0].mxu0
        %v5153 = vadd.f32 %v5028, %v5152
        %v5154 = vpop.f32.mrb[0].mxu0
        %v5155 = vpop.f32.mrb[0].mxu0
        %v5156 = vadd.f32 %v5028, %v5155
        %v5157 = vpop.f32.mrb[0].mxu0
        %5158 = vmatprep.mubr.bf16.mxu0 0
        %5159 = vmatmul.mubr.bf16.gmra.mrb[0].mxu0 %v1282
        %v5160 = vpop.f32.mrb[0].mxu0
        %v5161 = vadd.f32 %v5028, %v5160
        %v5162 = vpop.f32.mrb[0].mxu0
        %v5163 = vpop.f32.mrb[0].mxu0
        %v5164 = vadd.f32 %v5028, %v5163
        %v5165 = vpop.f32.mrb[0].mxu0
        %5166 = vmatprep.mubr.bf16.mxu0 0
        %5167 = vmatmul.mubr.bf16.gmra.mrb[0].mxu0 %v1285
        %v5168 = vpop.f32.mrb[0].mxu0
        %v5169 = vadd.f32 %v5028, %v5168
        %v5170 = vpop.f32.mrb[0].mxu0
        %v5171 = vpop.f32.mrb[0].mxu0
        %v5172 = vadd.f32 %v5028, %v5171
        %v5173 = vpop.f32.mrb[0].mxu0
        %5174 = vmatprep.mubr.bf16.mxu0 0
        %5175 = vmatmul.mubr.bf16.gmra.mrb[0].mxu0 %v1288
        %v5176 = vpop.f32.mrb[0].mxu0
        %v5177 = vadd.f32 %v5028, %v5176
        %v5178 = vpop.f32.mrb[0].mxu0
        %v5179 = vpop.f32.mrb[0].mxu0
        %v5180 = vadd.f32 %v5028, %v5179
        %v5181 = vpop.f32.mrb[0].mxu0
        %5182 = vmatprep.mubr.bf16.mxu0 0
        %5183 = vmatmul.mubr.bf16.gmra.mrb[0].mxu0 %v1291
        %v5184 = vpop.f32.mrb[0].mxu0
        %v5185 = vadd.f32 %v5028, %v5184
        %v5186 = vpop.f32.mrb[0].mxu0
        %v5187 = vpop.f32.mrb[0].mxu0
        %v5188 = vadd.f32 %v5028, %v5187
        %v5189 = vpop.f32.mrb[0].mxu0
        %5190 = vmatprep.mubr.bf16.mxu0 0
        %5191 = vmatmul.mubr.bf16.gmra.mrb[0].mxu0 %v1294
        %v5192 = vpop.f32.mrb[0].mxu0
        %v5193 = vadd.f32 %v5028, %v5192
        %v5194 = vpop.f32.mrb[0].mxu0
        %v5195 = vpop.f32.mrb[0].mxu0
        %v5196 = vadd.f32 %v5028, %v5195
        %v5197 = vpop.f32.mrb[0].mxu0
        %5198 = vmatprep.mubr.bf16.mxu0 0
        %5199 = vmatmul.mubr.bf16.gmra.mrb[0].mxu0 %v1297
        %v5200 = vpop.f32.mrb[0].mxu0
        %v5201 = vadd.f32 %v5028, %v5200
        %v5202 = vpop.f32.mrb[0].mxu0
        %v5203 = vpop.f32.mrb[0].mxu0
        %v5204 = vadd.f32 %v5028, %v5203
        %v5205 = vpop.f32.mrb[0].mxu0
        %5206 = vmatprep.mubr.bf16.mxu0 0
        %5207 = vmatmul.mubr.bf16.gmra.mrb[0].mxu0 %v1300
        %v5208 = vpop.f32.mrb[0].mxu0
        %v5209 = vadd.f32 %v5028, %v5208
        %v5210 = vpop.f32.mrb[0].mxu0
        %v5211 = vpop.f32.mrb[0].mxu0
        %v5212 = vadd.f32 %v5028, %v5211
        %v5213 = vpop.f32.mrb[0].mxu0
        %5214 = vdwg.mxu0
        %s5215 = scalar_lea.vmem %s629, 64
        %v5216 = vld [vmem:[%s5215] sm:$0xf]
        %v5217 = vld [vmem:[%s5215 + $0x4] sm:$0xf]
        %v5218 = vld [vmem:[%s5215 + $0x8] sm:$0xf]
        %v5219 = vld [vmem:[%s5215 + $0xc] sm:$0xf]
        %v5220 = vld [vmem:[%s5215 + $0x10] sm:$0xf]
        %v5221 = vld [vmem:[%s5215 + $0x14] sm:$0xf]
        %v5222 = vld [vmem:[%s5215 + $0x18] sm:$0xf]
        %v5223 = vld [vmem:[%s5215 + $0x1c] sm:$0xf]
        %s5224 = scalar_lea.vmem %s641, 2
        %v5225 = vld [vmem:[%s5224] sm:$0x1]
        %v5227 = vlaneseq
        %v5228 = vshrl.u32 %v5227, 7
        %v5229 = vsub.s32 0, %v5228
        %v5230 = vrot.slane %v5225, %v5229
        %v5240 = vunpack.c.l.b16 %v5216
        %v5241 = vunpack.c.l.b16 %v5217
        %v5242 = vunpack.c.l.b16 %v5218
        %v5243 = vunpack.c.l.b16 %v5219
        %v5244 = vunpack.c.l.b16 %v5220
        %v5245 = vunpack.c.l.b16 %v5221
        %v5246 = vunpack.c.l.b16 %v5222
        %v5247 = vunpack.c.l.b16 %v5223
        %v5248 = vpack.c.b16 %v5241, %v5240
        %v5249 = vpack.c.b16 %v5243, %v5242
        %v5250 = vpack.c.b16 %v5245, %v5244
        %v5251 = vpack.c.b16 %v5247, %v5246
        %5256 = vmatprep.subr.bf16.mxu0 0
        %5257 = vmatpush1.bf16.msra.mxu0 %v5248
        %5258 = vmatprep.subr.bf16.mxu0 0
        %5259 = vmatpush1.bf16.msra.mxu0 %v5249
        %5260 = vmatprep.subr.bf16.mxu0 0
        %5261 = vmatpush1.bf16.msra.mxu0 %v5250
        %5262 = vmatprep.subr.bf16.mxu0 0
        %5263 = vmatpush1.bf16.msra.mxu0 %v5251
        %5264 = vmatprep.subr.bf16.mxu0 0
        %5265 = vmatpush1.bf16.msra.mxu0 0
        %5266 = vmatprep.subr.bf16.mxu0 0
        %5267 = vmatpush1.bf16.msra.mxu0 0
        %5268 = vmatprep.subr.bf16.mxu0 0
        %5269 = vmatpush1.bf16.msra.mxu0 0
        %5270 = vmatprep.subr.bf16.mxu0 0
        %5271 = vmatpush1.bf16.msra.mxu0 0
        %5272 = vmatprep.subr.bf16.mxu0 0
        %5273 = vmatpush1.bf16.msra.mxu0 0
        %5274 = vmatprep.subr.bf16.mxu0 0
        %5275 = vmatpush1.bf16.msra.mxu0 0
        %5276 = vmatprep.subr.bf16.mxu0 0
        %5277 = vmatpush1.bf16.msra.mxu0 0
        %5278 = vmatprep.subr.bf16.mxu0 0
        %5279 = vmatpush1.bf16.msra.mxu0 0
        %5280 = vmatprep.subr.bf16.mxu0 0
        %5281 = vmatpush1.bf16.msra.mxu0 0
        %5282 = vmatprep.subr.bf16.mxu0 0
        %5283 = vmatpush1.bf16.msra.mxu0 0
        %5284 = vmatprep.subr.bf16.mxu0 0
        %5285 = vmatpush1.bf16.msra.mxu0 0
        %5286 = vmatprep.subr.bf16.mxu0 0
        %5287 = vmatpush1.bf16.msra.mxu0 0
        %5288 = vmatprep.mubr.bf16.mxu0 0
        %5289 = vmatmul.mubr.bf16.gmra.mrb[0].mxu0 %v1255
        %v5290 = vpop.f32.mrb[0].mxu0
        %v5291 = vadd.f32 %v5230, %v5290
        %v5292 = vpop.f32.mrb[0].mxu0
        %v5293 = vpop.f32.mrb[0].mxu0
        %v5294 = vadd.f32 %v5230, %v5293
        %v5295 = vpop.f32.mrb[0].mxu0
        %5296 = vmatprep.mubr.bf16.mxu0 0
        %5297 = vmatmul.mubr.bf16.gmra.mrb[0].mxu0 %v1258
        %v5298 = vpop.f32.mrb[0].mxu0
        %v5299 = vadd.f32 %v5230, %v5298
        %v5300 = vpop.f32.mrb[0].mxu0
        %v5301 = vpop.f32.mrb[0].mxu0
        %v5302 = vadd.f32 %v5230, %v5301
        %v5303 = vpop.f32.mrb[0].mxu0
        %5304 = vmatprep.mubr.bf16.mxu0 0
        %5305 = vmatmul.mubr.bf16.gmra.mrb[0].mxu0 %v1261
        %v5306 = vpop.f32.mrb[0].mxu0
        %v5307 = vadd.f32 %v5230, %v5306
        %v5308 = vpop.f32.mrb[0].mxu0
        %v5309 = vpop.f32.mrb[0].mxu0
        %v5310 = vadd.f32 %v5230, %v5309
        %v5311 = vpop.f32.mrb[0].mxu0
        %5312 = vmatprep.mubr.bf16.mxu0 0
        %5313 = vmatmul.mubr.bf16.gmra.mrb[0].mxu0 %v1264
        %v5314 = vpop.f32.mrb[0].mxu0
        %v5315 = vadd.f32 %v5230, %v5314
        %v5316 = vpop.f32.mrb[0].mxu0
        %v5317 = vpop.f32.mrb[0].mxu0
        %v5318 = vadd.f32 %v5230, %v5317
        %v5319 = vpop.f32.mrb[0].mxu0
        %5320 = vmatprep.mubr.bf16.mxu0 0
        %5321 = vmatmul.mubr.bf16.gmra.mrb[0].mxu0 %v1267
        %v5322 = vpop.f32.mrb[0].mxu0
        %v5323 = vadd.f32 %v5230, %v5322
        %v5324 = vpop.f32.mrb[0].mxu0
        %v5325 = vpop.f32.mrb[0].mxu0
        %v5326 = vadd.f32 %v5230, %v5325
        %v5327 = vpop.f32.mrb[0].mxu0
        %5328 = vmatprep.mubr.bf16.mxu0 0
        %5329 = vmatmul.mubr.bf16.gmra.mrb[0].mxu0 %v1270
        %v5330 = vpop.f32.mrb[0].mxu0
        %v5331 = vadd.f32 %v5230, %v5330
        %v5332 = vpop.f32.mrb[0].mxu0
        %v5333 = vpop.f32.mrb[0].mxu0
        %v5334 = vadd.f32 %v5230, %v5333
        %v5335 = vpop.f32.mrb[0].mxu0
        %5336 = vmatprep.mubr.bf16.mxu0 0
        %5337 = vmatmul.mubr.bf16.gmra.mrb[0].mxu0 %v1273
        %v5338 = vpop.f32.mrb[0].mxu0
        %v5339 = vadd.f32 %v5230, %v5338
        %v5340 = vpop.f32.mrb[0].mxu0
        %v5341 = vpop.f32.mrb[0].mxu0
        %v5342 = vadd.f32 %v5230, %v5341
        %v5343 = vpop.f32.mrb[0].mxu0
        %5344 = vmatprep.mubr.bf16.mxu0 0
        %5345 = vmatmul.mubr.bf16.gmra.mrb[0].mxu0 %v1276
        %v5346 = vpop.f32.mrb[0].mxu0
        %v5347 = vadd.f32 %v5230, %v5346
        %v5348 = vpop.f32.mrb[0].mxu0
        %v5349 = vpop.f32.mrb[0].mxu0
        %v5350 = vadd.f32 %v5230, %v5349
        %v5351 = vpop.f32.mrb[0].mxu0
        %5352 = vmatprep.mubr.bf16.mxu0 0
        %5353 = vmatmul.mubr.bf16.gmra.mrb[0].mxu0 %v1279
        %v5354 = vpop.f32.mrb[0].mxu0
        %v5355 = vadd.f32 %v5230, %v5354
        %v5356 = vpop.f32.mrb[0].mxu0
        %v5357 = vpop.f32.mrb[0].mxu0
        %v5358 = vadd.f32 %v5230, %v5357
        %v5359 = vpop.f32.mrb[0].mxu0
        %5360 = vmatprep.mubr.bf16.mxu0 0
        %5361 = vmatmul.mubr.bf16.gmra.mrb[0].mxu0 %v1282
        %v5362 = vpop.f32.mrb[0].mxu0
        %v5363 = vadd.f32 %v5230, %v5362
        %v5364 = vpop.f32.mrb[0].mxu0
        %v5365 = vpop.f32.mrb[0].mxu0
        %v5366 = vadd.f32 %v5230, %v5365
        %v5367 = vpop.f32.mrb[0].mxu0
        %5368 = vmatprep.mubr.bf16.mxu0 0
        %5369 = vmatmul.mubr.bf16.gmra.mrb[0].mxu0 %v1285
        %v5370 = vpop.f32.mrb[0].mxu0
        %v5371 = vadd.f32 %v5230, %v5370
        %v5372 = vpop.f32.mrb[0].mxu0
        %v5373 = vpop.f32.mrb[0].mxu0
        %v5374 = vadd.f32 %v5230, %v5373
        %v5375 = vpop.f32.mrb[0].mxu0
        %5376 = vmatprep.mubr.bf16.mxu0 0
        %5377 = vmatmul.mubr.bf16.gmra.mrb[0].mxu0 %v1288
        %v5378 = vpop.f32.mrb[0].mxu0
        %v5379 = vadd.f32 %v5230, %v5378
        %v5380 = vpop.f32.mrb[0].mxu0
        %v5381 = vpop.f32.mrb[0].mxu0
        %v5382 = vadd.f32 %v5230, %v5381
        %v5383 = vpop.f32.mrb[0].mxu0
        %5384 = vmatprep.mubr.bf16.mxu0 0
        %5385 = vmatmul.mubr.bf16.gmra.mrb[0].mxu0 %v1291
        %v5386 = vpop.f32.mrb[0].mxu0
        %v5387 = vadd.f32 %v5230, %v5386
        %v5388 = vpop.f32.mrb[0].mxu0
        %v5389 = vpop.f32.mrb[0].mxu0
        %v5390 = vadd.f32 %v5230, %v5389
        %v5391 = vpop.f32.mrb[0].mxu0
        %5392 = vmatprep.mubr.bf16.mxu0 0
        %5393 = vmatmul.mubr.bf16.gmra.mrb[0].mxu0 %v1294
        %v5394 = vpop.f32.mrb[0].mxu0
        %v5395 = vadd.f32 %v5230, %v5394
        %v5396 = vpop.f32.mrb[0].mxu0
        %v5397 = vpop.f32.mrb[0].mxu0
        %v5398 = vadd.f32 %v5230, %v5397
        %v5399 = vpop.f32.mrb[0].mxu0
        %5400 = vmatprep.mubr.bf16.mxu0 0
        %5401 = vmatmul.mubr.bf16.gmra.mrb[0].mxu0 %v1297
        %v5402 = vpop.f32.mrb[0].mxu0
        %v5403 = vadd.f32 %v5230, %v5402
        %v5404 = vpop.f32.mrb[0].mxu0
        %v5405 = vpop.f32.mrb[0].mxu0
        %v5406 = vadd.f32 %v5230, %v5405
        %v5407 = vpop.f32.mrb[0].mxu0
        %5408 = vmatprep.mubr.bf16.mxu0 0
        %5409 = vmatmul.mubr.bf16.gmra.mrb[0].mxu0 %v1300
        %v5410 = vpop.f32.mrb[0].mxu0
        %v5411 = vadd.f32 %v5230, %v5410
        %v5412 = vpop.f32.mrb[0].mxu0
        %v5413 = vpop.f32.mrb[0].mxu0
        %v5414 = vadd.f32 %v5230, %v5413
        %v5415 = vpop.f32.mrb[0].mxu0
        %5416 = vdwg.mxu0
        %v5417 = vpack.c.bf16 %v4890, %v4887
        %v5418 = vpack.c.bf16 %v4898, %v4895
        %v5419 = vpack.c.bf16 %v4906, %v4903
        %v5420 = vpack.c.bf16 %v4914, %v4911
        %v5421 = vpack.c.bf16 %v4922, %v4919
        %v5422 = vpack.c.bf16 %v4930, %v4927
        %v5423 = vpack.c.bf16 %v4938, %v4935
        %v5424 = vpack.c.bf16 %v4946, %v4943
        %v5425 = vpack.c.bf16 %v4954, %v4951
        %v5426 = vpack.c.bf16 %v4962, %v4959
        %v5427 = vpack.c.bf16 %v4970, %v4967
        %v5428 = vpack.c.bf16 %v4978, %v4975
        %v5429 = vpack.c.bf16 %v4986, %v4983
        %v5430 = vpack.c.bf16 %v4994, %v4991
        %v5431 = vpack.c.bf16 %v5002, %v4999
        %v5432 = vpack.c.bf16 %v5010, %v5007
        %v5433 = vpack.c.bf16 %v5092, %v5089
        %v5434 = vpack.c.bf16 %v5100, %v5097
        %v5435 = vpack.c.bf16 %v5108, %v5105
        %v5436 = vpack.c.bf16 %v5116, %v5113
        %v5437 = vpack.c.bf16 %v5124, %v5121
        %v5438 = vpack.c.bf16 %v5132, %v5129
        %v5439 = vpack.c.bf16 %v5140, %v5137
        %v5440 = vpack.c.bf16 %v5148, %v5145
        %v5441 = vpack.c.bf16 %v5156, %v5153
        %v5442 = vpack.c.bf16 %v5164, %v5161
        %v5443 = vpack.c.bf16 %v5172, %v5169
        %v5444 = vpack.c.bf16 %v5180, %v5177
        %v5445 = vpack.c.bf16 %v5188, %v5185
        %v5446 = vpack.c.bf16 %v5196, %v5193
        %v5447 = vpack.c.bf16 %v5204, %v5201
        %v5448 = vpack.c.bf16 %v5212, %v5209
        %v5450 = vsel %vm1895, %v5417, 0
        %v5453 = vsel %vm1895, %v5418, 0
        %v5456 = vsel %vm1895, %v5419, 0
        %v5459 = vsel %vm1895, %v5420, 0
        %v5462 = vsel %vm1895, %v5421, 0
        %v5465 = vsel %vm1895, %v5422, 0
        %v5468 = vsel %vm1895, %v5423, 0
        %v5471 = vsel %vm1895, %v5424, 0
        %v5474 = vsel %vm1895, %v5425, 0
        %v5477 = vsel %vm1895, %v5426, 0
        %v5480 = vsel %vm1895, %v5427, 0
        %v5483 = vsel %vm1895, %v5428, 0
        %v5486 = vsel %vm1895, %v5429, 0
        %v5489 = vsel %vm1895, %v5430, 0
        %v5492 = vsel %vm1895, %v5431, 0
        %v5495 = vsel %vm1895, %v5432, 0
        %v5498 = vsel %vm1895, %v5433, 0
        %v5501 = vsel %vm1895, %v5434, 0
        %v5504 = vsel %vm1895, %v5435, 0
        %v5507 = vsel %vm1895, %v5436, 0
        %v5510 = vsel %vm1895, %v5437, 0
        %v5513 = vsel %vm1895, %v5438, 0
        %v5516 = vsel %vm1895, %v5439, 0
        %v5519 = vsel %vm1895, %v5440, 0
        %v5522 = vsel %vm1895, %v5441, 0
        %v5525 = vsel %vm1895, %v5442, 0
        %v5528 = vsel %vm1895, %v5443, 0
        %v5531 = vsel %vm1895, %v5444, 0
        %v5534 = vsel %vm1895, %v5445, 0
        %v5537 = vsel %vm1895, %v5446, 0
        %v5540 = vsel %vm1895, %v5447, 0
        %v5543 = vsel %vm1895, %v5448, 0
        %5545 = vmatprep.subr.bf16.mxu0 0
        %5546 = vmatpush1.bf16.xpose.msra.mxu0 %v5498
        %5547 = vmatprep.subr.bf16.mxu0 0
        %5548 = vmatpush1.bf16.xpose.msra.mxu0 %v5501
        %5549 = vmatprep.subr.bf16.mxu0 0
        %5550 = vmatpush1.bf16.xpose.msra.mxu0 %v5504
        %5551 = vmatprep.subr.bf16.mxu0 0
        %5552 = vmatpush1.bf16.xpose.msra.mxu0 %v5507
        %5553 = vmatprep.subr.bf16.mxu0 0
        %5554 = vmatpush1.bf16.xpose.msra.mxu0 %v5510
        %5555 = vmatprep.subr.bf16.mxu0 0
        %5556 = vmatpush1.bf16.xpose.msra.mxu0 %v5513
        %5557 = vmatprep.subr.bf16.mxu0 0
        %5558 = vmatpush1.bf16.xpose.msra.mxu0 %v5516
        %5559 = vmatprep.subr.bf16.mxu0 0
        %5560 = vmatpush1.bf16.xpose.msra.mxu0 %v5519
        %5561 = vmatprep.subr.bf16.mxu0 0
        %5562 = vmatpush1.bf16.xpose.msra.mxu0 %v5522
        %5563 = vmatprep.subr.bf16.mxu0 0
        %5564 = vmatpush1.bf16.xpose.msra.mxu0 %v5525
        %5565 = vmatprep.subr.bf16.mxu0 0
        %5566 = vmatpush1.bf16.xpose.msra.mxu0 %v5528
        %5567 = vmatprep.subr.bf16.mxu0 0
        %5568 = vmatpush1.bf16.xpose.msra.mxu0 %v5531
        %5569 = vmatprep.subr.bf16.mxu0 0
        %5570 = vmatpush1.bf16.xpose.msra.mxu0 %v5534
        %5571 = vmatprep.subr.bf16.mxu0 0
        %5572 = vmatpush1.bf16.xpose.msra.mxu0 %v5537
        %5573 = vmatprep.subr.bf16.mxu0 0
        %5574 = vmatpush1.bf16.xpose.msra.mxu0 %v5540
        %5575 = vmatprep.subr.bf16.mxu0 0
        %5576 = vmatpush1.bf16.xpose.msra.mxu0 %v5543
        %5577 = vmatprep.mubr.bf16.mxu0 0
        %5578 = vmatmul.mubr.bf16.gmra.mrb[0].mxu0 %v5450
        %v5579 = vpop.f32.mrb[0].mxu0
        %v5580 = vadd.f32 0.0, %v5579
        %v5581 = vpop.f32.mrb[0].mxu0
        %v5582 = vadd.f32 0.0, %v5581
        %v5583 = vpop.f32.mrb[0].mxu0
        %v5584 = vadd.f32 0.0, %v5583
        %v5585 = vpop.f32.mrb[0].mxu0
        %v5586 = vadd.f32 0.0, %v5585
        %5587 = vmatprep.mubr.bf16.mxu0 0
        %5588 = vmatmul.mubr.bf16.gmra.mrb[0].mxu0 %v5453
        %v5589 = vpop.f32.mrb[0].mxu0
        %v5590 = vadd.f32 0.0, %v5589
        %v5591 = vpop.f32.mrb[0].mxu0
        %v5592 = vadd.f32 0.0, %v5591
        %v5593 = vpop.f32.mrb[0].mxu0
        %v5594 = vadd.f32 0.0, %v5593
        %v5595 = vpop.f32.mrb[0].mxu0
        %v5596 = vadd.f32 0.0, %v5595
        %5597 = vmatprep.mubr.bf16.mxu0 0
        %5598 = vmatmul.mubr.bf16.gmra.mrb[0].mxu0 %v5456
        %v5599 = vpop.f32.mrb[0].mxu0
        %v5600 = vadd.f32 0.0, %v5599
        %v5601 = vpop.f32.mrb[0].mxu0
        %v5602 = vadd.f32 0.0, %v5601
        %v5603 = vpop.f32.mrb[0].mxu0
        %v5604 = vadd.f32 0.0, %v5603
        %v5605 = vpop.f32.mrb[0].mxu0
        %v5606 = vadd.f32 0.0, %v5605
        %5607 = vmatprep.mubr.bf16.mxu0 0
        %5608 = vmatmul.mubr.bf16.gmra.mrb[0].mxu0 %v5459
        %v5609 = vpop.f32.mrb[0].mxu0
        %v5610 = vadd.f32 0.0, %v5609
        %v5611 = vpop.f32.mrb[0].mxu0
        %v5612 = vadd.f32 0.0, %v5611
        %v5613 = vpop.f32.mrb[0].mxu0
        %v5614 = vadd.f32 0.0, %v5613
        %v5615 = vpop.f32.mrb[0].mxu0
        %v5616 = vadd.f32 0.0, %v5615
        %5617 = vmatprep.mubr.bf16.mxu0 0
        %5618 = vmatmul.mubr.bf16.gmra.mrb[0].mxu0 %v5462
        %v5619 = vpop.f32.mrb[0].mxu0
        %v5620 = vadd.f32 0.0, %v5619
        %v5621 = vpop.f32.mrb[0].mxu0
        %v5622 = vadd.f32 0.0, %v5621
        %v5623 = vpop.f32.mrb[0].mxu0
        %v5624 = vadd.f32 0.0, %v5623
        %v5625 = vpop.f32.mrb[0].mxu0
        %v5626 = vadd.f32 0.0, %v5625
        %5627 = vmatprep.mubr.bf16.mxu0 0
        %5628 = vmatmul.mubr.bf16.gmra.mrb[0].mxu0 %v5465
        %v5629 = vpop.f32.mrb[0].mxu0
        %v5630 = vadd.f32 0.0, %v5629
        %v5631 = vpop.f32.mrb[0].mxu0
        %v5632 = vadd.f32 0.0, %v5631
        %v5633 = vpop.f32.mrb[0].mxu0
        %v5634 = vadd.f32 0.0, %v5633
        %v5635 = vpop.f32.mrb[0].mxu0
        %v5636 = vadd.f32 0.0, %v5635
        %5637 = vmatprep.mubr.bf16.mxu0 0
        %5638 = vmatmul.mubr.bf16.gmra.mrb[0].mxu0 %v5468
        %v5639 = vpop.f32.mrb[0].mxu0
        %v5640 = vadd.f32 0.0, %v5639
        %v5641 = vpop.f32.mrb[0].mxu0
        %v5642 = vadd.f32 0.0, %v5641
        %v5643 = vpop.f32.mrb[0].mxu0
        %v5644 = vadd.f32 0.0, %v5643
        %v5645 = vpop.f32.mrb[0].mxu0
        %v5646 = vadd.f32 0.0, %v5645
        %5647 = vmatprep.mubr.bf16.mxu0 0
        %5648 = vmatmul.mubr.bf16.gmra.mrb[0].mxu0 %v5471
        %v5649 = vpop.f32.mrb[0].mxu0
        %v5650 = vadd.f32 0.0, %v5649
        %v5651 = vpop.f32.mrb[0].mxu0
        %v5652 = vadd.f32 0.0, %v5651
        %v5653 = vpop.f32.mrb[0].mxu0
        %v5654 = vadd.f32 0.0, %v5653
        %v5655 = vpop.f32.mrb[0].mxu0
        %v5656 = vadd.f32 0.0, %v5655
        %5657 = vmatprep.mubr.bf16.mxu0 0
        %5658 = vmatmul.mubr.bf16.gmra.mrb[0].mxu0 %v5474
        %v5659 = vpop.f32.mrb[0].mxu0
        %v5660 = vadd.f32 0.0, %v5659
        %v5661 = vpop.f32.mrb[0].mxu0
        %v5662 = vadd.f32 0.0, %v5661
        %v5663 = vpop.f32.mrb[0].mxu0
        %v5664 = vadd.f32 0.0, %v5663
        %v5665 = vpop.f32.mrb[0].mxu0
        %v5666 = vadd.f32 0.0, %v5665
        %5667 = vmatprep.mubr.bf16.mxu0 0
        %5668 = vmatmul.mubr.bf16.gmra.mrb[0].mxu0 %v5477
        %v5669 = vpop.f32.mrb[0].mxu0
        %v5670 = vadd.f32 0.0, %v5669
        %v5671 = vpop.f32.mrb[0].mxu0
        %v5672 = vadd.f32 0.0, %v5671
        %v5673 = vpop.f32.mrb[0].mxu0
        %v5674 = vadd.f32 0.0, %v5673
        %v5675 = vpop.f32.mrb[0].mxu0
        %v5676 = vadd.f32 0.0, %v5675
        %5677 = vmatprep.mubr.bf16.mxu0 0
        %5678 = vmatmul.mubr.bf16.gmra.mrb[0].mxu0 %v5480
        %v5679 = vpop.f32.mrb[0].mxu0
        %v5680 = vadd.f32 0.0, %v5679
        %v5681 = vpop.f32.mrb[0].mxu0
        %v5682 = vadd.f32 0.0, %v5681
        %v5683 = vpop.f32.mrb[0].mxu0
        %v5684 = vadd.f32 0.0, %v5683
        %v5685 = vpop.f32.mrb[0].mxu0
        %v5686 = vadd.f32 0.0, %v5685
        %5687 = vmatprep.mubr.bf16.mxu0 0
        %5688 = vmatmul.mubr.bf16.gmra.mrb[0].mxu0 %v5483
        %v5689 = vpop.f32.mrb[0].mxu0
        %v5690 = vadd.f32 0.0, %v5689
        %v5691 = vpop.f32.mrb[0].mxu0
        %v5692 = vadd.f32 0.0, %v5691
        %v5693 = vpop.f32.mrb[0].mxu0
        %v5694 = vadd.f32 0.0, %v5693
        %v5695 = vpop.f32.mrb[0].mxu0
        %v5696 = vadd.f32 0.0, %v5695
        %5697 = vmatprep.mubr.bf16.mxu0 0
        %5698 = vmatmul.mubr.bf16.gmra.mrb[0].mxu0 %v5486
        %v5699 = vpop.f32.mrb[0].mxu0
        %v5700 = vadd.f32 0.0, %v5699
        %v5701 = vpop.f32.mrb[0].mxu0
        %v5702 = vadd.f32 0.0, %v5701
        %v5703 = vpop.f32.mrb[0].mxu0
        %v5704 = vadd.f32 0.0, %v5703
        %v5705 = vpop.f32.mrb[0].mxu0
        %v5706 = vadd.f32 0.0, %v5705
        %5707 = vmatprep.mubr.bf16.mxu0 0
        %5708 = vmatmul.mubr.bf16.gmra.mrb[0].mxu0 %v5489
        %v5709 = vpop.f32.mrb[0].mxu0
        %v5710 = vadd.f32 0.0, %v5709
        %v5711 = vpop.f32.mrb[0].mxu0
        %v5712 = vadd.f32 0.0, %v5711
        %v5713 = vpop.f32.mrb[0].mxu0
        %v5714 = vadd.f32 0.0, %v5713
        %v5715 = vpop.f32.mrb[0].mxu0
        %v5716 = vadd.f32 0.0, %v5715
        %5717 = vmatprep.mubr.bf16.mxu0 0
        %5718 = vmatmul.mubr.bf16.gmra.mrb[0].mxu0 %v5492
        %v5719 = vpop.f32.mrb[0].mxu0
        %v5720 = vadd.f32 0.0, %v5719
        %v5721 = vpop.f32.mrb[0].mxu0
        %v5722 = vadd.f32 0.0, %v5721
        %v5723 = vpop.f32.mrb[0].mxu0
        %v5724 = vadd.f32 0.0, %v5723
        %v5725 = vpop.f32.mrb[0].mxu0
        %v5726 = vadd.f32 0.0, %v5725
        %5727 = vmatprep.mubr.bf16.mxu0 0
        %5728 = vmatmul.mubr.bf16.gmra.mrb[0].mxu0 %v5495
        %v5729 = vpop.f32.mrb[0].mxu0
        %v5730 = vadd.f32 0.0, %v5729
        %v5731 = vpop.f32.mrb[0].mxu0
        %v5732 = vadd.f32 0.0, %v5731
        %v5733 = vpop.f32.mrb[0].mxu0
        %v5734 = vadd.f32 0.0, %v5733
        %v5735 = vpop.f32.mrb[0].mxu0
        %v5736 = vadd.f32 0.0, %v5735
        %5737 = vdwg.mxu0
        %v5738 = vmax.f32 %v5580, %v5582
        %5739 = vmax.xlane.f32.xlu0 %v5738
        %v5740 = vpop.xlane.xlu0 %5739
        %v5741 = vmax.f32 %v5584, %v5586
        %5742 = vmax.xlane.f32.xlu0 %v5741
        %v5743 = vpop.xlane.xlu0 %5742
        %v5744 = vmax.f32 %v5590, %v5592
        %5745 = vmax.xlane.f32.xlu0 %v5744
        %v5746 = vpop.xlane.xlu0 %5745
        %v5747 = vmax.f32 %v5594, %v5596
        %5748 = vmax.xlane.f32.xlu0 %v5747
        %v5749 = vpop.xlane.xlu0 %5748
        %v5750 = vmax.f32 %v5600, %v5602
        %5751 = vmax.xlane.f32.xlu0 %v5750
        %v5752 = vpop.xlane.xlu0 %5751
        %v5753 = vmax.f32 %v5604, %v5606
        %5754 = vmax.xlane.f32.xlu0 %v5753
        %v5755 = vpop.xlane.xlu0 %5754
        %v5756 = vmax.f32 %v5610, %v5612
        %5757 = vmax.xlane.f32.xlu0 %v5756
        %v5758 = vpop.xlane.xlu0 %5757
        %v5759 = vmax.f32 %v5614, %v5616
        %5760 = vmax.xlane.f32.xlu0 %v5759
        %v5761 = vpop.xlane.xlu0 %5760
        %v5762 = vmax.f32 %v5620, %v5622
        %5763 = vmax.xlane.f32.xlu0 %v5762
        %v5764 = vpop.xlane.xlu0 %5763
        %v5765 = vmax.f32 %v5624, %v5626
        %5766 = vmax.xlane.f32.xlu0 %v5765
        %v5767 = vpop.xlane.xlu0 %5766
        %v5768 = vmax.f32 %v5630, %v5632
        %5769 = vmax.xlane.f32.xlu0 %v5768
        %v5770 = vpop.xlane.xlu0 %5769
        %v5771 = vmax.f32 %v5634, %v5636
        %5772 = vmax.xlane.f32.xlu0 %v5771
        %v5773 = vpop.xlane.xlu0 %5772
        %v5774 = vmax.f32 %v5640, %v5642
        %5775 = vmax.xlane.f32.xlu0 %v5774
        %v5776 = vpop.xlane.xlu0 %5775
        %v5777 = vmax.f32 %v5644, %v5646
        %5778 = vmax.xlane.f32.xlu0 %v5777
        %v5779 = vpop.xlane.xlu0 %5778
        %v5780 = vmax.f32 %v5650, %v5652
        %5781 = vmax.xlane.f32.xlu0 %v5780
        %v5782 = vpop.xlane.xlu0 %5781
        %v5783 = vmax.f32 %v5654, %v5656
        %5784 = vmax.xlane.f32.xlu0 %v5783
        %v5785 = vpop.xlane.xlu0 %5784
        %v5786 = vmax.f32 %v5660, %v5662
        %5787 = vmax.xlane.f32.xlu0 %v5786
        %v5788 = vpop.xlane.xlu0 %5787
        %v5789 = vmax.f32 %v5664, %v5666
        %5790 = vmax.xlane.f32.xlu0 %v5789
        %v5791 = vpop.xlane.xlu0 %5790
        %v5792 = vmax.f32 %v5670, %v5672
        %5793 = vmax.xlane.f32.xlu0 %v5792
        %v5794 = vpop.xlane.xlu0 %5793
        %v5795 = vmax.f32 %v5674, %v5676
        %5796 = vmax.xlane.f32.xlu0 %v5795
        %v5797 = vpop.xlane.xlu0 %5796
        %v5798 = vmax.f32 %v5680, %v5682
        %5799 = vmax.xlane.f32.xlu0 %v5798
        %v5800 = vpop.xlane.xlu0 %5799
        %v5801 = vmax.f32 %v5684, %v5686
        %5802 = vmax.xlane.f32.xlu0 %v5801
        %v5803 = vpop.xlane.xlu0 %5802
        %v5804 = vmax.f32 %v5690, %v5692
        %5805 = vmax.xlane.f32.xlu0 %v5804
        %v5806 = vpop.xlane.xlu0 %5805
        %v5807 = vmax.f32 %v5694, %v5696
        %5808 = vmax.xlane.f32.xlu0 %v5807
        %v5809 = vpop.xlane.xlu0 %5808
        %v5810 = vmax.f32 %v5700, %v5702
        %5811 = vmax.xlane.f32.xlu0 %v5810
        %v5812 = vpop.xlane.xlu0 %5811
        %v5813 = vmax.f32 %v5704, %v5706
        %5814 = vmax.xlane.f32.xlu0 %v5813
        %v5815 = vpop.xlane.xlu0 %5814
        %v5816 = vmax.f32 %v5710, %v5712
        %5817 = vmax.xlane.f32.xlu0 %v5816
        %v5818 = vpop.xlane.xlu0 %5817
        %v5819 = vmax.f32 %v5714, %v5716
        %5820 = vmax.xlane.f32.xlu0 %v5819
        %v5821 = vpop.xlane.xlu0 %5820
        %v5822 = vmax.f32 %v5720, %v5722
        %5823 = vmax.xlane.f32.xlu0 %v5822
        %v5824 = vpop.xlane.xlu0 %5823
        %v5825 = vmax.f32 %v5724, %v5726
        %5826 = vmax.xlane.f32.xlu0 %v5825
        %v5827 = vpop.xlane.xlu0 %5826
        %v5828 = vmax.f32 %v5730, %v5732
        %5829 = vmax.xlane.f32.xlu0 %v5828
        %v5830 = vpop.xlane.xlu0 %5829
        %v5831 = vmax.f32 %v5734, %v5736
        %5832 = vmax.xlane.f32.xlu0 %v5831
        %v5833 = vpop.xlane.xlu0 %5832
        %v5834 = vsub.f32 %v5580, %v5740
        %v5835 = vsub.f32 %v5582, %v5740
        %v5836 = vsub.f32 %v5584, %v5743
        %v5837 = vsub.f32 %v5586, %v5743
        %v5838 = vsub.f32 %v5590, %v5746
        %v5839 = vsub.f32 %v5592, %v5746
        %v5840 = vsub.f32 %v5594, %v5749
        %v5841 = vsub.f32 %v5596, %v5749
        %v5842 = vsub.f32 %v5600, %v5752
        %v5843 = vsub.f32 %v5602, %v5752
        %v5844 = vsub.f32 %v5604, %v5755
        %v5845 = vsub.f32 %v5606, %v5755
        %v5846 = vsub.f32 %v5610, %v5758
        %v5847 = vsub.f32 %v5612, %v5758
        %v5848 = vsub.f32 %v5614, %v5761
        %v5849 = vsub.f32 %v5616, %v5761
        %v5850 = vsub.f32 %v5620, %v5764
        %v5851 = vsub.f32 %v5622, %v5764
        %v5852 = vsub.f32 %v5624, %v5767
        %v5853 = vsub.f32 %v5626, %v5767
        %v5854 = vsub.f32 %v5630, %v5770
        %v5855 = vsub.f32 %v5632, %v5770
        %v5856 = vsub.f32 %v5634, %v5773
        %v5857 = vsub.f32 %v5636, %v5773
        %v5858 = vsub.f32 %v5640, %v5776
        %v5859 = vsub.f32 %v5642, %v5776
        %v5860 = vsub.f32 %v5644, %v5779
        %v5861 = vsub.f32 %v5646, %v5779
        %v5862 = vsub.f32 %v5650, %v5782
        %v5863 = vsub.f32 %v5652, %v5782
        %v5864 = vsub.f32 %v5654, %v5785
        %v5865 = vsub.f32 %v5656, %v5785
        %v5866 = vsub.f32 %v5660, %v5788
        %v5867 = vsub.f32 %v5662, %v5788
        %v5868 = vsub.f32 %v5664, %v5791
        %v5869 = vsub.f32 %v5666, %v5791
        %v5870 = vsub.f32 %v5670, %v5794
        %v5871 = vsub.f32 %v5672, %v5794
        %v5872 = vsub.f32 %v5674, %v5797
        %v5873 = vsub.f32 %v5676, %v5797
        %v5874 = vsub.f32 %v5680, %v5800
        %v5875 = vsub.f32 %v5682, %v5800
        %v5876 = vsub.f32 %v5684, %v5803
        %v5877 = vsub.f32 %v5686, %v5803
        %v5878 = vsub.f32 %v5690, %v5806
        %v5879 = vsub.f32 %v5692, %v5806
        %v5880 = vsub.f32 %v5694, %v5809
        %v5881 = vsub.f32 %v5696, %v5809
        %v5882 = vsub.f32 %v5700, %v5812
        %v5883 = vsub.f32 %v5702, %v5812
        %v5884 = vsub.f32 %v5704, %v5815
        %v5885 = vsub.f32 %v5706, %v5815
        %v5886 = vsub.f32 %v5710, %v5818
        %v5887 = vsub.f32 %v5712, %v5818
        %v5888 = vsub.f32 %v5714, %v5821
        %v5889 = vsub.f32 %v5716, %v5821
        %v5890 = vsub.f32 %v5720, %v5824
        %v5891 = vsub.f32 %v5722, %v5824
        %v5892 = vsub.f32 %v5724, %v5827
        %v5893 = vsub.f32 %v5726, %v5827
        %v5894 = vsub.f32 %v5730, %v5830
        %v5895 = vsub.f32 %v5732, %v5830
        %v5896 = vsub.f32 %v5734, %v5833
        %v5897 = vsub.f32 %v5736, %v5833
        %v5898 = vmul.f32 %v5834, 1.442695
        %v5899 = vpow.pop %v5898
        %v5900 = vmul.f32 %v5835, 1.442695
        %v5901 = vpow.pop %v5900
        %v5902 = vmul.f32 %v5836, 1.442695
        %v5903 = vpow.pop %v5902
        %v5904 = vmul.f32 %v5837, 1.442695
        %v5905 = vpow.pop %v5904
        %v5906 = vmul.f32 %v5838, 1.442695
        %v5907 = vpow.pop %v5906
        %v5908 = vmul.f32 %v5839, 1.442695
        %v5909 = vpow.pop %v5908
        %v5910 = vmul.f32 %v5840, 1.442695
        %v5911 = vpow.pop %v5910
        %v5912 = vmul.f32 %v5841, 1.442695
        %v5913 = vpow.pop %v5912
        %v5914 = vmul.f32 %v5842, 1.442695
        %v5915 = vpow.pop %v5914
        %v5916 = vmul.f32 %v5843, 1.442695
        %v5917 = vpow.pop %v5916
        %v5918 = vmul.f32 %v5844, 1.442695
        %v5919 = vpow.pop %v5918
        %v5920 = vmul.f32 %v5845, 1.442695
        %v5921 = vpow.pop %v5920
        %v5922 = vmul.f32 %v5846, 1.442695
        %v5923 = vpow.pop %v5922
        %v5924 = vmul.f32 %v5847, 1.442695
        %v5925 = vpow.pop %v5924
        %v5926 = vmul.f32 %v5848, 1.442695
        %v5927 = vpow.pop %v5926
        %v5928 = vmul.f32 %v5849, 1.442695
        %v5929 = vpow.pop %v5928
        %v5930 = vmul.f32 %v5850, 1.442695
        %v5931 = vpow.pop %v5930
        %v5932 = vmul.f32 %v5851, 1.442695
        %v5933 = vpow.pop %v5932
        %v5934 = vmul.f32 %v5852, 1.442695
        %v5935 = vpow.pop %v5934
        %v5936 = vmul.f32 %v5853, 1.442695
        %v5937 = vpow.pop %v5936
        %v5938 = vmul.f32 %v5854, 1.442695
        %v5939 = vpow.pop %v5938
        %v5940 = vmul.f32 %v5855, 1.442695
        %v5941 = vpow.pop %v5940
        %v5942 = vmul.f32 %v5856, 1.442695
        %v5943 = vpow.pop %v5942
        %v5944 = vmul.f32 %v5857, 1.442695
        %v5945 = vpow.pop %v5944
        %v5946 = vmul.f32 %v5858, 1.442695
        %v5947 = vpow.pop %v5946
        %v5948 = vmul.f32 %v5859, 1.442695
        %v5949 = vpow.pop %v5948
        %v5950 = vmul.f32 %v5860, 1.442695
        %v5951 = vpow.pop %v5950
        %v5952 = vmul.f32 %v5861, 1.442695
        %v5953 = vpow.pop %v5952
        %v5954 = vmul.f32 %v5862, 1.442695
        %v5955 = vpow.pop %v5954
        %v5956 = vmul.f32 %v5863, 1.442695
        %v5957 = vpow.pop %v5956
        %v5958 = vmul.f32 %v5864, 1.442695
        %v5959 = vpow.pop %v5958
        %v5960 = vmul.f32 %v5865, 1.442695
        %v5961 = vpow.pop %v5960
        %v5962 = vmul.f32 %v5866, 1.442695
        %v5963 = vpow.pop %v5962
        %v5964 = vmul.f32 %v5867, 1.442695
        %v5965 = vpow.pop %v5964
        %v5966 = vmul.f32 %v5868, 1.442695
        %v5967 = vpow.pop %v5966
        %v5968 = vmul.f32 %v5869, 1.442695
        %v5969 = vpow.pop %v5968
        %v5970 = vmul.f32 %v5870, 1.442695
        %v5971 = vpow.pop %v5970
        %v5972 = vmul.f32 %v5871, 1.442695
        %v5973 = vpow.pop %v5972
        %v5974 = vmul.f32 %v5872, 1.442695
        %v5975 = vpow.pop %v5974
        %v5976 = vmul.f32 %v5873, 1.442695
        %v5977 = vpow.pop %v5976
        %v5978 = vmul.f32 %v5874, 1.442695
        %v5979 = vpow.pop %v5978
        %v5980 = vmul.f32 %v5875, 1.442695
        %v5981 = vpow.pop %v5980
        %v5982 = vmul.f32 %v5876, 1.442695
        %v5983 = vpow.pop %v5982
        %v5984 = vmul.f32 %v5877, 1.442695
        %v5985 = vpow.pop %v5984
        %v5986 = vmul.f32 %v5878, 1.442695
        %v5987 = vpow.pop %v5986
        %v5988 = vmul.f32 %v5879, 1.442695
        %v5989 = vpow.pop %v5988
        %v5990 = vmul.f32 %v5880, 1.442695
        %v5991 = vpow.pop %v5990
        %v5992 = vmul.f32 %v5881, 1.442695
        %v5993 = vpow.pop %v5992
        %v5994 = vmul.f32 %v5882, 1.442695
        %v5995 = vpow.pop %v5994
        %v5996 = vmul.f32 %v5883, 1.442695
        %v5997 = vpow.pop %v5996
        %v5998 = vmul.f32 %v5884, 1.442695
        %v5999 = vpow.pop %v5998
        %v6000 = vmul.f32 %v5885, 1.442695
        %v6001 = vpow.pop %v6000
        %v6002 = vmul.f32 %v5886, 1.442695
        %v6003 = vpow.pop %v6002
        %v6004 = vmul.f32 %v5887, 1.442695
        %v6005 = vpow.pop %v6004
        %v6006 = vmul.f32 %v5888, 1.442695
        %v6007 = vpow.pop %v6006
        %v6008 = vmul.f32 %v5889, 1.442695
        %v6009 = vpow.pop %v6008
        %v6010 = vmul.f32 %v5890, 1.442695
        %v6011 = vpow.pop %v6010
        %v6012 = vmul.f32 %v5891, 1.442695
        %v6013 = vpow.pop %v6012
        %v6014 = vmul.f32 %v5892, 1.442695
        %v6015 = vpow.pop %v6014
        %v6016 = vmul.f32 %v5893, 1.442695
        %v6017 = vpow.pop %v6016
        %v6018 = vmul.f32 %v5894, 1.442695
        %v6019 = vpow.pop %v6018
        %v6020 = vmul.f32 %v5895, 1.442695
        %v6021 = vpow.pop %v6020
        %v6022 = vmul.f32 %v5896, 1.442695
        %v6023 = vpow.pop %v6022
        %v6024 = vmul.f32 %v5897, 1.442695
        %v6025 = vpow.pop %v6024
        %v6026 = vadd.f32 %v5899, %v5901
        %6027 = vadd.xlane.f32.xlu0 %v6026
        %v6028 = vpop.xlane.xlu0 %6027
        %v6029 = vadd.f32 %v5903, %v5905
        %6030 = vadd.xlane.f32.xlu0 %v6029
        %v6031 = vpop.xlane.xlu0 %6030
        %v6032 = vadd.f32 %v5907, %v5909
        %6033 = vadd.xlane.f32.xlu0 %v6032
        %v6034 = vpop.xlane.xlu0 %6033
        %v6035 = vadd.f32 %v5911, %v5913
        %6036 = vadd.xlane.f32.xlu0 %v6035
        %v6037 = vpop.xlane.xlu0 %6036
        %v6038 = vadd.f32 %v5915, %v5917
        %6039 = vadd.xlane.f32.xlu0 %v6038
        %v6040 = vpop.xlane.xlu0 %6039
        %v6041 = vadd.f32 %v5919, %v5921
        %6042 = vadd.xlane.f32.xlu0 %v6041
        %v6043 = vpop.xlane.xlu0 %6042
        %v6044 = vadd.f32 %v5923, %v5925
        %6045 = vadd.xlane.f32.xlu0 %v6044
        %v6046 = vpop.xlane.xlu0 %6045
        %v6047 = vadd.f32 %v5927, %v5929
        %6048 = vadd.xlane.f32.xlu0 %v6047
        %v6049 = vpop.xlane.xlu0 %6048
        %v6050 = vadd.f32 %v5931, %v5933
        %6051 = vadd.xlane.f32.xlu0 %v6050
        %v6052 = vpop.xlane.xlu0 %6051
        %v6053 = vadd.f32 %v5935, %v5937
        %6054 = vadd.xlane.f32.xlu0 %v6053
        %v6055 = vpop.xlane.xlu0 %6054
        %v6056 = vadd.f32 %v5939, %v5941
        %6057 = vadd.xlane.f32.xlu0 %v6056
        %v6058 = vpop.xlane.xlu0 %6057
        %v6059 = vadd.f32 %v5943, %v5945
        %6060 = vadd.xlane.f32.xlu0 %v6059
        %v6061 = vpop.xlane.xlu0 %6060
        %v6062 = vadd.f32 %v5947, %v5949
        %6063 = vadd.xlane.f32.xlu0 %v6062
        %v6064 = vpop.xlane.xlu0 %6063
        %v6065 = vadd.f32 %v5951, %v5953
        %6066 = vadd.xlane.f32.xlu0 %v6065
        %v6067 = vpop.xlane.xlu0 %6066
        %v6068 = vadd.f32 %v5955, %v5957
        %6069 = vadd.xlane.f32.xlu0 %v6068
        %v6070 = vpop.xlane.xlu0 %6069
        %v6071 = vadd.f32 %v5959, %v5961
        %6072 = vadd.xlane.f32.xlu0 %v6071
        %v6073 = vpop.xlane.xlu0 %6072
        %v6074 = vadd.f32 %v5963, %v5965
        %6075 = vadd.xlane.f32.xlu0 %v6074
        %v6076 = vpop.xlane.xlu0 %6075
        %v6077 = vadd.f32 %v5967, %v5969
        %6078 = vadd.xlane.f32.xlu0 %v6077
        %v6079 = vpop.xlane.xlu0 %6078
        %v6080 = vadd.f32 %v5971, %v5973
        %6081 = vadd.xlane.f32.xlu0 %v6080
        %v6082 = vpop.xlane.xlu0 %6081
        %v6083 = vadd.f32 %v5975, %v5977
        %6084 = vadd.xlane.f32.xlu0 %v6083
        %v6085 = vpop.xlane.xlu0 %6084
        %v6086 = vadd.f32 %v5979, %v5981
        %6087 = vadd.xlane.f32.xlu0 %v6086
        %v6088 = vpop.xlane.xlu0 %6087
        %v6089 = vadd.f32 %v5983, %v5985
        %6090 = vadd.xlane.f32.xlu0 %v6089
        %v6091 = vpop.xlane.xlu0 %6090
        %v6092 = vadd.f32 %v5987, %v5989
        %6093 = vadd.xlane.f32.xlu0 %v6092
        %v6094 = vpop.xlane.xlu0 %6093
        %v6095 = vadd.f32 %v5991, %v5993
        %6096 = vadd.xlane.f32.xlu0 %v6095
        %v6097 = vpop.xlane.xlu0 %6096
        %v6098 = vadd.f32 %v5995, %v5997
        %6099 = vadd.xlane.f32.xlu0 %v6098
        %v6100 = vpop.xlane.xlu0 %6099
        %v6101 = vadd.f32 %v5999, %v6001
        %6102 = vadd.xlane.f32.xlu0 %v6101
        %v6103 = vpop.xlane.xlu0 %6102
        %v6104 = vadd.f32 %v6003, %v6005
        %6105 = vadd.xlane.f32.xlu0 %v6104
        %v6106 = vpop.xlane.xlu0 %6105
        %v6107 = vadd.f32 %v6007, %v6009
        %6108 = vadd.xlane.f32.xlu0 %v6107
        %v6109 = vpop.xlane.xlu0 %6108
        %v6110 = vadd.f32 %v6011, %v6013
        %6111 = vadd.xlane.f32.xlu0 %v6110
        %v6112 = vpop.xlane.xlu0 %6111
        %v6113 = vadd.f32 %v6015, %v6017
        %6114 = vadd.xlane.f32.xlu0 %v6113
        %v6115 = vpop.xlane.xlu0 %6114
        %v6116 = vadd.f32 %v6019, %v6021
        %6117 = vadd.xlane.f32.xlu0 %v6116
        %v6118 = vpop.xlane.xlu0 %6117
        %v6119 = vadd.f32 %v6023, %v6025
        %6120 = vadd.xlane.f32.xlu0 %v6119
        %v6121 = vpop.xlane.xlu0 %6120
        %v6122 = vrcp.pop %v6028
        %v6123 = vrcp.pop %v6031
        %v6124 = vrcp.pop %v6034
        %v6125 = vrcp.pop %v6037
        %v6126 = vrcp.pop %v6040
        %v6127 = vrcp.pop %v6043
        %v6128 = vrcp.pop %v6046
        %v6129 = vrcp.pop %v6049
        %v6130 = vrcp.pop %v6052
        %v6131 = vrcp.pop %v6055
        %v6132 = vrcp.pop %v6058
        %v6133 = vrcp.pop %v6061
        %v6134 = vrcp.pop %v6064
        %v6135 = vrcp.pop %v6067
        %v6136 = vrcp.pop %v6070
        %v6137 = vrcp.pop %v6073
        %v6138 = vrcp.pop %v6076
        %v6139 = vrcp.pop %v6079
        %v6140 = vrcp.pop %v6082
        %v6141 = vrcp.pop %v6085
        %v6142 = vrcp.pop %v6088
        %v6143 = vrcp.pop %v6091
        %v6144 = vrcp.pop %v6094
        %v6145 = vrcp.pop %v6097
        %v6146 = vrcp.pop %v6100
        %v6147 = vrcp.pop %v6103
        %v6148 = vrcp.pop %v6106
        %v6149 = vrcp.pop %v6109
        %v6150 = vrcp.pop %v6112
        %v6151 = vrcp.pop %v6115
        %v6152 = vrcp.pop %v6118
        %v6153 = vrcp.pop %v6121
        %v6154 = vmul.f32 %v5899, %v6122
        %v6155 = vmul.f32 %v5901, %v6122
        %v6156 = vmul.f32 %v5903, %v6123
        %v6157 = vmul.f32 %v5905, %v6123
        %v6158 = vmul.f32 %v5907, %v6124
        %v6159 = vmul.f32 %v5909, %v6124
        %v6160 = vmul.f32 %v5911, %v6125
        %v6161 = vmul.f32 %v5913, %v6125
        %v6162 = vmul.f32 %v5915, %v6126
        %v6163 = vmul.f32 %v5917, %v6126
        %v6164 = vmul.f32 %v5919, %v6127
        %v6165 = vmul.f32 %v5921, %v6127
        %v6166 = vmul.f32 %v5923, %v6128
        %v6167 = vmul.f32 %v5925, %v6128
        %v6168 = vmul.f32 %v5927, %v6129
        %v6169 = vmul.f32 %v5929, %v6129
        %v6170 = vmul.f32 %v5931, %v6130
        %v6171 = vmul.f32 %v5933, %v6130
        %v6172 = vmul.f32 %v5935, %v6131
        %v6173 = vmul.f32 %v5937, %v6131
        %v6174 = vmul.f32 %v5939, %v6132
        %v6175 = vmul.f32 %v5941, %v6132
        %v6176 = vmul.f32 %v5943, %v6133
        %v6177 = vmul.f32 %v5945, %v6133
        %v6178 = vmul.f32 %v5947, %v6134
        %v6179 = vmul.f32 %v5949, %v6134
        %v6180 = vmul.f32 %v5951, %v6135
        %v6181 = vmul.f32 %v5953, %v6135
        %v6182 = vmul.f32 %v5955, %v6136
        %v6183 = vmul.f32 %v5957, %v6136
        %v6184 = vmul.f32 %v5959, %v6137
        %v6185 = vmul.f32 %v5961, %v6137
        %v6186 = vmul.f32 %v5963, %v6138
        %v6187 = vmul.f32 %v5965, %v6138
        %v6188 = vmul.f32 %v5967, %v6139
        %v6189 = vmul.f32 %v5969, %v6139
        %v6190 = vmul.f32 %v5971, %v6140
        %v6191 = vmul.f32 %v5973, %v6140
        %v6192 = vmul.f32 %v5975, %v6141
        %v6193 = vmul.f32 %v5977, %v6141
        %v6194 = vmul.f32 %v5979, %v6142
        %v6195 = vmul.f32 %v5981, %v6142
        %v6196 = vmul.f32 %v5983, %v6143
        %v6197 = vmul.f32 %v5985, %v6143
        %v6198 = vmul.f32 %v5987, %v6144
        %v6199 = vmul.f32 %v5989, %v6144
        %v6200 = vmul.f32 %v5991, %v6145
        %v6201 = vmul.f32 %v5993, %v6145
        %v6202 = vmul.f32 %v5995, %v6146
        %v6203 = vmul.f32 %v5997, %v6146
        %v6204 = vmul.f32 %v5999, %v6147
        %v6205 = vmul.f32 %v6001, %v6147
        %v6206 = vmul.f32 %v6003, %v6148
        %v6207 = vmul.f32 %v6005, %v6148
        %v6208 = vmul.f32 %v6007, %v6149
        %v6209 = vmul.f32 %v6009, %v6149
        %v6210 = vmul.f32 %v6011, %v6150
        %v6211 = vmul.f32 %v6013, %v6150
        %v6212 = vmul.f32 %v6015, %v6151
        %v6213 = vmul.f32 %v6017, %v6151
        %v6214 = vmul.f32 %v6019, %v6152
        %v6215 = vmul.f32 %v6021, %v6152
        %v6216 = vmul.f32 %v6023, %v6153
        %v6217 = vmul.f32 %v6025, %v6153
        %v6218 = vpack.c.bf16 %v6156, %v6154
        %v6219 = vpack.c.bf16 %v6157, %v6155
        %v6220 = vpack.c.bf16 %v6160, %v6158
        %v6221 = vpack.c.bf16 %v6161, %v6159
        %v6222 = vpack.c.bf16 %v6164, %v6162
        %v6223 = vpack.c.bf16 %v6165, %v6163
        %v6224 = vpack.c.bf16 %v6168, %v6166
        %v6225 = vpack.c.bf16 %v6169, %v6167
        %v6226 = vpack.c.bf16 %v6172, %v6170
        %v6227 = vpack.c.bf16 %v6173, %v6171
        %v6228 = vpack.c.bf16 %v6176, %v6174
        %v6229 = vpack.c.bf16 %v6177, %v6175
        %v6230 = vpack.c.bf16 %v6180, %v6178
        %v6231 = vpack.c.bf16 %v6181, %v6179
        %v6232 = vpack.c.bf16 %v6184, %v6182
        %v6233 = vpack.c.bf16 %v6185, %v6183
        %v6234 = vpack.c.bf16 %v6188, %v6186
        %v6235 = vpack.c.bf16 %v6189, %v6187
        %v6236 = vpack.c.bf16 %v6192, %v6190
        %v6237 = vpack.c.bf16 %v6193, %v6191
        %v6238 = vpack.c.bf16 %v6196, %v6194
        %v6239 = vpack.c.bf16 %v6197, %v6195
        %v6240 = vpack.c.bf16 %v6200, %v6198
        %v6241 = vpack.c.bf16 %v6201, %v6199
        %v6242 = vpack.c.bf16 %v6204, %v6202
        %v6243 = vpack.c.bf16 %v6205, %v6203
        %v6244 = vpack.c.bf16 %v6208, %v6206
        %v6245 = vpack.c.bf16 %v6209, %v6207
        %v6246 = vpack.c.bf16 %v6212, %v6210
        %v6247 = vpack.c.bf16 %v6213, %v6211
        %v6248 = vpack.c.bf16 %v6216, %v6214
        %v6249 = vpack.c.bf16 %v6217, %v6215
        %v6250 = vpack.c.bf16 %v5294, %v5291
        %v6251 = vpack.c.bf16 %v5302, %v5299
        %v6252 = vpack.c.bf16 %v5310, %v5307
        %v6253 = vpack.c.bf16 %v5318, %v5315
        %v6254 = vpack.c.bf16 %v5326, %v5323
        %v6255 = vpack.c.bf16 %v5334, %v5331
        %v6256 = vpack.c.bf16 %v5342, %v5339
        %v6257 = vpack.c.bf16 %v5350, %v5347
        %v6258 = vpack.c.bf16 %v5358, %v5355
        %v6259 = vpack.c.bf16 %v5366, %v5363
        %v6260 = vpack.c.bf16 %v5374, %v5371
        %v6261 = vpack.c.bf16 %v5382, %v5379
        %v6262 = vpack.c.bf16 %v5390, %v5387
        %v6263 = vpack.c.bf16 %v5398, %v5395
        %v6264 = vpack.c.bf16 %v5406, %v5403
        %v6265 = vpack.c.bf16 %v5414, %v5411
        %6266 = vmatprep.subr.bf16.mxu0 0
        %6267 = vmatpush1.bf16.msra.mxu0 %v6250
        %6268 = vmatprep.subr.bf16.mxu0 0
        %6269 = vmatpush1.bf16.msra.mxu0 %v6251
        %6270 = vmatprep.subr.bf16.mxu0 0
        %6271 = vmatpush1.bf16.msra.mxu0 %v6252
        %6272 = vmatprep.subr.bf16.mxu0 0
        %6273 = vmatpush1.bf16.msra.mxu0 %v6253
        %6274 = vmatprep.subr.bf16.mxu0 0
        %6275 = vmatpush1.bf16.msra.mxu0 %v6254
        %6276 = vmatprep.subr.bf16.mxu0 0
        %6277 = vmatpush1.bf16.msra.mxu0 %v6255
        %6278 = vmatprep.subr.bf16.mxu0 0
        %6279 = vmatpush1.bf16.msra.mxu0 %v6256
        %6280 = vmatprep.subr.bf16.mxu0 0
        %6281 = vmatpush1.bf16.msra.mxu0 %v6257
        %6282 = vmatprep.subr.bf16.mxu0 0
        %6283 = vmatpush1.bf16.msra.mxu0 %v6258
        %6284 = vmatprep.subr.bf16.mxu0 0
        %6285 = vmatpush1.bf16.msra.mxu0 %v6259
        %6286 = vmatprep.subr.bf16.mxu0 0
        %6287 = vmatpush1.bf16.msra.mxu0 %v6260
        %6288 = vmatprep.subr.bf16.mxu0 0
        %6289 = vmatpush1.bf16.msra.mxu0 %v6261
        %6290 = vmatprep.subr.bf16.mxu0 0
        %6291 = vmatpush1.bf16.msra.mxu0 %v6262
        %6292 = vmatprep.subr.bf16.mxu0 0
        %6293 = vmatpush1.bf16.msra.mxu0 %v6263
        %6294 = vmatprep.subr.bf16.mxu0 0
        %6295 = vmatpush1.bf16.msra.mxu0 %v6264
        %6296 = vmatprep.subr.bf16.mxu0 0
        %6297 = vmatpush1.bf16.msra.mxu0 %v6265
        %6298 = vmatprep.mubr.bf16.mxu0 %v6219
        %6299 = vmatmul.mubr.bf16.gmra.mrb[0].mxu0 %v6218
        %v6300 = vpop.f32.mrb[0].mxu0
        %v6301 = vadd.f32 0.0, %v6300
        %v6302 = vpop.f32.mrb[0].mxu0
        %v6303 = vpop.f32.mrb[0].mxu0
        %v6304 = vadd.f32 0.0, %v6303
        %v6305 = vpop.f32.mrb[0].mxu0
        %6306 = vmatprep.mubr.bf16.mxu0 %v6221
        %6307 = vmatmul.mubr.bf16.gmra.mrb[0].mxu0 %v6220
        %v6308 = vpop.f32.mrb[0].mxu0
        %v6309 = vadd.f32 0.0, %v6308
        %v6310 = vpop.f32.mrb[0].mxu0
        %v6311 = vpop.f32.mrb[0].mxu0
        %v6312 = vadd.f32 0.0, %v6311
        %v6313 = vpop.f32.mrb[0].mxu0
        %6314 = vmatprep.mubr.bf16.mxu0 %v6223
        %6315 = vmatmul.mubr.bf16.gmra.mrb[0].mxu0 %v6222
        %v6316 = vpop.f32.mrb[0].mxu0
        %v6317 = vadd.f32 0.0, %v6316
        %v6318 = vpop.f32.mrb[0].mxu0
        %v6319 = vpop.f32.mrb[0].mxu0
        %v6320 = vadd.f32 0.0, %v6319
        %v6321 = vpop.f32.mrb[0].mxu0
        %6322 = vmatprep.mubr.bf16.mxu0 %v6225
        %6323 = vmatmul.mubr.bf16.gmra.mrb[0].mxu0 %v6224
        %v6324 = vpop.f32.mrb[0].mxu0
        %v6325 = vadd.f32 0.0, %v6324
        %v6326 = vpop.f32.mrb[0].mxu0
        %v6327 = vpop.f32.mrb[0].mxu0
        %v6328 = vadd.f32 0.0, %v6327
        %v6329 = vpop.f32.mrb[0].mxu0
        %6330 = vmatprep.mubr.bf16.mxu0 %v6227
        %6331 = vmatmul.mubr.bf16.gmra.mrb[0].mxu0 %v6226
        %v6332 = vpop.f32.mrb[0].mxu0
        %v6333 = vadd.f32 0.0, %v6332
        %v6334 = vpop.f32.mrb[0].mxu0
        %v6335 = vpop.f32.mrb[0].mxu0
        %v6336 = vadd.f32 0.0, %v6335
        %v6337 = vpop.f32.mrb[0].mxu0
        %6338 = vmatprep.mubr.bf16.mxu0 %v6229
        %6339 = vmatmul.mubr.bf16.gmra.mrb[0].mxu0 %v6228
        %v6340 = vpop.f32.mrb[0].mxu0
        %v6341 = vadd.f32 0.0, %v6340
        %v6342 = vpop.f32.mrb[0].mxu0
        %v6343 = vpop.f32.mrb[0].mxu0
        %v6344 = vadd.f32 0.0, %v6343
        %v6345 = vpop.f32.mrb[0].mxu0
        %6346 = vmatprep.mubr.bf16.mxu0 %v6231
        %6347 = vmatmul.mubr.bf16.gmra.mrb[0].mxu0 %v6230
        %v6348 = vpop.f32.mrb[0].mxu0
        %v6349 = vadd.f32 0.0, %v6348
        %v6350 = vpop.f32.mrb[0].mxu0
        %v6351 = vpop.f32.mrb[0].mxu0
        %v6352 = vadd.f32 0.0, %v6351
        %v6353 = vpop.f32.mrb[0].mxu0
        %6354 = vmatprep.mubr.bf16.mxu0 %v6233
        %6355 = vmatmul.mubr.bf16.gmra.mrb[0].mxu0 %v6232
        %v6356 = vpop.f32.mrb[0].mxu0
        %v6357 = vadd.f32 0.0, %v6356
        %v6358 = vpop.f32.mrb[0].mxu0
        %v6359 = vpop.f32.mrb[0].mxu0
        %v6360 = vadd.f32 0.0, %v6359
        %v6361 = vpop.f32.mrb[0].mxu0
        %6362 = vmatprep.mubr.bf16.mxu0 %v6235
        %6363 = vmatmul.mubr.bf16.gmra.mrb[0].mxu0 %v6234
        %v6364 = vpop.f32.mrb[0].mxu0
        %v6365 = vadd.f32 0.0, %v6364
        %v6366 = vpop.f32.mrb[0].mxu0
        %v6367 = vpop.f32.mrb[0].mxu0
        %v6368 = vadd.f32 0.0, %v6367
        %v6369 = vpop.f32.mrb[0].mxu0
        %6370 = vmatprep.mubr.bf16.mxu0 %v6237
        %6371 = vmatmul.mubr.bf16.gmra.mrb[0].mxu0 %v6236
        %v6372 = vpop.f32.mrb[0].mxu0
        %v6373 = vadd.f32 0.0, %v6372
        %v6374 = vpop.f32.mrb[0].mxu0
        %v6375 = vpop.f32.mrb[0].mxu0
        %v6376 = vadd.f32 0.0, %v6375
        %v6377 = vpop.f32.mrb[0].mxu0
        %6378 = vmatprep.mubr.bf16.mxu0 %v6239
        %6379 = vmatmul.mubr.bf16.gmra.mrb[0].mxu0 %v6238
        %v6380 = vpop.f32.mrb[0].mxu0
        %v6381 = vadd.f32 0.0, %v6380
        %v6382 = vpop.f32.mrb[0].mxu0
        %v6383 = vpop.f32.mrb[0].mxu0
        %v6384 = vadd.f32 0.0, %v6383
        %v6385 = vpop.f32.mrb[0].mxu0
        %6386 = vmatprep.mubr.bf16.mxu0 %v6241
        %6387 = vmatmul.mubr.bf16.gmra.mrb[0].mxu0 %v6240
        %v6388 = vpop.f32.mrb[0].mxu0
        %v6389 = vadd.f32 0.0, %v6388
        %v6390 = vpop.f32.mrb[0].mxu0
        %v6391 = vpop.f32.mrb[0].mxu0
        %v6392 = vadd.f32 0.0, %v6391
        %v6393 = vpop.f32.mrb[0].mxu0
        %6394 = vmatprep.mubr.bf16.mxu0 %v6243
        %6395 = vmatmul.mubr.bf16.gmra.mrb[0].mxu0 %v6242
        %v6396 = vpop.f32.mrb[0].mxu0
        %v6397 = vadd.f32 0.0, %v6396
        %v6398 = vpop.f32.mrb[0].mxu0
        %v6399 = vpop.f32.mrb[0].mxu0
        %v6400 = vadd.f32 0.0, %v6399
        %v6401 = vpop.f32.mrb[0].mxu0
        %6402 = vmatprep.mubr.bf16.mxu0 %v6245
        %6403 = vmatmul.mubr.bf16.gmra.mrb[0].mxu0 %v6244
        %v6404 = vpop.f32.mrb[0].mxu0
        %v6405 = vadd.f32 0.0, %v6404
        %v6406 = vpop.f32.mrb[0].mxu0
        %v6407 = vpop.f32.mrb[0].mxu0
        %v6408 = vadd.f32 0.0, %v6407
        %v6409 = vpop.f32.mrb[0].mxu0
        %6410 = vmatprep.mubr.bf16.mxu0 %v6247
        %6411 = vmatmul.mubr.bf16.gmra.mrb[0].mxu0 %v6246
        %v6412 = vpop.f32.mrb[0].mxu0
        %v6413 = vadd.f32 0.0, %v6412
        %v6414 = vpop.f32.mrb[0].mxu0
        %v6415 = vpop.f32.mrb[0].mxu0
        %v6416 = vadd.f32 0.0, %v6415
        %v6417 = vpop.f32.mrb[0].mxu0
        %6418 = vmatprep.mubr.bf16.mxu0 %v6249
        %6419 = vmatmul.mubr.bf16.gmra.mrb[0].mxu0 %v6248
        %v6420 = vpop.f32.mrb[0].mxu0
        %v6421 = vadd.f32 0.0, %v6420
        %v6422 = vpop.f32.mrb[0].mxu0
        %v6423 = vpop.f32.mrb[0].mxu0
        %v6424 = vadd.f32 0.0, %v6423
        %v6425 = vpop.f32.mrb[0].mxu0
        %6426 = vdwg.mxu0
        %v6427 = vld [vmem:[#allocation3] sm:$0xff]
        %v6428 = vld [vmem:[#allocation3 + $0x8] sm:$0xff]
        %v6429 = vld [vmem:[#allocation3 + $0x10] sm:$0xff]
        %v6430 = vld [vmem:[#allocation3 + $0x18] sm:$0xff]
        %v6431 = vld [vmem:[#allocation3 + $0x20] sm:$0xff]
        %v6432 = vld [vmem:[#allocation3 + $0x28] sm:$0xff]
        %v6433 = vld [vmem:[#allocation3 + $0x30] sm:$0xff]
        %v6434 = vld [vmem:[#allocation3 + $0x38] sm:$0xff]
        %v6435 = vld [vmem:[#allocation3 + $0x40] sm:$0xff]
        %v6436 = vld [vmem:[#allocation3 + $0x48] sm:$0xff]
        %v6437 = vld [vmem:[#allocation3 + $0x50] sm:$0xff]
        %v6438 = vld [vmem:[#allocation3 + $0x58] sm:$0xff]
        %v6439 = vld [vmem:[#allocation3 + $0x60] sm:$0xff]
        %v6440 = vld [vmem:[#allocation3 + $0x68] sm:$0xff]
        %v6441 = vld [vmem:[#allocation3 + $0x70] sm:$0xff]
        %v6442 = vld [vmem:[#allocation3 + $0x78] sm:$0xff]
        %v6443 = vld [vmem:[#allocation3 + $0x80] sm:$0xff]
        %v6444 = vld [vmem:[#allocation3 + $0x88] sm:$0xff]
        %v6445 = vld [vmem:[#allocation3 + $0x90] sm:$0xff]
        %v6446 = vld [vmem:[#allocation3 + $0x98] sm:$0xff]
        %v6447 = vld [vmem:[#allocation3 + $0xa0] sm:$0xff]
        %v6448 = vld [vmem:[#allocation3 + $0xa8] sm:$0xff]
        %v6449 = vld [vmem:[#allocation3 + $0xb0] sm:$0xff]
        %v6450 = vld [vmem:[#allocation3 + $0xb8] sm:$0xff]
        %v6451 = vld [vmem:[#allocation3 + $0xc0] sm:$0xff]
        %v6452 = vld [vmem:[#allocation3 + $0xc8] sm:$0xff]
        %v6453 = vld [vmem:[#allocation3 + $0xd0] sm:$0xff]
        %v6454 = vld [vmem:[#allocation3 + $0xd8] sm:$0xff]
        %v6455 = vld [vmem:[#allocation3 + $0xe0] sm:$0xff]
        %v6456 = vld [vmem:[#allocation3 + $0xe8] sm:$0xff]
        %v6457 = vld [vmem:[#allocation3 + $0xf0] sm:$0xff]
        %v6458 = vld [vmem:[#allocation3 + $0xf8] sm:$0xff]
        %6491 = vrot.lane.b32.xlu0 %v6301, 64
        %v6492 = vpop.permute.xlu0 %6491
        %6493 = vrot.lane.b32.xlu0 %v6304, 64
        %v6494 = vpop.permute.xlu0 %6493
        %6495 = vrot.lane.b32.xlu0 %v6309, 64
        %v6496 = vpop.permute.xlu0 %6495
        %6497 = vrot.lane.b32.xlu0 %v6312, 64
        %v6498 = vpop.permute.xlu0 %6497
        %6499 = vrot.lane.b32.xlu0 %v6317, 64
        %v6500 = vpop.permute.xlu0 %6499
        %6501 = vrot.lane.b32.xlu0 %v6320, 64
        %v6502 = vpop.permute.xlu0 %6501
        %6503 = vrot.lane.b32.xlu0 %v6325, 64
        %v6504 = vpop.permute.xlu0 %6503
        %6505 = vrot.lane.b32.xlu0 %v6328, 64
        %v6506 = vpop.permute.xlu0 %6505
        %6507 = vrot.lane.b32.xlu0 %v6333, 64
        %v6508 = vpop.permute.xlu0 %6507
        %6509 = vrot.lane.b32.xlu0 %v6336, 64
        %v6510 = vpop.permute.xlu0 %6509
        %6511 = vrot.lane.b32.xlu0 %v6341, 64
        %v6512 = vpop.permute.xlu0 %6511
        %6513 = vrot.lane.b32.xlu0 %v6344, 64
        %v6514 = vpop.permute.xlu0 %6513
        %6515 = vrot.lane.b32.xlu0 %v6349, 64
        %v6516 = vpop.permute.xlu0 %6515
        %6517 = vrot.lane.b32.xlu0 %v6352, 64
        %v6518 = vpop.permute.xlu0 %6517
        %6519 = vrot.lane.b32.xlu0 %v6357, 64
        %v6520 = vpop.permute.xlu0 %6519
        %6521 = vrot.lane.b32.xlu0 %v6360, 64
        %v6522 = vpop.permute.xlu0 %6521
        %6523 = vrot.lane.b32.xlu0 %v6365, 64
        %v6524 = vpop.permute.xlu0 %6523
        %6525 = vrot.lane.b32.xlu0 %v6368, 64
        %v6526 = vpop.permute.xlu0 %6525
        %6527 = vrot.lane.b32.xlu0 %v6373, 64
        %v6528 = vpop.permute.xlu0 %6527
        %6529 = vrot.lane.b32.xlu0 %v6376, 64
        %v6530 = vpop.permute.xlu0 %6529
        %6531 = vrot.lane.b32.xlu0 %v6381, 64
        %v6532 = vpop.permute.xlu0 %6531
        %6533 = vrot.lane.b32.xlu0 %v6384, 64
        %v6534 = vpop.permute.xlu0 %6533
        %6535 = vrot.lane.b32.xlu0 %v6389, 64
        %v6536 = vpop.permute.xlu0 %6535
        %6537 = vrot.lane.b32.xlu0 %v6392, 64
        %v6538 = vpop.permute.xlu0 %6537
        %6539 = vrot.lane.b32.xlu0 %v6397, 64
        %v6540 = vpop.permute.xlu0 %6539
        %6541 = vrot.lane.b32.xlu0 %v6400, 64
        %v6542 = vpop.permute.xlu0 %6541
        %6543 = vrot.lane.b32.xlu0 %v6405, 64
        %v6544 = vpop.permute.xlu0 %6543
        %6545 = vrot.lane.b32.xlu0 %v6408, 64
        %v6546 = vpop.permute.xlu0 %6545
        %6547 = vrot.lane.b32.xlu0 %v6413, 64
        %v6548 = vpop.permute.xlu0 %6547
        %6549 = vrot.lane.b32.xlu0 %v6416, 64
        %v6550 = vpop.permute.xlu0 %6549
        %6551 = vrot.lane.b32.xlu0 %v6421, 64
        %v6552 = vpop.permute.xlu0 %6551
        %6553 = vrot.lane.b32.xlu0 %v6424, 64
        %v6554 = vpop.permute.xlu0 %6553
        %v6587 = vadd.f32 %v6427, %v6492
        %v6588 = vadd.f32 %v6428, %v6494
        %v6589 = vadd.f32 %v6429, %v6496
        %v6590 = vadd.f32 %v6430, %v6498
        %v6591 = vadd.f32 %v6431, %v6500
        %v6592 = vadd.f32 %v6432, %v6502
        %v6593 = vadd.f32 %v6433, %v6504
        %v6594 = vadd.f32 %v6434, %v6506
        %v6595 = vadd.f32 %v6435, %v6508
        %v6596 = vadd.f32 %v6436, %v6510
        %v6597 = vadd.f32 %v6437, %v6512
        %v6598 = vadd.f32 %v6438, %v6514
        %v6599 = vadd.f32 %v6439, %v6516
        %v6600 = vadd.f32 %v6440, %v6518
        %v6601 = vadd.f32 %v6441, %v6520
        %v6602 = vadd.f32 %v6442, %v6522
        %v6603 = vadd.f32 %v6443, %v6524
        %v6604 = vadd.f32 %v6444, %v6526
        %v6605 = vadd.f32 %v6445, %v6528
        %v6606 = vadd.f32 %v6446, %v6530
        %v6607 = vadd.f32 %v6447, %v6532
        %v6608 = vadd.f32 %v6448, %v6534
        %v6609 = vadd.f32 %v6449, %v6536
        %v6610 = vadd.f32 %v6450, %v6538
        %v6611 = vadd.f32 %v6451, %v6540
        %v6612 = vadd.f32 %v6452, %v6542
        %v6613 = vadd.f32 %v6453, %v6544
        %v6614 = vadd.f32 %v6454, %v6546
        %v6615 = vadd.f32 %v6455, %v6548
        %v6616 = vadd.f32 %v6456, %v6550
        %v6617 = vadd.f32 %v6457, %v6552
        %v6618 = vadd.f32 %v6458, %v6554
        %vm6619 = vcmask 785920
        %6620 = vst.msk [vmem:[#allocation3] sm:$0xff] %vm6619, %v6587
        %6621 = vst.msk [vmem:[#allocation3 + $0x8] sm:$0xff] %vm6619, %v6588
        %6622 = vst.msk [vmem:[#allocation3 + $0x10] sm:$0xff] %vm6619, %v6589
        %6623 = vst.msk [vmem:[#allocation3 + $0x18] sm:$0xff] %vm6619, %v6590
        %6624 = vst.msk [vmem:[#allocation3 + $0x20] sm:$0xff] %vm6619, %v6591
        %6625 = vst.msk [vmem:[#allocation3 + $0x28] sm:$0xff] %vm6619, %v6592
        %6626 = vst.msk [vmem:[#allocation3 + $0x30] sm:$0xff] %vm6619, %v6593
        %6627 = vst.msk [vmem:[#allocation3 + $0x38] sm:$0xff] %vm6619, %v6594
        %6628 = vst.msk [vmem:[#allocation3 + $0x40] sm:$0xff] %vm6619, %v6595
        %6629 = vst.msk [vmem:[#allocation3 + $0x48] sm:$0xff] %vm6619, %v6596
        %6630 = vst.msk [vmem:[#allocation3 + $0x50] sm:$0xff] %vm6619, %v6597
        %6631 = vst.msk [vmem:[#allocation3 + $0x58] sm:$0xff] %vm6619, %v6598
        %6632 = vst.msk [vmem:[#allocation3 + $0x60] sm:$0xff] %vm6619, %v6599
        %6633 = vst.msk [vmem:[#allocation3 + $0x68] sm:$0xff] %vm6619, %v6600
        %6634 = vst.msk [vmem:[#allocation3 + $0x70] sm:$0xff] %vm6619, %v6601
        %6635 = vst.msk [vmem:[#allocation3 + $0x78] sm:$0xff] %vm6619, %v6602
        %6636 = vst.msk [vmem:[#allocation3 + $0x80] sm:$0xff] %vm6619, %v6603
        %6637 = vst.msk [vmem:[#allocation3 + $0x88] sm:$0xff] %vm6619, %v6604
        %6638 = vst.msk [vmem:[#allocation3 + $0x90] sm:$0xff] %vm6619, %v6605
        %6639 = vst.msk [vmem:[#allocation3 + $0x98] sm:$0xff] %vm6619, %v6606
        %6640 = vst.msk [vmem:[#allocation3 + $0xa0] sm:$0xff] %vm6619, %v6607
        %6641 = vst.msk [vmem:[#allocation3 + $0xa8] sm:$0xff] %vm6619, %v6608
        %6642 = vst.msk [vmem:[#allocation3 + $0xb0] sm:$0xff] %vm6619, %v6609
        %6643 = vst.msk [vmem:[#allocation3 + $0xb8] sm:$0xff] %vm6619, %v6610
        %6644 = vst.msk [vmem:[#allocation3 + $0xc0] sm:$0xff] %vm6619, %v6611
        %6645 = vst.msk [vmem:[#allocation3 + $0xc8] sm:$0xff] %vm6619, %v6612
        %6646 = vst.msk [vmem:[#allocation3 + $0xd0] sm:$0xff] %vm6619, %v6613
        %6647 = vst.msk [vmem:[#allocation3 + $0xd8] sm:$0xff] %vm6619, %v6614
        %6648 = vst.msk [vmem:[#allocation3 + $0xe0] sm:$0xff] %vm6619, %v6615
        %6649 = vst.msk [vmem:[#allocation3 + $0xe8] sm:$0xff] %vm6619, %v6616
        %6650 = vst.msk [vmem:[#allocation3 + $0xf0] sm:$0xff] %vm6619, %v6617
        %6651 = vst.msk [vmem:[#allocation3 + $0xf8] sm:$0xff] %vm6619, %v6618
        %s6652 = scalar_lea.vmem %s619, 96
        %v6653 = vld [vmem:[%s6652] sm:$0xf]
        %v6654 = vld [vmem:[%s6652 + $0x4] sm:$0xf]
        %v6655 = vld [vmem:[%s6652 + $0x8] sm:$0xf]
        %v6656 = vld [vmem:[%s6652 + $0xc] sm:$0xf]
        %v6657 = vld [vmem:[%s6652 + $0x10] sm:$0xf]
        %v6658 = vld [vmem:[%s6652 + $0x14] sm:$0xf]
        %v6659 = vld [vmem:[%s6652 + $0x18] sm:$0xf]
        %v6660 = vld [vmem:[%s6652 + $0x1c] sm:$0xf]
        %s6661 = scalar_lea.vmem %s633, 3
        %v6662 = vld [vmem:[%s6661] sm:$0x1]
        %v6664 = vlaneseq
        %v6665 = vshrl.u32 %v6664, 7
        %v6666 = vsub.s32 0, %v6665
        %v6667 = vrot.slane %v6662, %v6666
        %v6677 = vunpack.c.l.b16 %v6653
        %v6678 = vunpack.c.l.b16 %v6654
        %v6679 = vunpack.c.l.b16 %v6655
        %v6680 = vunpack.c.l.b16 %v6656
        %v6681 = vunpack.c.l.b16 %v6657
        %v6682 = vunpack.c.l.b16 %v6658
        %v6683 = vunpack.c.l.b16 %v6659
        %v6684 = vunpack.c.l.b16 %v6660
        %v6685 = vpack.c.b16 %v6678, %v6677
        %v6686 = vpack.c.b16 %v6680, %v6679
        %v6687 = vpack.c.b16 %v6682, %v6681
        %v6688 = vpack.c.b16 %v6684, %v6683
        %6693 = vmatprep.subr.bf16.mxu0 0
        %6694 = vmatpush1.bf16.msra.mxu0 %v6685
        %6695 = vmatprep.subr.bf16.mxu0 0
        %6696 = vmatpush1.bf16.msra.mxu0 %v6686
        %6697 = vmatprep.subr.bf16.mxu0 0
        %6698 = vmatpush1.bf16.msra.mxu0 %v6687
        %6699 = vmatprep.subr.bf16.mxu0 0
        %6700 = vmatpush1.bf16.msra.mxu0 %v6688
        %6701 = vmatprep.subr.bf16.mxu0 0
        %6702 = vmatpush1.bf16.msra.mxu0 0
        %6703 = vmatprep.subr.bf16.mxu0 0
        %6704 = vmatpush1.bf16.msra.mxu0 0
        %6705 = vmatprep.subr.bf16.mxu0 0
        %6706 = vmatpush1.bf16.msra.mxu0 0
        %6707 = vmatprep.subr.bf16.mxu0 0
        %6708 = vmatpush1.bf16.msra.mxu0 0
        %6709 = vmatprep.subr.bf16.mxu0 0
        %6710 = vmatpush1.bf16.msra.mxu0 0
        %6711 = vmatprep.subr.bf16.mxu0 0
        %6712 = vmatpush1.bf16.msra.mxu0 0
        %6713 = vmatprep.subr.bf16.mxu0 0
        %6714 = vmatpush1.bf16.msra.mxu0 0
        %6715 = vmatprep.subr.bf16.mxu0 0
        %6716 = vmatpush1.bf16.msra.mxu0 0
        %6717 = vmatprep.subr.bf16.mxu0 0
        %6718 = vmatpush1.bf16.msra.mxu0 0
        %6719 = vmatprep.subr.bf16.mxu0 0
        %6720 = vmatpush1.bf16.msra.mxu0 0
        %6721 = vmatprep.subr.bf16.mxu0 0
        %6722 = vmatpush1.bf16.msra.mxu0 0
        %6723 = vmatprep.subr.bf16.mxu0 0
        %6724 = vmatpush1.bf16.msra.mxu0 0
        %6725 = vmatprep.mubr.bf16.mxu0 0
        %6726 = vmatmul.mubr.bf16.gmra.mrb[0].mxu0 %v1255
        %v6727 = vpop.f32.mrb[0].mxu0
        %v6728 = vadd.f32 %v6667, %v6727
        %v6729 = vpop.f32.mrb[0].mxu0
        %v6730 = vpop.f32.mrb[0].mxu0
        %v6731 = vadd.f32 %v6667, %v6730
        %v6732 = vpop.f32.mrb[0].mxu0
        %6733 = vmatprep.mubr.bf16.mxu0 0
        %6734 = vmatmul.mubr.bf16.gmra.mrb[0].mxu0 %v1258
        %v6735 = vpop.f32.mrb[0].mxu0
        %v6736 = vadd.f32 %v6667, %v6735
        %v6737 = vpop.f32.mrb[0].mxu0
        %v6738 = vpop.f32.mrb[0].mxu0
        %v6739 = vadd.f32 %v6667, %v6738
        %v6740 = vpop.f32.mrb[0].mxu0
        %6741 = vmatprep.mubr.bf16.mxu0 0
        %6742 = vmatmul.mubr.bf16.gmra.mrb[0].mxu0 %v1261
        %v6743 = vpop.f32.mrb[0].mxu0
        %v6744 = vadd.f32 %v6667, %v6743
        %v6745 = vpop.f32.mrb[0].mxu0
        %v6746 = vpop.f32.mrb[0].mxu0
        %v6747 = vadd.f32 %v6667, %v6746
        %v6748 = vpop.f32.mrb[0].mxu0
        %6749 = vmatprep.mubr.bf16.mxu0 0
        %6750 = vmatmul.mubr.bf16.gmra.mrb[0].mxu0 %v1264
        %v6751 = vpop.f32.mrb[0].mxu0
        %v6752 = vadd.f32 %v6667, %v6751
        %v6753 = vpop.f32.mrb[0].mxu0
        %v6754 = vpop.f32.mrb[0].mxu0
        %v6755 = vadd.f32 %v6667, %v6754
        %v6756 = vpop.f32.mrb[0].mxu0
        %6757 = vmatprep.mubr.bf16.mxu0 0
        %6758 = vmatmul.mubr.bf16.gmra.mrb[0].mxu0 %v1267
        %v6759 = vpop.f32.mrb[0].mxu0
        %v6760 = vadd.f32 %v6667, %v6759
        %v6761 = vpop.f32.mrb[0].mxu0
        %v6762 = vpop.f32.mrb[0].mxu0
        %v6763 = vadd.f32 %v6667, %v6762
        %v6764 = vpop.f32.mrb[0].mxu0
        %6765 = vmatprep.mubr.bf16.mxu0 0
        %6766 = vmatmul.mubr.bf16.gmra.mrb[0].mxu0 %v1270
        %v6767 = vpop.f32.mrb[0].mxu0
        %v6768 = vadd.f32 %v6667, %v6767
        %v6769 = vpop.f32.mrb[0].mxu0
        %v6770 = vpop.f32.mrb[0].mxu0
        %v6771 = vadd.f32 %v6667, %v6770
        %v6772 = vpop.f32.mrb[0].mxu0
        %6773 = vmatprep.mubr.bf16.mxu0 0
        %6774 = vmatmul.mubr.bf16.gmra.mrb[0].mxu0 %v1273
        %v6775 = vpop.f32.mrb[0].mxu0
        %v6776 = vadd.f32 %v6667, %v6775
        %v6777 = vpop.f32.mrb[0].mxu0
        %v6778 = vpop.f32.mrb[0].mxu0
        %v6779 = vadd.f32 %v6667, %v6778
        %v6780 = vpop.f32.mrb[0].mxu0
        %6781 = vmatprep.mubr.bf16.mxu0 0
        %6782 = vmatmul.mubr.bf16.gmra.mrb[0].mxu0 %v1276
        %v6783 = vpop.f32.mrb[0].mxu0
        %v6784 = vadd.f32 %v6667, %v6783
        %v6785 = vpop.f32.mrb[0].mxu0
        %v6786 = vpop.f32.mrb[0].mxu0
        %v6787 = vadd.f32 %v6667, %v6786
        %v6788 = vpop.f32.mrb[0].mxu0
        %6789 = vmatprep.mubr.bf16.mxu0 0
        %6790 = vmatmul.mubr.bf16.gmra.mrb[0].mxu0 %v1279
        %v6791 = vpop.f32.mrb[0].mxu0
        %v6792 = vadd.f32 %v6667, %v6791
        %v6793 = vpop.f32.mrb[0].mxu0
        %v6794 = vpop.f32.mrb[0].mxu0
        %v6795 = vadd.f32 %v6667, %v6794
        %v6796 = vpop.f32.mrb[0].mxu0
        %6797 = vmatprep.mubr.bf16.mxu0 0
        %6798 = vmatmul.mubr.bf16.gmra.mrb[0].mxu0 %v1282
        %v6799 = vpop.f32.mrb[0].mxu0
        %v6800 = vadd.f32 %v6667, %v6799
        %v6801 = vpop.f32.mrb[0].mxu0
        %v6802 = vpop.f32.mrb[0].mxu0
        %v6803 = vadd.f32 %v6667, %v6802
        %v6804 = vpop.f32.mrb[0].mxu0
        %6805 = vmatprep.mubr.bf16.mxu0 0
        %6806 = vmatmul.mubr.bf16.gmra.mrb[0].mxu0 %v1285
        %v6807 = vpop.f32.mrb[0].mxu0
        %v6808 = vadd.f32 %v6667, %v6807
        %v6809 = vpop.f32.mrb[0].mxu0
        %v6810 = vpop.f32.mrb[0].mxu0
        %v6811 = vadd.f32 %v6667, %v6810
        %v6812 = vpop.f32.mrb[0].mxu0
        %6813 = vmatprep.mubr.bf16.mxu0 0
        %6814 = vmatmul.mubr.bf16.gmra.mrb[0].mxu0 %v1288
        %v6815 = vpop.f32.mrb[0].mxu0
        %v6816 = vadd.f32 %v6667, %v6815
        %v6817 = vpop.f32.mrb[0].mxu0
        %v6818 = vpop.f32.mrb[0].mxu0
        %v6819 = vadd.f32 %v6667, %v6818
        %v6820 = vpop.f32.mrb[0].mxu0
        %6821 = vmatprep.mubr.bf16.mxu0 0
        %6822 = vmatmul.mubr.bf16.gmra.mrb[0].mxu0 %v1291
        %v6823 = vpop.f32.mrb[0].mxu0
        %v6824 = vadd.f32 %v6667, %v6823
        %v6825 = vpop.f32.mrb[0].mxu0
        %v6826 = vpop.f32.mrb[0].mxu0
        %v6827 = vadd.f32 %v6667, %v6826
        %v6828 = vpop.f32.mrb[0].mxu0
        %6829 = vmatprep.mubr.bf16.mxu0 0
        %6830 = vmatmul.mubr.bf16.gmra.mrb[0].mxu0 %v1294
        %v6831 = vpop.f32.mrb[0].mxu0
        %v6832 = vadd.f32 %v6667, %v6831
        %v6833 = vpop.f32.mrb[0].mxu0
        %v6834 = vpop.f32.mrb[0].mxu0
        %v6835 = vadd.f32 %v6667, %v6834
        %v6836 = vpop.f32.mrb[0].mxu0
        %6837 = vmatprep.mubr.bf16.mxu0 0
        %6838 = vmatmul.mubr.bf16.gmra.mrb[0].mxu0 %v1297
        %v6839 = vpop.f32.mrb[0].mxu0
        %v6840 = vadd.f32 %v6667, %v6839
        %v6841 = vpop.f32.mrb[0].mxu0
        %v6842 = vpop.f32.mrb[0].mxu0
        %v6843 = vadd.f32 %v6667, %v6842
        %v6844 = vpop.f32.mrb[0].mxu0
        %6845 = vmatprep.mubr.bf16.mxu0 0
        %6846 = vmatmul.mubr.bf16.gmra.mrb[0].mxu0 %v1300
        %v6847 = vpop.f32.mrb[0].mxu0
        %v6848 = vadd.f32 %v6667, %v6847
        %v6849 = vpop.f32.mrb[0].mxu0
        %v6850 = vpop.f32.mrb[0].mxu0
        %v6851 = vadd.f32 %v6667, %v6850
        %v6852 = vpop.f32.mrb[0].mxu0
        %6853 = vdwg.mxu0
        %s6854 = scalar_lea.vmem %s624, 96
        %v6855 = vld [vmem:[%s6854] sm:$0xf]
        %v6856 = vld [vmem:[%s6854 + $0x4] sm:$0xf]
        %v6857 = vld [vmem:[%s6854 + $0x8] sm:$0xf]
        %v6858 = vld [vmem:[%s6854 + $0xc] sm:$0xf]
        %v6859 = vld [vmem:[%s6854 + $0x10] sm:$0xf]
        %v6860 = vld [vmem:[%s6854 + $0x14] sm:$0xf]
        %v6861 = vld [vmem:[%s6854 + $0x18] sm:$0xf]
        %v6862 = vld [vmem:[%s6854 + $0x1c] sm:$0xf]
        %s6863 = scalar_lea.vmem %s637, 3
        %v6864 = vld [vmem:[%s6863] sm:$0x1]
        %v6866 = vlaneseq
        %v6867 = vshrl.u32 %v6866, 7
        %v6868 = vsub.s32 0, %v6867
        %v6869 = vrot.slane %v6864, %v6868
        %v6879 = vunpack.c.l.b16 %v6855
        %v6880 = vunpack.c.l.b16 %v6856
        %v6881 = vunpack.c.l.b16 %v6857
        %v6882 = vunpack.c.l.b16 %v6858
        %v6883 = vunpack.c.l.b16 %v6859
        %v6884 = vunpack.c.l.b16 %v6860
        %v6885 = vunpack.c.l.b16 %v6861
        %v6886 = vunpack.c.l.b16 %v6862
        %v6887 = vpack.c.b16 %v6880, %v6879
        %v6888 = vpack.c.b16 %v6882, %v6881
        %v6889 = vpack.c.b16 %v6884, %v6883
        %v6890 = vpack.c.b16 %v6886, %v6885
        %6895 = vmatprep.subr.bf16.mxu0 0
        %6896 = vmatpush1.bf16.msra.mxu0 %v6887
        %6897 = vmatprep.subr.bf16.mxu0 0
        %6898 = vmatpush1.bf16.msra.mxu0 %v6888
        %6899 = vmatprep.subr.bf16.mxu0 0
        %6900 = vmatpush1.bf16.msra.mxu0 %v6889
        %6901 = vmatprep.subr.bf16.mxu0 0
        %6902 = vmatpush1.bf16.msra.mxu0 %v6890
        %6903 = vmatprep.subr.bf16.mxu0 0
        %6904 = vmatpush1.bf16.msra.mxu0 0
        %6905 = vmatprep.subr.bf16.mxu0 0
        %6906 = vmatpush1.bf16.msra.mxu0 0
        %6907 = vmatprep.subr.bf16.mxu0 0
        %6908 = vmatpush1.bf16.msra.mxu0 0
        %6909 = vmatprep.subr.bf16.mxu0 0
        %6910 = vmatpush1.bf16.msra.mxu0 0
        %6911 = vmatprep.subr.bf16.mxu0 0
        %6912 = vmatpush1.bf16.msra.mxu0 0
        %6913 = vmatprep.subr.bf16.mxu0 0
        %6914 = vmatpush1.bf16.msra.mxu0 0
        %6915 = vmatprep.subr.bf16.mxu0 0
        %6916 = vmatpush1.bf16.msra.mxu0 0
        %6917 = vmatprep.subr.bf16.mxu0 0
        %6918 = vmatpush1.bf16.msra.mxu0 0
        %6919 = vmatprep.subr.bf16.mxu0 0
        %6920 = vmatpush1.bf16.msra.mxu0 0
        %6921 = vmatprep.subr.bf16.mxu0 0
        %6922 = vmatpush1.bf16.msra.mxu0 0
        %6923 = vmatprep.subr.bf16.mxu0 0
        %6924 = vmatpush1.bf16.msra.mxu0 0
        %6925 = vmatprep.subr.bf16.mxu0 0
        %6926 = vmatpush1.bf16.msra.mxu0 0
        %6927 = vmatprep.mubr.bf16.mxu0 0
        %6928 = vmatmul.mubr.bf16.gmra.mrb[0].mxu0 %v1255
        %v6929 = vpop.f32.mrb[0].mxu0
        %v6930 = vadd.f32 %v6869, %v6929
        %v6931 = vpop.f32.mrb[0].mxu0
        %v6932 = vpop.f32.mrb[0].mxu0
        %v6933 = vadd.f32 %v6869, %v6932
        %v6934 = vpop.f32.mrb[0].mxu0
        %6935 = vmatprep.mubr.bf16.mxu0 0
        %6936 = vmatmul.mubr.bf16.gmra.mrb[0].mxu0 %v1258
        %v6937 = vpop.f32.mrb[0].mxu0
        %v6938 = vadd.f32 %v6869, %v6937
        %v6939 = vpop.f32.mrb[0].mxu0
        %v6940 = vpop.f32.mrb[0].mxu0
        %v6941 = vadd.f32 %v6869, %v6940
        %v6942 = vpop.f32.mrb[0].mxu0
        %6943 = vmatprep.mubr.bf16.mxu0 0
        %6944 = vmatmul.mubr.bf16.gmra.mrb[0].mxu0 %v1261
        %v6945 = vpop.f32.mrb[0].mxu0
        %v6946 = vadd.f32 %v6869, %v6945
        %v6947 = vpop.f32.mrb[0].mxu0
        %v6948 = vpop.f32.mrb[0].mxu0
        %v6949 = vadd.f32 %v6869, %v6948
        %v6950 = vpop.f32.mrb[0].mxu0
        %6951 = vmatprep.mubr.bf16.mxu0 0
        %6952 = vmatmul.mubr.bf16.gmra.mrb[0].mxu0 %v1264
        %v6953 = vpop.f32.mrb[0].mxu0
        %v6954 = vadd.f32 %v6869, %v6953
        %v6955 = vpop.f32.mrb[0].mxu0
        %v6956 = vpop.f32.mrb[0].mxu0
        %v6957 = vadd.f32 %v6869, %v6956
        %v6958 = vpop.f32.mrb[0].mxu0
        %6959 = vmatprep.mubr.bf16.mxu0 0
        %6960 = vmatmul.mubr.bf16.gmra.mrb[0].mxu0 %v1267
        %v6961 = vpop.f32.mrb[0].mxu0
        %v6962 = vadd.f32 %v6869, %v6961
        %v6963 = vpop.f32.mrb[0].mxu0
        %v6964 = vpop.f32.mrb[0].mxu0
        %v6965 = vadd.f32 %v6869, %v6964
        %v6966 = vpop.f32.mrb[0].mxu0
        %6967 = vmatprep.mubr.bf16.mxu0 0
        %6968 = vmatmul.mubr.bf16.gmra.mrb[0].mxu0 %v1270
        %v6969 = vpop.f32.mrb[0].mxu0
        %v6970 = vadd.f32 %v6869, %v6969
        %v6971 = vpop.f32.mrb[0].mxu0
        %v6972 = vpop.f32.mrb[0].mxu0
        %v6973 = vadd.f32 %v6869, %v6972
        %v6974 = vpop.f32.mrb[0].mxu0
        %6975 = vmatprep.mubr.bf16.mxu0 0
        %6976 = vmatmul.mubr.bf16.gmra.mrb[0].mxu0 %v1273
        %v6977 = vpop.f32.mrb[0].mxu0
        %v6978 = vadd.f32 %v6869, %v6977
        %v6979 = vpop.f32.mrb[0].mxu0
        %v6980 = vpop.f32.mrb[0].mxu0
        %v6981 = vadd.f32 %v6869, %v6980
        %v6982 = vpop.f32.mrb[0].mxu0
        %6983 = vmatprep.mubr.bf16.mxu0 0
        %6984 = vmatmul.mubr.bf16.gmra.mrb[0].mxu0 %v1276
        %v6985 = vpop.f32.mrb[0].mxu0
        %v6986 = vadd.f32 %v6869, %v6985
        %v6987 = vpop.f32.mrb[0].mxu0
        %v6988 = vpop.f32.mrb[0].mxu0
        %v6989 = vadd.f32 %v6869, %v6988
        %v6990 = vpop.f32.mrb[0].mxu0
        %6991 = vmatprep.mubr.bf16.mxu0 0
        %6992 = vmatmul.mubr.bf16.gmra.mrb[0].mxu0 %v1279
        %v6993 = vpop.f32.mrb[0].mxu0
        %v6994 = vadd.f32 %v6869, %v6993
        %v6995 = vpop.f32.mrb[0].mxu0
        %v6996 = vpop.f32.mrb[0].mxu0
        %v6997 = vadd.f32 %v6869, %v6996
        %v6998 = vpop.f32.mrb[0].mxu0
        %6999 = vmatprep.mubr.bf16.mxu0 0
        %7000 = vmatmul.mubr.bf16.gmra.mrb[0].mxu0 %v1282
        %v7001 = vpop.f32.mrb[0].mxu0
        %v7002 = vadd.f32 %v6869, %v7001
        %v7003 = vpop.f32.mrb[0].mxu0
        %v7004 = vpop.f32.mrb[0].mxu0
        %v7005 = vadd.f32 %v6869, %v7004
        %v7006 = vpop.f32.mrb[0].mxu0
        %7007 = vmatprep.mubr.bf16.mxu0 0
        %7008 = vmatmul.mubr.bf16.gmra.mrb[0].mxu0 %v1285
        %v7009 = vpop.f32.mrb[0].mxu0
        %v7010 = vadd.f32 %v6869, %v7009
        %v7011 = vpop.f32.mrb[0].mxu0
        %v7012 = vpop.f32.mrb[0].mxu0
        %v7013 = vadd.f32 %v6869, %v7012
        %v7014 = vpop.f32.mrb[0].mxu0
        %7015 = vmatprep.mubr.bf16.mxu0 0
        %7016 = vmatmul.mubr.bf16.gmra.mrb[0].mxu0 %v1288
        %v7017 = vpop.f32.mrb[0].mxu0
        %v7018 = vadd.f32 %v6869, %v7017
        %v7019 = vpop.f32.mrb[0].mxu0
        %v7020 = vpop.f32.mrb[0].mxu0
        %v7021 = vadd.f32 %v6869, %v7020
        %v7022 = vpop.f32.mrb[0].mxu0
        %7023 = vmatprep.mubr.bf16.mxu0 0
        %7024 = vmatmul.mubr.bf16.gmra.mrb[0].mxu0 %v1291
        %v7025 = vpop.f32.mrb[0].mxu0
        %v7026 = vadd.f32 %v6869, %v7025
        %v7027 = vpop.f32.mrb[0].mxu0
        %v7028 = vpop.f32.mrb[0].mxu0
        %v7029 = vadd.f32 %v6869, %v7028
        %v7030 = vpop.f32.mrb[0].mxu0
        %7031 = vmatprep.mubr.bf16.mxu0 0
        %7032 = vmatmul.mubr.bf16.gmra.mrb[0].mxu0 %v1294
        %v7033 = vpop.f32.mrb[0].mxu0
        %v7034 = vadd.f32 %v6869, %v7033
        %v7035 = vpop.f32.mrb[0].mxu0
        %v7036 = vpop.f32.mrb[0].mxu0
        %v7037 = vadd.f32 %v6869, %v7036
        %v7038 = vpop.f32.mrb[0].mxu0
        %7039 = vmatprep.mubr.bf16.mxu0 0
        %7040 = vmatmul.mubr.bf16.gmra.mrb[0].mxu0 %v1297
        %v7041 = vpop.f32.mrb[0].mxu0
        %v7042 = vadd.f32 %v6869, %v7041
        %v7043 = vpop.f32.mrb[0].mxu0
        %v7044 = vpop.f32.mrb[0].mxu0
        %v7045 = vadd.f32 %v6869, %v7044
        %v7046 = vpop.f32.mrb[0].mxu0
        %7047 = vmatprep.mubr.bf16.mxu0 0
        %7048 = vmatmul.mubr.bf16.gmra.mrb[0].mxu0 %v1300
        %v7049 = vpop.f32.mrb[0].mxu0
        %v7050 = vadd.f32 %v6869, %v7049
        %v7051 = vpop.f32.mrb[0].mxu0
        %v7052 = vpop.f32.mrb[0].mxu0
        %v7053 = vadd.f32 %v6869, %v7052
        %v7054 = vpop.f32.mrb[0].mxu0
        %7055 = vdwg.mxu0
        %s7056 = scalar_lea.vmem %s629, 96
        %v7057 = vld [vmem:[%s7056] sm:$0xf]
        %v7058 = vld [vmem:[%s7056 + $0x4] sm:$0xf]
        %v7059 = vld [vmem:[%s7056 + $0x8] sm:$0xf]
        %v7060 = vld [vmem:[%s7056 + $0xc] sm:$0xf]
        %v7061 = vld [vmem:[%s7056 + $0x10] sm:$0xf]
        %v7062 = vld [vmem:[%s7056 + $0x14] sm:$0xf]
        %v7063 = vld [vmem:[%s7056 + $0x18] sm:$0xf]
        %v7064 = vld [vmem:[%s7056 + $0x1c] sm:$0xf]
        %s7065 = scalar_lea.vmem %s641, 3
        %v7066 = vld [vmem:[%s7065] sm:$0x1]
        %v7068 = vlaneseq
        %v7069 = vshrl.u32 %v7068, 7
        %v7070 = vsub.s32 0, %v7069
        %v7071 = vrot.slane %v7066, %v7070
        %v7081 = vunpack.c.l.b16 %v7057
        %v7082 = vunpack.c.l.b16 %v7058
        %v7083 = vunpack.c.l.b16 %v7059
        %v7084 = vunpack.c.l.b16 %v7060
        %v7085 = vunpack.c.l.b16 %v7061
        %v7086 = vunpack.c.l.b16 %v7062
        %v7087 = vunpack.c.l.b16 %v7063
        %v7088 = vunpack.c.l.b16 %v7064
        %v7089 = vpack.c.b16 %v7082, %v7081
        %v7090 = vpack.c.b16 %v7084, %v7083
        %v7091 = vpack.c.b16 %v7086, %v7085
        %v7092 = vpack.c.b16 %v7088, %v7087
        %7097 = vmatprep.subr.bf16.mxu0 0
        %7098 = vmatpush1.bf16.msra.mxu0 %v7089
        %7099 = vmatprep.subr.bf16.mxu0 0
        %7100 = vmatpush1.bf16.msra.mxu0 %v7090
        %7101 = vmatprep.subr.bf16.mxu0 0
        %7102 = vmatpush1.bf16.msra.mxu0 %v7091
        %7103 = vmatprep.subr.bf16.mxu0 0
        %7104 = vmatpush1.bf16.msra.mxu0 %v7092
        %7105 = vmatprep.subr.bf16.mxu0 0
        %7106 = vmatpush1.bf16.msra.mxu0 0
        %7107 = vmatprep.subr.bf16.mxu0 0
        %7108 = vmatpush1.bf16.msra.mxu0 0
        %7109 = vmatprep.subr.bf16.mxu0 0
        %7110 = vmatpush1.bf16.msra.mxu0 0
        %7111 = vmatprep.subr.bf16.mxu0 0
        %7112 = vmatpush1.bf16.msra.mxu0 0
        %7113 = vmatprep.subr.bf16.mxu0 0
        %7114 = vmatpush1.bf16.msra.mxu0 0
        %7115 = vmatprep.subr.bf16.mxu0 0
        %7116 = vmatpush1.bf16.msra.mxu0 0
        %7117 = vmatprep.subr.bf16.mxu0 0
        %7118 = vmatpush1.bf16.msra.mxu0 0
        %7119 = vmatprep.subr.bf16.mxu0 0
        %7120 = vmatpush1.bf16.msra.mxu0 0
        %7121 = vmatprep.subr.bf16.mxu0 0
        %7122 = vmatpush1.bf16.msra.mxu0 0
        %7123 = vmatprep.subr.bf16.mxu0 0
        %7124 = vmatpush1.bf16.msra.mxu0 0
        %7125 = vmatprep.subr.bf16.mxu0 0
        %7126 = vmatpush1.bf16.msra.mxu0 0
        %7127 = vmatprep.subr.bf16.mxu0 0
        %7128 = vmatpush1.bf16.msra.mxu0 0
        %7129 = vmatprep.mubr.bf16.mxu0 0
        %7130 = vmatmul.mubr.bf16.gmra.mrb[0].mxu0 %v1255
        %v7131 = vpop.f32.mrb[0].mxu0
        %v7132 = vadd.f32 %v7071, %v7131
        %v7133 = vpop.f32.mrb[0].mxu0
        %v7134 = vpop.f32.mrb[0].mxu0
        %v7135 = vadd.f32 %v7071, %v7134
        %v7136 = vpop.f32.mrb[0].mxu0
        %7137 = vmatprep.mubr.bf16.mxu0 0
        %7138 = vmatmul.mubr.bf16.gmra.mrb[0].mxu0 %v1258
        %v7139 = vpop.f32.mrb[0].mxu0
        %v7140 = vadd.f32 %v7071, %v7139
        %v7141 = vpop.f32.mrb[0].mxu0
        %v7142 = vpop.f32.mrb[0].mxu0
        %v7143 = vadd.f32 %v7071, %v7142
        %v7144 = vpop.f32.mrb[0].mxu0
        %7145 = vmatprep.mubr.bf16.mxu0 0
        %7146 = vmatmul.mubr.bf16.gmra.mrb[0].mxu0 %v1261
        %v7147 = vpop.f32.mrb[0].mxu0
        %v7148 = vadd.f32 %v7071, %v7147
        %v7149 = vpop.f32.mrb[0].mxu0
        %v7150 = vpop.f32.mrb[0].mxu0
        %v7151 = vadd.f32 %v7071, %v7150
        %v7152 = vpop.f32.mrb[0].mxu0
        %7153 = vmatprep.mubr.bf16.mxu0 0
        %7154 = vmatmul.mubr.bf16.gmra.mrb[0].mxu0 %v1264
        %v7155 = vpop.f32.mrb[0].mxu0
        %v7156 = vadd.f32 %v7071, %v7155
        %v7157 = vpop.f32.mrb[0].mxu0
        %v7158 = vpop.f32.mrb[0].mxu0
        %v7159 = vadd.f32 %v7071, %v7158
        %v7160 = vpop.f32.mrb[0].mxu0
        %7161 = vmatprep.mubr.bf16.mxu0 0
        %7162 = vmatmul.mubr.bf16.gmra.mrb[0].mxu0 %v1267
        %v7163 = vpop.f32.mrb[0].mxu0
        %v7164 = vadd.f32 %v7071, %v7163
        %v7165 = vpop.f32.mrb[0].mxu0
        %v7166 = vpop.f32.mrb[0].mxu0
        %v7167 = vadd.f32 %v7071, %v7166
        %v7168 = vpop.f32.mrb[0].mxu0
        %7169 = vmatprep.mubr.bf16.mxu0 0
        %7170 = vmatmul.mubr.bf16.gmra.mrb[0].mxu0 %v1270
        %v7171 = vpop.f32.mrb[0].mxu0
        %v7172 = vadd.f32 %v7071, %v7171
        %v7173 = vpop.f32.mrb[0].mxu0
        %v7174 = vpop.f32.mrb[0].mxu0
        %v7175 = vadd.f32 %v7071, %v7174
        %v7176 = vpop.f32.mrb[0].mxu0
        %7177 = vmatprep.mubr.bf16.mxu0 0
        %7178 = vmatmul.mubr.bf16.gmra.mrb[0].mxu0 %v1273
        %v7179 = vpop.f32.mrb[0].mxu0
        %v7180 = vadd.f32 %v7071, %v7179
        %v7181 = vpop.f32.mrb[0].mxu0
        %v7182 = vpop.f32.mrb[0].mxu0
        %v7183 = vadd.f32 %v7071, %v7182
        %v7184 = vpop.f32.mrb[0].mxu0
        %7185 = vmatprep.mubr.bf16.mxu0 0
        %7186 = vmatmul.mubr.bf16.gmra.mrb[0].mxu0 %v1276
        %v7187 = vpop.f32.mrb[0].mxu0
        %v7188 = vadd.f32 %v7071, %v7187
        %v7189 = vpop.f32.mrb[0].mxu0
        %v7190 = vpop.f32.mrb[0].mxu0
        %v7191 = vadd.f32 %v7071, %v7190
        %v7192 = vpop.f32.mrb[0].mxu0
        %7193 = vmatprep.mubr.bf16.mxu0 0
        %7194 = vmatmul.mubr.bf16.gmra.mrb[0].mxu0 %v1279
        %v7195 = vpop.f32.mrb[0].mxu0
        %v7196 = vadd.f32 %v7071, %v7195
        %v7197 = vpop.f32.mrb[0].mxu0
        %v7198 = vpop.f32.mrb[0].mxu0
        %v7199 = vadd.f32 %v7071, %v7198
        %v7200 = vpop.f32.mrb[0].mxu0
        %7201 = vmatprep.mubr.bf16.mxu0 0
        %7202 = vmatmul.mubr.bf16.gmra.mrb[0].mxu0 %v1282
        %v7203 = vpop.f32.mrb[0].mxu0
        %v7204 = vadd.f32 %v7071, %v7203
        %v7205 = vpop.f32.mrb[0].mxu0
        %v7206 = vpop.f32.mrb[0].mxu0
        %v7207 = vadd.f32 %v7071, %v7206
        %v7208 = vpop.f32.mrb[0].mxu0
        %7209 = vmatprep.mubr.bf16.mxu0 0
        %7210 = vmatmul.mubr.bf16.gmra.mrb[0].mxu0 %v1285
        %v7211 = vpop.f32.mrb[0].mxu0
        %v7212 = vadd.f32 %v7071, %v7211
        %v7213 = vpop.f32.mrb[0].mxu0
        %v7214 = vpop.f32.mrb[0].mxu0
        %v7215 = vadd.f32 %v7071, %v7214
        %v7216 = vpop.f32.mrb[0].mxu0
        %7217 = vmatprep.mubr.bf16.mxu0 0
        %7218 = vmatmul.mubr.bf16.gmra.mrb[0].mxu0 %v1288
        %v7219 = vpop.f32.mrb[0].mxu0
        %v7220 = vadd.f32 %v7071, %v7219
        %v7221 = vpop.f32.mrb[0].mxu0
        %v7222 = vpop.f32.mrb[0].mxu0
        %v7223 = vadd.f32 %v7071, %v7222
        %v7224 = vpop.f32.mrb[0].mxu0
        %7225 = vmatprep.mubr.bf16.mxu0 0
        %7226 = vmatmul.mubr.bf16.gmra.mrb[0].mxu0 %v1291
        %v7227 = vpop.f32.mrb[0].mxu0
        %v7228 = vadd.f32 %v7071, %v7227
        %v7229 = vpop.f32.mrb[0].mxu0
        %v7230 = vpop.f32.mrb[0].mxu0
        %v7231 = vadd.f32 %v7071, %v7230
        %v7232 = vpop.f32.mrb[0].mxu0
        %7233 = vmatprep.mubr.bf16.mxu0 0
        %7234 = vmatmul.mubr.bf16.gmra.mrb[0].mxu0 %v1294
        %v7235 = vpop.f32.mrb[0].mxu0
        %v7236 = vadd.f32 %v7071, %v7235
        %v7237 = vpop.f32.mrb[0].mxu0
        %v7238 = vpop.f32.mrb[0].mxu0
        %v7239 = vadd.f32 %v7071, %v7238
        %v7240 = vpop.f32.mrb[0].mxu0
        %7241 = vmatprep.mubr.bf16.mxu0 0
        %7242 = vmatmul.mubr.bf16.gmra.mrb[0].mxu0 %v1297
        %v7243 = vpop.f32.mrb[0].mxu0
        %v7244 = vadd.f32 %v7071, %v7243
        %v7245 = vpop.f32.mrb[0].mxu0
        %v7246 = vpop.f32.mrb[0].mxu0
        %v7247 = vadd.f32 %v7071, %v7246
        %v7248 = vpop.f32.mrb[0].mxu0
        %7249 = vmatprep.mubr.bf16.mxu0 0
        %7250 = vmatmul.mubr.bf16.gmra.mrb[0].mxu0 %v1300
        %v7251 = vpop.f32.mrb[0].mxu0
        %v7252 = vadd.f32 %v7071, %v7251
        %v7253 = vpop.f32.mrb[0].mxu0
        %v7254 = vpop.f32.mrb[0].mxu0
        %v7255 = vadd.f32 %v7071, %v7254
        %v7256 = vpop.f32.mrb[0].mxu0
        %7257 = vdwg.mxu0
        %v7258 = vpack.c.bf16 %v6731, %v6728
        %v7259 = vpack.c.bf16 %v6739, %v6736
        %v7260 = vpack.c.bf16 %v6747, %v6744
        %v7261 = vpack.c.bf16 %v6755, %v6752
        %v7262 = vpack.c.bf16 %v6763, %v6760
        %v7263 = vpack.c.bf16 %v6771, %v6768
        %v7264 = vpack.c.bf16 %v6779, %v6776
        %v7265 = vpack.c.bf16 %v6787, %v6784
        %v7266 = vpack.c.bf16 %v6795, %v6792
        %v7267 = vpack.c.bf16 %v6803, %v6800
        %v7268 = vpack.c.bf16 %v6811, %v6808
        %v7269 = vpack.c.bf16 %v6819, %v6816
        %v7270 = vpack.c.bf16 %v6827, %v6824
        %v7271 = vpack.c.bf16 %v6835, %v6832
        %v7272 = vpack.c.bf16 %v6843, %v6840
        %v7273 = vpack.c.bf16 %v6851, %v6848
        %v7274 = vpack.c.bf16 %v6933, %v6930
        %v7275 = vpack.c.bf16 %v6941, %v6938
        %v7276 = vpack.c.bf16 %v6949, %v6946
        %v7277 = vpack.c.bf16 %v6957, %v6954
        %v7278 = vpack.c.bf16 %v6965, %v6962
        %v7279 = vpack.c.bf16 %v6973, %v6970
        %v7280 = vpack.c.bf16 %v6981, %v6978
        %v7281 = vpack.c.bf16 %v6989, %v6986
        %v7282 = vpack.c.bf16 %v6997, %v6994
        %v7283 = vpack.c.bf16 %v7005, %v7002
        %v7284 = vpack.c.bf16 %v7013, %v7010
        %v7285 = vpack.c.bf16 %v7021, %v7018
        %v7286 = vpack.c.bf16 %v7029, %v7026
        %v7287 = vpack.c.bf16 %v7037, %v7034
        %v7288 = vpack.c.bf16 %v7045, %v7042
        %v7289 = vpack.c.bf16 %v7053, %v7050
        %v7291 = vsel %vm1895, %v7258, 0
        %v7294 = vsel %vm1895, %v7259, 0
        %v7297 = vsel %vm1895, %v7260, 0
        %v7300 = vsel %vm1895, %v7261, 0
        %v7303 = vsel %vm1895, %v7262, 0
        %v7306 = vsel %vm1895, %v7263, 0
        %v7309 = vsel %vm1895, %v7264, 0
        %v7312 = vsel %vm1895, %v7265, 0
        %v7315 = vsel %vm1895, %v7266, 0
        %v7318 = vsel %vm1895, %v7267, 0
        %v7321 = vsel %vm1895, %v7268, 0
        %v7324 = vsel %vm1895, %v7269, 0
        %v7327 = vsel %vm1895, %v7270, 0
        %v7330 = vsel %vm1895, %v7271, 0
        %v7333 = vsel %vm1895, %v7272, 0
        %v7336 = vsel %vm1895, %v7273, 0
        %v7339 = vsel %vm1895, %v7274, 0
        %v7342 = vsel %vm1895, %v7275, 0
        %v7345 = vsel %vm1895, %v7276, 0
        %v7348 = vsel %vm1895, %v7277, 0
        %v7351 = vsel %vm1895, %v7278, 0
        %v7354 = vsel %vm1895, %v7279, 0
        %v7357 = vsel %vm1895, %v7280, 0
        %v7360 = vsel %vm1895, %v7281, 0
        %v7363 = vsel %vm1895, %v7282, 0
        %v7366 = vsel %vm1895, %v7283, 0
        %v7369 = vsel %vm1895, %v7284, 0
        %v7372 = vsel %vm1895, %v7285, 0
        %v7375 = vsel %vm1895, %v7286, 0
        %v7378 = vsel %vm1895, %v7287, 0
        %v7381 = vsel %vm1895, %v7288, 0
        %v7384 = vsel %vm1895, %v7289, 0
        %7386 = vmatprep.subr.bf16.mxu0 0
        %7387 = vmatpush1.bf16.xpose.msra.mxu0 %v7339
        %7388 = vmatprep.subr.bf16.mxu0 0
        %7389 = vmatpush1.bf16.xpose.msra.mxu0 %v7342
        %7390 = vmatprep.subr.bf16.mxu0 0
        %7391 = vmatpush1.bf16.xpose.msra.mxu0 %v7345
        %7392 = vmatprep.subr.bf16.mxu0 0
        %7393 = vmatpush1.bf16.xpose.msra.mxu0 %v7348
        %7394 = vmatprep.subr.bf16.mxu0 0
        %7395 = vmatpush1.bf16.xpose.msra.mxu0 %v7351
        %7396 = vmatprep.subr.bf16.mxu0 0
        %7397 = vmatpush1.bf16.xpose.msra.mxu0 %v7354
        %7398 = vmatprep.subr.bf16.mxu0 0
        %7399 = vmatpush1.bf16.xpose.msra.mxu0 %v7357
        %7400 = vmatprep.subr.bf16.mxu0 0
        %7401 = vmatpush1.bf16.xpose.msra.mxu0 %v7360
        %7402 = vmatprep.subr.bf16.mxu0 0
        %7403 = vmatpush1.bf16.xpose.msra.mxu0 %v7363
        %7404 = vmatprep.subr.bf16.mxu0 0
        %7405 = vmatpush1.bf16.xpose.msra.mxu0 %v7366
        %7406 = vmatprep.subr.bf16.mxu0 0
        %7407 = vmatpush1.bf16.xpose.msra.mxu0 %v7369
        %7408 = vmatprep.subr.bf16.mxu0 0
        %7409 = vmatpush1.bf16.xpose.msra.mxu0 %v7372
        %7410 = vmatprep.subr.bf16.mxu0 0
        %7411 = vmatpush1.bf16.xpose.msra.mxu0 %v7375
        %7412 = vmatprep.subr.bf16.mxu0 0
        %7413 = vmatpush1.bf16.xpose.msra.mxu0 %v7378
        %7414 = vmatprep.subr.bf16.mxu0 0
        %7415 = vmatpush1.bf16.xpose.msra.mxu0 %v7381
        %7416 = vmatprep.subr.bf16.mxu0 0
        %7417 = vmatpush1.bf16.xpose.msra.mxu0 %v7384
        %7418 = vmatprep.mubr.bf16.mxu0 0
        %7419 = vmatmul.mubr.bf16.gmra.mrb[0].mxu0 %v7291
        %v7420 = vpop.f32.mrb[0].mxu0
        %v7421 = vadd.f32 0.0, %v7420
        %v7422 = vpop.f32.mrb[0].mxu0
        %v7423 = vadd.f32 0.0, %v7422
        %v7424 = vpop.f32.mrb[0].mxu0
        %v7425 = vadd.f32 0.0, %v7424
        %v7426 = vpop.f32.mrb[0].mxu0
        %v7427 = vadd.f32 0.0, %v7426
        %7428 = vmatprep.mubr.bf16.mxu0 0
        %7429 = vmatmul.mubr.bf16.gmra.mrb[0].mxu0 %v7294
        %v7430 = vpop.f32.mrb[0].mxu0
        %v7431 = vadd.f32 0.0, %v7430
        %v7432 = vpop.f32.mrb[0].mxu0
        %v7433 = vadd.f32 0.0, %v7432
        %v7434 = vpop.f32.mrb[0].mxu0
        %v7435 = vadd.f32 0.0, %v7434
        %v7436 = vpop.f32.mrb[0].mxu0
        %v7437 = vadd.f32 0.0, %v7436
        %7438 = vmatprep.mubr.bf16.mxu0 0
        %7439 = vmatmul.mubr.bf16.gmra.mrb[0].mxu0 %v7297
        %v7440 = vpop.f32.mrb[0].mxu0
        %v7441 = vadd.f32 0.0, %v7440
        %v7442 = vpop.f32.mrb[0].mxu0
        %v7443 = vadd.f32 0.0, %v7442
        %v7444 = vpop.f32.mrb[0].mxu0
        %v7445 = vadd.f32 0.0, %v7444
        %v7446 = vpop.f32.mrb[0].mxu0
        %v7447 = vadd.f32 0.0, %v7446
        %7448 = vmatprep.mubr.bf16.mxu0 0
        %7449 = vmatmul.mubr.bf16.gmra.mrb[0].mxu0 %v7300
        %v7450 = vpop.f32.mrb[0].mxu0
        %v7451 = vadd.f32 0.0, %v7450
        %v7452 = vpop.f32.mrb[0].mxu0
        %v7453 = vadd.f32 0.0, %v7452
        %v7454 = vpop.f32.mrb[0].mxu0
        %v7455 = vadd.f32 0.0, %v7454
        %v7456 = vpop.f32.mrb[0].mxu0
        %v7457 = vadd.f32 0.0, %v7456
        %7458 = vmatprep.mubr.bf16.mxu0 0
        %7459 = vmatmul.mubr.bf16.gmra.mrb[0].mxu0 %v7303
        %v7460 = vpop.f32.mrb[0].mxu0
        %v7461 = vadd.f32 0.0, %v7460
        %v7462 = vpop.f32.mrb[0].mxu0
        %v7463 = vadd.f32 0.0, %v7462
        %v7464 = vpop.f32.mrb[0].mxu0
        %v7465 = vadd.f32 0.0, %v7464
        %v7466 = vpop.f32.mrb[0].mxu0
        %v7467 = vadd.f32 0.0, %v7466
        %7468 = vmatprep.mubr.bf16.mxu0 0
        %7469 = vmatmul.mubr.bf16.gmra.mrb[0].mxu0 %v7306
        %v7470 = vpop.f32.mrb[0].mxu0
        %v7471 = vadd.f32 0.0, %v7470
        %v7472 = vpop.f32.mrb[0].mxu0
        %v7473 = vadd.f32 0.0, %v7472
        %v7474 = vpop.f32.mrb[0].mxu0
        %v7475 = vadd.f32 0.0, %v7474
        %v7476 = vpop.f32.mrb[0].mxu0
        %v7477 = vadd.f32 0.0, %v7476
        %7478 = vmatprep.mubr.bf16.mxu0 0
        %7479 = vmatmul.mubr.bf16.gmra.mrb[0].mxu0 %v7309
        %v7480 = vpop.f32.mrb[0].mxu0
        %v7481 = vadd.f32 0.0, %v7480
        %v7482 = vpop.f32.mrb[0].mxu0
        %v7483 = vadd.f32 0.0, %v7482
        %v7484 = vpop.f32.mrb[0].mxu0
        %v7485 = vadd.f32 0.0, %v7484
        %v7486 = vpop.f32.mrb[0].mxu0
        %v7487 = vadd.f32 0.0, %v7486
        %7488 = vmatprep.mubr.bf16.mxu0 0
        %7489 = vmatmul.mubr.bf16.gmra.mrb[0].mxu0 %v7312
        %v7490 = vpop.f32.mrb[0].mxu0
        %v7491 = vadd.f32 0.0, %v7490
        %v7492 = vpop.f32.mrb[0].mxu0
        %v7493 = vadd.f32 0.0, %v7492
        %v7494 = vpop.f32.mrb[0].mxu0
        %v7495 = vadd.f32 0.0, %v7494
        %v7496 = vpop.f32.mrb[0].mxu0
        %v7497 = vadd.f32 0.0, %v7496
        %7498 = vmatprep.mubr.bf16.mxu0 0
        %7499 = vmatmul.mubr.bf16.gmra.mrb[0].mxu0 %v7315
        %v7500 = vpop.f32.mrb[0].mxu0
        %v7501 = vadd.f32 0.0, %v7500
        %v7502 = vpop.f32.mrb[0].mxu0
        %v7503 = vadd.f32 0.0, %v7502
        %v7504 = vpop.f32.mrb[0].mxu0
        %v7505 = vadd.f32 0.0, %v7504
        %v7506 = vpop.f32.mrb[0].mxu0
        %v7507 = vadd.f32 0.0, %v7506
        %7508 = vmatprep.mubr.bf16.mxu0 0
        %7509 = vmatmul.mubr.bf16.gmra.mrb[0].mxu0 %v7318
        %v7510 = vpop.f32.mrb[0].mxu0
        %v7511 = vadd.f32 0.0, %v7510
        %v7512 = vpop.f32.mrb[0].mxu0
        %v7513 = vadd.f32 0.0, %v7512
        %v7514 = vpop.f32.mrb[0].mxu0
        %v7515 = vadd.f32 0.0, %v7514
        %v7516 = vpop.f32.mrb[0].mxu0
        %v7517 = vadd.f32 0.0, %v7516
        %7518 = vmatprep.mubr.bf16.mxu0 0
        %7519 = vmatmul.mubr.bf16.gmra.mrb[0].mxu0 %v7321
        %v7520 = vpop.f32.mrb[0].mxu0
        %v7521 = vadd.f32 0.0, %v7520
        %v7522 = vpop.f32.mrb[0].mxu0
        %v7523 = vadd.f32 0.0, %v7522
        %v7524 = vpop.f32.mrb[0].mxu0
        %v7525 = vadd.f32 0.0, %v7524
        %v7526 = vpop.f32.mrb[0].mxu0
        %v7527 = vadd.f32 0.0, %v7526
        %7528 = vmatprep.mubr.bf16.mxu0 0
        %7529 = vmatmul.mubr.bf16.gmra.mrb[0].mxu0 %v7324
        %v7530 = vpop.f32.mrb[0].mxu0
        %v7531 = vadd.f32 0.0, %v7530
        %v7532 = vpop.f32.mrb[0].mxu0
        %v7533 = vadd.f32 0.0, %v7532
        %v7534 = vpop.f32.mrb[0].mxu0
        %v7535 = vadd.f32 0.0, %v7534
        %v7536 = vpop.f32.mrb[0].mxu0
        %v7537 = vadd.f32 0.0, %v7536
        %7538 = vmatprep.mubr.bf16.mxu0 0
        %7539 = vmatmul.mubr.bf16.gmra.mrb[0].mxu0 %v7327
        %v7540 = vpop.f32.mrb[0].mxu0
        %v7541 = vadd.f32 0.0, %v7540
        %v7542 = vpop.f32.mrb[0].mxu0
        %v7543 = vadd.f32 0.0, %v7542
        %v7544 = vpop.f32.mrb[0].mxu0
        %v7545 = vadd.f32 0.0, %v7544
        %v7546 = vpop.f32.mrb[0].mxu0
        %v7547 = vadd.f32 0.0, %v7546
        %7548 = vmatprep.mubr.bf16.mxu0 0
        %7549 = vmatmul.mubr.bf16.gmra.mrb[0].mxu0 %v7330
        %v7550 = vpop.f32.mrb[0].mxu0
        %v7551 = vadd.f32 0.0, %v7550
        %v7552 = vpop.f32.mrb[0].mxu0
        %v7553 = vadd.f32 0.0, %v7552
        %v7554 = vpop.f32.mrb[0].mxu0
        %v7555 = vadd.f32 0.0, %v7554
        %v7556 = vpop.f32.mrb[0].mxu0
        %v7557 = vadd.f32 0.0, %v7556
        %7558 = vmatprep.mubr.bf16.mxu0 0
        %7559 = vmatmul.mubr.bf16.gmra.mrb[0].mxu0 %v7333
        %v7560 = vpop.f32.mrb[0].mxu0
        %v7561 = vadd.f32 0.0, %v7560
        %v7562 = vpop.f32.mrb[0].mxu0
        %v7563 = vadd.f32 0.0, %v7562
        %v7564 = vpop.f32.mrb[0].mxu0
        %v7565 = vadd.f32 0.0, %v7564
        %v7566 = vpop.f32.mrb[0].mxu0
        %v7567 = vadd.f32 0.0, %v7566
        %7568 = vmatprep.mubr.bf16.mxu0 0
        %7569 = vmatmul.mubr.bf16.gmra.mrb[0].mxu0 %v7336
        %v7570 = vpop.f32.mrb[0].mxu0
        %v7571 = vadd.f32 0.0, %v7570
        %v7572 = vpop.f32.mrb[0].mxu0
        %v7573 = vadd.f32 0.0, %v7572
        %v7574 = vpop.f32.mrb[0].mxu0
        %v7575 = vadd.f32 0.0, %v7574
        %v7576 = vpop.f32.mrb[0].mxu0
        %v7577 = vadd.f32 0.0, %v7576
        %7578 = vdwg.mxu0
        %v7579 = vmax.f32 %v7421, %v7423
        %7580 = vmax.xlane.f32.xlu0 %v7579
        %v7581 = vpop.xlane.xlu0 %7580
        %v7582 = vmax.f32 %v7425, %v7427
        %7583 = vmax.xlane.f32.xlu0 %v7582
        %v7584 = vpop.xlane.xlu0 %7583
        %v7585 = vmax.f32 %v7431, %v7433
        %7586 = vmax.xlane.f32.xlu0 %v7585
        %v7587 = vpop.xlane.xlu0 %7586
        %v7588 = vmax.f32 %v7435, %v7437
        %7589 = vmax.xlane.f32.xlu0 %v7588
        %v7590 = vpop.xlane.xlu0 %7589
        %v7591 = vmax.f32 %v7441, %v7443
        %7592 = vmax.xlane.f32.xlu0 %v7591
        %v7593 = vpop.xlane.xlu0 %7592
        %v7594 = vmax.f32 %v7445, %v7447
        %7595 = vmax.xlane.f32.xlu0 %v7594
        %v7596 = vpop.xlane.xlu0 %7595
        %v7597 = vmax.f32 %v7451, %v7453
        %7598 = vmax.xlane.f32.xlu0 %v7597
        %v7599 = vpop.xlane.xlu0 %7598
        %v7600 = vmax.f32 %v7455, %v7457
        %7601 = vmax.xlane.f32.xlu0 %v7600
        %v7602 = vpop.xlane.xlu0 %7601
        %v7603 = vmax.f32 %v7461, %v7463
        %7604 = vmax.xlane.f32.xlu0 %v7603
        %v7605 = vpop.xlane.xlu0 %7604
        %v7606 = vmax.f32 %v7465, %v7467
        %7607 = vmax.xlane.f32.xlu0 %v7606
        %v7608 = vpop.xlane.xlu0 %7607
        %v7609 = vmax.f32 %v7471, %v7473
        %7610 = vmax.xlane.f32.xlu0 %v7609
        %v7611 = vpop.xlane.xlu0 %7610
        %v7612 = vmax.f32 %v7475, %v7477
        %7613 = vmax.xlane.f32.xlu0 %v7612
        %v7614 = vpop.xlane.xlu0 %7613
        %v7615 = vmax.f32 %v7481, %v7483
        %7616 = vmax.xlane.f32.xlu0 %v7615
        %v7617 = vpop.xlane.xlu0 %7616
        %v7618 = vmax.f32 %v7485, %v7487
        %7619 = vmax.xlane.f32.xlu0 %v7618
        %v7620 = vpop.xlane.xlu0 %7619
        %v7621 = vmax.f32 %v7491, %v7493
        %7622 = vmax.xlane.f32.xlu0 %v7621
        %v7623 = vpop.xlane.xlu0 %7622
        %v7624 = vmax.f32 %v7495, %v7497
        %7625 = vmax.xlane.f32.xlu0 %v7624
        %v7626 = vpop.xlane.xlu0 %7625
        %v7627 = vmax.f32 %v7501, %v7503
        %7628 = vmax.xlane.f32.xlu0 %v7627
        %v7629 = vpop.xlane.xlu0 %7628
        %v7630 = vmax.f32 %v7505, %v7507
        %7631 = vmax.xlane.f32.xlu0 %v7630
        %v7632 = vpop.xlane.xlu0 %7631
        %v7633 = vmax.f32 %v7511, %v7513
        %7634 = vmax.xlane.f32.xlu0 %v7633
        %v7635 = vpop.xlane.xlu0 %7634
        %v7636 = vmax.f32 %v7515, %v7517
        %7637 = vmax.xlane.f32.xlu0 %v7636
        %v7638 = vpop.xlane.xlu0 %7637
        %v7639 = vmax.f32 %v7521, %v7523
        %7640 = vmax.xlane.f32.xlu0 %v7639
        %v7641 = vpop.xlane.xlu0 %7640
        %v7642 = vmax.f32 %v7525, %v7527
        %7643 = vmax.xlane.f32.xlu0 %v7642
        %v7644 = vpop.xlane.xlu0 %7643
        %v7645 = vmax.f32 %v7531, %v7533
        %7646 = vmax.xlane.f32.xlu0 %v7645
        %v7647 = vpop.xlane.xlu0 %7646
        %v7648 = vmax.f32 %v7535, %v7537
        %7649 = vmax.xlane.f32.xlu0 %v7648
        %v7650 = vpop.xlane.xlu0 %7649
        %v7651 = vmax.f32 %v7541, %v7543
        %7652 = vmax.xlane.f32.xlu0 %v7651
        %v7653 = vpop.xlane.xlu0 %7652
        %v7654 = vmax.f32 %v7545, %v7547
        %7655 = vmax.xlane.f32.xlu0 %v7654
        %v7656 = vpop.xlane.xlu0 %7655
        %v7657 = vmax.f32 %v7551, %v7553
        %7658 = vmax.xlane.f32.xlu0 %v7657
        %v7659 = vpop.xlane.xlu0 %7658
        %v7660 = vmax.f32 %v7555, %v7557
        %7661 = vmax.xlane.f32.xlu0 %v7660
        %v7662 = vpop.xlane.xlu0 %7661
        %v7663 = vmax.f32 %v7561, %v7563
        %7664 = vmax.xlane.f32.xlu0 %v7663
        %v7665 = vpop.xlane.xlu0 %7664
        %v7666 = vmax.f32 %v7565, %v7567
        %7667 = vmax.xlane.f32.xlu0 %v7666
        %v7668 = vpop.xlane.xlu0 %7667
        %v7669 = vmax.f32 %v7571, %v7573
        %7670 = vmax.xlane.f32.xlu0 %v7669
        %v7671 = vpop.xlane.xlu0 %7670
        %v7672 = vmax.f32 %v7575, %v7577
        %7673 = vmax.xlane.f32.xlu0 %v7672
        %v7674 = vpop.xlane.xlu0 %7673
        %v7675 = vsub.f32 %v7421, %v7581
        %v7676 = vsub.f32 %v7423, %v7581
        %v7677 = vsub.f32 %v7425, %v7584
        %v7678 = vsub.f32 %v7427, %v7584
        %v7679 = vsub.f32 %v7431, %v7587
        %v7680 = vsub.f32 %v7433, %v7587
        %v7681 = vsub.f32 %v7435, %v7590
        %v7682 = vsub.f32 %v7437, %v7590
        %v7683 = vsub.f32 %v7441, %v7593
        %v7684 = vsub.f32 %v7443, %v7593
        %v7685 = vsub.f32 %v7445, %v7596
        %v7686 = vsub.f32 %v7447, %v7596
        %v7687 = vsub.f32 %v7451, %v7599
        %v7688 = vsub.f32 %v7453, %v7599
        %v7689 = vsub.f32 %v7455, %v7602
        %v7690 = vsub.f32 %v7457, %v7602
        %v7691 = vsub.f32 %v7461, %v7605
        %v7692 = vsub.f32 %v7463, %v7605
        %v7693 = vsub.f32 %v7465, %v7608
        %v7694 = vsub.f32 %v7467, %v7608
        %v7695 = vsub.f32 %v7471, %v7611
        %v7696 = vsub.f32 %v7473, %v7611
        %v7697 = vsub.f32 %v7475, %v7614
        %v7698 = vsub.f32 %v7477, %v7614
        %v7699 = vsub.f32 %v7481, %v7617
        %v7700 = vsub.f32 %v7483, %v7617
        %v7701 = vsub.f32 %v7485, %v7620
        %v7702 = vsub.f32 %v7487, %v7620
        %v7703 = vsub.f32 %v7491, %v7623
        %v7704 = vsub.f32 %v7493, %v7623
        %v7705 = vsub.f32 %v7495, %v7626
        %v7706 = vsub.f32 %v7497, %v7626
        %v7707 = vsub.f32 %v7501, %v7629
        %v7708 = vsub.f32 %v7503, %v7629
        %v7709 = vsub.f32 %v7505, %v7632
        %v7710 = vsub.f32 %v7507, %v7632
        %v7711 = vsub.f32 %v7511, %v7635
        %v7712 = vsub.f32 %v7513, %v7635
        %v7713 = vsub.f32 %v7515, %v7638
        %v7714 = vsub.f32 %v7517, %v7638
        %v7715 = vsub.f32 %v7521, %v7641
        %v7716 = vsub.f32 %v7523, %v7641
        %v7717 = vsub.f32 %v7525, %v7644
        %v7718 = vsub.f32 %v7527, %v7644
        %v7719 = vsub.f32 %v7531, %v7647
        %v7720 = vsub.f32 %v7533, %v7647
        %v7721 = vsub.f32 %v7535, %v7650
        %v7722 = vsub.f32 %v7537, %v7650
        %v7723 = vsub.f32 %v7541, %v7653
        %v7724 = vsub.f32 %v7543, %v7653
        %v7725 = vsub.f32 %v7545, %v7656
        %v7726 = vsub.f32 %v7547, %v7656
        %v7727 = vsub.f32 %v7551, %v7659
        %v7728 = vsub.f32 %v7553, %v7659
        %v7729 = vsub.f32 %v7555, %v7662
        %v7730 = vsub.f32 %v7557, %v7662
        %v7731 = vsub.f32 %v7561, %v7665
        %v7732 = vsub.f32 %v7563, %v7665
        %v7733 = vsub.f32 %v7565, %v7668
        %v7734 = vsub.f32 %v7567, %v7668
        %v7735 = vsub.f32 %v7571, %v7671
        %v7736 = vsub.f32 %v7573, %v7671
        %v7737 = vsub.f32 %v7575, %v7674
        %v7738 = vsub.f32 %v7577, %v7674
        %v7739 = vmul.f32 %v7675, 1.442695
        %v7740 = vpow.pop %v7739
        %v7741 = vmul.f32 %v7676, 1.442695
        %v7742 = vpow.pop %v7741
        %v7743 = vmul.f32 %v7677, 1.442695
        %v7744 = vpow.pop %v7743
        %v7745 = vmul.f32 %v7678, 1.442695
        %v7746 = vpow.pop %v7745
        %v7747 = vmul.f32 %v7679, 1.442695
        %v7748 = vpow.pop %v7747
        %v7749 = vmul.f32 %v7680, 1.442695
        %v7750 = vpow.pop %v7749
        %v7751 = vmul.f32 %v7681, 1.442695
        %v7752 = vpow.pop %v7751
        %v7753 = vmul.f32 %v7682, 1.442695
        %v7754 = vpow.pop %v7753
        %v7755 = vmul.f32 %v7683, 1.442695
        %v7756 = vpow.pop %v7755
        %v7757 = vmul.f32 %v7684, 1.442695
        %v7758 = vpow.pop %v7757
        %v7759 = vmul.f32 %v7685, 1.442695
        %v7760 = vpow.pop %v7759
        %v7761 = vmul.f32 %v7686, 1.442695
        %v7762 = vpow.pop %v7761
        %v7763 = vmul.f32 %v7687, 1.442695
        %v7764 = vpow.pop %v7763
        %v7765 = vmul.f32 %v7688, 1.442695
        %v7766 = vpow.pop %v7765
        %v7767 = vmul.f32 %v7689, 1.442695
        %v7768 = vpow.pop %v7767
        %v7769 = vmul.f32 %v7690, 1.442695
        %v7770 = vpow.pop %v7769
        %v7771 = vmul.f32 %v7691, 1.442695
        %v7772 = vpow.pop %v7771
        %v7773 = vmul.f32 %v7692, 1.442695
        %v7774 = vpow.pop %v7773
        %v7775 = vmul.f32 %v7693, 1.442695
        %v7776 = vpow.pop %v7775
        %v7777 = vmul.f32 %v7694, 1.442695
        %v7778 = vpow.pop %v7777
        %v7779 = vmul.f32 %v7695, 1.442695
        %v7780 = vpow.pop %v7779
        %v7781 = vmul.f32 %v7696, 1.442695
        %v7782 = vpow.pop %v7781
        %v7783 = vmul.f32 %v7697, 1.442695
        %v7784 = vpow.pop %v7783
        %v7785 = vmul.f32 %v7698, 1.442695
        %v7786 = vpow.pop %v7785
        %v7787 = vmul.f32 %v7699, 1.442695
        %v7788 = vpow.pop %v7787
        %v7789 = vmul.f32 %v7700, 1.442695
        %v7790 = vpow.pop %v7789
        %v7791 = vmul.f32 %v7701, 1.442695
        %v7792 = vpow.pop %v7791
        %v7793 = vmul.f32 %v7702, 1.442695
        %v7794 = vpow.pop %v7793
        %v7795 = vmul.f32 %v7703, 1.442695
        %v7796 = vpow.pop %v7795
        %v7797 = vmul.f32 %v7704, 1.442695
        %v7798 = vpow.pop %v7797
        %v7799 = vmul.f32 %v7705, 1.442695
        %v7800 = vpow.pop %v7799
        %v7801 = vmul.f32 %v7706, 1.442695
        %v7802 = vpow.pop %v7801
        %v7803 = vmul.f32 %v7707, 1.442695
        %v7804 = vpow.pop %v7803
        %v7805 = vmul.f32 %v7708, 1.442695
        %v7806 = vpow.pop %v7805
        %v7807 = vmul.f32 %v7709, 1.442695
        %v7808 = vpow.pop %v7807
        %v7809 = vmul.f32 %v7710, 1.442695
        %v7810 = vpow.pop %v7809
        %v7811 = vmul.f32 %v7711, 1.442695
        %v7812 = vpow.pop %v7811
        %v7813 = vmul.f32 %v7712, 1.442695
        %v7814 = vpow.pop %v7813
        %v7815 = vmul.f32 %v7713, 1.442695
        %v7816 = vpow.pop %v7815
        %v7817 = vmul.f32 %v7714, 1.442695
        %v7818 = vpow.pop %v7817
        %v7819 = vmul.f32 %v7715, 1.442695
        %v7820 = vpow.pop %v7819
        %v7821 = vmul.f32 %v7716, 1.442695
        %v7822 = vpow.pop %v7821
        %v7823 = vmul.f32 %v7717, 1.442695
        %v7824 = vpow.pop %v7823
        %v7825 = vmul.f32 %v7718, 1.442695
        %v7826 = vpow.pop %v7825
        %v7827 = vmul.f32 %v7719, 1.442695
        %v7828 = vpow.pop %v7827
        %v7829 = vmul.f32 %v7720, 1.442695
        %v7830 = vpow.pop %v7829
        %v7831 = vmul.f32 %v7721, 1.442695
        %v7832 = vpow.pop %v7831
        %v7833 = vmul.f32 %v7722, 1.442695
        %v7834 = vpow.pop %v7833
        %v7835 = vmul.f32 %v7723, 1.442695
        %v7836 = vpow.pop %v7835
        %v7837 = vmul.f32 %v7724, 1.442695
        %v7838 = vpow.pop %v7837
        %v7839 = vmul.f32 %v7725, 1.442695
        %v7840 = vpow.pop %v7839
        %v7841 = vmul.f32 %v7726, 1.442695
        %v7842 = vpow.pop %v7841
        %v7843 = vmul.f32 %v7727, 1.442695
        %v7844 = vpow.pop %v7843
        %v7845 = vmul.f32 %v7728, 1.442695
        %v7846 = vpow.pop %v7845
        %v7847 = vmul.f32 %v7729, 1.442695
        %v7848 = vpow.pop %v7847
        %v7849 = vmul.f32 %v7730, 1.442695
        %v7850 = vpow.pop %v7849
        %v7851 = vmul.f32 %v7731, 1.442695
        %v7852 = vpow.pop %v7851
        %v7853 = vmul.f32 %v7732, 1.442695
        %v7854 = vpow.pop %v7853
        %v7855 = vmul.f32 %v7733, 1.442695
        %v7856 = vpow.pop %v7855
        %v7857 = vmul.f32 %v7734, 1.442695
        %v7858 = vpow.pop %v7857
        %v7859 = vmul.f32 %v7735, 1.442695
        %v7860 = vpow.pop %v7859
        %v7861 = vmul.f32 %v7736, 1.442695
        %v7862 = vpow.pop %v7861
        %v7863 = vmul.f32 %v7737, 1.442695
        %v7864 = vpow.pop %v7863
        %v7865 = vmul.f32 %v7738, 1.442695
        %v7866 = vpow.pop %v7865
        %v7867 = vadd.f32 %v7740, %v7742
        %7868 = vadd.xlane.f32.xlu0 %v7867
        %v7869 = vpop.xlane.xlu0 %7868
        %v7870 = vadd.f32 %v7744, %v7746
        %7871 = vadd.xlane.f32.xlu0 %v7870
        %v7872 = vpop.xlane.xlu0 %7871
        %v7873 = vadd.f32 %v7748, %v7750
        %7874 = vadd.xlane.f32.xlu0 %v7873
        %v7875 = vpop.xlane.xlu0 %7874
        %v7876 = vadd.f32 %v7752, %v7754
        %7877 = vadd.xlane.f32.xlu0 %v7876
        %v7878 = vpop.xlane.xlu0 %7877
        %v7879 = vadd.f32 %v7756, %v7758
        %7880 = vadd.xlane.f32.xlu0 %v7879
        %v7881 = vpop.xlane.xlu0 %7880
        %v7882 = vadd.f32 %v7760, %v7762
        %7883 = vadd.xlane.f32.xlu0 %v7882
        %v7884 = vpop.xlane.xlu0 %7883
        %v7885 = vadd.f32 %v7764, %v7766
        %7886 = vadd.xlane.f32.xlu0 %v7885
        %v7887 = vpop.xlane.xlu0 %7886
        %v7888 = vadd.f32 %v7768, %v7770
        %7889 = vadd.xlane.f32.xlu0 %v7888
        %v7890 = vpop.xlane.xlu0 %7889
        %v7891 = vadd.f32 %v7772, %v7774
        %7892 = vadd.xlane.f32.xlu0 %v7891
        %v7893 = vpop.xlane.xlu0 %7892
        %v7894 = vadd.f32 %v7776, %v7778
        %7895 = vadd.xlane.f32.xlu0 %v7894
        %v7896 = vpop.xlane.xlu0 %7895
        %v7897 = vadd.f32 %v7780, %v7782
        %7898 = vadd.xlane.f32.xlu0 %v7897
        %v7899 = vpop.xlane.xlu0 %7898
        %v7900 = vadd.f32 %v7784, %v7786
        %7901 = vadd.xlane.f32.xlu0 %v7900
        %v7902 = vpop.xlane.xlu0 %7901
        %v7903 = vadd.f32 %v7788, %v7790
        %7904 = vadd.xlane.f32.xlu0 %v7903
        %v7905 = vpop.xlane.xlu0 %7904
        %v7906 = vadd.f32 %v7792, %v7794
        %7907 = vadd.xlane.f32.xlu0 %v7906
        %v7908 = vpop.xlane.xlu0 %7907
        %v7909 = vadd.f32 %v7796, %v7798
        %7910 = vadd.xlane.f32.xlu0 %v7909
        %v7911 = vpop.xlane.xlu0 %7910
        %v7912 = vadd.f32 %v7800, %v7802
        %7913 = vadd.xlane.f32.xlu0 %v7912
        %v7914 = vpop.xlane.xlu0 %7913
        %v7915 = vadd.f32 %v7804, %v7806
        %7916 = vadd.xlane.f32.xlu0 %v7915
        %v7917 = vpop.xlane.xlu0 %7916
        %v7918 = vadd.f32 %v7808, %v7810
        %7919 = vadd.xlane.f32.xlu0 %v7918
        %v7920 = vpop.xlane.xlu0 %7919
        %v7921 = vadd.f32 %v7812, %v7814
        %7922 = vadd.xlane.f32.xlu0 %v7921
        %v7923 = vpop.xlane.xlu0 %7922
        %v7924 = vadd.f32 %v7816, %v7818
        %7925 = vadd.xlane.f32.xlu0 %v7924
        %v7926 = vpop.xlane.xlu0 %7925
        %v7927 = vadd.f32 %v7820, %v7822
        %7928 = vadd.xlane.f32.xlu0 %v7927
        %v7929 = vpop.xlane.xlu0 %7928
        %v7930 = vadd.f32 %v7824, %v7826
        %7931 = vadd.xlane.f32.xlu0 %v7930
        %v7932 = vpop.xlane.xlu0 %7931
        %v7933 = vadd.f32 %v7828, %v7830
        %7934 = vadd.xlane.f32.xlu0 %v7933
        %v7935 = vpop.xlane.xlu0 %7934
        %v7936 = vadd.f32 %v7832, %v7834
        %7937 = vadd.xlane.f32.xlu0 %v7936
        %v7938 = vpop.xlane.xlu0 %7937
        %v7939 = vadd.f32 %v7836, %v7838
        %7940 = vadd.xlane.f32.xlu0 %v7939
        %v7941 = vpop.xlane.xlu0 %7940
        %v7942 = vadd.f32 %v7840, %v7842
        %7943 = vadd.xlane.f32.xlu0 %v7942
        %v7944 = vpop.xlane.xlu0 %7943
        %v7945 = vadd.f32 %v7844, %v7846
        %7946 = vadd.xlane.f32.xlu0 %v7945
        %v7947 = vpop.xlane.xlu0 %7946
        %v7948 = vadd.f32 %v7848, %v7850
        %7949 = vadd.xlane.f32.xlu0 %v7948
        %v7950 = vpop.xlane.xlu0 %7949
        %v7951 = vadd.f32 %v7852, %v7854
        %7952 = vadd.xlane.f32.xlu0 %v7951
        %v7953 = vpop.xlane.xlu0 %7952
        %v7954 = vadd.f32 %v7856, %v7858
        %7955 = vadd.xlane.f32.xlu0 %v7954
        %v7956 = vpop.xlane.xlu0 %7955
        %v7957 = vadd.f32 %v7860, %v7862
        %7958 = vadd.xlane.f32.xlu0 %v7957
        %v7959 = vpop.xlane.xlu0 %7958
        %v7960 = vadd.f32 %v7864, %v7866
        %7961 = vadd.xlane.f32.xlu0 %v7960
        %v7962 = vpop.xlane.xlu0 %7961
        %v7963 = vrcp.pop %v7869
        %v7964 = vrcp.pop %v7872
        %v7965 = vrcp.pop %v7875
        %v7966 = vrcp.pop %v7878
        %v7967 = vrcp.pop %v7881
        %v7968 = vrcp.pop %v7884
        %v7969 = vrcp.pop %v7887
        %v7970 = vrcp.pop %v7890
        %v7971 = vrcp.pop %v7893
        %v7972 = vrcp.pop %v7896
        %v7973 = vrcp.pop %v7899
        %v7974 = vrcp.pop %v7902
        %v7975 = vrcp.pop %v7905
        %v7976 = vrcp.pop %v7908
        %v7977 = vrcp.pop %v7911
        %v7978 = vrcp.pop %v7914
        %v7979 = vrcp.pop %v7917
        %v7980 = vrcp.pop %v7920
        %v7981 = vrcp.pop %v7923
        %v7982 = vrcp.pop %v7926
        %v7983 = vrcp.pop %v7929
        %v7984 = vrcp.pop %v7932
        %v7985 = vrcp.pop %v7935
        %v7986 = vrcp.pop %v7938
        %v7987 = vrcp.pop %v7941
        %v7988 = vrcp.pop %v7944
        %v7989 = vrcp.pop %v7947
        %v7990 = vrcp.pop %v7950
        %v7991 = vrcp.pop %v7953
        %v7992 = vrcp.pop %v7956
        %v7993 = vrcp.pop %v7959
        %v7994 = vrcp.pop %v7962
        %v7995 = vmul.f32 %v7740, %v7963
        %v7996 = vmul.f32 %v7742, %v7963
        %v7997 = vmul.f32 %v7744, %v7964
        %v7998 = vmul.f32 %v7746, %v7964
        %v7999 = vmul.f32 %v7748, %v7965
        %v8000 = vmul.f32 %v7750, %v7965
        %v8001 = vmul.f32 %v7752, %v7966
        %v8002 = vmul.f32 %v7754, %v7966
        %v8003 = vmul.f32 %v7756, %v7967
        %v8004 = vmul.f32 %v7758, %v7967
        %v8005 = vmul.f32 %v7760, %v7968
        %v8006 = vmul.f32 %v7762, %v7968
        %v8007 = vmul.f32 %v7764, %v7969
        %v8008 = vmul.f32 %v7766, %v7969
        %v8009 = vmul.f32 %v7768, %v7970
        %v8010 = vmul.f32 %v7770, %v7970
        %v8011 = vmul.f32 %v7772, %v7971
        %v8012 = vmul.f32 %v7774, %v7971
        %v8013 = vmul.f32 %v7776, %v7972
        %v8014 = vmul.f32 %v7778, %v7972
        %v8015 = vmul.f32 %v7780, %v7973
        %v8016 = vmul.f32 %v7782, %v7973
        %v8017 = vmul.f32 %v7784, %v7974
        %v8018 = vmul.f32 %v7786, %v7974
        %v8019 = vmul.f32 %v7788, %v7975
        %v8020 = vmul.f32 %v7790, %v7975
        %v8021 = vmul.f32 %v7792, %v7976
        %v8022 = vmul.f32 %v7794, %v7976
        %v8023 = vmul.f32 %v7796, %v7977
        %v8024 = vmul.f32 %v7798, %v7977
        %v8025 = vmul.f32 %v7800, %v7978
        %v8026 = vmul.f32 %v7802, %v7978
        %v8027 = vmul.f32 %v7804, %v7979
        %v8028 = vmul.f32 %v7806, %v7979
        %v8029 = vmul.f32 %v7808, %v7980
        %v8030 = vmul.f32 %v7810, %v7980
        %v8031 = vmul.f32 %v7812, %v7981
        %v8032 = vmul.f32 %v7814, %v7981
        %v8033 = vmul.f32 %v7816, %v7982
        %v8034 = vmul.f32 %v7818, %v7982
        %v8035 = vmul.f32 %v7820, %v7983
        %v8036 = vmul.f32 %v7822, %v7983
        %v8037 = vmul.f32 %v7824, %v7984
        %v8038 = vmul.f32 %v7826, %v7984
        %v8039 = vmul.f32 %v7828, %v7985
        %v8040 = vmul.f32 %v7830, %v7985
        %v8041 = vmul.f32 %v7832, %v7986
        %v8042 = vmul.f32 %v7834, %v7986
        %v8043 = vmul.f32 %v7836, %v7987
        %v8044 = vmul.f32 %v7838, %v7987
        %v8045 = vmul.f32 %v7840, %v7988
        %v8046 = vmul.f32 %v7842, %v7988
        %v8047 = vmul.f32 %v7844, %v7989
        %v8048 = vmul.f32 %v7846, %v7989
        %v8049 = vmul.f32 %v7848, %v7990
        %v8050 = vmul.f32 %v7850, %v7990
        %v8051 = vmul.f32 %v7852, %v7991
        %v8052 = vmul.f32 %v7854, %v7991
        %v8053 = vmul.f32 %v7856, %v7992
        %v8054 = vmul.f32 %v7858, %v7992
        %v8055 = vmul.f32 %v7860, %v7993
        %v8056 = vmul.f32 %v7862, %v7993
        %v8057 = vmul.f32 %v7864, %v7994
        %v8058 = vmul.f32 %v7866, %v7994
        %v8059 = vpack.c.bf16 %v7997, %v7995
        %v8060 = vpack.c.bf16 %v7998, %v7996
        %v8061 = vpack.c.bf16 %v8001, %v7999
        %v8062 = vpack.c.bf16 %v8002, %v8000
        %v8063 = vpack.c.bf16 %v8005, %v8003
        %v8064 = vpack.c.bf16 %v8006, %v8004
        %v8065 = vpack.c.bf16 %v8009, %v8007
        %v8066 = vpack.c.bf16 %v8010, %v8008
        %v8067 = vpack.c.bf16 %v8013, %v8011
        %v8068 = vpack.c.bf16 %v8014, %v8012
        %v8069 = vpack.c.bf16 %v8017, %v8015
        %v8070 = vpack.c.bf16 %v8018, %v8016
        %v8071 = vpack.c.bf16 %v8021, %v8019
        %v8072 = vpack.c.bf16 %v8022, %v8020
        %v8073 = vpack.c.bf16 %v8025, %v8023
        %v8074 = vpack.c.bf16 %v8026, %v8024
        %v8075 = vpack.c.bf16 %v8029, %v8027
        %v8076 = vpack.c.bf16 %v8030, %v8028
        %v8077 = vpack.c.bf16 %v8033, %v8031
        %v8078 = vpack.c.bf16 %v8034, %v8032
        %v8079 = vpack.c.bf16 %v8037, %v8035
        %v8080 = vpack.c.bf16 %v8038, %v8036
        %v8081 = vpack.c.bf16 %v8041, %v8039
        %v8082 = vpack.c.bf16 %v8042, %v8040
        %v8083 = vpack.c.bf16 %v8045, %v8043
        %v8084 = vpack.c.bf16 %v8046, %v8044
        %v8085 = vpack.c.bf16 %v8049, %v8047
        %v8086 = vpack.c.bf16 %v8050, %v8048
        %v8087 = vpack.c.bf16 %v8053, %v8051
        %v8088 = vpack.c.bf16 %v8054, %v8052
        %v8089 = vpack.c.bf16 %v8057, %v8055
        %v8090 = vpack.c.bf16 %v8058, %v8056
        %v8091 = vpack.c.bf16 %v7135, %v7132
        %v8092 = vpack.c.bf16 %v7143, %v7140
        %v8093 = vpack.c.bf16 %v7151, %v7148
        %v8094 = vpack.c.bf16 %v7159, %v7156
        %v8095 = vpack.c.bf16 %v7167, %v7164
        %v8096 = vpack.c.bf16 %v7175, %v7172
        %v8097 = vpack.c.bf16 %v7183, %v7180
        %v8098 = vpack.c.bf16 %v7191, %v7188
        %v8099 = vpack.c.bf16 %v7199, %v7196
        %v8100 = vpack.c.bf16 %v7207, %v7204
        %v8101 = vpack.c.bf16 %v7215, %v7212
        %v8102 = vpack.c.bf16 %v7223, %v7220
        %v8103 = vpack.c.bf16 %v7231, %v7228
        %v8104 = vpack.c.bf16 %v7239, %v7236
        %v8105 = vpack.c.bf16 %v7247, %v7244
        %v8106 = vpack.c.bf16 %v7255, %v7252
        %8107 = vmatprep.subr.bf16.mxu0 0
        %8108 = vmatpush1.bf16.msra.mxu0 %v8091
        %8109 = vmatprep.subr.bf16.mxu0 0
        %8110 = vmatpush1.bf16.msra.mxu0 %v8092
        %8111 = vmatprep.subr.bf16.mxu0 0
        %8112 = vmatpush1.bf16.msra.mxu0 %v8093
        %8113 = vmatprep.subr.bf16.mxu0 0
        %8114 = vmatpush1.bf16.msra.mxu0 %v8094
        %8115 = vmatprep.subr.bf16.mxu0 0
        %8116 = vmatpush1.bf16.msra.mxu0 %v8095
        %8117 = vmatprep.subr.bf16.mxu0 0
        %8118 = vmatpush1.bf16.msra.mxu0 %v8096
        %8119 = vmatprep.subr.bf16.mxu0 0
        %8120 = vmatpush1.bf16.msra.mxu0 %v8097
        %8121 = vmatprep.subr.bf16.mxu0 0
        %8122 = vmatpush1.bf16.msra.mxu0 %v8098
        %8123 = vmatprep.subr.bf16.mxu0 0
        %8124 = vmatpush1.bf16.msra.mxu0 %v8099
        %8125 = vmatprep.subr.bf16.mxu0 0
        %8126 = vmatpush1.bf16.msra.mxu0 %v8100
        %8127 = vmatprep.subr.bf16.mxu0 0
        %8128 = vmatpush1.bf16.msra.mxu0 %v8101
        %8129 = vmatprep.subr.bf16.mxu0 0
        %8130 = vmatpush1.bf16.msra.mxu0 %v8102
        %8131 = vmatprep.subr.bf16.mxu0 0
        %8132 = vmatpush1.bf16.msra.mxu0 %v8103
        %8133 = vmatprep.subr.bf16.mxu0 0
        %8134 = vmatpush1.bf16.msra.mxu0 %v8104
        %8135 = vmatprep.subr.bf16.mxu0 0
        %8136 = vmatpush1.bf16.msra.mxu0 %v8105
        %8137 = vmatprep.subr.bf16.mxu0 0
        %8138 = vmatpush1.bf16.msra.mxu0 %v8106
        %8139 = vmatprep.mubr.bf16.mxu0 %v8060
        %8140 = vmatmul.mubr.bf16.gmra.mrb[0].mxu0 %v8059
        %v8141 = vpop.f32.mrb[0].mxu0
        %v8142 = vadd.f32 0.0, %v8141
        %v8143 = vpop.f32.mrb[0].mxu0
        %v8144 = vpop.f32.mrb[0].mxu0
        %v8145 = vadd.f32 0.0, %v8144
        %v8146 = vpop.f32.mrb[0].mxu0
        %8147 = vmatprep.mubr.bf16.mxu0 %v8062
        %8148 = vmatmul.mubr.bf16.gmra.mrb[0].mxu0 %v8061
        %v8149 = vpop.f32.mrb[0].mxu0
        %v8150 = vadd.f32 0.0, %v8149
        %v8151 = vpop.f32.mrb[0].mxu0
        %v8152 = vpop.f32.mrb[0].mxu0
        %v8153 = vadd.f32 0.0, %v8152
        %v8154 = vpop.f32.mrb[0].mxu0
        %8155 = vmatprep.mubr.bf16.mxu0 %v8064
        %8156 = vmatmul.mubr.bf16.gmra.mrb[0].mxu0 %v8063
        %v8157 = vpop.f32.mrb[0].mxu0
        %v8158 = vadd.f32 0.0, %v8157
        %v8159 = vpop.f32.mrb[0].mxu0
        %v8160 = vpop.f32.mrb[0].mxu0
        %v8161 = vadd.f32 0.0, %v8160
        %v8162 = vpop.f32.mrb[0].mxu0
        %8163 = vmatprep.mubr.bf16.mxu0 %v8066
        %8164 = vmatmul.mubr.bf16.gmra.mrb[0].mxu0 %v8065
        %v8165 = vpop.f32.mrb[0].mxu0
        %v8166 = vadd.f32 0.0, %v8165
        %v8167 = vpop.f32.mrb[0].mxu0
        %v8168 = vpop.f32.mrb[0].mxu0
        %v8169 = vadd.f32 0.0, %v8168
        %v8170 = vpop.f32.mrb[0].mxu0
        %8171 = vmatprep.mubr.bf16.mxu0 %v8068
        %8172 = vmatmul.mubr.bf16.gmra.mrb[0].mxu0 %v8067
        %v8173 = vpop.f32.mrb[0].mxu0
        %v8174 = vadd.f32 0.0, %v8173
        %v8175 = vpop.f32.mrb[0].mxu0
        %v8176 = vpop.f32.mrb[0].mxu0
        %v8177 = vadd.f32 0.0, %v8176
        %v8178 = vpop.f32.mrb[0].mxu0
        %8179 = vmatprep.mubr.bf16.mxu0 %v8070
        %8180 = vmatmul.mubr.bf16.gmra.mrb[0].mxu0 %v8069
        %v8181 = vpop.f32.mrb[0].mxu0
        %v8182 = vadd.f32 0.0, %v8181
        %v8183 = vpop.f32.mrb[0].mxu0
        %v8184 = vpop.f32.mrb[0].mxu0
        %v8185 = vadd.f32 0.0, %v8184
        %v8186 = vpop.f32.mrb[0].mxu0
        %8187 = vmatprep.mubr.bf16.mxu0 %v8072
        %8188 = vmatmul.mubr.bf16.gmra.mrb[0].mxu0 %v8071
        %v8189 = vpop.f32.mrb[0].mxu0
        %v8190 = vadd.f32 0.0, %v8189
        %v8191 = vpop.f32.mrb[0].mxu0
        %v8192 = vpop.f32.mrb[0].mxu0
        %v8193 = vadd.f32 0.0, %v8192
        %v8194 = vpop.f32.mrb[0].mxu0
        %8195 = vmatprep.mubr.bf16.mxu0 %v8074
        %8196 = vmatmul.mubr.bf16.gmra.mrb[0].mxu0 %v8073
        %v8197 = vpop.f32.mrb[0].mxu0
        %v8198 = vadd.f32 0.0, %v8197
        %v8199 = vpop.f32.mrb[0].mxu0
        %v8200 = vpop.f32.mrb[0].mxu0
        %v8201 = vadd.f32 0.0, %v8200
        %v8202 = vpop.f32.mrb[0].mxu0
        %8203 = vmatprep.mubr.bf16.mxu0 %v8076
        %8204 = vmatmul.mubr.bf16.gmra.mrb[0].mxu0 %v8075
        %v8205 = vpop.f32.mrb[0].mxu0
        %v8206 = vadd.f32 0.0, %v8205
        %v8207 = vpop.f32.mrb[0].mxu0
        %v8208 = vpop.f32.mrb[0].mxu0
        %v8209 = vadd.f32 0.0, %v8208
        %v8210 = vpop.f32.mrb[0].mxu0
        %8211 = vmatprep.mubr.bf16.mxu0 %v8078
        %8212 = vmatmul.mubr.bf16.gmra.mrb[0].mxu0 %v8077
        %v8213 = vpop.f32.mrb[0].mxu0
        %v8214 = vadd.f32 0.0, %v8213
        %v8215 = vpop.f32.mrb[0].mxu0
        %v8216 = vpop.f32.mrb[0].mxu0
        %v8217 = vadd.f32 0.0, %v8216
        %v8218 = vpop.f32.mrb[0].mxu0
        %8219 = vmatprep.mubr.bf16.mxu0 %v8080
        %8220 = vmatmul.mubr.bf16.gmra.mrb[0].mxu0 %v8079
        %v8221 = vpop.f32.mrb[0].mxu0
        %v8222 = vadd.f32 0.0, %v8221
        %v8223 = vpop.f32.mrb[0].mxu0
        %v8224 = vpop.f32.mrb[0].mxu0
        %v8225 = vadd.f32 0.0, %v8224
        %v8226 = vpop.f32.mrb[0].mxu0
        %8227 = vmatprep.mubr.bf16.mxu0 %v8082
        %8228 = vmatmul.mubr.bf16.gmra.mrb[0].mxu0 %v8081
        %v8229 = vpop.f32.mrb[0].mxu0
        %v8230 = vadd.f32 0.0, %v8229
        %v8231 = vpop.f32.mrb[0].mxu0
        %v8232 = vpop.f32.mrb[0].mxu0
        %v8233 = vadd.f32 0.0, %v8232
        %v8234 = vpop.f32.mrb[0].mxu0
        %8235 = vmatprep.mubr.bf16.mxu0 %v8084
        %8236 = vmatmul.mubr.bf16.gmra.mrb[0].mxu0 %v8083
        %v8237 = vpop.f32.mrb[0].mxu0
        %v8238 = vadd.f32 0.0, %v8237
        %v8239 = vpop.f32.mrb[0].mxu0
        %v8240 = vpop.f32.mrb[0].mxu0
        %v8241 = vadd.f32 0.0, %v8240
        %v8242 = vpop.f32.mrb[0].mxu0
        %8243 = vmatprep.mubr.bf16.mxu0 %v8086
        %8244 = vmatmul.mubr.bf16.gmra.mrb[0].mxu0 %v8085
        %v8245 = vpop.f32.mrb[0].mxu0
        %v8246 = vadd.f32 0.0, %v8245
        %v8247 = vpop.f32.mrb[0].mxu0
        %v8248 = vpop.f32.mrb[0].mxu0
        %v8249 = vadd.f32 0.0, %v8248
        %v8250 = vpop.f32.mrb[0].mxu0
        %8251 = vmatprep.mubr.bf16.mxu0 %v8088
        %8252 = vmatmul.mubr.bf16.gmra.mrb[0].mxu0 %v8087
        %v8253 = vpop.f32.mrb[0].mxu0
        %v8254 = vadd.f32 0.0, %v8253
        %v8255 = vpop.f32.mrb[0].mxu0
        %v8256 = vpop.f32.mrb[0].mxu0
        %v8257 = vadd.f32 0.0, %v8256
        %v8258 = vpop.f32.mrb[0].mxu0
        %8259 = vmatprep.mubr.bf16.mxu0 %v8090
        %8260 = vmatmul.mubr.bf16.gmra.mrb[0].mxu0 %v8089
        %v8261 = vpop.f32.mrb[0].mxu0
        %v8262 = vadd.f32 0.0, %v8261
        %v8263 = vpop.f32.mrb[0].mxu0
        %v8264 = vpop.f32.mrb[0].mxu0
        %v8265 = vadd.f32 0.0, %v8264
        %v8266 = vpop.f32.mrb[0].mxu0
        %8267 = vdwg.mxu0
        %v8268 = vld [vmem:[#allocation3] sm:$0xff]
        %v8269 = vld [vmem:[#allocation3 + $0x8] sm:$0xff]
        %v8270 = vld [vmem:[#allocation3 + $0x10] sm:$0xff]
        %v8271 = vld [vmem:[#allocation3 + $0x18] sm:$0xff]
        %v8272 = vld [vmem:[#allocation3 + $0x20] sm:$0xff]
        %v8273 = vld [vmem:[#allocation3 + $0x28] sm:$0xff]
        %v8274 = vld [vmem:[#allocation3 + $0x30] sm:$0xff]
        %v8275 = vld [vmem:[#allocation3 + $0x38] sm:$0xff]
        %v8276 = vld [vmem:[#allocation3 + $0x40] sm:$0xff]
        %v8277 = vld [vmem:[#allocation3 + $0x48] sm:$0xff]
        %v8278 = vld [vmem:[#allocation3 + $0x50] sm:$0xff]
        %v8279 = vld [vmem:[#allocation3 + $0x58] sm:$0xff]
        %v8280 = vld [vmem:[#allocation3 + $0x60] sm:$0xff]
        %v8281 = vld [vmem:[#allocation3 + $0x68] sm:$0xff]
        %v8282 = vld [vmem:[#allocation3 + $0x70] sm:$0xff]
        %v8283 = vld [vmem:[#allocation3 + $0x78] sm:$0xff]
        %v8284 = vld [vmem:[#allocation3 + $0x80] sm:$0xff]
        %v8285 = vld [vmem:[#allocation3 + $0x88] sm:$0xff]
        %v8286 = vld [vmem:[#allocation3 + $0x90] sm:$0xff]
        %v8287 = vld [vmem:[#allocation3 + $0x98] sm:$0xff]
        %v8288 = vld [vmem:[#allocation3 + $0xa0] sm:$0xff]
        %v8289 = vld [vmem:[#allocation3 + $0xa8] sm:$0xff]
        %v8290 = vld [vmem:[#allocation3 + $0xb0] sm:$0xff]
        %v8291 = vld [vmem:[#allocation3 + $0xb8] sm:$0xff]
        %v8292 = vld [vmem:[#allocation3 + $0xc0] sm:$0xff]
        %v8293 = vld [vmem:[#allocation3 + $0xc8] sm:$0xff]
        %v8294 = vld [vmem:[#allocation3 + $0xd0] sm:$0xff]
        %v8295 = vld [vmem:[#allocation3 + $0xd8] sm:$0xff]
        %v8296 = vld [vmem:[#allocation3 + $0xe0] sm:$0xff]
        %v8297 = vld [vmem:[#allocation3 + $0xe8] sm:$0xff]
        %v8298 = vld [vmem:[#allocation3 + $0xf0] sm:$0xff]
        %v8299 = vld [vmem:[#allocation3 + $0xf8] sm:$0xff]
        %8332 = vrot.lane.b32.xlu0 %v8142, 96
        %v8333 = vpop.permute.xlu0 %8332
        %8334 = vrot.lane.b32.xlu0 %v8145, 96
        %v8335 = vpop.permute.xlu0 %8334
        %8336 = vrot.lane.b32.xlu0 %v8150, 96
        %v8337 = vpop.permute.xlu0 %8336
        %8338 = vrot.lane.b32.xlu0 %v8153, 96
        %v8339 = vpop.permute.xlu0 %8338
        %8340 = vrot.lane.b32.xlu0 %v8158, 96
        %v8341 = vpop.permute.xlu0 %8340
        %8342 = vrot.lane.b32.xlu0 %v8161, 96
        %v8343 = vpop.permute.xlu0 %8342
        %8344 = vrot.lane.b32.xlu0 %v8166, 96
        %v8345 = vpop.permute.xlu0 %8344
        %8346 = vrot.lane.b32.xlu0 %v8169, 96
        %v8347 = vpop.permute.xlu0 %8346
        %8348 = vrot.lane.b32.xlu0 %v8174, 96
        %v8349 = vpop.permute.xlu0 %8348
        %8350 = vrot.lane.b32.xlu0 %v8177, 96
        %v8351 = vpop.permute.xlu0 %8350
        %8352 = vrot.lane.b32.xlu0 %v8182, 96
        %v8353 = vpop.permute.xlu0 %8352
        %8354 = vrot.lane.b32.xlu0 %v8185, 96
        %v8355 = vpop.permute.xlu0 %8354
        %8356 = vrot.lane.b32.xlu0 %v8190, 96
        %v8357 = vpop.permute.xlu0 %8356
        %8358 = vrot.lane.b32.xlu0 %v8193, 96
        %v8359 = vpop.permute.xlu0 %8358
        %8360 = vrot.lane.b32.xlu0 %v8198, 96
        %v8361 = vpop.permute.xlu0 %8360
        %8362 = vrot.lane.b32.xlu0 %v8201, 96
        %v8363 = vpop.permute.xlu0 %8362
        %8364 = vrot.lane.b32.xlu0 %v8206, 96
        %v8365 = vpop.permute.xlu0 %8364
        %8366 = vrot.lane.b32.xlu0 %v8209, 96
        %v8367 = vpop.permute.xlu0 %8366
        %8368 = vrot.lane.b32.xlu0 %v8214, 96
        %v8369 = vpop.permute.xlu0 %8368
        %8370 = vrot.lane.b32.xlu0 %v8217, 96
        %v8371 = vpop.permute.xlu0 %8370
        %8372 = vrot.lane.b32.xlu0 %v8222, 96
        %v8373 = vpop.permute.xlu0 %8372
        %8374 = vrot.lane.b32.xlu0 %v8225, 96
        %v8375 = vpop.permute.xlu0 %8374
        %8376 = vrot.lane.b32.xlu0 %v8230, 96
        %v8377 = vpop.permute.xlu0 %8376
        %8378 = vrot.lane.b32.xlu0 %v8233, 96
        %v8379 = vpop.permute.xlu0 %8378
        %8380 = vrot.lane.b32.xlu0 %v8238, 96
        %v8381 = vpop.permute.xlu0 %8380
        %8382 = vrot.lane.b32.xlu0 %v8241, 96
        %v8383 = vpop.permute.xlu0 %8382
        %8384 = vrot.lane.b32.xlu0 %v8246, 96
        %v8385 = vpop.permute.xlu0 %8384
        %8386 = vrot.lane.b32.xlu0 %v8249, 96
        %v8387 = vpop.permute.xlu0 %8386
        %8388 = vrot.lane.b32.xlu0 %v8254, 96
        %v8389 = vpop.permute.xlu0 %8388
        %8390 = vrot.lane.b32.xlu0 %v8257, 96
        %v8391 = vpop.permute.xlu0 %8390
        %8392 = vrot.lane.b32.xlu0 %v8262, 96
        %v8393 = vpop.permute.xlu0 %8392
        %8394 = vrot.lane.b32.xlu0 %v8265, 96
        %v8395 = vpop.permute.xlu0 %8394
        %v8428 = vadd.f32 %v8268, %v8333
        %v8429 = vadd.f32 %v8269, %v8335
        %v8430 = vadd.f32 %v8270, %v8337
        %v8431 = vadd.f32 %v8271, %v8339
        %v8432 = vadd.f32 %v8272, %v8341
        %v8433 = vadd.f32 %v8273, %v8343
        %v8434 = vadd.f32 %v8274, %v8345
        %v8435 = vadd.f32 %v8275, %v8347
        %v8436 = vadd.f32 %v8276, %v8349
        %v8437 = vadd.f32 %v8277, %v8351
        %v8438 = vadd.f32 %v8278, %v8353
        %v8439 = vadd.f32 %v8279, %v8355
        %v8440 = vadd.f32 %v8280, %v8357
        %v8441 = vadd.f32 %v8281, %v8359
        %v8442 = vadd.f32 %v8282, %v8361
        %v8443 = vadd.f32 %v8283, %v8363
        %v8444 = vadd.f32 %v8284, %v8365
        %v8445 = vadd.f32 %v8285, %v8367
        %v8446 = vadd.f32 %v8286, %v8369
        %v8447 = vadd.f32 %v8287, %v8371
        %v8448 = vadd.f32 %v8288, %v8373
        %v8449 = vadd.f32 %v8289, %v8375
        %v8450 = vadd.f32 %v8290, %v8377
        %v8451 = vadd.f32 %v8291, %v8379
        %v8452 = vadd.f32 %v8292, %v8381
        %v8453 = vadd.f32 %v8293, %v8383
        %v8454 = vadd.f32 %v8294, %v8385
        %v8455 = vadd.f32 %v8295, %v8387
        %v8456 = vadd.f32 %v8296, %v8389
        %v8457 = vadd.f32 %v8297, %v8391
        %v8458 = vadd.f32 %v8298, %v8393
        %v8459 = vadd.f32 %v8299, %v8395
        %vm8460 = vcmask 1048320
        %8461 = vst.msk [vmem:[#allocation3] sm:$0xff] %vm8460, %v8428
        %8462 = vst.msk [vmem:[#allocation3 + $0x8] sm:$0xff] %vm8460, %v8429
        %8463 = vst.msk [vmem:[#allocation3 + $0x10] sm:$0xff] %vm8460, %v8430
        %8464 = vst.msk [vmem:[#allocation3 + $0x18] sm:$0xff] %vm8460, %v8431
        %8465 = vst.msk [vmem:[#allocation3 + $0x20] sm:$0xff] %vm8460, %v8432
        %8466 = vst.msk [vmem:[#allocation3 + $0x28] sm:$0xff] %vm8460, %v8433
        %8467 = vst.msk [vmem:[#allocation3 + $0x30] sm:$0xff] %vm8460, %v8434
        %8468 = vst.msk [vmem:[#allocation3 + $0x38] sm:$0xff] %vm8460, %v8435
        %8469 = vst.msk [vmem:[#allocation3 + $0x40] sm:$0xff] %vm8460, %v8436
        %8470 = vst.msk [vmem:[#allocation3 + $0x48] sm:$0xff] %vm8460, %v8437
        %8471 = vst.msk [vmem:[#allocation3 + $0x50] sm:$0xff] %vm8460, %v8438
        %8472 = vst.msk [vmem:[#allocation3 + $0x58] sm:$0xff] %vm8460, %v8439
        %8473 = vst.msk [vmem:[#allocation3 + $0x60] sm:$0xff] %vm8460, %v8440
        %8474 = vst.msk [vmem:[#allocation3 + $0x68] sm:$0xff] %vm8460, %v8441
        %8475 = vst.msk [vmem:[#allocation3 + $0x70] sm:$0xff] %vm8460, %v8442
        %8476 = vst.msk [vmem:[#allocation3 + $0x78] sm:$0xff] %vm8460, %v8443
        %8477 = vst.msk [vmem:[#allocation3 + $0x80] sm:$0xff] %vm8460, %v8444
        %8478 = vst.msk [vmem:[#allocation3 + $0x88] sm:$0xff] %vm8460, %v8445
        %8479 = vst.msk [vmem:[#allocation3 + $0x90] sm:$0xff] %vm8460, %v8446
        %8480 = vst.msk [vmem:[#allocation3 + $0x98] sm:$0xff] %vm8460, %v8447
        %8481 = vst.msk [vmem:[#allocation3 + $0xa0] sm:$0xff] %vm8460, %v8448
        %8482 = vst.msk [vmem:[#allocation3 + $0xa8] sm:$0xff] %vm8460, %v8449
        %8483 = vst.msk [vmem:[#allocation3 + $0xb0] sm:$0xff] %vm8460, %v8450
        %8484 = vst.msk [vmem:[#allocation3 + $0xb8] sm:$0xff] %vm8460, %v8451
        %8485 = vst.msk [vmem:[#allocation3 + $0xc0] sm:$0xff] %vm8460, %v8452
        %8486 = vst.msk [vmem:[#allocation3 + $0xc8] sm:$0xff] %vm8460, %v8453
        %8487 = vst.msk [vmem:[#allocation3 + $0xd0] sm:$0xff] %vm8460, %v8454
        %8488 = vst.msk [vmem:[#allocation3 + $0xd8] sm:$0xff] %vm8460, %v8455
        %8489 = vst.msk [vmem:[#allocation3 + $0xe0] sm:$0xff] %vm8460, %v8456
        %8490 = vst.msk [vmem:[#allocation3 + $0xe8] sm:$0xff] %vm8460, %v8457
        %8491 = vst.msk [vmem:[#allocation3 + $0xf0] sm:$0xff] %vm8460, %v8458
        %8492 = vst.msk [vmem:[#allocation3 + $0xf8] sm:$0xff] %vm8460, %v8459
        %v8493 = vld [vmem:[#allocation3] sm:$0xff]
        %v8494 = vld [vmem:[#allocation3 + $0x8] sm:$0xff]
        %v8495 = vld [vmem:[#allocation3 + $0x10] sm:$0xff]
        %v8496 = vld [vmem:[#allocation3 + $0x18] sm:$0xff]
        %v8497 = vld [vmem:[#allocation3 + $0x20] sm:$0xff]
        %v8498 = vld [vmem:[#allocation3 + $0x28] sm:$0xff]
        %v8499 = vld [vmem:[#allocation3 + $0x30] sm:$0xff]
        %v8500 = vld [vmem:[#allocation3 + $0x38] sm:$0xff]
        %v8501 = vld [vmem:[#allocation3 + $0x40] sm:$0xff]
        %v8502 = vld [vmem:[#allocation3 + $0x48] sm:$0xff]
        %v8503 = vld [vmem:[#allocation3 + $0x50] sm:$0xff]
        %v8504 = vld [vmem:[#allocation3 + $0x58] sm:$0xff]
        %v8505 = vld [vmem:[#allocation3 + $0x60] sm:$0xff]
        %v8506 = vld [vmem:[#allocation3 + $0x68] sm:$0xff]
        %v8507 = vld [vmem:[#allocation3 + $0x70] sm:$0xff]
        %v8508 = vld [vmem:[#allocation3 + $0x78] sm:$0xff]
        %v8509 = vld [vmem:[#allocation3 + $0x80] sm:$0xff]
        %v8510 = vld [vmem:[#allocation3 + $0x88] sm:$0xff]
        %v8511 = vld [vmem:[#allocation3 + $0x90] sm:$0xff]
        %v8512 = vld [vmem:[#allocation3 + $0x98] sm:$0xff]
        %v8513 = vld [vmem:[#allocation3 + $0xa0] sm:$0xff]
        %v8514 = vld [vmem:[#allocation3 + $0xa8] sm:$0xff]
        %v8515 = vld [vmem:[#allocation3 + $0xb0] sm:$0xff]
        %v8516 = vld [vmem:[#allocation3 + $0xb8] sm:$0xff]
        %v8517 = vld [vmem:[#allocation3 + $0xc0] sm:$0xff]
        %v8518 = vld [vmem:[#allocation3 + $0xc8] sm:$0xff]
        %v8519 = vld [vmem:[#allocation3 + $0xd0] sm:$0xff]
        %v8520 = vld [vmem:[#allocation3 + $0xd8] sm:$0xff]
        %v8521 = vld [vmem:[#allocation3 + $0xe0] sm:$0xff]
        %v8522 = vld [vmem:[#allocation3 + $0xe8] sm:$0xff]
        %v8523 = vld [vmem:[#allocation3 + $0xf0] sm:$0xff]
        %v8524 = vld [vmem:[#allocation3 + $0xf8] sm:$0xff]
        %v8525 = vpack.c.bf16 %v8494, %v8493
        %v8526 = vpack.c.bf16 %v8496, %v8495
        %v8527 = vpack.c.bf16 %v8498, %v8497
        %v8528 = vpack.c.bf16 %v8500, %v8499
        %v8529 = vpack.c.bf16 %v8502, %v8501
        %v8530 = vpack.c.bf16 %v8504, %v8503
        %v8531 = vpack.c.bf16 %v8506, %v8505
        %v8532 = vpack.c.bf16 %v8508, %v8507
        %v8533 = vpack.c.bf16 %v8510, %v8509
        %v8534 = vpack.c.bf16 %v8512, %v8511
        %v8535 = vpack.c.bf16 %v8514, %v8513
        %v8536 = vpack.c.bf16 %v8516, %v8515
        %v8537 = vpack.c.bf16 %v8518, %v8517
        %v8538 = vpack.c.bf16 %v8520, %v8519
        %v8539 = vpack.c.bf16 %v8522, %v8521
        %v8540 = vpack.c.bf16 %v8524, %v8523
        %v8541 = vld [vmem:[%s654] sm:$0xf]
        %v8542 = vld [vmem:[%s654 + $0x4] sm:$0xf]
        %v8543 = vld [vmem:[%s654 + $0x8] sm:$0xf]
        %v8544 = vld [vmem:[%s654 + $0xc] sm:$0xf]
        %v8545 = vld [vmem:[%s654 + $0x10] sm:$0xf]
        %v8546 = vld [vmem:[%s654 + $0x14] sm:$0xf]
        %v8547 = vld [vmem:[%s654 + $0x18] sm:$0xf]
        %v8548 = vld [vmem:[%s654 + $0x1c] sm:$0xf]
        %v8549 = vld [vmem:[%s654 + $0x20] sm:$0xf]
        %v8550 = vld [vmem:[%s654 + $0x24] sm:$0xf]
        %v8551 = vld [vmem:[%s654 + $0x28] sm:$0xf]
        %v8552 = vld [vmem:[%s654 + $0x2c] sm:$0xf]
        %v8553 = vld [vmem:[%s654 + $0x30] sm:$0xf]
        %v8554 = vld [vmem:[%s654 + $0x34] sm:$0xf]
        %v8555 = vld [vmem:[%s654 + $0x38] sm:$0xf]
        %v8556 = vld [vmem:[%s654 + $0x3c] sm:$0xf]
        %v8557 = vld [vmem:[%s657] sm:$0x1]
        %v8559 = vlaneseq
        %v8560 = vshrl.u32 %v8559, 7
        %v8561 = vsub.s32 0, %v8560
        %v8562 = vrot.slane %v8557, %v8561
        %v8580 = vunpack.c.l.b16 %v8541
        %v8581 = vunpack.c.l.b16 %v8542
        %v8582 = vunpack.c.l.b16 %v8543
        %v8583 = vunpack.c.l.b16 %v8544
        %v8584 = vunpack.c.l.b16 %v8545
        %v8585 = vunpack.c.l.b16 %v8546
        %v8586 = vunpack.c.l.b16 %v8547
        %v8587 = vunpack.c.l.b16 %v8548
        %v8588 = vunpack.c.l.b16 %v8549
        %v8589 = vunpack.c.l.b16 %v8550
        %v8590 = vunpack.c.l.b16 %v8551
        %v8591 = vunpack.c.l.b16 %v8552
        %v8592 = vunpack.c.l.b16 %v8553
        %v8593 = vunpack.c.l.b16 %v8554
        %v8594 = vunpack.c.l.b16 %v8555
        %v8595 = vunpack.c.l.b16 %v8556
        %v8596 = vpack.c.b16 %v8581, %v8580
        %v8597 = vpack.c.b16 %v8583, %v8582
        %v8598 = vpack.c.b16 %v8585, %v8584
        %v8599 = vpack.c.b16 %v8587, %v8586
        %v8600 = vpack.c.b16 %v8589, %v8588
        %v8601 = vpack.c.b16 %v8591, %v8590
        %v8602 = vpack.c.b16 %v8593, %v8592
        %v8603 = vpack.c.b16 %v8595, %v8594
        %8612 = vmatprep.subr.bf16.mxu0 0
        %8613 = vmatpush1.bf16.msra.mxu0 %v8596
        %8614 = vmatprep.subr.bf16.mxu0 0
        %8615 = vmatpush1.bf16.msra.mxu0 %v8597
        %8616 = vmatprep.subr.bf16.mxu0 0
        %8617 = vmatpush1.bf16.msra.mxu0 %v8598
        %8618 = vmatprep.subr.bf16.mxu0 0
        %8619 = vmatpush1.bf16.msra.mxu0 %v8599
        %8620 = vmatprep.subr.bf16.mxu0 0
        %8621 = vmatpush1.bf16.msra.mxu0 %v8600
        %8622 = vmatprep.subr.bf16.mxu0 0
        %8623 = vmatpush1.bf16.msra.mxu0 %v8601
        %8624 = vmatprep.subr.bf16.mxu0 0
        %8625 = vmatpush1.bf16.msra.mxu0 %v8602
        %8626 = vmatprep.subr.bf16.mxu0 0
        %8627 = vmatpush1.bf16.msra.mxu0 %v8603
        %8628 = vmatprep.subr.bf16.mxu0 0
        %8629 = vmatpush1.bf16.msra.mxu0 0
        %8630 = vmatprep.subr.bf16.mxu0 0
        %8631 = vmatpush1.bf16.msra.mxu0 0
        %8632 = vmatprep.subr.bf16.mxu0 0
        %8633 = vmatpush1.bf16.msra.mxu0 0
        %8634 = vmatprep.subr.bf16.mxu0 0
        %8635 = vmatpush1.bf16.msra.mxu0 0
        %8636 = vmatprep.subr.bf16.mxu0 0
        %8637 = vmatpush1.bf16.msra.mxu0 0
        %8638 = vmatprep.subr.bf16.mxu0 0
        %8639 = vmatpush1.bf16.msra.mxu0 0
        %8640 = vmatprep.subr.bf16.mxu0 0
        %8641 = vmatpush1.bf16.msra.mxu0 0
        %8642 = vmatprep.subr.bf16.mxu0 0
        %8643 = vmatpush1.bf16.msra.mxu0 0
        %8644 = vmatprep.mubr.bf16.mxu0 0
        %8645 = vmatmul.mubr.bf16.gmra.mrb[0].mxu0 %v8525
        %v8646 = vpop.f32.mrb[0].mxu0
        %v8647 = vadd.f32 %v8562, %v8646
        %v8648 = vpop.f32.mrb[0].mxu0
        %v8649 = vpop.f32.mrb[0].mxu0
        %v8650 = vadd.f32 %v8562, %v8649
        %v8651 = vpop.f32.mrb[0].mxu0
        %8652 = vmatprep.mubr.bf16.mxu0 0
        %8653 = vmatmul.mubr.bf16.gmra.mrb[0].mxu0 %v8526
        %v8654 = vpop.f32.mrb[0].mxu0
        %v8655 = vadd.f32 %v8562, %v8654
        %v8656 = vpop.f32.mrb[0].mxu0
        %v8657 = vpop.f32.mrb[0].mxu0
        %v8658 = vadd.f32 %v8562, %v8657
        %v8659 = vpop.f32.mrb[0].mxu0
        %8660 = vmatprep.mubr.bf16.mxu0 0
        %8661 = vmatmul.mubr.bf16.gmra.mrb[0].mxu0 %v8527
        %v8662 = vpop.f32.mrb[0].mxu0
        %v8663 = vadd.f32 %v8562, %v8662
        %v8664 = vpop.f32.mrb[0].mxu0
        %v8665 = vpop.f32.mrb[0].mxu0
        %v8666 = vadd.f32 %v8562, %v8665
        %v8667 = vpop.f32.mrb[0].mxu0
        %8668 = vmatprep.mubr.bf16.mxu0 0
        %8669 = vmatmul.mubr.bf16.gmra.mrb[0].mxu0 %v8528
        %v8670 = vpop.f32.mrb[0].mxu0
        %v8671 = vadd.f32 %v8562, %v8670
        %v8672 = vpop.f32.mrb[0].mxu0
        %v8673 = vpop.f32.mrb[0].mxu0
        %v8674 = vadd.f32 %v8562, %v8673
        %v8675 = vpop.f32.mrb[0].mxu0
        %8676 = vmatprep.mubr.bf16.mxu0 0
        %8677 = vmatmul.mubr.bf16.gmra.mrb[0].mxu0 %v8529
        %v8678 = vpop.f32.mrb[0].mxu0
        %v8679 = vadd.f32 %v8562, %v8678
        %v8680 = vpop.f32.mrb[0].mxu0
        %v8681 = vpop.f32.mrb[0].mxu0
        %v8682 = vadd.f32 %v8562, %v8681
        %v8683 = vpop.f32.mrb[0].mxu0
        %8684 = vmatprep.mubr.bf16.mxu0 0
        %8685 = vmatmul.mubr.bf16.gmra.mrb[0].mxu0 %v8530
        %v8686 = vpop.f32.mrb[0].mxu0
        %v8687 = vadd.f32 %v8562, %v8686
        %v8688 = vpop.f32.mrb[0].mxu0
        %v8689 = vpop.f32.mrb[0].mxu0
        %v8690 = vadd.f32 %v8562, %v8689
        %v8691 = vpop.f32.mrb[0].mxu0
        %8692 = vmatprep.mubr.bf16.mxu0 0
        %8693 = vmatmul.mubr.bf16.gmra.mrb[0].mxu0 %v8531
        %v8694 = vpop.f32.mrb[0].mxu0
        %v8695 = vadd.f32 %v8562, %v8694
        %v8696 = vpop.f32.mrb[0].mxu0
        %v8697 = vpop.f32.mrb[0].mxu0
        %v8698 = vadd.f32 %v8562, %v8697
        %v8699 = vpop.f32.mrb[0].mxu0
        %8700 = vmatprep.mubr.bf16.mxu0 0
        %8701 = vmatmul.mubr.bf16.gmra.mrb[0].mxu0 %v8532
        %v8702 = vpop.f32.mrb[0].mxu0
        %v8703 = vadd.f32 %v8562, %v8702
        %v8704 = vpop.f32.mrb[0].mxu0
        %v8705 = vpop.f32.mrb[0].mxu0
        %v8706 = vadd.f32 %v8562, %v8705
        %v8707 = vpop.f32.mrb[0].mxu0
        %8708 = vmatprep.mubr.bf16.mxu0 0
        %8709 = vmatmul.mubr.bf16.gmra.mrb[0].mxu0 %v8533
        %v8710 = vpop.f32.mrb[0].mxu0
        %v8711 = vadd.f32 %v8562, %v8710
        %v8712 = vpop.f32.mrb[0].mxu0
        %v8713 = vpop.f32.mrb[0].mxu0
        %v8714 = vadd.f32 %v8562, %v8713
        %v8715 = vpop.f32.mrb[0].mxu0
        %8716 = vmatprep.mubr.bf16.mxu0 0
        %8717 = vmatmul.mubr.bf16.gmra.mrb[0].mxu0 %v8534
        %v8718 = vpop.f32.mrb[0].mxu0
        %v8719 = vadd.f32 %v8562, %v8718
        %v8720 = vpop.f32.mrb[0].mxu0
        %v8721 = vpop.f32.mrb[0].mxu0
        %v8722 = vadd.f32 %v8562, %v8721
        %v8723 = vpop.f32.mrb[0].mxu0
        %8724 = vmatprep.mubr.bf16.mxu0 0
        %8725 = vmatmul.mubr.bf16.gmra.mrb[0].mxu0 %v8535
        %v8726 = vpop.f32.mrb[0].mxu0
        %v8727 = vadd.f32 %v8562, %v8726
        %v8728 = vpop.f32.mrb[0].mxu0
        %v8729 = vpop.f32.mrb[0].mxu0
        %v8730 = vadd.f32 %v8562, %v8729
        %v8731 = vpop.f32.mrb[0].mxu0
        %8732 = vmatprep.mubr.bf16.mxu0 0
        %8733 = vmatmul.mubr.bf16.gmra.mrb[0].mxu0 %v8536
        %v8734 = vpop.f32.mrb[0].mxu0
        %v8735 = vadd.f32 %v8562, %v8734
        %v8736 = vpop.f32.mrb[0].mxu0
        %v8737 = vpop.f32.mrb[0].mxu0
        %v8738 = vadd.f32 %v8562, %v8737
        %v8739 = vpop.f32.mrb[0].mxu0
        %8740 = vmatprep.mubr.bf16.mxu0 0
        %8741 = vmatmul.mubr.bf16.gmra.mrb[0].mxu0 %v8537
        %v8742 = vpop.f32.mrb[0].mxu0
        %v8743 = vadd.f32 %v8562, %v8742
        %v8744 = vpop.f32.mrb[0].mxu0
        %v8745 = vpop.f32.mrb[0].mxu0
        %v8746 = vadd.f32 %v8562, %v8745
        %v8747 = vpop.f32.mrb[0].mxu0
        %8748 = vmatprep.mubr.bf16.mxu0 0
        %8749 = vmatmul.mubr.bf16.gmra.mrb[0].mxu0 %v8538
        %v8750 = vpop.f32.mrb[0].mxu0
        %v8751 = vadd.f32 %v8562, %v8750
        %v8752 = vpop.f32.mrb[0].mxu0
        %v8753 = vpop.f32.mrb[0].mxu0
        %v8754 = vadd.f32 %v8562, %v8753
        %v8755 = vpop.f32.mrb[0].mxu0
        %8756 = vmatprep.mubr.bf16.mxu0 0
        %8757 = vmatmul.mubr.bf16.gmra.mrb[0].mxu0 %v8539
        %v8758 = vpop.f32.mrb[0].mxu0
        %v8759 = vadd.f32 %v8562, %v8758
        %v8760 = vpop.f32.mrb[0].mxu0
        %v8761 = vpop.f32.mrb[0].mxu0
        %v8762 = vadd.f32 %v8562, %v8761
        %v8763 = vpop.f32.mrb[0].mxu0
        %8764 = vmatprep.mubr.bf16.mxu0 0
        %8765 = vmatmul.mubr.bf16.gmra.mrb[0].mxu0 %v8540
        %v8766 = vpop.f32.mrb[0].mxu0
        %v8767 = vadd.f32 %v8562, %v8766
        %v8768 = vpop.f32.mrb[0].mxu0
        %v8769 = vpop.f32.mrb[0].mxu0
        %v8770 = vadd.f32 %v8562, %v8769
        %v8771 = vpop.f32.mrb[0].mxu0
        %8772 = vdwg.mxu0
        %v8773 = vmul.f32 %v8647, %v8647
        %v8774 = vmul.f32 %v8650, %v8650
        %v8775 = vmul.f32 %v8655, %v8655
        %v8776 = vmul.f32 %v8658, %v8658
        %v8777 = vmul.f32 %v8663, %v8663
        %v8778 = vmul.f32 %v8666, %v8666
        %v8779 = vmul.f32 %v8671, %v8671
        %v8780 = vmul.f32 %v8674, %v8674
        %v8781 = vmul.f32 %v8679, %v8679
        %v8782 = vmul.f32 %v8682, %v8682
        %v8783 = vmul.f32 %v8687, %v8687
        %v8784 = vmul.f32 %v8690, %v8690
        %v8785 = vmul.f32 %v8695, %v8695
        %v8786 = vmul.f32 %v8698, %v8698
        %v8787 = vmul.f32 %v8703, %v8703
        %v8788 = vmul.f32 %v8706, %v8706
        %v8789 = vmul.f32 %v8711, %v8711
        %v8790 = vmul.f32 %v8714, %v8714
        %v8791 = vmul.f32 %v8719, %v8719
        %v8792 = vmul.f32 %v8722, %v8722
        %v8793 = vmul.f32 %v8727, %v8727
        %v8794 = vmul.f32 %v8730, %v8730
        %v8795 = vmul.f32 %v8735, %v8735
        %v8796 = vmul.f32 %v8738, %v8738
        %v8797 = vmul.f32 %v8743, %v8743
        %v8798 = vmul.f32 %v8746, %v8746
        %v8799 = vmul.f32 %v8751, %v8751
        %v8800 = vmul.f32 %v8754, %v8754
        %v8801 = vmul.f32 %v8759, %v8759
        %v8802 = vmul.f32 %v8762, %v8762
        %v8803 = vmul.f32 %v8767, %v8767
        %v8804 = vmul.f32 %v8770, %v8770
        %v8805 = vmul.f32 %v8647, %v8773
        %v8806 = vmul.f32 %v8650, %v8774
        %v8807 = vmul.f32 %v8655, %v8775
        %v8808 = vmul.f32 %v8658, %v8776
        %v8809 = vmul.f32 %v8663, %v8777
        %v8810 = vmul.f32 %v8666, %v8778
        %v8811 = vmul.f32 %v8671, %v8779
        %v8812 = vmul.f32 %v8674, %v8780
        %v8813 = vmul.f32 %v8679, %v8781
        %v8814 = vmul.f32 %v8682, %v8782
        %v8815 = vmul.f32 %v8687, %v8783
        %v8816 = vmul.f32 %v8690, %v8784
        %v8817 = vmul.f32 %v8695, %v8785
        %v8818 = vmul.f32 %v8698, %v8786
        %v8819 = vmul.f32 %v8703, %v8787
        %v8820 = vmul.f32 %v8706, %v8788
        %v8821 = vmul.f32 %v8711, %v8789
        %v8822 = vmul.f32 %v8714, %v8790
        %v8823 = vmul.f32 %v8719, %v8791
        %v8824 = vmul.f32 %v8722, %v8792
        %v8825 = vmul.f32 %v8727, %v8793
        %v8826 = vmul.f32 %v8730, %v8794
        %v8827 = vmul.f32 %v8735, %v8795
        %v8828 = vmul.f32 %v8738, %v8796
        %v8829 = vmul.f32 %v8743, %v8797
        %v8830 = vmul.f32 %v8746, %v8798
        %v8831 = vmul.f32 %v8751, %v8799
        %v8832 = vmul.f32 %v8754, %v8800
        %v8833 = vmul.f32 %v8759, %v8801
        %v8834 = vmul.f32 %v8762, %v8802
        %v8835 = vmul.f32 %v8767, %v8803
        %v8836 = vmul.f32 %v8770, %v8804
        %v8837 = vmul.f32 %v8805, 0.044715
        %v8838 = vmul.f32 %v8806, 0.044715
        %v8839 = vmul.f32 %v8807, 0.044715
        %v8840 = vmul.f32 %v8808, 0.044715
        %v8841 = vmul.f32 %v8809, 0.044715
        %v8842 = vmul.f32 %v8810, 0.044715
        %v8843 = vmul.f32 %v8811, 0.044715
        %v8844 = vmul.f32 %v8812, 0.044715
        %v8845 = vmul.f32 %v8813, 0.044715
        %v8846 = vmul.f32 %v8814, 0.044715
        %v8847 = vmul.f32 %v8815, 0.044715
        %v8848 = vmul.f32 %v8816, 0.044715
        %v8849 = vmul.f32 %v8817, 0.044715
        %v8850 = vmul.f32 %v8818, 0.044715
        %v8851 = vmul.f32 %v8819, 0.044715
        %v8852 = vmul.f32 %v8820, 0.044715
        %v8853 = vmul.f32 %v8821, 0.044715
        %v8854 = vmul.f32 %v8822, 0.044715
        %v8855 = vmul.f32 %v8823, 0.044715
        %v8856 = vmul.f32 %v8824, 0.044715
        %v8857 = vmul.f32 %v8825, 0.044715
        %v8858 = vmul.f32 %v8826, 0.044715
        %v8859 = vmul.f32 %v8827, 0.044715
        %v8860 = vmul.f32 %v8828, 0.044715
        %v8861 = vmul.f32 %v8829, 0.044715
        %v8862 = vmul.f32 %v8830, 0.044715
        %v8863 = vmul.f32 %v8831, 0.044715
        %v8864 = vmul.f32 %v8832, 0.044715
        %v8865 = vmul.f32 %v8833, 0.044715
        %v8866 = vmul.f32 %v8834, 0.044715
        %v8867 = vmul.f32 %v8835, 0.044715
        %v8868 = vmul.f32 %v8836, 0.044715
        %v8869 = vadd.f32 %v8647, %v8837
        %v8870 = vadd.f32 %v8650, %v8838
        %v8871 = vadd.f32 %v8655, %v8839
        %v8872 = vadd.f32 %v8658, %v8840
        %v8873 = vadd.f32 %v8663, %v8841
        %v8874 = vadd.f32 %v8666, %v8842
        %v8875 = vadd.f32 %v8671, %v8843
        %v8876 = vadd.f32 %v8674, %v8844
        %v8877 = vadd.f32 %v8679, %v8845
        %v8878 = vadd.f32 %v8682, %v8846
        %v8879 = vadd.f32 %v8687, %v8847
        %v8880 = vadd.f32 %v8690, %v8848
        %v8881 = vadd.f32 %v8695, %v8849
        %v8882 = vadd.f32 %v8698, %v8850
        %v8883 = vadd.f32 %v8703, %v8851
        %v8884 = vadd.f32 %v8706, %v8852
        %v8885 = vadd.f32 %v8711, %v8853
        %v8886 = vadd.f32 %v8714, %v8854
        %v8887 = vadd.f32 %v8719, %v8855
        %v8888 = vadd.f32 %v8722, %v8856
        %v8889 = vadd.f32 %v8727, %v8857
        %v8890 = vadd.f32 %v8730, %v8858
        %v8891 = vadd.f32 %v8735, %v8859
        %v8892 = vadd.f32 %v8738, %v8860
        %v8893 = vadd.f32 %v8743, %v8861
        %v8894 = vadd.f32 %v8746, %v8862
        %v8895 = vadd.f32 %v8751, %v8863
        %v8896 = vadd.f32 %v8754, %v8864
        %v8897 = vadd.f32 %v8759, %v8865
        %v8898 = vadd.f32 %v8762, %v8866
        %v8899 = vadd.f32 %v8767, %v8867
        %v8900 = vadd.f32 %v8770, %v8868
        %v8901 = vmul.f32 %v8869, 0.7978846
        %v8902 = vmul.f32 %v8870, 0.7978846
        %v8903 = vmul.f32 %v8871, 0.7978846
        %v8904 = vmul.f32 %v8872, 0.7978846
        %v8905 = vmul.f32 %v8873, 0.7978846
        %v8906 = vmul.f32 %v8874, 0.7978846
        %v8907 = vmul.f32 %v8875, 0.7978846
        %v8908 = vmul.f32 %v8876, 0.7978846
        %v8909 = vmul.f32 %v8877, 0.7978846
        %v8910 = vmul.f32 %v8878, 0.7978846
        %v8911 = vmul.f32 %v8879, 0.7978846
        %v8912 = vmul.f32 %v8880, 0.7978846
        %v8913 = vmul.f32 %v8881, 0.7978846
        %v8914 = vmul.f32 %v8882, 0.7978846
        %v8915 = vmul.f32 %v8883, 0.7978846
        %v8916 = vmul.f32 %v8884, 0.7978846
        %v8917 = vmul.f32 %v8885, 0.7978846
        %v8918 = vmul.f32 %v8886, 0.7978846
        %v8919 = vmul.f32 %v8887, 0.7978846
        %v8920 = vmul.f32 %v8888, 0.7978846
        %v8921 = vmul.f32 %v8889, 0.7978846
        %v8922 = vmul.f32 %v8890, 0.7978846
        %v8923 = vmul.f32 %v8891, 0.7978846
        %v8924 = vmul.f32 %v8892, 0.7978846
        %v8925 = vmul.f32 %v8893, 0.7978846
        %v8926 = vmul.f32 %v8894, 0.7978846
        %v8927 = vmul.f32 %v8895, 0.7978846
        %v8928 = vmul.f32 %v8896, 0.7978846
        %v8929 = vmul.f32 %v8897, 0.7978846
        %v8930 = vmul.f32 %v8898, 0.7978846
        %v8931 = vmul.f32 %v8899, 0.7978846
        %v8932 = vmul.f32 %v8900, 0.7978846
        %v8933 = vtanh.pop %v8901
        %v8934 = vtanh.pop %v8902
        %v8935 = vtanh.pop %v8903
        %v8936 = vtanh.pop %v8904
        %v8937 = vtanh.pop %v8905
        %v8938 = vtanh.pop %v8906
        %v8939 = vtanh.pop %v8907
        %v8940 = vtanh.pop %v8908
        %v8941 = vtanh.pop %v8909
        %v8942 = vtanh.pop %v8910
        %v8943 = vtanh.pop %v8911
        %v8944 = vtanh.pop %v8912
        %v8945 = vtanh.pop %v8913
        %v8946 = vtanh.pop %v8914
        %v8947 = vtanh.pop %v8915
        %v8948 = vtanh.pop %v8916
        %v8949 = vtanh.pop %v8917
        %v8950 = vtanh.pop %v8918
        %v8951 = vtanh.pop %v8919
        %v8952 = vtanh.pop %v8920
        %v8953 = vtanh.pop %v8921
        %v8954 = vtanh.pop %v8922
        %v8955 = vtanh.pop %v8923
        %v8956 = vtanh.pop %v8924
        %v8957 = vtanh.pop %v8925
        %v8958 = vtanh.pop %v8926
        %v8959 = vtanh.pop %v8927
        %v8960 = vtanh.pop %v8928
        %v8961 = vtanh.pop %v8929
        %v8962 = vtanh.pop %v8930
        %v8963 = vtanh.pop %v8931
        %v8964 = vtanh.pop %v8932
        %v8965 = vadd.f32 %v8933, 1.0
        %v8966 = vadd.f32 %v8934, 1.0
        %v8967 = vadd.f32 %v8935, 1.0
        %v8968 = vadd.f32 %v8936, 1.0
        %v8969 = vadd.f32 %v8937, 1.0
        %v8970 = vadd.f32 %v8938, 1.0
        %v8971 = vadd.f32 %v8939, 1.0
        %v8972 = vadd.f32 %v8940, 1.0
        %v8973 = vadd.f32 %v8941, 1.0
        %v8974 = vadd.f32 %v8942, 1.0
        %v8975 = vadd.f32 %v8943, 1.0
        %v8976 = vadd.f32 %v8944, 1.0
        %v8977 = vadd.f32 %v8945, 1.0
        %v8978 = vadd.f32 %v8946, 1.0
        %v8979 = vadd.f32 %v8947, 1.0
        %v8980 = vadd.f32 %v8948, 1.0
        %v8981 = vadd.f32 %v8949, 1.0
        %v8982 = vadd.f32 %v8950, 1.0
        %v8983 = vadd.f32 %v8951, 1.0
        %v8984 = vadd.f32 %v8952, 1.0
        %v8985 = vadd.f32 %v8953, 1.0
        %v8986 = vadd.f32 %v8954, 1.0
        %v8987 = vadd.f32 %v8955, 1.0
        %v8988 = vadd.f32 %v8956, 1.0
        %v8989 = vadd.f32 %v8957, 1.0
        %v8990 = vadd.f32 %v8958, 1.0
        %v8991 = vadd.f32 %v8959, 1.0
        %v8992 = vadd.f32 %v8960, 1.0
        %v8993 = vadd.f32 %v8961, 1.0
        %v8994 = vadd.f32 %v8962, 1.0
        %v8995 = vadd.f32 %v8963, 1.0
        %v8996 = vadd.f32 %v8964, 1.0
        %v8997 = vmul.f32 %v8965, 0.5
        %v8998 = vmul.f32 %v8966, 0.5
        %v8999 = vmul.f32 %v8967, 0.5
        %v9000 = vmul.f32 %v8968, 0.5
        %v9001 = vmul.f32 %v8969, 0.5
        %v9002 = vmul.f32 %v8970, 0.5
        %v9003 = vmul.f32 %v8971, 0.5
        %v9004 = vmul.f32 %v8972, 0.5
        %v9005 = vmul.f32 %v8973, 0.5
        %v9006 = vmul.f32 %v8974, 0.5
        %v9007 = vmul.f32 %v8975, 0.5
        %v9008 = vmul.f32 %v8976, 0.5
        %v9009 = vmul.f32 %v8977, 0.5
        %v9010 = vmul.f32 %v8978, 0.5
        %v9011 = vmul.f32 %v8979, 0.5
        %v9012 = vmul.f32 %v8980, 0.5
        %v9013 = vmul.f32 %v8981, 0.5
        %v9014 = vmul.f32 %v8982, 0.5
        %v9015 = vmul.f32 %v8983, 0.5
        %v9016 = vmul.f32 %v8984, 0.5
        %v9017 = vmul.f32 %v8985, 0.5
        %v9018 = vmul.f32 %v8986, 0.5
        %v9019 = vmul.f32 %v8987, 0.5
        %v9020 = vmul.f32 %v8988, 0.5
        %v9021 = vmul.f32 %v8989, 0.5
        %v9022 = vmul.f32 %v8990, 0.5
        %v9023 = vmul.f32 %v8991, 0.5
        %v9024 = vmul.f32 %v8992, 0.5
        %v9025 = vmul.f32 %v8993, 0.5
        %v9026 = vmul.f32 %v8994, 0.5
        %v9027 = vmul.f32 %v8995, 0.5
        %v9028 = vmul.f32 %v8996, 0.5
        %v9029 = vmul.f32 %v8647, %v8997
        %v9030 = vmul.f32 %v8650, %v8998
        %v9031 = vmul.f32 %v8655, %v8999
        %v9032 = vmul.f32 %v8658, %v9000
        %v9033 = vmul.f32 %v8663, %v9001
        %v9034 = vmul.f32 %v8666, %v9002
        %v9035 = vmul.f32 %v8671, %v9003
        %v9036 = vmul.f32 %v8674, %v9004
        %v9037 = vmul.f32 %v8679, %v9005
        %v9038 = vmul.f32 %v8682, %v9006
        %v9039 = vmul.f32 %v8687, %v9007
        %v9040 = vmul.f32 %v8690, %v9008
        %v9041 = vmul.f32 %v8695, %v9009
        %v9042 = vmul.f32 %v8698, %v9010
        %v9043 = vmul.f32 %v8703, %v9011
        %v9044 = vmul.f32 %v8706, %v9012
        %v9045 = vmul.f32 %v8711, %v9013
        %v9046 = vmul.f32 %v8714, %v9014
        %v9047 = vmul.f32 %v8719, %v9015
        %v9048 = vmul.f32 %v8722, %v9016
        %v9049 = vmul.f32 %v8727, %v9017
        %v9050 = vmul.f32 %v8730, %v9018
        %v9051 = vmul.f32 %v8735, %v9019
        %v9052 = vmul.f32 %v8738, %v9020
        %v9053 = vmul.f32 %v8743, %v9021
        %v9054 = vmul.f32 %v8746, %v9022
        %v9055 = vmul.f32 %v8751, %v9023
        %v9056 = vmul.f32 %v8754, %v9024
        %v9057 = vmul.f32 %v8759, %v9025
        %v9058 = vmul.f32 %v8762, %v9026
        %v9059 = vmul.f32 %v8767, %v9027
        %v9060 = vmul.f32 %v8770, %v9028
        %9061 = vst.msk [vmem:[#allocation2] sm:$0xff] %vm941, %v9029
        %9062 = vst.msk [vmem:[#allocation2 + $0x8] sm:$0xff] %vm941, %v9030
        %9063 = vst.msk [vmem:[#allocation2 + $0x10] sm:$0xff] %vm941, %v9031
        %9064 = vst.msk [vmem:[#allocation2 + $0x18] sm:$0xff] %vm941, %v9032
        %9065 = vst.msk [vmem:[#allocation2 + $0x20] sm:$0xff] %vm941, %v9033
        %9066 = vst.msk [vmem:[#allocation2 + $0x28] sm:$0xff] %vm941, %v9034
        %9067 = vst.msk [vmem:[#allocation2 + $0x30] sm:$0xff] %vm941, %v9035
        %9068 = vst.msk [vmem:[#allocation2 + $0x38] sm:$0xff] %vm941, %v9036
        %9069 = vst.msk [vmem:[#allocation2 + $0x40] sm:$0xff] %vm941, %v9037
        %9070 = vst.msk [vmem:[#allocation2 + $0x48] sm:$0xff] %vm941, %v9038
        %9071 = vst.msk [vmem:[#allocation2 + $0x50] sm:$0xff] %vm941, %v9039
        %9072 = vst.msk [vmem:[#allocation2 + $0x58] sm:$0xff] %vm941, %v9040
        %9073 = vst.msk [vmem:[#allocation2 + $0x60] sm:$0xff] %vm941, %v9041
        %9074 = vst.msk [vmem:[#allocation2 + $0x68] sm:$0xff] %vm941, %v9042
        %9075 = vst.msk [vmem:[#allocation2 + $0x70] sm:$0xff] %vm941, %v9043
        %9076 = vst.msk [vmem:[#allocation2 + $0x78] sm:$0xff] %vm941, %v9044
        %9077 = vst.msk [vmem:[#allocation2 + $0x80] sm:$0xff] %vm941, %v9045
        %9078 = vst.msk [vmem:[#allocation2 + $0x88] sm:$0xff] %vm941, %v9046
        %9079 = vst.msk [vmem:[#allocation2 + $0x90] sm:$0xff] %vm941, %v9047
        %9080 = vst.msk [vmem:[#allocation2 + $0x98] sm:$0xff] %vm941, %v9048
        %9081 = vst.msk [vmem:[#allocation2 + $0xa0] sm:$0xff] %vm941, %v9049
        %9082 = vst.msk [vmem:[#allocation2 + $0xa8] sm:$0xff] %vm941, %v9050
        %9083 = vst.msk [vmem:[#allocation2 + $0xb0] sm:$0xff] %vm941, %v9051
        %9084 = vst.msk [vmem:[#allocation2 + $0xb8] sm:$0xff] %vm941, %v9052
        %9085 = vst.msk [vmem:[#allocation2 + $0xc0] sm:$0xff] %vm941, %v9053
        %9086 = vst.msk [vmem:[#allocation2 + $0xc8] sm:$0xff] %vm941, %v9054
        %9087 = vst.msk [vmem:[#allocation2 + $0xd0] sm:$0xff] %vm941, %v9055
        %9088 = vst.msk [vmem:[#allocation2 + $0xd8] sm:$0xff] %vm941, %v9056
        %9089 = vst.msk [vmem:[#allocation2 + $0xe0] sm:$0xff] %vm941, %v9057
        %9090 = vst.msk [vmem:[#allocation2 + $0xe8] sm:$0xff] %vm941, %v9058
        %9091 = vst.msk [vmem:[#allocation2 + $0xf0] sm:$0xff] %vm941, %v9059
        %9092 = vst.msk [vmem:[#allocation2 + $0xf8] sm:$0xff] %vm941, %v9060
        %p9093 = scmp.eq.s32.totalorder %s32, 1
        // Predicated region
        $region77: #{ssa_fwd.1} parent=71 // pred_check
          %p9094 = pneg %p9093
        $region78: #{ssa_fwd.1} parent=71 // pred_check_branch
          %9096 = sbr.rel (%p9094) target = $region80
        $region79: #{ssa_fwd.1} parent=71 // pred_region
          %9097 = vst.msk [vmem:[%s603] sm:$0xff] %vm941, %v9029
          %9098 = vst.msk [vmem:[%s603 + $0x8] sm:$0xff] %vm941, %v9030
          %9099 = vst.msk [vmem:[%s603 + $0x10] sm:$0xff] %vm941, %v9031
          %9100 = vst.msk [vmem:[%s603 + $0x18] sm:$0xff] %vm941, %v9032
          %9101 = vst.msk [vmem:[%s603 + $0x20] sm:$0xff] %vm941, %v9033
          %9102 = vst.msk [vmem:[%s603 + $0x28] sm:$0xff] %vm941, %v9034
          %9103 = vst.msk [vmem:[%s603 + $0x30] sm:$0xff] %vm941, %v9035
          %9104 = vst.msk [vmem:[%s603 + $0x38] sm:$0xff] %vm941, %v9036
          %9105 = vst.msk [vmem:[%s603 + $0x40] sm:$0xff] %vm941, %v9037
          %9106 = vst.msk [vmem:[%s603 + $0x48] sm:$0xff] %vm941, %v9038
          %9107 = vst.msk [vmem:[%s603 + $0x50] sm:$0xff] %vm941, %v9039
          %9108 = vst.msk [vmem:[%s603 + $0x58] sm:$0xff] %vm941, %v9040
          %9109 = vst.msk [vmem:[%s603 + $0x60] sm:$0xff] %vm941, %v9041
          %9110 = vst.msk [vmem:[%s603 + $0x68] sm:$0xff] %vm941, %v9042
          %9111 = vst.msk [vmem:[%s603 + $0x70] sm:$0xff] %vm941, %v9043
          %9112 = vst.msk [vmem:[%s603 + $0x78] sm:$0xff] %vm941, %v9044
          %9113 = vst.msk [vmem:[%s603 + $0x80] sm:$0xff] %vm941, %v9045
          %9114 = vst.msk [vmem:[%s603 + $0x88] sm:$0xff] %vm941, %v9046
          %9115 = vst.msk [vmem:[%s603 + $0x90] sm:$0xff] %vm941, %v9047
          %9116 = vst.msk [vmem:[%s603 + $0x98] sm:$0xff] %vm941, %v9048
          %9117 = vst.msk [vmem:[%s603 + $0xa0] sm:$0xff] %vm941, %v9049
          %9118 = vst.msk [vmem:[%s603 + $0xa8] sm:$0xff] %vm941, %v9050
          %9119 = vst.msk [vmem:[%s603 + $0xb0] sm:$0xff] %vm941, %v9051
          %9120 = vst.msk [vmem:[%s603 + $0xb8] sm:$0xff] %vm941, %v9052
          %9121 = vst.msk [vmem:[%s603 + $0xc0] sm:$0xff] %vm941, %v9053
          %9122 = vst.msk [vmem:[%s603 + $0xc8] sm:$0xff] %vm941, %v9054
          %9123 = vst.msk [vmem:[%s603 + $0xd0] sm:$0xff] %vm941, %v9055
          %9124 = vst.msk [vmem:[%s603 + $0xd8] sm:$0xff] %vm941, %v9056
          %9125 = vst.msk [vmem:[%s603 + $0xe0] sm:$0xff] %vm941, %v9057
          %9126 = vst.msk [vmem:[%s603 + $0xe8] sm:$0xff] %vm941, %v9058
          %9127 = vst.msk [vmem:[%s603 + $0xf0] sm:$0xff] %vm941, %v9059
          %9128 = vst.msk [vmem:[%s603 + $0xf8] sm:$0xff] %vm941, %v9060
        $region80: #{ssa_fwd.1} parent=71 // pred_fallthru
          _
        %s9129 = sand.u32 %s385, 1
        %s9130 = scalar_lea.sflag [#allocation5], %s9129
        %s9131 = sand.u32 %s385, 1
        %s9132 = smul.addr %s9131, 256
        %s9133 = scalar_lea.vmem [#allocation4], %s9132
        // Predicated region
        $region81: #{ssa_fwd.1} parent=71 // pred_check
          %p9134 = pneg %p395
        $region82: #{ssa_fwd.1} parent=71 // pred_check_branch
          %9136 = sbr.rel (%p9134) target = $region84
        $region83: #{ssa_fwd.1} parent=71 // pred_region
          %s9138 = ssub.s32 4096, 4096
          %9139 = vsyncadd %s9130, %s9138
          %s9140 = smul.addr %s31, 32
          %s9141 = smul.addr %s9140, 128
          %s9142 = scalar_lea.hbm %s13, %s9141
          %s9143 = sshll.u32 %s9133, 4
          %s9144 = int_to_ptr.vmem [resolvable:$true] %s9143
          %9149 = dma.vmem_to_hbm [thread:$0]  %s9144, 4096, %s9142, %s9130, 128, 128, 8
        $region84: #{ssa_fwd.1} parent=71 // pred_fallthru
          _
      $region72: #{ssa_fwd.1} parent=5 // pred_fallthru
        _
      %p9150 = scmp.le.s32.totalorder 2, %s22
      // Predicated region
      $region85: #{ssa_fwd.1} parent=5 // pred_check
        %p9151 = pneg %p9150
      $region86: #{ssa_fwd.1} parent=5 // pred_check_branch
        %9153 = sbr.rel (%p9151) target = $region88
      $region87: #{ssa_fwd.1} parent=5 // pred_region
        %s9154 = ssub.s32 %s22, 2
        // Predicated region
        $region89: #{ssa_fwd.1} parent=87 // pred_check
          %p9155 = pneg %p401
        $region90: #{ssa_fwd.1} parent=87 // pred_check_branch
          %9157 = sbr.rel (%p9155) target = $region92
        $region91: #{ssa_fwd.1} parent=87 // pred_region
          %s9158 = sand.u32 %s386, 1
          %s9159 = scalar_lea.sflag [#allocation5], %s9158
          %s9160 = sand.u32 %s386, 1
          %s9161 = smul.addr %s9160, 256
          %s9162 = scalar_lea.vmem [#allocation4], %s9161
          %9163 = dma.done %s9159, 4096
        $region92: #{ssa_fwd.1} parent=87 // pred_fallthru
          _
      $region88: #{ssa_fwd.1} parent=5 // pred_fallthru
        _
    $region6: #{ssa_fwd.1} parent=1 // loop_footer
      %s26 = sadd.s32 1, %s22
    $region7: #{ssa_fwd.1} parent=1 // loop_footer_branch
      %21 = sbr.rel target = $region3
    $region8: #{ssa_fwd.1} parent=1 // loop_exit
      _
    %9164 = vsyncpa [#allocation5], 1
    %s9165 = scalar_lea.sflag [#allocation5], 1
    %9166 = vsyncpa %s9165, 1

</llo_original>
